<compile_context>
chip_gen: v6e
topology: v6e:2x2x1
jax: 0.10.0
libtpu: 0.0.40
codegen_flags: <defaults>
</compile_context>

<pallas_src>
import jax
import jax.numpy as jnp
from jax.experimental import pallas as pl
from jax.experimental.pallas import tpu as pltpu

LENS = 4.0  # ReLUX / Multispike clamp threshold


def _spike(v):
    """Multispike forward: floor(clamp(v, 0, 4) + 0.5) / 4 (f32 math)."""
    return jnp.floor(jnp.clip(v, 0.0, LENS) + 0.5) * 0.25


def _images_per_step(n_total, cap=8):
    """Largest divisor of n_total <= cap, preferring a grid length >= 2."""
    divisors = [d for d in range(1, min(n_total, cap) + 1) if n_total % d == 0]
    multi_step = [d for d in divisors if n_total // d >= 2]
    return max(multi_step) if multi_step else max(divisors)


def _make_ms_conv_block_kernel(H, W, C, C_mid, n_img, pad):
    HW = H * W
    # Tap order t = (dy+1)*3 + (dx+1) matches w.reshape(9, C_in, C_out).
    shifts = [(dy * W + dx, dx) for dy in (-1, 0, 1) for dx in (-1, 0, 1)]

    def kernel(x_ref, ml_ref, mr_ref, w1_ref, s1_ref, b1_ref,
               w2_ref, s2_ref, b2_ref, o_ref, apad1, apad2):
        # --- zero ONLY the pad rows; interior rows are rewritten every image ---
        apad1[pl.ds(0, pad), :] = jnp.zeros((pad, C), jnp.float32)
        apad1[pl.ds(pad + HW, pad), :] = jnp.zeros((pad, C), jnp.float32)
        apad2[pl.ds(0, pad), :] = jnp.zeros((pad, C_mid), jnp.float32)
        apad2[pl.ds(pad + HW, pad), :] = jnp.zeros((pad, C_mid), jnp.float32)

        mask_l = ml_ref[...]                      # (HW, 1) bf16, 0 where col == 0
        mask_r = mr_ref[...]                      # (HW, 1) bf16, 0 where col == W-1
        s1 = s1_ref[...]
        b1 = b1_ref[...]                          # (1, C_mid) f32
        s2 = s2_ref[...]
        b2 = b2_ref[...]                          # (1, C)     f32

        def tap(src, shift, dx):
            """One shifted conv tap as a bf16 (HW, C_in) MXU operand."""
            v = src[pl.ds(pad + shift, HW), :].astype(jnp.bfloat16)
            if dx == -1:
                v = v * mask_l                    # output col 0 has no left neighbour
            elif dx == 1:
                v = v * mask_r                    # output col W-1 has no right neighbour
            return v

        for i in range(n_img):                    # static unroll, n_img <= 8
            xi = x_ref[i].astype(jnp.float32)     # (C, HW), cast fused in-kernel

            # neuron1 -> zero-padded slab (rows = flat spatial, lanes = channels)
            apad1[pl.ds(pad, HW), :] = jnp.transpose(_spike(xi))

            # conv1: in-register im2col -> ONE deep-K bf16 matmul (K = 9*C)
            lhs1 = jnp.concatenate([tap(apad1, s, dx) for s, dx in shifts], axis=1)
            r1 = jnp.dot(lhs1, w1_ref[...], preferred_element_type=jnp.float32)

            # bn1 -> neuron2 -> second slab
            apad2[pl.ds(pad, HW), :] = _spike(r1 * s1 + b1)

            # conv2: 9 bf16 taps (K = C_mid each), accumulated in registers
            acc = None
            for t, (s, dx) in enumerate(shifts):
                d = jnp.dot(tap(apad2, s, dx), w2_ref[t],
                            preferred_element_type=jnp.float32)
                acc = d if acc is None else acc + d

            # bn2 + residual, emitted lane-dense in (C, HW) layout
            y = jnp.transpose(acc * s2 + b2) + xi
            o_ref[i] = y.astype(o_ref.dtype)

    return kernel


def ms_conv_block(x, w1, scale1, bias1, w2, scale2, bias2):
    """MS_ConvBlock forward.

    x:  [T, B, C, H, W]  (any float dtype; SeqToANNContainer layout)
    w1: [3, 3, C, C_mid] conv1 weight (HWIO, bias-free)
    w2: [3, 3, C_mid, C] conv2 weight (HWIO, bias-free)
    scale*/bias*: per-channel folded inference-mode BatchNorm affine.
    """
    T, B, C, H, W = x.shape
    C_mid = w1.shape[3]
    N, HW = T * B, H * W
    pad = max(8, ((W + 1 + 7) // 8) * 8)     # sublane-aligned vertical zero pad (>= W+1)
    n_img = _images_per_step(N)

    # Layout plumbing only (pure reshapes, no HBM transposes, no activation casts).
    x2 = x.reshape(N, C, HW)
    w1f = w1.reshape(9 * C, C_mid).astype(jnp.bfloat16)        # deep-K conv1 weight
    w2f = w2.reshape(9, C_mid, C).astype(jnp.bfloat16)         # per-tap conv2 weight
    s1 = scale1.reshape(1, C_mid).astype(jnp.float32)
    b1 = bias1.reshape(1, C_mid).astype(jnp.float32)
    s2 = scale2.reshape(1, C).astype(jnp.float32)
    b2 = bias2.reshape(1, C).astype(jnp.float32)
    col = jnp.arange(HW, dtype=jnp.int32) % W
    mask_l = (col > 0).astype(jnp.bfloat16).reshape(HW, 1)
    mask_r = (col < W - 1).astype(jnp.bfloat16).reshape(HW, 1)

    kernel = _make_ms_conv_block_kernel(H, W, C, C_mid, n_img, pad)

    out2 = pl.pallas_call(
        kernel,
        out_shape=jax.ShapeDtypeStruct((N, C, HW), x.dtype),
        grid_spec=pltpu.PrefetchScalarGridSpec(
            num_scalar_prefetch=0,
            grid=(N // n_img,),
            in_specs=[
                pl.BlockSpec((n_img, C, HW), lambda n: (n, 0, 0)),      # x images
                pl.BlockSpec((HW, 1), lambda n: (0, 0)),                # left-col mask
                pl.BlockSpec((HW, 1), lambda n: (0, 0)),                # right-col mask
                pl.BlockSpec((9 * C, C_mid), lambda n: (0, 0)),         # w1 (bf16, resident)
                pl.BlockSpec((1, C_mid), lambda n: (0, 0)),             # bn1 scale
                pl.BlockSpec((1, C_mid), lambda n: (0, 0)),             # bn1 bias
                pl.BlockSpec((9, C_mid, C), lambda n: (0, 0, 0)),       # w2 (bf16, resident)
                pl.BlockSpec((1, C), lambda n: (0, 0)),                 # bn2 scale
                pl.BlockSpec((1, C), lambda n: (0, 0)),                 # bn2 bias
            ],
            out_specs=pl.BlockSpec((n_img, C, HW), lambda n: (n, 0, 0)),
            scratch_shapes=[
                pltpu.VMEM((pad + HW + pad, C), jnp.float32),       # zero-padded spike(x)
                pltpu.VMEM((pad + HW + pad, C_mid), jnp.float32),   # zero-padded spike(bn1(conv1))
            ],
        ),
        compiler_params=pltpu.CompilerParams(
            dimension_semantics=("parallel",),
        ),
    )(x2, mask_l, mask_r, w1f, s1, b1, w2f, s2, b2)

    return out2.reshape(T, B, C, H, W)


def ms_conv_block_reference(x, w1, scale1, bias1, w2, scale2, bias2):
    """Pure-JAX reference matching the PyTorch module (inference-mode BN)."""
    T, B, C, H, W = x.shape
    xf = x.astype(jnp.float32).reshape(T * B, C, H, W)

    def conv_bn(v, w, scale, bias):
        out = jax.lax.conv_general_dilated(
            v, w, window_strides=(1, 1), padding="SAME",
            dimension_numbers=("NCHW", "HWIO", "NCHW"),
            precision=jax.lax.Precision.HIGHEST)
        return out * scale[None, :, None, None] + bias[None, :, None, None]

    h = conv_bn(_spike(xf), w1, scale1, bias1)
    h = conv_bn(_spike(h), w2, scale2, bias2)
    out = h + xf
    return out.reshape(T, B, C, H, W).astype(x.dtype)


if __name__ == "__main__":
    T, B, dim, H, W = 2, 2, 32, 16, 16
    mlp_ratio = 4.0
    C_mid = int(dim * mlp_ratio)                 # 128

    keys = jax.random.split(jax.random.PRNGKey(0), 11)
    x = jax.random.normal(keys[0], (T, B, dim, H, W), dtype=jnp.float32) * 2.0

    # Parameters are snapped to a 1/64 grid with small magnitude so they are
    # bf16-exact and the conv + folded-BN arithmetic is exact in f32; the
    # floor() inside the second Multispike then cannot flip between the bf16
    # MXU kernel and the f32 XLA reference.
    def q64(v):
        return jnp.round(v * 64.0) / 64.0

    w1 = q64(jnp.clip(0.06 * jax.random.normal(keys[1], (3, 3, dim, C_mid)), -0.25, 0.25))
    w2 = q64(jnp.clip(0.06 * jax.random.normal(keys[2], (3, 3, C_mid, dim)), -0.25, 0.25))

    def folded_bn(kg, kb, km, kv, n):
        gamma = 1.0 + 0.2 * jax.random.normal(kg, (n,))
        beta = 0.2 * jax.random.normal(kb, (n,))
        mean = 0.2 * jax.random.normal(km, (n,))
        var = jnp.abs(1.0 + 0.2 * jax.random.normal(kv, (n,)))
        scale = gamma * jax.lax.rsqrt(var + 1e-5)
        return q64(scale), q64(beta - mean * scale)

    s1, b1 = folded_bn(keys[3], keys[4], keys[5], keys[6], C_mid)
    s2, b2 = folded_bn(keys[7], keys[8], keys[9], keys[10], dim)

    fwd = jax.jit(ms_conv_block)
    out = jax.block_until_ready(fwd(x, w1, s1, b1, w2, s2, b2))

    ref = ms_conv_block_reference(x, w1, s1, b1, w2, s2, b2)
    assert out.shape == x.shape and out.dtype == x.dtype
    assert jnp.allclose(out, ref, atol=1e-4, rtol=1e-4), (
        f"mismatch vs reference, max abs err = {jnp.max(jnp.abs(out - ref))}")

    print("KERNEL_OK")
</pallas_src>

<mosaic_0001>
module attributes {stable_mosaic.version = 11 : i64} {
  func.func @kernel(%arg0: i32, %arg1: memref<2x32x256xf32, #tpu.memory_space<vmem>>, %arg2: memref<256x1xbf16, #tpu.memory_space<vmem>>, %arg3: memref<256x1xbf16, #tpu.memory_space<vmem>>, %arg4: memref<288x128xbf16, #tpu.memory_space<vmem>>, %arg5: memref<1x128xf32, #tpu.memory_space<vmem>>, %arg6: memref<1x128xf32, #tpu.memory_space<vmem>>, %arg7: memref<9x128x32xbf16, #tpu.memory_space<vmem>>, %arg8: memref<1x32xf32, #tpu.memory_space<vmem>>, %arg9: memref<1x32xf32, #tpu.memory_space<vmem>>, %arg10: memref<2x32x256xf32, #tpu.memory_space<vmem>>, %arg11: memref<304x32xf32, #tpu.memory_space<vmem>>, %arg12: memref<304x128xf32, #tpu.memory_space<vmem>>) attributes {dimension_semantics = [#tpu.dimension_semantics<parallel>], iteration_bounds = array<i64: 2>, scalar_prefetch = 0 : i64, scratch_operands = 2 : i64, tpu.core_type = #tpu.core_type<tc>, window_params = [{transform_indices = @transform_0, window_bounds = array<i64: 2, 32, 256>}, {pipeline_mode = #tpu.pipeline_mode<synchronous>, transform_indices = @transform_1, window_bounds = array<i64: 256, 1>}, {pipeline_mode = #tpu.pipeline_mode<synchronous>, transform_indices = @transform_2, window_bounds = array<i64: 256, 1>}, {pipeline_mode = #tpu.pipeline_mode<synchronous>, transform_indices = @transform_3, window_bounds = array<i64: 288, 128>}, {pipeline_mode = #tpu.pipeline_mode<synchronous>, transform_indices = @transform_4, window_bounds = array<i64: 1, 128>}, {pipeline_mode = #tpu.pipeline_mode<synchronous>, transform_indices = @transform_5, window_bounds = array<i64: 1, 128>}, {pipeline_mode = #tpu.pipeline_mode<synchronous>, transform_indices = @transform_6, window_bounds = array<i64: 9, 128, 32>}, {pipeline_mode = #tpu.pipeline_mode<synchronous>, transform_indices = @transform_7, window_bounds = array<i64: 1, 32>}, {pipeline_mode = #tpu.pipeline_mode<synchronous>, transform_indices = @transform_8, window_bounds = array<i64: 1, 32>}, {transform_indices = @transform_9, window_bounds = array<i64: 2, 32, 256>}]} {
    %cst = arith.constant 0.000000e+00 : f32
    %0 = vector.broadcast %cst : f32 to vector<24x32xf32>
    %c0 = arith.constant 0 : index
    %c0_0 = arith.constant 0 : index
    %1 = vector.load %arg11[%c0, %c0_0] : memref<304x32xf32, #tpu.memory_space<vmem>>, vector<24x32xf32>
    tpu.vector_store %arg11[%c0, %c0_0], %0 {strides = array<i32>} : memref<304x32xf32, #tpu.memory_space<vmem>>, vector<24x32xf32>,
    %cst_1 = arith.constant 0.000000e+00 : f32
    %2 = vector.broadcast %cst_1 : f32 to vector<24x32xf32>
    %c280 = arith.constant 280 : index
    %c0_2 = arith.constant 0 : index
    %3 = vector.load %arg11[%c280, %c0_2] : memref<304x32xf32, #tpu.memory_space<vmem>>, vector<24x32xf32>
    tpu.vector_store %arg11[%c280, %c0_2], %2 {strides = array<i32>} : memref<304x32xf32, #tpu.memory_space<vmem>>, vector<24x32xf32>,
    %cst_3 = arith.constant 0.000000e+00 : f32
    %4 = vector.broadcast %cst_3 : f32 to vector<24x128xf32>
    %c0_4 = arith.constant 0 : index
    %c0_5 = arith.constant 0 : index
    %5 = vector.load %arg12[%c0_4, %c0_5] : memref<304x128xf32, #tpu.memory_space<vmem>>, vector<24x128xf32>
    tpu.vector_store %arg12[%c0_4, %c0_5], %4 {strides = array<i32>} : memref<304x128xf32, #tpu.memory_space<vmem>>, vector<24x128xf32>,
    %cst_6 = arith.constant 0.000000e+00 : f32
    %6 = vector.broadcast %cst_6 : f32 to vector<24x128xf32>
    %c280_7 = arith.constant 280 : index
    %c0_8 = arith.constant 0 : index
    %7 = vector.load %arg12[%c280_7, %c0_8] : memref<304x128xf32, #tpu.memory_space<vmem>>, vector<24x128xf32>
    tpu.vector_store %arg12[%c280_7, %c0_8], %6 {strides = array<i32>} : memref<304x128xf32, #tpu.memory_space<vmem>>, vector<24x128xf32>,
    %c0_9 = arith.constant 0 : index
    %c0_10 = arith.constant 0 : index
    %8 = vector.load %arg2[%c0_9, %c0_10] : memref<256x1xbf16, #tpu.memory_space<vmem>>, vector<256x1xbf16>
    %c0_11 = arith.constant 0 : index
    %c0_12 = arith.constant 0 : index
    %9 = vector.load %arg3[%c0_11, %c0_12] : memref<256x1xbf16, #tpu.memory_space<vmem>>, vector<256x1xbf16>
    %c0_13 = arith.constant 0 : index
    %c0_14 = arith.constant 0 : index
    %10 = vector.load %arg5[%c0_13, %c0_14] : memref<1x128xf32, #tpu.memory_space<vmem>>, vector<1x128xf32>
    %c0_15 = arith.constant 0 : index
    %c0_16 = arith.constant 0 : index
    %11 = vector.load %arg6[%c0_15, %c0_16] : memref<1x128xf32, #tpu.memory_space<vmem>>, vector<1x128xf32>
    %c0_17 = arith.constant 0 : index
    %c0_18 = arith.constant 0 : index
    %12 = vector.load %arg8[%c0_17, %c0_18] : memref<1x32xf32, #tpu.memory_space<vmem>>, vector<1x32xf32>
    %c0_19 = arith.constant 0 : index
    %c0_20 = arith.constant 0 : index
    %13 = vector.load %arg9[%c0_19, %c0_20] : memref<1x32xf32, #tpu.memory_space<vmem>>, vector<1x32xf32>
    %c0_21 = arith.constant 0 : index
    %c0_22 = arith.constant 0 : index
    %c0_23 = arith.constant 0 : index
    %14 = vector.load %arg1[%c0_21, %c0_22, %c0_23] : memref<2x32x256xf32, #tpu.memory_space<vmem>>, vector<1x32x256xf32>
    %15 = vector.shape_cast %14 : vector<1x32x256xf32> to vector<32x256xf32>
    %cst_24 = arith.constant 0.000000e+00 : f32
    %cst_25 = arith.constant 4.000000e+00 : f32
    %16 = vector.broadcast %cst_24 : f32 to vector<32x256xf32>
    %17 = arith.maximumf %16, %15 : vector<32x256xf32>
    %18 = vector.broadcast %cst_25 : f32 to vector<32x256xf32>
    %19 = arith.minimumf %18, %17 : vector<32x256xf32>
    %cst_26 = arith.constant 5.000000e-01 : f32
    %20 = vector.broadcast %cst_26 : f32 to vector<32x256xf32>
    %21 = arith.addf %19, %20 : vector<32x256xf32>
    %22 = math.floor %21 : vector<32x256xf32>
    %cst_27 = arith.constant 2.500000e-01 : f32
    %23 = vector.broadcast %cst_27 : f32 to vector<32x256xf32>
    %24 = arith.mulf %22, %23 : vector<32x256xf32>
    %25 = tpu.transpose %24, [1, 0] : vector<32x256xf32> -> vector<256x32xf32>
    %c24 = arith.constant 24 : index
    %c0_28 = arith.constant 0 : index
    %26 = vector.load %arg11[%c24, %c0_28] : memref<304x32xf32, #tpu.memory_space<vmem>>, vector<256x32xf32>
    tpu.vector_store %arg11[%c24, %c0_28], %25 {strides = array<i32>} : memref<304x32xf32, #tpu.memory_space<vmem>>, vector<256x32xf32>,
    %c7 = arith.constant 7 : index
    %c0_29 = arith.constant 0 : index
    %27 = vector.load %arg11[%c7, %c0_29] : memref<304x32xf32, #tpu.memory_space<vmem>>, vector<256x32xf32>
    %28 = arith.truncf %27 : vector<256x32xf32> to vector<256x32xbf16>
    %29 = vector.broadcast %8 : vector<256x1xbf16> to vector<256x32xbf16>
    %30 = arith.mulf %28, %29 : vector<256x32xbf16>
    %c8 = arith.constant 8 : index
    %c0_30 = arith.constant 0 : index
    %31 = vector.load %arg11[%c8, %c0_30] : memref<304x32xf32, #tpu.memory_space<vmem>>, vector<256x32xf32>
    %32 = arith.truncf %31 : vector<256x32xf32> to vector<256x32xbf16>
    %c9 = arith.constant 9 : index
    %c0_31 = arith.constant 0 : index
    %33 = vector.load %arg11[%c9, %c0_31] : memref<304x32xf32, #tpu.memory_space<vmem>>, vector<256x32xf32>
    %34 = arith.truncf %33 : vector<256x32xf32> to vector<256x32xbf16>
    %35 = vector.broadcast %9 : vector<256x1xbf16> to vector<256x32xbf16>
    %36 = arith.mulf %34, %35 : vector<256x32xbf16>
    %c23 = arith.constant 23 : index
    %c0_32 = arith.constant 0 : index
    %37 = vector.load %arg11[%c23, %c0_32] : memref<304x32xf32, #tpu.memory_space<vmem>>, vector<256x32xf32>
    %38 = arith.truncf %37 : vector<256x32xf32> to vector<256x32xbf16>
    %39 = vector.broadcast %8 : vector<256x1xbf16> to vector<256x32xbf16>
    %40 = arith.mulf %38, %39 : vector<256x32xbf16>
    %c24_33 = arith.constant 24 : index
    %c0_34 = arith.constant 0 : index
    %41 = vector.load %arg11[%c24_33, %c0_34] : memref<304x32xf32, #tpu.memory_space<vmem>>, vector<256x32xf32>
    %42 = arith.truncf %41 : vector<256x32xf32> to vector<256x32xbf16>
    %c25 = arith.constant 25 : index
    %c0_35 = arith.constant 0 : index
    %43 = vector.load %arg11[%c25, %c0_35] : memref<304x32xf32, #tpu.memory_space<vmem>>, vector<256x32xf32>
    %44 = arith.truncf %43 : vector<256x32xf32> to vector<256x32xbf16>
    %45 = vector.broadcast %9 : vector<256x1xbf16> to vector<256x32xbf16>
    %46 = arith.mulf %44, %45 : vector<256x32xbf16>
    %c39 = arith.constant 39 : index
    %c0_36 = arith.constant 0 : index
    %47 = vector.load %arg11[%c39, %c0_36] : memref<304x32xf32, #tpu.memory_space<vmem>>, vector<256x32xf32>
    %48 = arith.truncf %47 : vector<256x32xf32> to vector<256x32xbf16>
    %49 = vector.broadcast %8 : vector<256x1xbf16> to vector<256x32xbf16>
    %50 = arith.mulf %48, %49 : vector<256x32xbf16>
    %c40 = arith.constant 40 : index
    %c0_37 = arith.constant 0 : index
    %51 = vector.load %arg11[%c40, %c0_37] : memref<304x32xf32, #tpu.memory_space<vmem>>, vector<256x32xf32>
    %52 = arith.truncf %51 : vector<256x32xf32> to vector<256x32xbf16>
    %c41 = arith.constant 41 : index
    %c0_38 = arith.constant 0 : index
    %53 = vector.load %arg11[%c41, %c0_38] : memref<304x32xf32, #tpu.memory_space<vmem>>, vector<256x32xf32>
    %54 = arith.truncf %53 : vector<256x32xf32> to vector<256x32xbf16>
    %55 = vector.broadcast %9 : vector<256x1xbf16> to vector<256x32xbf16>
    %56 = arith.mulf %54, %55 : vector<256x32xbf16>
    %57 = tpu.concatenate %30, %32, %36, %40, %42, %46, %50, %52, %56 in 1 : vector<256x32xbf16>, vector<256x32xbf16>, vector<256x32xbf16>, vector<256x32xbf16>, vector<256x32xbf16>, vector<256x32xbf16>, vector<256x32xbf16>, vector<256x32xbf16>, vector<256x32xbf16> -> vector<256x288xbf16>
    %c0_39 = arith.constant 0 : index
    %c0_40 = arith.constant 0 : index
    %58 = vector.load %arg4[%c0_39, %c0_40] : memref<288x128xbf16, #tpu.memory_space<vmem>>, vector<288x128xbf16>
    %cst_41 = arith.constant dense<0.000000e+00> : vector<256x128xf32>
    %59 = tpu.matmul %57, %58, %cst_41 {dimension_numbers = #tpu.dot_dimension_numbers<[1], [0], [0], [1], [0, 0, 1, 1], [], []>} : vector<256x288xbf16>, vector<288x128xbf16>, vector<256x128xf32> -> vector<256x128xf32>
    %60 = vector.broadcast %10 : vector<1x128xf32> to vector<256x128xf32>
    %61 = arith.mulf %59, %60 : vector<256x128xf32>
    %62 = vector.broadcast %11 : vector<1x128xf32> to vector<256x128xf32>
    %63 = arith.addf %61, %62 : vector<256x128xf32>
    %cst_42 = arith.constant 0.000000e+00 : f32
    %cst_43 = arith.constant 4.000000e+00 : f32
    %64 = vector.broadcast %cst_42 : f32 to vector<256x128xf32>
    %65 = arith.maximumf %64, %63 : vector<256x128xf32>
    %66 = vector.broadcast %cst_43 : f32 to vector<256x128xf32>
    %67 = arith.minimumf %66, %65 : vector<256x128xf32>
    %cst_44 = arith.constant 5.000000e-01 : f32
    %68 = vector.broadcast %cst_44 : f32 to vector<256x128xf32>
    %69 = arith.addf %67, %68 : vector<256x128xf32>
    %70 = math.floor %69 : vector<256x128xf32>
    %cst_45 = arith.constant 2.500000e-01 : f32
    %71 = vector.broadcast %cst_45 : f32 to vector<256x128xf32>
    %72 = arith.mulf %70, %71 : vector<256x128xf32>
    %c24_46 = arith.constant 24 : index
    %c0_47 = arith.constant 0 : index
    %73 = vector.load %arg12[%c24_46, %c0_47] : memref<304x128xf32, #tpu.memory_space<vmem>>, vector<256x128xf32>
    tpu.vector_store %arg12[%c24_46, %c0_47], %72 {strides = array<i32>} : memref<304x128xf32, #tpu.memory_space<vmem>>, vector<256x128xf32>,
    %c7_48 = arith.constant 7 : index
    %c0_49 = arith.constant 0 : index
    %74 = vector.load %arg12[%c7_48, %c0_49] : memref<304x128xf32, #tpu.memory_space<vmem>>, vector<256x128xf32>
    %75 = arith.truncf %74 : vector<256x128xf32> to vector<256x128xbf16>
    %76 = vector.broadcast %8 : vector<256x1xbf16> to vector<256x128xbf16>
    %77 = arith.mulf %75, %76 : vector<256x128xbf16>
    %c0_50 = arith.constant 0 : index
    %c0_51 = arith.constant 0 : index
    %c0_52 = arith.constant 0 : index
    %78 = vector.load %arg7[%c0_50, %c0_51, %c0_52] : memref<9x128x32xbf16, #tpu.memory_space<vmem>>, vector<1x128x32xbf16>
    %79 = vector.shape_cast %78 : vector<1x128x32xbf16> to vector<128x32xbf16>
    %cst_53 = arith.constant dense<0.000000e+00> : vector<256x32xf32>
    %80 = tpu.matmul %77, %79, %cst_53 {dimension_numbers = #tpu.dot_dimension_numbers<[1], [0], [0], [1], [0, 0, 1, 1], [], []>} : vector<256x128xbf16>, vector<128x32xbf16>, vector<256x32xf32> -> vector<256x32xf32>
    %c8_54 = arith.constant 8 : index
    %c0_55 = arith.constant 0 : index
    %81 = vector.load %arg12[%c8_54, %c0_55] : memref<304x128xf32, #tpu.memory_space<vmem>>, vector<256x128xf32>
    %82 = arith.truncf %81 : vector<256x128xf32> to vector<256x128xbf16>
    %c1 = arith.constant 1 : index
    %c0_56 = arith.constant 0 : index
    %c0_57 = arith.constant 0 : index
    %83 = vector.load %arg7[%c1, %c0_56, %c0_57] : memref<9x128x32xbf16, #tpu.memory_space<vmem>>, vector<1x128x32xbf16>
    %84 = vector.shape_cast %83 : vector<1x128x32xbf16> to vector<128x32xbf16>
    %cst_58 = arith.constant dense<0.000000e+00> : vector<256x32xf32>
    %85 = tpu.matmul %82, %84, %cst_58 {dimension_numbers = #tpu.dot_dimension_numbers<[1], [0], [0], [1], [0, 0, 1, 1], [], []>} : vector<256x128xbf16>, vector<128x32xbf16>, vector<256x32xf32> -> vector<256x32xf32>
    %86 = arith.addf %80, %85 : vector<256x32xf32>
    %c9_59 = arith.constant 9 : index
    %c0_60 = arith.constant 0 : index
    %87 = vector.load %arg12[%c9_59, %c0_60] : memref<304x128xf32, #tpu.memory_space<vmem>>, vector<256x128xf32>
    %88 = arith.truncf %87 : vector<256x128xf32> to vector<256x128xbf16>
    %89 = vector.broadcast %9 : vector<256x1xbf16> to vector<256x128xbf16>
    %90 = arith.mulf %88, %89 : vector<256x128xbf16>
    %c2 = arith.constant 2 : index
    %c0_61 = arith.constant 0 : index
    %c0_62 = arith.constant 0 : index
    %91 = vector.load %arg7[%c2, %c0_61, %c0_62] : memref<9x128x32xbf16, #tpu.memory_space<vmem>>, vector<1x128x32xbf16>
    %92 = vector.shape_cast %91 : vector<1x128x32xbf16> to vector<128x32xbf16>
    %cst_63 = arith.constant dense<0.000000e+00> : vector<256x32xf32>
    %93 = tpu.matmul %90, %92, %cst_63 {dimension_numbers = #tpu.dot_dimension_numbers<[1], [0], [0], [1], [0, 0, 1, 1], [], []>} : vector<256x128xbf16>, vector<128x32xbf16>, vector<256x32xf32> -> vector<256x32xf32>
    %94 = arith.addf %86, %93 : vector<256x32xf32>
    %c23_64 = arith.constant 23 : index
    %c0_65 = arith.constant 0 : index
    %95 = vector.load %arg12[%c23_64, %c0_65] : memref<304x128xf32, #tpu.memory_space<vmem>>, vector<256x128xf32>
    %96 = arith.truncf %95 : vector<256x128xf32> to vector<256x128xbf16>
    %97 = vector.broadcast %8 : vector<256x1xbf16> to vector<256x128xbf16>
    %98 = arith.mulf %96, %97 : vector<256x128xbf16>
    %c3 = arith.constant 3 : index
    %c0_66 = arith.constant 0 : index
    %c0_67 = arith.constant 0 : index
    %99 = vector.load %arg7[%c3, %c0_66, %c0_67] : memref<9x128x32xbf16, #tpu.memory_space<vmem>>, vector<1x128x32xbf16>
    %100 = vector.shape_cast %99 : vector<1x128x32xbf16> to vector<128x32xbf16>
    %cst_68 = arith.constant dense<0.000000e+00> : vector<256x32xf32>
    %101 = tpu.matmul %98, %100, %cst_68 {dimension_numbers = #tpu.dot_dimension_numbers<[1], [0], [0], [1], [0, 0, 1, 1], [], []>} : vector<256x128xbf16>, vector<128x32xbf16>, vector<256x32xf32> -> vector<256x32xf32>
    %102 = arith.addf %94, %101 : vector<256x32xf32>
    %c24_69 = arith.constant 24 : index
    %c0_70 = arith.constant 0 : index
    %103 = vector.load %arg12[%c24_69, %c0_70] : memref<304x128xf32, #tpu.memory_space<vmem>>, vector<256x128xf32>
    %104 = arith.truncf %103 : vector<256x128xf32> to vector<256x128xbf16>
    %c4 = arith.constant 4 : index
    %c0_71 = arith.constant 0 : index
    %c0_72 = arith.constant 0 : index
    %105 = vector.load %arg7[%c4, %c0_71, %c0_72] : memref<9x128x32xbf16, #tpu.memory_space<vmem>>, vector<1x128x32xbf16>
    %106 = vector.shape_cast %105 : vector<1x128x32xbf16> to vector<128x32xbf16>
    %cst_73 = arith.constant dense<0.000000e+00> : vector<256x32xf32>
    %107 = tpu.matmul %104, %106, %cst_73 {dimension_numbers = #tpu.dot_dimension_numbers<[1], [0], [0], [1], [0, 0, 1, 1], [], []>} : vector<256x128xbf16>, vector<128x32xbf16>, vector<256x32xf32> -> vector<256x32xf32>
    %108 = arith.addf %102, %107 : vector<256x32xf32>
    %c25_74 = arith.constant 25 : index
    %c0_75 = arith.constant 0 : index
    %109 = vector.load %arg12[%c25_74, %c0_75] : memref<304x128xf32, #tpu.memory_space<vmem>>, vector<256x128xf32>
    %110 = arith.truncf %109 : vector<256x128xf32> to vector<256x128xbf16>
    %111 = vector.broadcast %9 : vector<256x1xbf16> to vector<256x128xbf16>
    %112 = arith.mulf %110, %111 : vector<256x128xbf16>
    %c5 = arith.constant 5 : index
    %c0_76 = arith.constant 0 : index
    %c0_77 = arith.constant 0 : index
    %113 = vector.load %arg7[%c5, %c0_76, %c0_77] : memref<9x128x32xbf16, #tpu.memory_space<vmem>>, vector<1x128x32xbf16>
    %114 = vector.shape_cast %113 : vector<1x128x32xbf16> to vector<128x32xbf16>
    %cst_78 = arith.constant dense<0.000000e+00> : vector<256x32xf32>
    %115 = tpu.matmul %112, %114, %cst_78 {dimension_numbers = #tpu.dot_dimension_numbers<[1], [0], [0], [1], [0, 0, 1, 1], [], []>} : vector<256x128xbf16>, vector<128x32xbf16>, vector<256x32xf32> -> vector<256x32xf32>
    %116 = arith.addf %108, %115 : vector<256x32xf32>
    %c39_79 = arith.constant 39 : index
    %c0_80 = arith.constant 0 : index
    %117 = vector.load %arg12[%c39_79, %c0_80] : memref<304x128xf32, #tpu.memory_space<vmem>>, vector<256x128xf32>
    %118 = arith.truncf %117 : vector<256x128xf32> to vector<256x128xbf16>
    %119 = vector.broadcast %8 : vector<256x1xbf16> to vector<256x128xbf16>
    %120 = arith.mulf %118, %119 : vector<256x128xbf16>
    %c6 = arith.constant 6 : index
    %c0_81 = arith.constant 0 : index
    %c0_82 = arith.constant 0 : index
    %121 = vector.load %arg7[%c6, %c0_81, %c0_82] : memref<9x128x32xbf16, #tpu.memory_space<vmem>>, vector<1x128x32xbf16>
    %122 = vector.shape_cast %121 : vector<1x128x32xbf16> to vector<128x32xbf16>
    %cst_83 = arith.constant dense<0.000000e+00> : vector<256x32xf32>
    %123 = tpu.matmul %120, %122, %cst_83 {dimension_numbers = #tpu.dot_dimension_numbers<[1], [0], [0], [1], [0, 0, 1, 1], [], []>} : vector<256x128xbf16>, vector<128x32xbf16>, vector<256x32xf32> -> vector<256x32xf32>
    %124 = arith.addf %116, %123 : vector<256x32xf32>
    %c40_84 = arith.constant 40 : index
    %c0_85 = arith.constant 0 : index
    %125 = vector.load %arg12[%c40_84, %c0_85] : memref<304x128xf32, #tpu.memory_space<vmem>>, vector<256x128xf32>
    %126 = arith.truncf %125 : vector<256x128xf32> to vector<256x128xbf16>
    %c7_86 = arith.constant 7 : index
    %c0_87 = arith.constant 0 : index
    %c0_88 = arith.constant 0 : index
    %127 = vector.load %arg7[%c7_86, %c0_87, %c0_88] : memref<9x128x32xbf16, #tpu.memory_space<vmem>>, vector<1x128x32xbf16>
    %128 = vector.shape_cast %127 : vector<1x128x32xbf16> to vector<128x32xbf16>
    %cst_89 = arith.constant dense<0.000000e+00> : vector<256x32xf32>
    %129 = tpu.matmul %126, %128, %cst_89 {dimension_numbers = #tpu.dot_dimension_numbers<[1], [0], [0], [1], [0, 0, 1, 1], [], []>} : vector<256x128xbf16>, vector<128x32xbf16>, vector<256x32xf32> -> vector<256x32xf32>
    %130 = arith.addf %124, %129 : vector<256x32xf32>
    %c41_90 = arith.constant 41 : index
    %c0_91 = arith.constant 0 : index
    %131 = vector.load %arg12[%c41_90, %c0_91] : memref<304x128xf32, #tpu.memory_space<vmem>>, vector<256x128xf32>
    %132 = arith.truncf %131 : vector<256x128xf32> to vector<256x128xbf16>
    %133 = vector.broadcast %9 : vector<256x1xbf16> to vector<256x128xbf16>
    %134 = arith.mulf %132, %133 : vector<256x128xbf16>
    %c8_92 = arith.constant 8 : index
    %c0_93 = arith.constant 0 : index
    %c0_94 = arith.constant 0 : index
    %135 = vector.load %arg7[%c8_92, %c0_93, %c0_94] : memref<9x128x32xbf16, #tpu.memory_space<vmem>>, vector<1x128x32xbf16>
    %136 = vector.shape_cast %135 : vector<1x128x32xbf16> to vector<128x32xbf16>
    %cst_95 = arith.constant dense<0.000000e+00> : vector<256x32xf32>
    %137 = tpu.matmul %134, %136, %cst_95 {dimension_numbers = #tpu.dot_dimension_numbers<[1], [0], [0], [1], [0, 0, 1, 1], [], []>} : vector<256x128xbf16>, vector<128x32xbf16>, vector<256x32xf32> -> vector<256x32xf32>
    %138 = arith.addf %130, %137 : vector<256x32xf32>
    %139 = vector.broadcast %12 : vector<1x32xf32> to vector<256x32xf32>
    %140 = arith.mulf %138, %139 : vector<256x32xf32>
    %141 = vector.broadcast %13 : vector<1x32xf32> to vector<256x32xf32>
    %142 = arith.addf %140, %141 : vector<256x32xf32>
    %143 = tpu.transpose %142, [1, 0] : vector<256x32xf32> -> vector<32x256xf32>
    %144 = arith.addf %143, %15 : vector<32x256xf32>
    %c0_96 = arith.constant 0 : index
    %c0_97 = arith.constant 0 : index
    %c0_98 = arith.constant 0 : index
    %145 = vector.load %arg10[%c0_96, %c0_97, %c0_98] : memref<2x32x256xf32, #tpu.memory_space<vmem>>, vector<1x32x256xf32>
    %146 = vector.shape_cast %145 : vector<1x32x256xf32> to vector<32x256xf32>
    %147 = vector.shape_cast %144 : vector<32x256xf32> to vector<1x32x256xf32>
    tpu.vector_store %arg10[%c0_96, %c0_97, %c0_98], %147 {strides = array<i32>} : memref<2x32x256xf32, #tpu.memory_space<vmem>>, vector<1x32x256xf32>,
    %c1_99 = arith.constant 1 : index
    %c0_100 = arith.constant 0 : index
    %c0_101 = arith.constant 0 : index
    %148 = vector.load %arg1[%c1_99, %c0_100, %c0_101] : memref<2x32x256xf32, #tpu.memory_space<vmem>>, vector<1x32x256xf32>
    %149 = vector.shape_cast %148 : vector<1x32x256xf32> to vector<32x256xf32>
    %cst_102 = arith.constant 0.000000e+00 : f32
    %cst_103 = arith.constant 4.000000e+00 : f32
    %150 = vector.broadcast %cst_102 : f32 to vector<32x256xf32>
    %151 = arith.maximumf %150, %149 : vector<32x256xf32>
    %152 = vector.broadcast %cst_103 : f32 to vector<32x256xf32>
    %153 = arith.minimumf %152, %151 : vector<32x256xf32>
    %cst_104 = arith.constant 5.000000e-01 : f32
    %154 = vector.broadcast %cst_104 : f32 to vector<32x256xf32>
    %155 = arith.addf %153, %154 : vector<32x256xf32>
    %156 = math.floor %155 : vector<32x256xf32>
    %cst_105 = arith.constant 2.500000e-01 : f32
    %157 = vector.broadcast %cst_105 : f32 to vector<32x256xf32>
    %158 = arith.mulf %156, %157 : vector<32x256xf32>
    %159 = tpu.transpose %158, [1, 0] : vector<32x256xf32> -> vector<256x32xf32>
    %c24_106 = arith.constant 24 : index
    %c0_107 = arith.constant 0 : index
    %160 = vector.load %arg11[%c24_106, %c0_107] : memref<304x32xf32, #tpu.memory_space<vmem>>, vector<256x32xf32>
    tpu.vector_store %arg11[%c24_106, %c0_107], %159 {strides = array<i32>} : memref<304x32xf32, #tpu.memory_space<vmem>>, vector<256x32xf32>,
    %c7_108 = arith.constant 7 : index
    %c0_109 = arith.constant 0 : index
    %161 = vector.load %arg11[%c7_108, %c0_109] : memref<304x32xf32, #tpu.memory_space<vmem>>, vector<256x32xf32>
    %162 = arith.truncf %161 : vector<256x32xf32> to vector<256x32xbf16>
    %163 = vector.broadcast %8 : vector<256x1xbf16> to vector<256x32xbf16>
    %164 = arith.mulf %162, %163 : vector<256x32xbf16>
    %c8_110 = arith.constant 8 : index
    %c0_111 = arith.constant 0 : index
    %165 = vector.load %arg11[%c8_110, %c0_111] : memref<304x32xf32, #tpu.memory_space<vmem>>, vector<256x32xf32>
    %166 = arith.truncf %165 : vector<256x32xf32> to vector<256x32xbf16>
    %c9_112 = arith.constant 9 : index
    %c0_113 = arith.constant 0 : index
    %167 = vector.load %arg11[%c9_112, %c0_113] : memref<304x32xf32, #tpu.memory_space<vmem>>, vector<256x32xf32>
    %168 = arith.truncf %167 : vector<256x32xf32> to vector<256x32xbf16>
    %169 = vector.broadcast %9 : vector<256x1xbf16> to vector<256x32xbf16>
    %170 = arith.mulf %168, %169 : vector<256x32xbf16>
    %c23_114 = arith.constant 23 : index
    %c0_115 = arith.constant 0 : index
    %171 = vector.load %arg11[%c23_114, %c0_115] : memref<304x32xf32, #tpu.memory_space<vmem>>, vector<256x32xf32>
    %172 = arith.truncf %171 : vector<256x32xf32> to vector<256x32xbf16>
    %173 = vector.broadcast %8 : vector<256x1xbf16> to vector<256x32xbf16>
    %174 = arith.mulf %172, %173 : vector<256x32xbf16>
    %c24_116 = arith.constant 24 : index
    %c0_117 = arith.constant 0 : index
    %175 = vector.load %arg11[%c24_116, %c0_117] : memref<304x32xf32, #tpu.memory_space<vmem>>, vector<256x32xf32>
    %176 = arith.truncf %175 : vector<256x32xf32> to vector<256x32xbf16>
    %c25_118 = arith.constant 25 : index
    %c0_119 = arith.constant 0 : index
    %177 = vector.load %arg11[%c25_118, %c0_119] : memref<304x32xf32, #tpu.memory_space<vmem>>, vector<256x32xf32>
    %178 = arith.truncf %177 : vector<256x32xf32> to vector<256x32xbf16>
    %179 = vector.broadcast %9 : vector<256x1xbf16> to vector<256x32xbf16>
    %180 = arith.mulf %178, %179 : vector<256x32xbf16>
    %c39_120 = arith.constant 39 : index
    %c0_121 = arith.constant 0 : index
    %181 = vector.load %arg11[%c39_120, %c0_121] : memref<304x32xf32, #tpu.memory_space<vmem>>, vector<256x32xf32>
    %182 = arith.truncf %181 : vector<256x32xf32> to vector<256x32xbf16>
    %183 = vector.broadcast %8 : vector<256x1xbf16> to vector<256x32xbf16>
    %184 = arith.mulf %182, %183 : vector<256x32xbf16>
    %c40_122 = arith.constant 40 : index
    %c0_123 = arith.constant 0 : index
    %185 = vector.load %arg11[%c40_122, %c0_123] : memref<304x32xf32, #tpu.memory_space<vmem>>, vector<256x32xf32>
    %186 = arith.truncf %185 : vector<256x32xf32> to vector<256x32xbf16>
    %c41_124 = arith.constant 41 : index
    %c0_125 = arith.constant 0 : index
    %187 = vector.load %arg11[%c41_124, %c0_125] : memref<304x32xf32, #tpu.memory_space<vmem>>, vector<256x32xf32>
    %188 = arith.truncf %187 : vector<256x32xf32> to vector<256x32xbf16>
    %189 = vector.broadcast %9 : vector<256x1xbf16> to vector<256x32xbf16>
    %190 = arith.mulf %188, %189 : vector<256x32xbf16>
    %191 = tpu.concatenate %164, %166, %170, %174, %176, %180, %184, %186, %190 in 1 : vector<256x32xbf16>, vector<256x32xbf16>, vector<256x32xbf16>, vector<256x32xbf16>, vector<256x32xbf16>, vector<256x32xbf16>, vector<256x32xbf16>, vector<256x32xbf16>, vector<256x32xbf16> -> vector<256x288xbf16>
    %c0_126 = arith.constant 0 : index
    %c0_127 = arith.constant 0 : index
    %192 = vector.load %arg4[%c0_126, %c0_127] : memref<288x128xbf16, #tpu.memory_space<vmem>>, vector<288x128xbf16>
    %cst_128 = arith.constant dense<0.000000e+00> : vector<256x128xf32>
    %193 = tpu.matmul %191, %192, %cst_128 {dimension_numbers = #tpu.dot_dimension_numbers<[1], [0], [0], [1], [0, 0, 1, 1], [], []>} : vector<256x288xbf16>, vector<288x128xbf16>, vector<256x128xf32> -> vector<256x128xf32>
    %194 = vector.broadcast %10 : vector<1x128xf32> to vector<256x128xf32>
    %195 = arith.mulf %193, %194 : vector<256x128xf32>
    %196 = vector.broadcast %11 : vector<1x128xf32> to vector<256x128xf32>
    %197 = arith.addf %195, %196 : vector<256x128xf32>
    %cst_129 = arith.constant 0.000000e+00 : f32
    %cst_130 = arith.constant 4.000000e+00 : f32
    %198 = vector.broadcast %cst_129 : f32 to vector<256x128xf32>
    %199 = arith.maximumf %198, %197 : vector<256x128xf32>
    %200 = vector.broadcast %cst_130 : f32 to vector<256x128xf32>
    %201 = arith.minimumf %200, %199 : vector<256x128xf32>
    %cst_131 = arith.constant 5.000000e-01 : f32
    %202 = vector.broadcast %cst_131 : f32 to vector<256x128xf32>
    %203 = arith.addf %201, %202 : vector<256x128xf32>
    %204 = math.floor %203 : vector<256x128xf32>
    %cst_132 = arith.constant 2.500000e-01 : f32
    %205 = vector.broadcast %cst_132 : f32 to vector<256x128xf32>
    %206 = arith.mulf %204, %205 : vector<256x128xf32>
    %c24_133 = arith.constant 24 : index
    %c0_134 = arith.constant 0 : index
    %207 = vector.load %arg12[%c24_133, %c0_134] : memref<304x128xf32, #tpu.memory_space<vmem>>, vector<256x128xf32>
    tpu.vector_store %arg12[%c24_133, %c0_134], %206 {strides = array<i32>} : memref<304x128xf32, #tpu.memory_space<vmem>>, vector<256x128xf32>,
    %c7_135 = arith.constant 7 : index
    %c0_136 = arith.constant 0 : index
    %208 = vector.load %arg12[%c7_135, %c0_136] : memref<304x128xf32, #tpu.memory_space<vmem>>, vector<256x128xf32>
    %209 = arith.truncf %208 : vector<256x128xf32> to vector<256x128xbf16>
    %210 = vector.broadcast %8 : vector<256x1xbf16> to vector<256x128xbf16>
    %211 = arith.mulf %209, %210 : vector<256x128xbf16>
    %c0_137 = arith.constant 0 : index
    %c0_138 = arith.constant 0 : index
    %c0_139 = arith.constant 0 : index
    %212 = vector.load %arg7[%c0_137, %c0_138, %c0_139] : memref<9x128x32xbf16, #tpu.memory_space<vmem>>, vector<1x128x32xbf16>
    %213 = vector.shape_cast %212 : vector<1x128x32xbf16> to vector<128x32xbf16>
    %cst_140 = arith.constant dense<0.000000e+00> : vector<256x32xf32>
    %214 = tpu.matmul %211, %213, %cst_140 {dimension_numbers = #tpu.dot_dimension_numbers<[1], [0], [0], [1], [0, 0, 1, 1], [], []>} : vector<256x128xbf16>, vector<128x32xbf16>, vector<256x32xf32> -> vector<256x32xf32>
    %c8_141 = arith.constant 8 : index
    %c0_142 = arith.constant 0 : index
    %215 = vector.load %arg12[%c8_141, %c0_142] : memref<304x128xf32, #tpu.memory_space<vmem>>, vector<256x128xf32>
    %216 = arith.truncf %215 : vector<256x128xf32> to vector<256x128xbf16>
    %c1_143 = arith.constant 1 : index
    %c0_144 = arith.constant 0 : index
    %c0_145 = arith.constant 0 : index
    %217 = vector.load %arg7[%c1_143, %c0_144, %c0_145] : memref<9x128x32xbf16, #tpu.memory_space<vmem>>, vector<1x128x32xbf16>
    %218 = vector.shape_cast %217 : vector<1x128x32xbf16> to vector<128x32xbf16>
    %cst_146 = arith.constant dense<0.000000e+00> : vector<256x32xf32>
    %219 = tpu.matmul %216, %218, %cst_146 {dimension_numbers = #tpu.dot_dimension_numbers<[1], [0], [0], [1], [0, 0, 1, 1], [], []>} : vector<256x128xbf16>, vector<128x32xbf16>, vector<256x32xf32> -> vector<256x32xf32>
    %220 = arith.addf %214, %219 : vector<256x32xf32>
    %c9_147 = arith.constant 9 : index
    %c0_148 = arith.constant 0 : index
    %221 = vector.load %arg12[%c9_147, %c0_148] : memref<304x128xf32, #tpu.memory_space<vmem>>, vector<256x128xf32>
    %222 = arith.truncf %221 : vector<256x128xf32> to vector<256x128xbf16>
    %223 = vector.broadcast %9 : vector<256x1xbf16> to vector<256x128xbf16>
    %224 = arith.mulf %222, %223 : vector<256x128xbf16>
    %c2_149 = arith.constant 2 : index
    %c0_150 = arith.constant 0 : index
    %c0_151 = arith.constant 0 : index
    %225 = vector.load %arg7[%c2_149, %c0_150, %c0_151] : memref<9x128x32xbf16, #tpu.memory_space<vmem>>, vector<1x128x32xbf16>
    %226 = vector.shape_cast %225 : vector<1x128x32xbf16> to vector<128x32xbf16>
    %cst_152 = arith.constant dense<0.000000e+00> : vector<256x32xf32>
    %227 = tpu.matmul %224, %226, %cst_152 {dimension_numbers = #tpu.dot_dimension_numbers<[1], [0], [0], [1], [0, 0, 1, 1], [], []>} : vector<256x128xbf16>, vector<128x32xbf16>, vector<256x32xf32> -> vector<256x32xf32>
    %228 = arith.addf %220, %227 : vector<256x32xf32>
    %c23_153 = arith.constant 23 : index
    %c0_154 = arith.constant 0 : index
    %229 = vector.load %arg12[%c23_153, %c0_154] : memref<304x128xf32, #tpu.memory_space<vmem>>, vector<256x128xf32>
    %230 = arith.truncf %229 : vector<256x128xf32> to vector<256x128xbf16>
    %231 = vector.broadcast %8 : vector<256x1xbf16> to vector<256x128xbf16>
    %232 = arith.mulf %230, %231 : vector<256x128xbf16>
    %c3_155 = arith.constant 3 : index
    %c0_156 = arith.constant 0 : index
    %c0_157 = arith.constant 0 : index
    %233 = vector.load %arg7[%c3_155, %c0_156, %c0_157] : memref<9x128x32xbf16, #tpu.memory_space<vmem>>, vector<1x128x32xbf16>
    %234 = vector.shape_cast %233 : vector<1x128x32xbf16> to vector<128x32xbf16>
    %cst_158 = arith.constant dense<0.000000e+00> : vector<256x32xf32>
    %235 = tpu.matmul %232, %234, %cst_158 {dimension_numbers = #tpu.dot_dimension_numbers<[1], [0], [0], [1], [0, 0, 1, 1], [], []>} : vector<256x128xbf16>, vector<128x32xbf16>, vector<256x32xf32> -> vector<256x32xf32>
    %236 = arith.addf %228, %235 : vector<256x32xf32>
    %c24_159 = arith.constant 24 : index
    %c0_160 = arith.constant 0 : index
    %237 = vector.load %arg12[%c24_159, %c0_160] : memref<304x128xf32, #tpu.memory_space<vmem>>, vector<256x128xf32>
    %238 = arith.truncf %237 : vector<256x128xf32> to vector<256x128xbf16>
    %c4_161 = arith.constant 4 : index
    %c0_162 = arith.constant 0 : index
    %c0_163 = arith.constant 0 : index
    %239 = vector.load %arg7[%c4_161, %c0_162, %c0_163] : memref<9x128x32xbf16, #tpu.memory_space<vmem>>, vector<1x128x32xbf16>
    %240 = vector.shape_cast %239 : vector<1x128x32xbf16> to vector<128x32xbf16>
    %cst_164 = arith.constant dense<0.000000e+00> : vector<256x32xf32>
    %241 = tpu.matmul %238, %240, %cst_164 {dimension_numbers = #tpu.dot_dimension_numbers<[1], [0], [0], [1], [0, 0, 1, 1], [], []>} : vector<256x128xbf16>, vector<128x32xbf16>, vector<256x32xf32> -> vector<256x32xf32>
    %242 = arith.addf %236, %241 : vector<256x32xf32>
    %c25_165 = arith.constant 25 : index
    %c0_166 = arith.constant 0 : index
    %243 = vector.load %arg12[%c25_165, %c0_166] : memref<304x128xf32, #tpu.memory_space<vmem>>, vector<256x128xf32>
    %244 = arith.truncf %243 : vector<256x128xf32> to vector<256x128xbf16>
    %245 = vector.broadcast %9 : vector<256x1xbf16> to vector<256x128xbf16>
    %246 = arith.mulf %244, %245 : vector<256x128xbf16>
    %c5_167 = arith.constant 5 : index
    %c0_168 = arith.constant 0 : index
    %c0_169 = arith.constant 0 : index
    %247 = vector.load %arg7[%c5_167, %c0_168, %c0_169] : memref<9x128x32xbf16, #tpu.memory_space<vmem>>, vector<1x128x32xbf16>
    %248 = vector.shape_cast %247 : vector<1x128x32xbf16> to vector<128x32xbf16>
    %cst_170 = arith.constant dense<0.000000e+00> : vector<256x32xf32>
    %249 = tpu.matmul %246, %248, %cst_170 {dimension_numbers = #tpu.dot_dimension_numbers<[1], [0], [0], [1], [0, 0, 1, 1], [], []>} : vector<256x128xbf16>, vector<128x32xbf16>, vector<256x32xf32> -> vector<256x32xf32>
    %250 = arith.addf %242, %249 : vector<256x32xf32>
    %c39_171 = arith.constant 39 : index
    %c0_172 = arith.constant 0 : index
    %251 = vector.load %arg12[%c39_171, %c0_172] : memref<304x128xf32, #tpu.memory_space<vmem>>, vector<256x128xf32>
    %252 = arith.truncf %251 : vector<256x128xf32> to vector<256x128xbf16>
    %253 = vector.broadcast %8 : vector<256x1xbf16> to vector<256x128xbf16>
    %254 = arith.mulf %252, %253 : vector<256x128xbf16>
    %c6_173 = arith.constant 6 : index
    %c0_174 = arith.constant 0 : index
    %c0_175 = arith.constant 0 : index
    %255 = vector.load %arg7[%c6_173, %c0_174, %c0_175] : memref<9x128x32xbf16, #tpu.memory_space<vmem>>, vector<1x128x32xbf16>
    %256 = vector.shape_cast %255 : vector<1x128x32xbf16> to vector<128x32xbf16>
    %cst_176 = arith.constant dense<0.000000e+00> : vector<256x32xf32>
    %257 = tpu.matmul %254, %256, %cst_176 {dimension_numbers = #tpu.dot_dimension_numbers<[1], [0], [0], [1], [0, 0, 1, 1], [], []>} : vector<256x128xbf16>, vector<128x32xbf16>, vector<256x32xf32> -> vector<256x32xf32>
    %258 = arith.addf %250, %257 : vector<256x32xf32>
    %c40_177 = arith.constant 40 : index
    %c0_178 = arith.constant 0 : index
    %259 = vector.load %arg12[%c40_177, %c0_178] : memref<304x128xf32, #tpu.memory_space<vmem>>, vector<256x128xf32>
    %260 = arith.truncf %259 : vector<256x128xf32> to vector<256x128xbf16>
    %c7_179 = arith.constant 7 : index
    %c0_180 = arith.constant 0 : index
    %c0_181 = arith.constant 0 : index
    %261 = vector.load %arg7[%c7_179, %c0_180, %c0_181] : memref<9x128x32xbf16, #tpu.memory_space<vmem>>, vector<1x128x32xbf16>
    %262 = vector.shape_cast %261 : vector<1x128x32xbf16> to vector<128x32xbf16>
    %cst_182 = arith.constant dense<0.000000e+00> : vector<256x32xf32>
    %263 = tpu.matmul %260, %262, %cst_182 {dimension_numbers = #tpu.dot_dimension_numbers<[1], [0], [0], [1], [0, 0, 1, 1], [], []>} : vector<256x128xbf16>, vector<128x32xbf16>, vector<256x32xf32> -> vector<256x32xf32>
    %264 = arith.addf %258, %263 : vector<256x32xf32>
    %c41_183 = arith.constant 41 : index
    %c0_184 = arith.constant 0 : index
    %265 = vector.load %arg12[%c41_183, %c0_184] : memref<304x128xf32, #tpu.memory_space<vmem>>, vector<256x128xf32>
    %266 = arith.truncf %265 : vector<256x128xf32> to vector<256x128xbf16>
    %267 = vector.broadcast %9 : vector<256x1xbf16> to vector<256x128xbf16>
    %268 = arith.mulf %266, %267 : vector<256x128xbf16>
    %c8_185 = arith.constant 8 : index
    %c0_186 = arith.constant 0 : index
    %c0_187 = arith.constant 0 : index
    %269 = vector.load %arg7[%c8_185, %c0_186, %c0_187] : memref<9x128x32xbf16, #tpu.memory_space<vmem>>, vector<1x128x32xbf16>
    %270 = vector.shape_cast %269 : vector<1x128x32xbf16> to vector<128x32xbf16>
    %cst_188 = arith.constant dense<0.000000e+00> : vector<256x32xf32>
    %271 = tpu.matmul %268, %270, %cst_188 {dimension_numbers = #tpu.dot_dimension_numbers<[1], [0], [0], [1], [0, 0, 1, 1], [], []>} : vector<256x128xbf16>, vector<128x32xbf16>, vector<256x32xf32> -> vector<256x32xf32>
    %272 = arith.addf %264, %271 : vector<256x32xf32>
    %273 = vector.broadcast %12 : vector<1x32xf32> to vector<256x32xf32>
    %274 = arith.mulf %272, %273 : vector<256x32xf32>
    %275 = vector.broadcast %13 : vector<1x32xf32> to vector<256x32xf32>
    %276 = arith.addf %274, %275 : vector<256x32xf32>
    %277 = tpu.transpose %276, [1, 0] : vector<256x32xf32> -> vector<32x256xf32>
    %278 = arith.addf %277, %149 : vector<32x256xf32>
    %c1_189 = arith.constant 1 : index
    %c0_190 = arith.constant 0 : index
    %c0_191 = arith.constant 0 : index
    %279 = vector.load %arg10[%c1_189, %c0_190, %c0_191] : memref<2x32x256xf32, #tpu.memory_space<vmem>>, vector<1x32x256xf32>
    %280 = vector.shape_cast %279 : vector<1x32x256xf32> to vector<32x256xf32>
    %281 = vector.shape_cast %278 : vector<32x256xf32> to vector<1x32x256xf32>
    tpu.vector_store %arg10[%c1_189, %c0_190, %c0_191], %281 {strides = array<i32>} : memref<2x32x256xf32, #tpu.memory_space<vmem>>, vector<1x32x256xf32>,
    return
  }
  func.func @transform_0(%arg0: i32) -> (i32, i32, i32) {
    %c0_i32 = arith.constant 0 : i32
    %c0_i32_0 = arith.constant 0 : i32
    %c0_i32_1 = arith.constant 0 : i32
    return %arg0, %c0_i32, %c0_i32_0 : i32, i32, i32
  }
  func.func @transform_1(%arg0: i32) -> (i32, i32) {
    %c0_i32 = arith.constant 0 : i32
    %c0_i32_0 = arith.constant 0 : i32
    %c0_i32_1 = arith.constant 0 : i32
    return %c0_i32, %c0_i32_0 : i32, i32
  }
  func.func @transform_2(%arg0: i32) -> (i32, i32) {
    %c0_i32 = arith.constant 0 : i32
    %c0_i32_0 = arith.constant 0 : i32
    %c0_i32_1 = arith.constant 0 : i32
    return %c0_i32, %c0_i32_0 : i32, i32
  }
  func.func @transform_3(%arg0: i32) -> (i32, i32) {
    %c0_i32 = arith.constant 0 : i32
    %c0_i32_0 = arith.constant 0 : i32
    %c0_i32_1 = arith.constant 0 : i32
    return %c0_i32, %c0_i32_0 : i32, i32
  }
  func.func @transform_4(%arg0: i32) -> (i32, i32) {
    %c0_i32 = arith.constant 0 : i32
    %c0_i32_0 = arith.constant 0 : i32
    %c0_i32_1 = arith.constant 0 : i32
    return %c0_i32, %c0_i32_0 : i32, i32
  }
  func.func @transform_5(%arg0: i32) -> (i32, i32) {
    %c0_i32 = arith.constant 0 : i32
    %c0_i32_0 = arith.constant 0 : i32
    %c0_i32_1 = arith.constant 0 : i32
    return %c0_i32, %c0_i32_0 : i32, i32
  }
  func.func @transform_6(%arg0: i32) -> (i32, i32, i32) {
    %c0_i32 = arith.constant 0 : i32
    %c0_i32_0 = arith.constant 0 : i32
    %c0_i32_1 = arith.constant 0 : i32
    %c0_i32_2 = arith.constant 0 : i32
    return %c0_i32, %c0_i32_0, %c0_i32_1 : i32, i32, i32
  }
  func.func @transform_7(%arg0: i32) -> (i32, i32) {
    %c0_i32 = arith.constant 0 : i32
    %c0_i32_0 = arith.constant 0 : i32
    %c0_i32_1 = arith.constant 0 : i32
    return %c0_i32, %c0_i32_0 : i32, i32
  }
  func.func @transform_8(%arg0: i32) -> (i32, i32) {
    %c0_i32 = arith.constant 0 : i32
    %c0_i32_0 = arith.constant 0 : i32
    %c0_i32_1 = arith.constant 0 : i32
    return %c0_i32, %c0_i32_0 : i32, i32
  }
  func.func @transform_9(%arg0: i32) -> (i32, i32, i32) {
    %c0_i32 = arith.constant 0 : i32
    %c0_i32_0 = arith.constant 0 : i32
    %c0_i32_1 = arith.constant 0 : i32
    return %arg0, %c0_i32, %c0_i32_0 : i32, i32, i32
  }
}

</mosaic_0001>

<llo_original>
// kernel: ms_conv_block.1
$region0: #{ms_conv_block.1}
  #allocation0 [shape = 'u32[]', space=smem, size = 0x4, offset = 0x4, fixed_abs, tag = 'smem constant byte address 0x4 - core index']
  #allocation1 [shape = 'u32[144,128]{1,0:T(1,128)}', space=vmem, size = 0x12000, scoped, tag = 'internal scratch']
  #allocation2 [shape = 'f32[304,32]{1,0:T(8,128)}', space=vmem, size = 0x26000, scoped, tag = 'scratch operand']
  #allocation3 [shape = 'f32[304,128]{1,0:T(8,128)}', space=vmem, size = 0x26000, scoped, tag = 'scratch operand']
  %s0 = inlined_call_operand.vmem [shape: f32[4,32,256], index: 0, kind: input, shape index: {}]
  %s1 = inlined_call_operand.vmem [shape: bf16[256,1], index: 1, kind: input, shape index: {}]
  %s2 = inlined_call_operand.vmem [shape: bf16[256,1], index: 2, kind: input, shape index: {}]
  %s3 = inlined_call_operand.vmem [shape: bf16[288,128], index: 3, kind: input, shape index: {}]
  %s4 = inlined_call_operand.vmem [shape: f32[1,128], index: 4, kind: input, shape index: {}]
  %s5 = inlined_call_operand.vmem [shape: f32[1,128], index: 5, kind: input, shape index: {}]
  %s6 = inlined_call_operand.vmem [shape: bf16[9,128,32], index: 6, kind: input, shape index: {}]
  %s7 = inlined_call_operand.vmem [shape: f32[1,32], index: 7, kind: input, shape index: {}]
  %s8 = inlined_call_operand.vmem [shape: f32[1,32], index: 8, kind: input, shape index: {}]
  %s9 = inlined_call_operand.vmem [shape: f32[4,32,256], index: 9, kind: output, shape index: {}]
  %s10 = sld [smem:[#allocation0]]
  $region69: #{ms_conv_block.1} parent=0
    _
  %s12 = ssub.s32 1, %s10
  %s13 = scalar_select 0, %s12, %s10
  loop: start=0, step=1, limit=4
  $region2: #{ms_conv_block.1} parent=0 // loop_pre_header
    _
  $region3: #{ms_conv_block.1} parent=0 // loop_header
    %s15 = sphi 0, %s19
    %p16 = scmp.ge.s32.totalorder %s15, 4
    %s25 = sphi 0, %s27
    %s28 = sphi 0, %s25
    %s29 = sphi 0, %s28
    %s45 = sphi 0, %s29
    %s49 = sphi 0, %s49
    %s51 = sphi 0, %s49
    %s52 = sphi 0, %s51
    %s66 = sphi 0, %s52
    %s70 = sphi 0, %s70
    %s72 = sphi 0, %s70
    %s73 = sphi 0, %s72
    %s87 = sphi 0, %s73
    %s91 = sphi 0, %s91
    %s93 = sphi 0, %s91
    %s94 = sphi 0, %s93
    %s108 = sphi 0, %s94
    %s112 = sphi 0, %s112
    %s114 = sphi 0, %s112
    %s115 = sphi 0, %s114
    %s129 = sphi 0, %s115
    %s133 = sphi 0, %s133
    %s135 = sphi 0, %s133
    %s136 = sphi 0, %s135
    %s150 = sphi 0, %s136
    %s154 = sphi 0, %s154
    %s156 = sphi 0, %s154
    %s157 = sphi 0, %s156
    %s171 = sphi 0, %s157
    %s175 = sphi 0, %s175
    %s177 = sphi 0, %s175
    %s178 = sphi 0, %s177
    %s192 = sphi 0, %s178
    %s196 = sphi 0, %s196
    %s198 = sphi 0, %s196
    %s199 = sphi 0, %s198
    %s213 = sphi 0, %s199
    %s219 = sphi 0, %s221
    %s222 = sphi 0, %s219
    %s223 = sphi 0, %s222
    %s239 = sphi 0, %s223
  $region4: #{ms_conv_block.1} parent=0 // loop_header_branch
    %18 = sbr.rel (%p16) target = $region8
  $region5: #{ms_conv_block.1} parent=0 // loop_body
    %s20 = ssub.s32 %s15, 1
    %s21 = ssub.s32 %s15, 2
    %s22 = sadd.s32 %s15, 1
    %s23 = ssub.s32 %s15, %s22
    %p24 = scmp.eq.s32.totalorder %s23, 0
    %s26 = sadd.s32 %s25, 1
    %s27 = scalar_select %p24, %s25, %s26
    %p30 = pneg %p24
    %p31 = scmp.eq.s32.totalorder %s15, 1
    %p32 = por %p30, %p31
    %p33 = scmp.ne.s32.totalorder %s25, %s28
    %p34 = scmp.eq.s32.totalorder %s15, 0
    %p35 = por %p33, %p34
    %p36 = scmp.ne.s32.totalorder %s25, %s28
    %p37 = scmp.eq.s32.totalorder %s20, 1
    %p38 = por %p36, %p37
    %p39 = scmp.ne.s32.totalorder %s28, %s29
    %p40 = scmp.eq.s32.totalorder %s20, 0
    %p41 = por %p39, %p40
    %p42 = scmp.ne.s32.totalorder %s28, %s29
    %p43 = scmp.eq.s32.totalorder %s21, 1
    %p44 = por %p42, %p43
    %p46 = scmp.ne.s32.totalorder %s29, %s45
    %p47 = scmp.eq.s32.totalorder %s21, 0
    %p48 = por %p46, %p47
    %s50 = sadd.s32 %s49, 1
    %p53 = scmp.eq.s32.totalorder %s15, 1
    %p54 = scmp.ne.s32.totalorder %s49, %s51
    %p55 = scmp.eq.s32.totalorder %s15, 0
    %p56 = por %p54, %p55
    %p57 = scmp.ne.s32.totalorder %s49, %s51
    %p58 = scmp.eq.s32.totalorder %s20, 1
    %p59 = por %p57, %p58
    %p60 = scmp.ne.s32.totalorder %s51, %s52
    %p61 = scmp.eq.s32.totalorder %s20, 0
    %p62 = por %p60, %p61
    %p63 = scmp.ne.s32.totalorder %s51, %s52
    %p64 = scmp.eq.s32.totalorder %s21, 1
    %p65 = por %p63, %p64
    %p67 = scmp.ne.s32.totalorder %s52, %s66
    %p68 = scmp.eq.s32.totalorder %s21, 0
    %p69 = por %p67, %p68
    %s71 = sadd.s32 %s70, 1
    %p74 = scmp.eq.s32.totalorder %s15, 1
    %p75 = scmp.ne.s32.totalorder %s70, %s72
    %p76 = scmp.eq.s32.totalorder %s15, 0
    %p77 = por %p75, %p76
    %p78 = scmp.ne.s32.totalorder %s70, %s72
    %p79 = scmp.eq.s32.totalorder %s20, 1
    %p80 = por %p78, %p79
    %p81 = scmp.ne.s32.totalorder %s72, %s73
    %p82 = scmp.eq.s32.totalorder %s20, 0
    %p83 = por %p81, %p82
    %p84 = scmp.ne.s32.totalorder %s72, %s73
    %p85 = scmp.eq.s32.totalorder %s21, 1
    %p86 = por %p84, %p85
    %p88 = scmp.ne.s32.totalorder %s73, %s87
    %p89 = scmp.eq.s32.totalorder %s21, 0
    %p90 = por %p88, %p89
    %s92 = sadd.s32 %s91, 1
    %p95 = scmp.eq.s32.totalorder %s15, 1
    %p96 = scmp.ne.s32.totalorder %s91, %s93
    %p97 = scmp.eq.s32.totalorder %s15, 0
    %p98 = por %p96, %p97
    %p99 = scmp.ne.s32.totalorder %s91, %s93
    %p100 = scmp.eq.s32.totalorder %s20, 1
    %p101 = por %p99, %p100
    %p102 = scmp.ne.s32.totalorder %s93, %s94
    %p103 = scmp.eq.s32.totalorder %s20, 0
    %p104 = por %p102, %p103
    %p105 = scmp.ne.s32.totalorder %s93, %s94
    %p106 = scmp.eq.s32.totalorder %s21, 1
    %p107 = por %p105, %p106
    %p109 = scmp.ne.s32.totalorder %s94, %s108
    %p110 = scmp.eq.s32.totalorder %s21, 0
    %p111 = por %p109, %p110
    %s113 = sadd.s32 %s112, 1
    %p116 = scmp.eq.s32.totalorder %s15, 1
    %p117 = scmp.ne.s32.totalorder %s112, %s114
    %p118 = scmp.eq.s32.totalorder %s15, 0
    %p119 = por %p117, %p118
    %p120 = scmp.ne.s32.totalorder %s112, %s114
    %p121 = scmp.eq.s32.totalorder %s20, 1
    %p122 = por %p120, %p121
    %p123 = scmp.ne.s32.totalorder %s114, %s115
    %p124 = scmp.eq.s32.totalorder %s20, 0
    %p125 = por %p123, %p124
    %p126 = scmp.ne.s32.totalorder %s114, %s115
    %p127 = scmp.eq.s32.totalorder %s21, 1
    %p128 = por %p126, %p127
    %p130 = scmp.ne.s32.totalorder %s115, %s129
    %p131 = scmp.eq.s32.totalorder %s21, 0
    %p132 = por %p130, %p131
    %s134 = sadd.s32 %s133, 1
    %p137 = scmp.eq.s32.totalorder %s15, 1
    %p138 = scmp.ne.s32.totalorder %s133, %s135
    %p139 = scmp.eq.s32.totalorder %s15, 0
    %p140 = por %p138, %p139
    %p141 = scmp.ne.s32.totalorder %s133, %s135
    %p142 = scmp.eq.s32.totalorder %s20, 1
    %p143 = por %p141, %p142
    %p144 = scmp.ne.s32.totalorder %s135, %s136
    %p145 = scmp.eq.s32.totalorder %s20, 0
    %p146 = por %p144, %p145
    %p147 = scmp.ne.s32.totalorder %s135, %s136
    %p148 = scmp.eq.s32.totalorder %s21, 1
    %p149 = por %p147, %p148
    %p151 = scmp.ne.s32.totalorder %s136, %s150
    %p152 = scmp.eq.s32.totalorder %s21, 0
    %p153 = por %p151, %p152
    %s155 = sadd.s32 %s154, 1
    %p158 = scmp.eq.s32.totalorder %s15, 1
    %p159 = scmp.ne.s32.totalorder %s154, %s156
    %p160 = scmp.eq.s32.totalorder %s15, 0
    %p161 = por %p159, %p160
    %p162 = scmp.ne.s32.totalorder %s154, %s156
    %p163 = scmp.eq.s32.totalorder %s20, 1
    %p164 = por %p162, %p163
    %p165 = scmp.ne.s32.totalorder %s156, %s157
    %p166 = scmp.eq.s32.totalorder %s20, 0
    %p167 = por %p165, %p166
    %p168 = scmp.ne.s32.totalorder %s156, %s157
    %p169 = scmp.eq.s32.totalorder %s21, 1
    %p170 = por %p168, %p169
    %p172 = scmp.ne.s32.totalorder %s157, %s171
    %p173 = scmp.eq.s32.totalorder %s21, 0
    %p174 = por %p172, %p173
    %s176 = sadd.s32 %s175, 1
    %p179 = scmp.eq.s32.totalorder %s15, 1
    %p180 = scmp.ne.s32.totalorder %s175, %s177
    %p181 = scmp.eq.s32.totalorder %s15, 0
    %p182 = por %p180, %p181
    %p183 = scmp.ne.s32.totalorder %s175, %s177
    %p184 = scmp.eq.s32.totalorder %s20, 1
    %p185 = por %p183, %p184
    %p186 = scmp.ne.s32.totalorder %s177, %s178
    %p187 = scmp.eq.s32.totalorder %s20, 0
    %p188 = por %p186, %p187
    %p189 = scmp.ne.s32.totalorder %s177, %s178
    %p190 = scmp.eq.s32.totalorder %s21, 1
    %p191 = por %p189, %p190
    %p193 = scmp.ne.s32.totalorder %s178, %s192
    %p194 = scmp.eq.s32.totalorder %s21, 0
    %p195 = por %p193, %p194
    %s197 = sadd.s32 %s196, 1
    %p200 = scmp.eq.s32.totalorder %s15, 1
    %p201 = scmp.ne.s32.totalorder %s196, %s198
    %p202 = scmp.eq.s32.totalorder %s15, 0
    %p203 = por %p201, %p202
    %p204 = scmp.ne.s32.totalorder %s196, %s198
    %p205 = scmp.eq.s32.totalorder %s20, 1
    %p206 = por %p204, %p205
    %p207 = scmp.ne.s32.totalorder %s198, %s199
    %p208 = scmp.eq.s32.totalorder %s20, 0
    %p209 = por %p207, %p208
    %p210 = scmp.ne.s32.totalorder %s198, %s199
    %p211 = scmp.eq.s32.totalorder %s21, 1
    %p212 = por %p210, %p211
    %p214 = scmp.ne.s32.totalorder %s199, %s213
    %p215 = scmp.eq.s32.totalorder %s21, 0
    %p216 = por %p214, %p215
    %s217 = ssub.s32 %s15, %s22
    %p218 = scmp.eq.s32.totalorder %s217, 0
    %s220 = sadd.s32 %s219, 1
    %s221 = scalar_select %p218, %s219, %s220
    %p224 = pneg %p218
    %p225 = scmp.eq.s32.totalorder %s15, 1
    %p226 = por %p224, %p225
    %p227 = scmp.ne.s32.totalorder %s219, %s222
    %p228 = scmp.eq.s32.totalorder %s15, 0
    %p229 = por %p227, %p228
    %p230 = scmp.ne.s32.totalorder %s219, %s222
    %p231 = scmp.eq.s32.totalorder %s20, 1
    %p232 = por %p230, %p231
    %p233 = scmp.ne.s32.totalorder %s222, %s223
    %p234 = scmp.eq.s32.totalorder %s20, 0
    %p235 = por %p233, %p234
    %p236 = scmp.ne.s32.totalorder %s222, %s223
    %p237 = scmp.eq.s32.totalorder %s21, 1
    %p238 = por %p236, %p237
    %p240 = scmp.ne.s32.totalorder %s223, %s239
    %p241 = scmp.eq.s32.totalorder %s21, 0
    %p242 = por %p240, %p241
    %p243 = scmp.le.s32.totalorder 1, %s15
    %p244 = scmp.lt.s32.totalorder %s15, 3
    %p245 = pnand %p243, %p244
    %p246 = pneg %p245
    // Predicated region
    $region9: #{ms_conv_block.1} parent=5 // pred_check
      _
    $region10: #{ms_conv_block.1} parent=5 // pred_check_branch
      %248 = sbr.rel (%p245) target = $region12
    $region11: #{ms_conv_block.1} parent=5 // pred_region
      %s249 = ssub.s32 %s15, 1
      // Predicated region
      $region13: #{ms_conv_block.1} parent=11 // pred_check
        %p250 = pneg %p62
      $region14: #{ms_conv_block.1} parent=11 // pred_check_branch
        %252 = sbr.rel (%p250) target = $region16
      $region15: #{ms_conv_block.1} parent=11 // pred_region
        _
      $region16: #{ms_conv_block.1} parent=11 // pred_fallthru
        _
      // Predicated region
      $region17: #{ms_conv_block.1} parent=11 // pred_check
        %p253 = pneg %p83
      $region18: #{ms_conv_block.1} parent=11 // pred_check_branch
        %255 = sbr.rel (%p253) target = $region20
      $region19: #{ms_conv_block.1} parent=11 // pred_region
        _
      $region20: #{ms_conv_block.1} parent=11 // pred_fallthru
        _
      // Predicated region
      $region21: #{ms_conv_block.1} parent=11 // pred_check
        %p256 = pneg %p104
      $region22: #{ms_conv_block.1} parent=11 // pred_check_branch
        %258 = sbr.rel (%p256) target = $region24
      $region23: #{ms_conv_block.1} parent=11 // pred_region
        _
      $region24: #{ms_conv_block.1} parent=11 // pred_fallthru
        _
      // Predicated region
      $region25: #{ms_conv_block.1} parent=11 // pred_check
        %p259 = pneg %p125
      $region26: #{ms_conv_block.1} parent=11 // pred_check_branch
        %261 = sbr.rel (%p259) target = $region28
      $region27: #{ms_conv_block.1} parent=11 // pred_region
        _
      $region28: #{ms_conv_block.1} parent=11 // pred_fallthru
        _
      // Predicated region
      $region29: #{ms_conv_block.1} parent=11 // pred_check
        %p262 = pneg %p146
      $region30: #{ms_conv_block.1} parent=11 // pred_check_branch
        %264 = sbr.rel (%p262) target = $region32
      $region31: #{ms_conv_block.1} parent=11 // pred_region
        _
      $region32: #{ms_conv_block.1} parent=11 // pred_fallthru
        _
      // Predicated region
      $region33: #{ms_conv_block.1} parent=11 // pred_check
        %p265 = pneg %p167
      $region34: #{ms_conv_block.1} parent=11 // pred_check_branch
        %267 = sbr.rel (%p265) target = $region36
      $region35: #{ms_conv_block.1} parent=11 // pred_region
        _
      $region36: #{ms_conv_block.1} parent=11 // pred_fallthru
        _
      // Predicated region
      $region37: #{ms_conv_block.1} parent=11 // pred_check
        %p268 = pneg %p188
      $region38: #{ms_conv_block.1} parent=11 // pred_check_branch
        %270 = sbr.rel (%p268) target = $region40
      $region39: #{ms_conv_block.1} parent=11 // pred_region
        _
      $region40: #{ms_conv_block.1} parent=11 // pred_fallthru
        _
      // Predicated region
      $region41: #{ms_conv_block.1} parent=11 // pred_check
        %p271 = pneg %p209
      $region42: #{ms_conv_block.1} parent=11 // pred_check_branch
        %273 = sbr.rel (%p271) target = $region44
      $region43: #{ms_conv_block.1} parent=11 // pred_region
        _
      $region44: #{ms_conv_block.1} parent=11 // pred_fallthru
        _
    $region12: #{ms_conv_block.1} parent=5 // pred_fallthru
      _
    %p274 = scmp.lt.s32.totalorder %s15, 2
    // Predicated region
    $region45: #{ms_conv_block.1} parent=5 // pred_check
      %p275 = pneg %p274
    $region46: #{ms_conv_block.1} parent=5 // pred_check_branch
      %277 = sbr.rel (%p275) target = $region48
    $region47: #{ms_conv_block.1} parent=5 // pred_region
      // Predicated region
      $region49: #{ms_conv_block.1} parent=47 // pred_check
        %p278 = pneg %p35
      $region50: #{ms_conv_block.1} parent=47 // pred_check_branch
        %280 = sbr.rel (%p278) target = $region52
      $region51: #{ms_conv_block.1} parent=47 // pred_region
        %s281 = smul.u32 2, %s15
        %p282 = scmp.lt.s32.totalorder %s281, 3
        %s283 = scalar_select %p282, %s281, 3
        %s284 = smul.addr %s283, 8
        %s285 = smul.addr %s284, 8
        %s286 = scalar_lea.vmem %s0, %s285
        %s287 = smul.u32 2, %s15
      $region52: #{ms_conv_block.1} parent=47 // pred_fallthru
        _
    $region48: #{ms_conv_block.1} parent=5 // pred_fallthru
      _
    %p288 = scmp.le.s32.totalorder 1, %s15
    %p289 = scmp.lt.s32.totalorder %s15, 3
    %p290 = pnand %p288, %p289
    %p291 = pneg %p290
    // Predicated region
    $region53: #{ms_conv_block.1} parent=5 // pred_check
      _
    $region54: #{ms_conv_block.1} parent=5 // pred_check_branch
      %293 = sbr.rel (%p290) target = $region56
    $region55: #{ms_conv_block.1} parent=5 // pred_region
      %s294 = ssub.s32 %s15, 1
      %s295 = smul.u32 2, %s20
      %p296 = scmp.lt.s32.totalorder %s295, 3
      %s297 = scalar_select %p296, %s295, 3
      %s298 = smul.addr %s297, 8
      %s299 = smul.addr %s298, 8
      %s300 = scalar_lea.vmem %s0, %s299
      %p301 = pneg %p41
      %p302 = pneg %p38
      %p303 = pneg %p62
      %p304 = pneg %p59
      %p305 = pneg %p83
      %p306 = pneg %p80
      %p307 = pneg %p104
      %p308 = pneg %p101
      %p309 = pneg %p125
      %p310 = pneg %p122
      %p311 = pneg %p146
      %p312 = pneg %p143
      %p313 = pneg %p167
      %p314 = pneg %p164
      %p315 = pneg %p188
      %p316 = pneg %p185
      %p317 = pneg %p209
      %p318 = pneg %p206
      %p319 = pneg %p235
      %p320 = pneg %p232
      %s321 = smul.u32 2, %s20
      %p322 = scmp.lt.s32.totalorder %s321, 3
      %s323 = scalar_select %p322, %s321, 3
      %s324 = smul.addr %s323, 8
      %s325 = smul.addr %s324, 8
      %s326 = scalar_lea.vmem %s9, %s325
      %s327 = smul.u32 2, %s20
      %p328 = scmp.lt.s32.totalorder %s327, 3
      %s329 = scalar_select %p328, %s327, 3
      %s330 = smul.addr %s329, 8
      %s331 = smul.addr %s330, 8
      %s332 = scalar_lea.vmem %s0, %s331
      %s333 = smul.u32 2, %s20
      %s334 = smul.u32 2, %s20
      %p335 = scmp.lt.s32.totalorder %s334, 3
      %s336 = scalar_select %p335, %s334, 3
      %s337 = smul.addr %s336, 8
      %s338 = smul.addr %s337, 8
      %s339 = scalar_lea.vmem %s9, %s338
      %s340 = smul.u32 2, %s20
      %vm342 = vcmask 261120
      %343 = vst.msk [vmem:[#allocation2] sm:$0xff] %vm342, 0.0
      %344 = vst.msk [vmem:[#allocation2 + $0x8] sm:$0xff] %vm342, 0.0
      %345 = vst.msk [vmem:[#allocation2 + $0x10] sm:$0xff] %vm342, 0.0
      %346 = vst.msk [vmem:[#allocation2 + $0x118] sm:$0xff] %vm342, 0.0
      %347 = vst.msk [vmem:[#allocation2 + $0x120] sm:$0xff] %vm342, 0.0
      %348 = vst.msk [vmem:[#allocation2 + $0x128] sm:$0xff] %vm342, 0.0
      %349 = vst [vmem:[#allocation3] sm:$0xff] 0.0
      %350 = vst [vmem:[#allocation3 + $0x8] sm:$0xff] 0.0
      %351 = vst [vmem:[#allocation3 + $0x10] sm:$0xff] 0.0
      %352 = vst [vmem:[#allocation3 + $0x118] sm:$0xff] 0.0
      %353 = vst [vmem:[#allocation3 + $0x120] sm:$0xff] 0.0
      %354 = vst [vmem:[#allocation3 + $0x128] sm:$0xff] 0.0
      %v355 = vld [vmem:[%s1] sm:$0xf]
      %v356 = vld [vmem:[%s1 + $0x4] sm:$0xf]
      %v357 = vld [vmem:[%s1 + $0x8] sm:$0xf]
      %v358 = vld [vmem:[%s1 + $0xc] sm:$0xf]
      %v359 = vld [vmem:[%s1 + $0x10] sm:$0xf]
      %v360 = vld [vmem:[%s1 + $0x14] sm:$0xf]
      %v361 = vld [vmem:[%s1 + $0x18] sm:$0xf]
      %v362 = vld [vmem:[%s1 + $0x1c] sm:$0xf]
      %v363 = vld [vmem:[%s1 + $0x20] sm:$0xf]
      %v364 = vld [vmem:[%s1 + $0x24] sm:$0xf]
      %v365 = vld [vmem:[%s1 + $0x28] sm:$0xf]
      %v366 = vld [vmem:[%s1 + $0x2c] sm:$0xf]
      %v367 = vld [vmem:[%s1 + $0x30] sm:$0xf]
      %v368 = vld [vmem:[%s1 + $0x34] sm:$0xf]
      %v369 = vld [vmem:[%s1 + $0x38] sm:$0xf]
      %v370 = vld [vmem:[%s1 + $0x3c] sm:$0xf]
      %v371 = vld [vmem:[%s1 + $0x40] sm:$0xf]
      %v372 = vld [vmem:[%s1 + $0x44] sm:$0xf]
      %v373 = vld [vmem:[%s1 + $0x48] sm:$0xf]
      %v374 = vld [vmem:[%s1 + $0x4c] sm:$0xf]
      %v375 = vld [vmem:[%s1 + $0x50] sm:$0xf]
      %v376 = vld [vmem:[%s1 + $0x54] sm:$0xf]
      %v377 = vld [vmem:[%s1 + $0x58] sm:$0xf]
      %v378 = vld [vmem:[%s1 + $0x5c] sm:$0xf]
      %v379 = vld [vmem:[%s1 + $0x60] sm:$0xf]
      %v380 = vld [vmem:[%s1 + $0x64] sm:$0xf]
      %v381 = vld [vmem:[%s1 + $0x68] sm:$0xf]
      %v382 = vld [vmem:[%s1 + $0x6c] sm:$0xf]
      %v383 = vld [vmem:[%s1 + $0x70] sm:$0xf]
      %v384 = vld [vmem:[%s1 + $0x74] sm:$0xf]
      %v385 = vld [vmem:[%s1 + $0x78] sm:$0xf]
      %v386 = vld [vmem:[%s1 + $0x7c] sm:$0xf]
      %v387 = vld [vmem:[%s2] sm:$0xf]
      %v388 = vld [vmem:[%s2 + $0x4] sm:$0xf]
      %v389 = vld [vmem:[%s2 + $0x8] sm:$0xf]
      %v390 = vld [vmem:[%s2 + $0xc] sm:$0xf]
      %v391 = vld [vmem:[%s2 + $0x10] sm:$0xf]
      %v392 = vld [vmem:[%s2 + $0x14] sm:$0xf]
      %v393 = vld [vmem:[%s2 + $0x18] sm:$0xf]
      %v394 = vld [vmem:[%s2 + $0x1c] sm:$0xf]
      %v395 = vld [vmem:[%s2 + $0x20] sm:$0xf]
      %v396 = vld [vmem:[%s2 + $0x24] sm:$0xf]
      %v397 = vld [vmem:[%s2 + $0x28] sm:$0xf]
      %v398 = vld [vmem:[%s2 + $0x2c] sm:$0xf]
      %v399 = vld [vmem:[%s2 + $0x30] sm:$0xf]
      %v400 = vld [vmem:[%s2 + $0x34] sm:$0xf]
      %v401 = vld [vmem:[%s2 + $0x38] sm:$0xf]
      %v402 = vld [vmem:[%s2 + $0x3c] sm:$0xf]
      %v403 = vld [vmem:[%s2 + $0x40] sm:$0xf]
      %v404 = vld [vmem:[%s2 + $0x44] sm:$0xf]
      %v405 = vld [vmem:[%s2 + $0x48] sm:$0xf]
      %v406 = vld [vmem:[%s2 + $0x4c] sm:$0xf]
      %v407 = vld [vmem:[%s2 + $0x50] sm:$0xf]
      %v408 = vld [vmem:[%s2 + $0x54] sm:$0xf]
      %v409 = vld [vmem:[%s2 + $0x58] sm:$0xf]
      %v410 = vld [vmem:[%s2 + $0x5c] sm:$0xf]
      %v411 = vld [vmem:[%s2 + $0x60] sm:$0xf]
      %v412 = vld [vmem:[%s2 + $0x64] sm:$0xf]
      %v413 = vld [vmem:[%s2 + $0x68] sm:$0xf]
      %v414 = vld [vmem:[%s2 + $0x6c] sm:$0xf]
      %v415 = vld [vmem:[%s2 + $0x70] sm:$0xf]
      %v416 = vld [vmem:[%s2 + $0x74] sm:$0xf]
      %v417 = vld [vmem:[%s2 + $0x78] sm:$0xf]
      %v418 = vld [vmem:[%s2 + $0x7c] sm:$0xf]
      %v419 = vld [vmem:[%s4] sm:$0x1]
      %v420 = vld [vmem:[%s5] sm:$0x1]
      %v421 = vld [vmem:[%s7] sm:$0x1]
      %v422 = vld [vmem:[%s8] sm:$0x1]
      %v423 = vld [vmem:[%s332] sm:$0xff]
      %v424 = vld [vmem:[%s332 + $0x8] sm:$0xff]
      %v425 = vld [vmem:[%s332 + $0x10] sm:$0xff]
      %v426 = vld [vmem:[%s332 + $0x18] sm:$0xff]
      %v427 = vld [vmem:[%s332 + $0x20] sm:$0xff]
      %v428 = vld [vmem:[%s332 + $0x28] sm:$0xff]
      %v429 = vld [vmem:[%s332 + $0x30] sm:$0xff]
      %v430 = vld [vmem:[%s332 + $0x38] sm:$0xff]
      %v431 = vmax.f32 %v423, 0.0
      %v432 = vmax.f32 %v424, 0.0
      %v433 = vmax.f32 %v425, 0.0
      %v434 = vmax.f32 %v426, 0.0
      %v435 = vmax.f32 %v427, 0.0
      %v436 = vmax.f32 %v428, 0.0
      %v437 = vmax.f32 %v429, 0.0
      %v438 = vmax.f32 %v430, 0.0
      %v439 = vmin.f32 %v431, 4.0
      %v440 = vmin.f32 %v432, 4.0
      %v441 = vmin.f32 %v433, 4.0
      %v442 = vmin.f32 %v434, 4.0
      %v443 = vmin.f32 %v435, 4.0
      %v444 = vmin.f32 %v436, 4.0
      %v445 = vmin.f32 %v437, 4.0
      %v446 = vmin.f32 %v438, 4.0
      %v447 = vadd.f32 %v439, 0.5
      %v448 = vadd.f32 %v440, 0.5
      %v449 = vadd.f32 %v441, 0.5
      %v450 = vadd.f32 %v442, 0.5
      %v451 = vadd.f32 %v443, 0.5
      %v452 = vadd.f32 %v444, 0.5
      %v453 = vadd.f32 %v445, 0.5
      %v454 = vadd.f32 %v446, 0.5
      %v455 = vfloor.f32 %v447
      %v456 = vfloor.f32 %v448
      %v457 = vfloor.f32 %v449
      %v458 = vfloor.f32 %v450
      %v459 = vfloor.f32 %v451
      %v460 = vfloor.f32 %v452
      %v461 = vfloor.f32 %v453
      %v462 = vfloor.f32 %v454
      %v463 = vmul.f32 %v455, 0.25
      %v464 = vmul.f32 %v456, 0.25
      %v465 = vmul.f32 %v457, 0.25
      %v466 = vmul.f32 %v458, 0.25
      %v467 = vmul.f32 %v459, 0.25
      %v468 = vmul.f32 %v460, 0.25
      %v469 = vmul.f32 %v461, 0.25
      %v470 = vmul.f32 %v462, 0.25
      %471 = vxpose.xlu0.b32.start [1/16] %v463, 128
      %472 = vxpose.xlu0.b32.cont [2/16] %v465, 128
      %473 = vxpose.xlu0.b32.cont [3/16] %v467, 128
      %474 = vxpose.xlu0.b32.cont [4/16] %v469, 128
      %475 = vxpose.xlu0.b32.cont [5/16] 0.0, 128
      %476 = vxpose.xlu0.b32.cont [6/16] 0.0, 128
      %477 = vxpose.xlu0.b32.cont [7/16] 0.0, 128
      %478 = vxpose.xlu0.b32.cont [8/16] 0.0, 128
      %479 = vxpose.xlu0.b32.cont [9/16] 0.0, 128
      %480 = vxpose.xlu0.b32.cont [10/16] 0.0, 128
      %481 = vxpose.xlu0.b32.cont [11/16] 0.0, 128
      %482 = vxpose.xlu0.b32.cont [12/16] 0.0, 128
      %483 = vxpose.xlu0.b32.cont [13/16] 0.0, 128
      %484 = vxpose.xlu0.b32.cont [14/16] 0.0, 128
      %485 = vxpose.xlu0.b32.cont [15/16] 0.0, 128
      %486 = vxpose.xlu0.b32.end [16/16] 0.0, 128
      %v487 = vpop.trf.xlu0
      %v488 = vpop.trf.xlu0
      %v489 = vpop.trf.xlu0
      %v490 = vpop.trf.xlu0
      %v491 = vpop.trf.xlu0
      %v492 = vpop.trf.xlu0
      %v493 = vpop.trf.xlu0
      %v494 = vpop.trf.xlu0
      %v495 = vpop.trf.xlu0
      %v496 = vpop.trf.xlu0
      %v497 = vpop.trf.xlu0
      %v498 = vpop.trf.xlu0
      %v499 = vpop.trf.xlu0
      %v500 = vpop.trf.xlu0
      %v501 = vpop.trf.xlu0
      %v502 = vpop.trf.xlu0
      %503 = vxpose.xlu0.b32.start [1/16] %v464, 128
      %504 = vxpose.xlu0.b32.cont [2/16] %v466, 128
      %505 = vxpose.xlu0.b32.cont [3/16] %v468, 128
      %506 = vxpose.xlu0.b32.cont [4/16] %v470, 128
      %507 = vxpose.xlu0.b32.cont [5/16] 0.0, 128
      %508 = vxpose.xlu0.b32.cont [6/16] 0.0, 128
      %509 = vxpose.xlu0.b32.cont [7/16] 0.0, 128
      %510 = vxpose.xlu0.b32.cont [8/16] 0.0, 128
      %511 = vxpose.xlu0.b32.cont [9/16] 0.0, 128
      %512 = vxpose.xlu0.b32.cont [10/16] 0.0, 128
      %513 = vxpose.xlu0.b32.cont [11/16] 0.0, 128
      %514 = vxpose.xlu0.b32.cont [12/16] 0.0, 128
      %515 = vxpose.xlu0.b32.cont [13/16] 0.0, 128
      %516 = vxpose.xlu0.b32.cont [14/16] 0.0, 128
      %517 = vxpose.xlu0.b32.cont [15/16] 0.0, 128
      %518 = vxpose.xlu0.b32.end [16/16] 0.0, 128
      %v519 = vpop.trf.xlu0
      %v520 = vpop.trf.xlu0
      %v521 = vpop.trf.xlu0
      %v522 = vpop.trf.xlu0
      %v523 = vpop.trf.xlu0
      %v524 = vpop.trf.xlu0
      %v525 = vpop.trf.xlu0
      %v526 = vpop.trf.xlu0
      %v527 = vpop.trf.xlu0
      %v528 = vpop.trf.xlu0
      %v529 = vpop.trf.xlu0
      %v530 = vpop.trf.xlu0
      %v531 = vpop.trf.xlu0
      %v532 = vpop.trf.xlu0
      %v533 = vpop.trf.xlu0
      %v534 = vpop.trf.xlu0
      %535 = vst.msk [vmem:[#allocation2 + $0x18] sm:$0xff] %vm342, %v487
      %536 = vst.msk [vmem:[#allocation2 + $0x20] sm:$0xff] %vm342, %v488
      %537 = vst.msk [vmem:[#allocation2 + $0x28] sm:$0xff] %vm342, %v489
      %538 = vst.msk [vmem:[#allocation2 + $0x30] sm:$0xff] %vm342, %v490
      %539 = vst.msk [vmem:[#allocation2 + $0x38] sm:$0xff] %vm342, %v491
      %540 = vst.msk [vmem:[#allocation2 + $0x40] sm:$0xff] %vm342, %v492
      %541 = vst.msk [vmem:[#allocation2 + $0x48] sm:$0xff] %vm342, %v493
      %542 = vst.msk [vmem:[#allocation2 + $0x50] sm:$0xff] %vm342, %v494
      %543 = vst.msk [vmem:[#allocation2 + $0x58] sm:$0xff] %vm342, %v495
      %544 = vst.msk [vmem:[#allocation2 + $0x60] sm:$0xff] %vm342, %v496
      %545 = vst.msk [vmem:[#allocation2 + $0x68] sm:$0xff] %vm342, %v497
      %546 = vst.msk [vmem:[#allocation2 + $0x70] sm:$0xff] %vm342, %v498
      %547 = vst.msk [vmem:[#allocation2 + $0x78] sm:$0xff] %vm342, %v499
      %548 = vst.msk [vmem:[#allocation2 + $0x80] sm:$0xff] %vm342, %v500
      %549 = vst.msk [vmem:[#allocation2 + $0x88] sm:$0xff] %vm342, %v501
      %550 = vst.msk [vmem:[#allocation2 + $0x90] sm:$0xff] %vm342, %v502
      %551 = vst.msk [vmem:[#allocation2 + $0x98] sm:$0xff] %vm342, %v519
      %552 = vst.msk [vmem:[#allocation2 + $0xa0] sm:$0xff] %vm342, %v520
      %553 = vst.msk [vmem:[#allocation2 + $0xa8] sm:$0xff] %vm342, %v521
      %554 = vst.msk [vmem:[#allocation2 + $0xb0] sm:$0xff] %vm342, %v522
      %555 = vst.msk [vmem:[#allocation2 + $0xb8] sm:$0xff] %vm342, %v523
      %556 = vst.msk [vmem:[#allocation2 + $0xc0] sm:$0xff] %vm342, %v524
      %557 = vst.msk [vmem:[#allocation2 + $0xc8] sm:$0xff] %vm342, %v525
      %558 = vst.msk [vmem:[#allocation2 + $0xd0] sm:$0xff] %vm342, %v526
      %559 = vst.msk [vmem:[#allocation2 + $0xd8] sm:$0xff] %vm342, %v527
      %560 = vst.msk [vmem:[#allocation2 + $0xe0] sm:$0xff] %vm342, %v528
      %561 = vst.msk [vmem:[#allocation2 + $0xe8] sm:$0xff] %vm342, %v529
      %562 = vst.msk [vmem:[#allocation2 + $0xf0] sm:$0xff] %vm342, %v530
      %563 = vst.msk [vmem:[#allocation2 + $0xf8] sm:$0xff] %vm342, %v531
      %564 = vst.msk [vmem:[#allocation2 + $0x100] sm:$0xff] %vm342, %v532
      %565 = vst.msk [vmem:[#allocation2 + $0x108] sm:$0xff] %vm342, %v533
      %566 = vst.msk [vmem:[#allocation2 + $0x110] sm:$0xff] %vm342, %v534
      %v567 = vld [vmem:[#allocation2 + $0x7] sm:$0xff]
      %v568 = vld [vmem:[#allocation2 + $0xf] sm:$0xff]
      %v569 = vld [vmem:[#allocation2 + $0x17] sm:$0xff]
      %v570 = vld [vmem:[#allocation2 + $0x1f] sm:$0xff]
      %v571 = vld [vmem:[#allocation2 + $0x27] sm:$0xff]
      %v572 = vld [vmem:[#allocation2 + $0x2f] sm:$0xff]
      %v573 = vld [vmem:[#allocation2 + $0x37] sm:$0xff]
      %v574 = vld [vmem:[#allocation2 + $0x3f] sm:$0xff]
      %v575 = vld [vmem:[#allocation2 + $0x47] sm:$0xff]
      %v576 = vld [vmem:[#allocation2 + $0x4f] sm:$0xff]
      %v577 = vld [vmem:[#allocation2 + $0x57] sm:$0xff]
      %v578 = vld [vmem:[#allocation2 + $0x5f] sm:$0xff]
      %v579 = vld [vmem:[#allocation2 + $0x67] sm:$0xff]
      %v580 = vld [vmem:[#allocation2 + $0x6f] sm:$0xff]
      %v581 = vld [vmem:[#allocation2 + $0x77] sm:$0xff]
      %v582 = vld [vmem:[#allocation2 + $0x7f] sm:$0xff]
      %v583 = vld [vmem:[#allocation2 + $0x87] sm:$0xff]
      %v584 = vld [vmem:[#allocation2 + $0x8f] sm:$0xff]
      %v585 = vld [vmem:[#allocation2 + $0x97] sm:$0xff]
      %v586 = vld [vmem:[#allocation2 + $0x9f] sm:$0xff]
      %v587 = vld [vmem:[#allocation2 + $0xa7] sm:$0xff]
      %v588 = vld [vmem:[#allocation2 + $0xaf] sm:$0xff]
      %v589 = vld [vmem:[#allocation2 + $0xb7] sm:$0xff]
      %v590 = vld [vmem:[#allocation2 + $0xbf] sm:$0xff]
      %v591 = vld [vmem:[#allocation2 + $0xc7] sm:$0xff]
      %v592 = vld [vmem:[#allocation2 + $0xcf] sm:$0xff]
      %v593 = vld [vmem:[#allocation2 + $0xd7] sm:$0xff]
      %v594 = vld [vmem:[#allocation2 + $0xdf] sm:$0xff]
      %v595 = vld [vmem:[#allocation2 + $0xe7] sm:$0xff]
      %v596 = vld [vmem:[#allocation2 + $0xef] sm:$0xff]
      %v597 = vld [vmem:[#allocation2 + $0xf7] sm:$0xff]
      %v598 = vld [vmem:[#allocation2 + $0xff] sm:$0xff]
      %v599 = vpack.c.bf16 %v568, %v567
      %v600 = vpack.c.bf16 %v570, %v569
      %v601 = vpack.c.bf16 %v572, %v571
      %v602 = vpack.c.bf16 %v574, %v573
      %v603 = vpack.c.bf16 %v576, %v575
      %v604 = vpack.c.bf16 %v578, %v577
      %v605 = vpack.c.bf16 %v580, %v579
      %v606 = vpack.c.bf16 %v582, %v581
      %v607 = vpack.c.bf16 %v584, %v583
      %v608 = vpack.c.bf16 %v586, %v585
      %v609 = vpack.c.bf16 %v588, %v587
      %v610 = vpack.c.bf16 %v590, %v589
      %v611 = vpack.c.bf16 %v592, %v591
      %v612 = vpack.c.bf16 %v594, %v593
      %v613 = vpack.c.bf16 %v596, %v595
      %v614 = vpack.c.bf16 %v598, %v597
      %616 = vset.pattern.permute.xlu0 0
      %617 = vperm.xlu0 %616, %v355
      %v618 = vpop.permute.xlu0 %617
      %v621 = vunpack.c.l.s4 839922192
      %v622 = vunpack.c.0.s8 %v621
      %v623 = vlaneseq
      %v624 = vshrl.u32 %v623, 7
      %v625 = vsub.s32 %v622, %v624
      %v626 = vrot.slane %v618, %v625
      %628 = vset.pattern.permute.xlu0 0
      %629 = vperm.xlu0 %628, %v356
      %v630 = vpop.permute.xlu0 %629
      %v633 = vunpack.c.l.s4 839922192
      %v634 = vunpack.c.0.s8 %v633
      %v635 = vlaneseq
      %v636 = vshrl.u32 %v635, 7
      %v637 = vsub.s32 %v634, %v636
      %v638 = vrot.slane %v630, %v637
      %640 = vset.pattern.permute.xlu0 0
      %641 = vperm.xlu0 %640, %v357
      %v642 = vpop.permute.xlu0 %641
      %v645 = vunpack.c.l.s4 839922192
      %v646 = vunpack.c.0.s8 %v645
      %v647 = vlaneseq
      %v648 = vshrl.u32 %v647, 7
      %v649 = vsub.s32 %v646, %v648
      %v650 = vrot.slane %v642, %v649
      %652 = vset.pattern.permute.xlu0 0
      %653 = vperm.xlu0 %652, %v358
      %v654 = vpop.permute.xlu0 %653
      %v657 = vunpack.c.l.s4 839922192
      %v658 = vunpack.c.0.s8 %v657
      %v659 = vlaneseq
      %v660 = vshrl.u32 %v659, 7
      %v661 = vsub.s32 %v658, %v660
      %v662 = vrot.slane %v654, %v661
      %664 = vset.pattern.permute.xlu0 0
      %665 = vperm.xlu0 %664, %v359
      %v666 = vpop.permute.xlu0 %665
      %v669 = vunpack.c.l.s4 839922192
      %v670 = vunpack.c.0.s8 %v669
      %v671 = vlaneseq
      %v672 = vshrl.u32 %v671, 7
      %v673 = vsub.s32 %v670, %v672
      %v674 = vrot.slane %v666, %v673
      %676 = vset.pattern.permute.xlu0 0
      %677 = vperm.xlu0 %676, %v360
      %v678 = vpop.permute.xlu0 %677
      %v681 = vunpack.c.l.s4 839922192
      %v682 = vunpack.c.0.s8 %v681
      %v683 = vlaneseq
      %v684 = vshrl.u32 %v683, 7
      %v685 = vsub.s32 %v682, %v684
      %v686 = vrot.slane %v678, %v685
      %688 = vset.pattern.permute.xlu0 0
      %689 = vperm.xlu0 %688, %v361
      %v690 = vpop.permute.xlu0 %689
      %v693 = vunpack.c.l.s4 839922192
      %v694 = vunpack.c.0.s8 %v693
      %v695 = vlaneseq
      %v696 = vshrl.u32 %v695, 7
      %v697 = vsub.s32 %v694, %v696
      %v698 = vrot.slane %v690, %v697
      %700 = vset.pattern.permute.xlu0 0
      %701 = vperm.xlu0 %700, %v362
      %v702 = vpop.permute.xlu0 %701
      %v705 = vunpack.c.l.s4 839922192
      %v706 = vunpack.c.0.s8 %v705
      %v707 = vlaneseq
      %v708 = vshrl.u32 %v707, 7
      %v709 = vsub.s32 %v706, %v708
      %v710 = vrot.slane %v702, %v709
      %712 = vset.pattern.permute.xlu0 0
      %713 = vperm.xlu0 %712, %v363
      %v714 = vpop.permute.xlu0 %713
      %v717 = vunpack.c.l.s4 839922192
      %v718 = vunpack.c.0.s8 %v717
      %v719 = vlaneseq
      %v720 = vshrl.u32 %v719, 7
      %v721 = vsub.s32 %v718, %v720
      %v722 = vrot.slane %v714, %v721
      %724 = vset.pattern.permute.xlu0 0
      %725 = vperm.xlu0 %724, %v364
      %v726 = vpop.permute.xlu0 %725
      %v729 = vunpack.c.l.s4 839922192
      %v730 = vunpack.c.0.s8 %v729
      %v731 = vlaneseq
      %v732 = vshrl.u32 %v731, 7
      %v733 = vsub.s32 %v730, %v732
      %v734 = vrot.slane %v726, %v733
      %736 = vset.pattern.permute.xlu0 0
      %737 = vperm.xlu0 %736, %v365
      %v738 = vpop.permute.xlu0 %737
      %v741 = vunpack.c.l.s4 839922192
      %v742 = vunpack.c.0.s8 %v741
      %v743 = vlaneseq
      %v744 = vshrl.u32 %v743, 7
      %v745 = vsub.s32 %v742, %v744
      %v746 = vrot.slane %v738, %v745
      %748 = vset.pattern.permute.xlu0 0
      %749 = vperm.xlu0 %748, %v366
      %v750 = vpop.permute.xlu0 %749
      %v753 = vunpack.c.l.s4 839922192
      %v754 = vunpack.c.0.s8 %v753
      %v755 = vlaneseq
      %v756 = vshrl.u32 %v755, 7
      %v757 = vsub.s32 %v754, %v756
      %v758 = vrot.slane %v750, %v757
      %760 = vset.pattern.permute.xlu0 0
      %761 = vperm.xlu0 %760, %v367
      %v762 = vpop.permute.xlu0 %761
      %v765 = vunpack.c.l.s4 839922192
      %v766 = vunpack.c.0.s8 %v765
      %v767 = vlaneseq
      %v768 = vshrl.u32 %v767, 7
      %v769 = vsub.s32 %v766, %v768
      %v770 = vrot.slane %v762, %v769
      %772 = vset.pattern.permute.xlu0 0
      %773 = vperm.xlu0 %772, %v368
      %v774 = vpop.permute.xlu0 %773
      %v777 = vunpack.c.l.s4 839922192
      %v778 = vunpack.c.0.s8 %v777
      %v779 = vlaneseq
      %v780 = vshrl.u32 %v779, 7
      %v781 = vsub.s32 %v778, %v780
      %v782 = vrot.slane %v774, %v781
      %784 = vset.pattern.permute.xlu0 0
      %785 = vperm.xlu0 %784, %v369
      %v786 = vpop.permute.xlu0 %785
      %v789 = vunpack.c.l.s4 839922192
      %v790 = vunpack.c.0.s8 %v789
      %v791 = vlaneseq
      %v792 = vshrl.u32 %v791, 7
      %v793 = vsub.s32 %v790, %v792
      %v794 = vrot.slane %v786, %v793
      %796 = vset.pattern.permute.xlu0 0
      %797 = vperm.xlu0 %796, %v370
      %v798 = vpop.permute.xlu0 %797
      %v801 = vunpack.c.l.s4 839922192
      %v802 = vunpack.c.0.s8 %v801
      %v803 = vlaneseq
      %v804 = vshrl.u32 %v803, 7
      %v805 = vsub.s32 %v802, %v804
      %v806 = vrot.slane %v798, %v805
      %808 = vset.pattern.permute.xlu0 0
      %809 = vperm.xlu0 %808, %v371
      %v810 = vpop.permute.xlu0 %809
      %v813 = vunpack.c.l.s4 839922192
      %v814 = vunpack.c.0.s8 %v813
      %v815 = vlaneseq
      %v816 = vshrl.u32 %v815, 7
      %v817 = vsub.s32 %v814, %v816
      %v818 = vrot.slane %v810, %v817
      %820 = vset.pattern.permute.xlu0 0
      %821 = vperm.xlu0 %820, %v372
      %v822 = vpop.permute.xlu0 %821
      %v825 = vunpack.c.l.s4 839922192
      %v826 = vunpack.c.0.s8 %v825
      %v827 = vlaneseq
      %v828 = vshrl.u32 %v827, 7
      %v829 = vsub.s32 %v826, %v828
      %v830 = vrot.slane %v822, %v829
      %832 = vset.pattern.permute.xlu0 0
      %833 = vperm.xlu0 %832, %v373
      %v834 = vpop.permute.xlu0 %833
      %v837 = vunpack.c.l.s4 839922192
      %v838 = vunpack.c.0.s8 %v837
      %v839 = vlaneseq
      %v840 = vshrl.u32 %v839, 7
      %v841 = vsub.s32 %v838, %v840
      %v842 = vrot.slane %v834, %v841
      %844 = vset.pattern.permute.xlu0 0
      %845 = vperm.xlu0 %844, %v374
      %v846 = vpop.permute.xlu0 %845
      %v849 = vunpack.c.l.s4 839922192
      %v850 = vunpack.c.0.s8 %v849
      %v851 = vlaneseq
      %v852 = vshrl.u32 %v851, 7
      %v853 = vsub.s32 %v850, %v852
      %v854 = vrot.slane %v846, %v853
      %856 = vset.pattern.permute.xlu0 0
      %857 = vperm.xlu0 %856, %v375
      %v858 = vpop.permute.xlu0 %857
      %v861 = vunpack.c.l.s4 839922192
      %v862 = vunpack.c.0.s8 %v861
      %v863 = vlaneseq
      %v864 = vshrl.u32 %v863, 7
      %v865 = vsub.s32 %v862, %v864
      %v866 = vrot.slane %v858, %v865
      %868 = vset.pattern.permute.xlu0 0
      %869 = vperm.xlu0 %868, %v376
      %v870 = vpop.permute.xlu0 %869
      %v873 = vunpack.c.l.s4 839922192
      %v874 = vunpack.c.0.s8 %v873
      %v875 = vlaneseq
      %v876 = vshrl.u32 %v875, 7
      %v877 = vsub.s32 %v874, %v876
      %v878 = vrot.slane %v870, %v877
      %880 = vset.pattern.permute.xlu0 0
      %881 = vperm.xlu0 %880, %v377
      %v882 = vpop.permute.xlu0 %881
      %v885 = vunpack.c.l.s4 839922192
      %v886 = vunpack.c.0.s8 %v885
      %v887 = vlaneseq
      %v888 = vshrl.u32 %v887, 7
      %v889 = vsub.s32 %v886, %v888
      %v890 = vrot.slane %v882, %v889
      %892 = vset.pattern.permute.xlu0 0
      %893 = vperm.xlu0 %892, %v378
      %v894 = vpop.permute.xlu0 %893
      %v897 = vunpack.c.l.s4 839922192
      %v898 = vunpack.c.0.s8 %v897
      %v899 = vlaneseq
      %v900 = vshrl.u32 %v899, 7
      %v901 = vsub.s32 %v898, %v900
      %v902 = vrot.slane %v894, %v901
      %904 = vset.pattern.permute.xlu0 0
      %905 = vperm.xlu0 %904, %v379
      %v906 = vpop.permute.xlu0 %905
      %v909 = vunpack.c.l.s4 839922192
      %v910 = vunpack.c.0.s8 %v909
      %v911 = vlaneseq
      %v912 = vshrl.u32 %v911, 7
      %v913 = vsub.s32 %v910, %v912
      %v914 = vrot.slane %v906, %v913
      %916 = vset.pattern.permute.xlu0 0
      %917 = vperm.xlu0 %916, %v380
      %v918 = vpop.permute.xlu0 %917
      %v921 = vunpack.c.l.s4 839922192
      %v922 = vunpack.c.0.s8 %v921
      %v923 = vlaneseq
      %v924 = vshrl.u32 %v923, 7
      %v925 = vsub.s32 %v922, %v924
      %v926 = vrot.slane %v918, %v925
      %928 = vset.pattern.permute.xlu0 0
      %929 = vperm.xlu0 %928, %v381
      %v930 = vpop.permute.xlu0 %929
      %v933 = vunpack.c.l.s4 839922192
      %v934 = vunpack.c.0.s8 %v933
      %v935 = vlaneseq
      %v936 = vshrl.u32 %v935, 7
      %v937 = vsub.s32 %v934, %v936
      %v938 = vrot.slane %v930, %v937
      %940 = vset.pattern.permute.xlu0 0
      %941 = vperm.xlu0 %940, %v382
      %v942 = vpop.permute.xlu0 %941
      %v945 = vunpack.c.l.s4 839922192
      %v946 = vunpack.c.0.s8 %v945
      %v947 = vlaneseq
      %v948 = vshrl.u32 %v947, 7
      %v949 = vsub.s32 %v946, %v948
      %v950 = vrot.slane %v942, %v949
      %952 = vset.pattern.permute.xlu0 0
      %953 = vperm.xlu0 %952, %v383
      %v954 = vpop.permute.xlu0 %953
      %v957 = vunpack.c.l.s4 839922192
      %v958 = vunpack.c.0.s8 %v957
      %v959 = vlaneseq
      %v960 = vshrl.u32 %v959, 7
      %v961 = vsub.s32 %v958, %v960
      %v962 = vrot.slane %v954, %v961
      %964 = vset.pattern.permute.xlu0 0
      %965 = vperm.xlu0 %964, %v384
      %v966 = vpop.permute.xlu0 %965
      %v969 = vunpack.c.l.s4 839922192
      %v970 = vunpack.c.0.s8 %v969
      %v971 = vlaneseq
      %v972 = vshrl.u32 %v971, 7
      %v973 = vsub.s32 %v970, %v972
      %v974 = vrot.slane %v966, %v973
      %976 = vset.pattern.permute.xlu0 0
      %977 = vperm.xlu0 %976, %v385
      %v978 = vpop.permute.xlu0 %977
      %v981 = vunpack.c.l.s4 839922192
      %v982 = vunpack.c.0.s8 %v981
      %v983 = vlaneseq
      %v984 = vshrl.u32 %v983, 7
      %v985 = vsub.s32 %v982, %v984
      %v986 = vrot.slane %v978, %v985
      %988 = vset.pattern.permute.xlu0 0
      %989 = vperm.xlu0 %988, %v386
      %v990 = vpop.permute.xlu0 %989
      %v993 = vunpack.c.l.s4 839922192
      %v994 = vunpack.c.0.s8 %v993
      %v995 = vlaneseq
      %v996 = vshrl.u32 %v995, 7
      %v997 = vsub.s32 %v994, %v996
      %v998 = vrot.slane %v990, %v997
      %v1031 = vunpack.c.l.b16 %v626
      %v1032 = vunpack.c.l.b16 %v638
      %v1033 = vunpack.c.l.b16 %v650
      %v1034 = vunpack.c.l.b16 %v662
      %v1035 = vunpack.c.l.b16 %v674
      %v1036 = vunpack.c.l.b16 %v686
      %v1037 = vunpack.c.l.b16 %v698
      %v1038 = vunpack.c.l.b16 %v710
      %v1039 = vunpack.c.l.b16 %v722
      %v1040 = vunpack.c.l.b16 %v734
      %v1041 = vunpack.c.l.b16 %v746
      %v1042 = vunpack.c.l.b16 %v758
      %v1043 = vunpack.c.l.b16 %v770
      %v1044 = vunpack.c.l.b16 %v782
      %v1045 = vunpack.c.l.b16 %v794
      %v1046 = vunpack.c.l.b16 %v806
      %v1047 = vunpack.c.l.b16 %v818
      %v1048 = vunpack.c.l.b16 %v830
      %v1049 = vunpack.c.l.b16 %v842
      %v1050 = vunpack.c.l.b16 %v854
      %v1051 = vunpack.c.l.b16 %v866
      %v1052 = vunpack.c.l.b16 %v878
      %v1053 = vunpack.c.l.b16 %v890
      %v1054 = vunpack.c.l.b16 %v902
      %v1055 = vunpack.c.l.b16 %v914
      %v1056 = vunpack.c.l.b16 %v926
      %v1057 = vunpack.c.l.b16 %v938
      %v1058 = vunpack.c.l.b16 %v950
      %v1059 = vunpack.c.l.b16 %v962
      %v1060 = vunpack.c.l.b16 %v974
      %v1061 = vunpack.c.l.b16 %v986
      %v1062 = vunpack.c.l.b16 %v998
      %v1063 = vpack.c.b16 %v1032, %v1031
      %v1064 = vpack.c.b16 %v1034, %v1033
      %v1065 = vpack.c.b16 %v1036, %v1035
      %v1066 = vpack.c.b16 %v1038, %v1037
      %v1067 = vpack.c.b16 %v1040, %v1039
      %v1068 = vpack.c.b16 %v1042, %v1041
      %v1069 = vpack.c.b16 %v1044, %v1043
      %v1070 = vpack.c.b16 %v1046, %v1045
      %v1071 = vpack.c.b16 %v1048, %v1047
      %v1072 = vpack.c.b16 %v1050, %v1049
      %v1073 = vpack.c.b16 %v1052, %v1051
      %v1074 = vpack.c.b16 %v1054, %v1053
      %v1075 = vpack.c.b16 %v1056, %v1055
      %v1076 = vpack.c.b16 %v1058, %v1057
      %v1077 = vpack.c.b16 %v1060, %v1059
      %v1078 = vpack.c.b16 %v1062, %v1061
      %v1095 = vmul.bf16 %v599, %v1063
      %v1096 = vmul.bf16 %v600, %v1064
      %v1097 = vmul.bf16 %v601, %v1065
      %v1098 = vmul.bf16 %v602, %v1066
      %v1099 = vmul.bf16 %v603, %v1067
      %v1100 = vmul.bf16 %v604, %v1068
      %v1101 = vmul.bf16 %v605, %v1069
      %v1102 = vmul.bf16 %v606, %v1070
      %v1103 = vmul.bf16 %v607, %v1071
      %v1104 = vmul.bf16 %v608, %v1072
      %v1105 = vmul.bf16 %v609, %v1073
      %v1106 = vmul.bf16 %v610, %v1074
      %v1107 = vmul.bf16 %v611, %v1075
      %v1108 = vmul.bf16 %v612, %v1076
      %v1109 = vmul.bf16 %v613, %v1077
      %v1110 = vmul.bf16 %v614, %v1078
      %v1111 = vld [vmem:[#allocation2 + $0x8] sm:$0xff]
      %v1112 = vld [vmem:[#allocation2 + $0x10] sm:$0xff]
      %v1113 = vld [vmem:[#allocation2 + $0x18] sm:$0xff]
      %v1114 = vld [vmem:[#allocation2 + $0x20] sm:$0xff]
      %v1115 = vld [vmem:[#allocation2 + $0x28] sm:$0xff]
      %v1116 = vld [vmem:[#allocation2 + $0x30] sm:$0xff]
      %v1117 = vld [vmem:[#allocation2 + $0x38] sm:$0xff]
      %v1118 = vld [vmem:[#allocation2 + $0x40] sm:$0xff]
      %v1119 = vld [vmem:[#allocation2 + $0x48] sm:$0xff]
      %v1120 = vld [vmem:[#allocation2 + $0x50] sm:$0xff]
      %v1121 = vld [vmem:[#allocation2 + $0x58] sm:$0xff]
      %v1122 = vld [vmem:[#allocation2 + $0x60] sm:$0xff]
      %v1123 = vld [vmem:[#allocation2 + $0x68] sm:$0xff]
      %v1124 = vld [vmem:[#allocation2 + $0x70] sm:$0xff]
      %v1125 = vld [vmem:[#allocation2 + $0x78] sm:$0xff]
      %v1126 = vld [vmem:[#allocation2 + $0x80] sm:$0xff]
      %v1127 = vld [vmem:[#allocation2 + $0x88] sm:$0xff]
      %v1128 = vld [vmem:[#allocation2 + $0x90] sm:$0xff]
      %v1129 = vld [vmem:[#allocation2 + $0x98] sm:$0xff]
      %v1130 = vld [vmem:[#allocation2 + $0xa0] sm:$0xff]
      %v1131 = vld [vmem:[#allocation2 + $0xa8] sm:$0xff]
      %v1132 = vld [vmem:[#allocation2 + $0xb0] sm:$0xff]
      %v1133 = vld [vmem:[#allocation2 + $0xb8] sm:$0xff]
      %v1134 = vld [vmem:[#allocation2 + $0xc0] sm:$0xff]
      %v1135 = vld [vmem:[#allocation2 + $0xc8] sm:$0xff]
      %v1136 = vld [vmem:[#allocation2 + $0xd0] sm:$0xff]
      %v1137 = vld [vmem:[#allocation2 + $0xd8] sm:$0xff]
      %v1138 = vld [vmem:[#allocation2 + $0xe0] sm:$0xff]
      %v1139 = vld [vmem:[#allocation2 + $0xe8] sm:$0xff]
      %v1140 = vld [vmem:[#allocation2 + $0xf0] sm:$0xff]
      %v1141 = vld [vmem:[#allocation2 + $0xf8] sm:$0xff]
      %v1142 = vld [vmem:[#allocation2 + $0x100] sm:$0xff]
      %v1143 = vpack.c.bf16 %v1112, %v1111
      %v1144 = vpack.c.bf16 %v1114, %v1113
      %v1145 = vpack.c.bf16 %v1116, %v1115
      %v1146 = vpack.c.bf16 %v1118, %v1117
      %v1147 = vpack.c.bf16 %v1120, %v1119
      %v1148 = vpack.c.bf16 %v1122, %v1121
      %v1149 = vpack.c.bf16 %v1124, %v1123
      %v1150 = vpack.c.bf16 %v1126, %v1125
      %v1151 = vpack.c.bf16 %v1128, %v1127
      %v1152 = vpack.c.bf16 %v1130, %v1129
      %v1153 = vpack.c.bf16 %v1132, %v1131
      %v1154 = vpack.c.bf16 %v1134, %v1133
      %v1155 = vpack.c.bf16 %v1136, %v1135
      %v1156 = vpack.c.bf16 %v1138, %v1137
      %v1157 = vpack.c.bf16 %v1140, %v1139
      %v1158 = vpack.c.bf16 %v1142, %v1141
      %v1159 = vld [vmem:[#allocation2 + $0x9] sm:$0xff]
      %v1160 = vld [vmem:[#allocation2 + $0x11] sm:$0xff]
      %v1161 = vld [vmem:[#allocation2 + $0x19] sm:$0xff]
      %v1162 = vld [vmem:[#allocation2 + $0x21] sm:$0xff]
      %v1163 = vld [vmem:[#allocation2 + $0x29] sm:$0xff]
      %v1164 = vld [vmem:[#allocation2 + $0x31] sm:$0xff]
      %v1165 = vld [vmem:[#allocation2 + $0x39] sm:$0xff]
      %v1166 = vld [vmem:[#allocation2 + $0x41] sm:$0xff]
      %v1167 = vld [vmem:[#allocation2 + $0x49] sm:$0xff]
      %v1168 = vld [vmem:[#allocation2 + $0x51] sm:$0xff]
      %v1169 = vld [vmem:[#allocation2 + $0x59] sm:$0xff]
      %v1170 = vld [vmem:[#allocation2 + $0x61] sm:$0xff]
      %v1171 = vld [vmem:[#allocation2 + $0x69] sm:$0xff]
      %v1172 = vld [vmem:[#allocation2 + $0x71] sm:$0xff]
      %v1173 = vld [vmem:[#allocation2 + $0x79] sm:$0xff]
      %v1174 = vld [vmem:[#allocation2 + $0x81] sm:$0xff]
      %v1175 = vld [vmem:[#allocation2 + $0x89] sm:$0xff]
      %v1176 = vld [vmem:[#allocation2 + $0x91] sm:$0xff]
      %v1177 = vld [vmem:[#allocation2 + $0x99] sm:$0xff]
      %v1178 = vld [vmem:[#allocation2 + $0xa1] sm:$0xff]
      %v1179 = vld [vmem:[#allocation2 + $0xa9] sm:$0xff]
      %v1180 = vld [vmem:[#allocation2 + $0xb1] sm:$0xff]
      %v1181 = vld [vmem:[#allocation2 + $0xb9] sm:$0xff]
      %v1182 = vld [vmem:[#allocation2 + $0xc1] sm:$0xff]
      %v1183 = vld [vmem:[#allocation2 + $0xc9] sm:$0xff]
      %v1184 = vld [vmem:[#allocation2 + $0xd1] sm:$0xff]
      %v1185 = vld [vmem:[#allocation2 + $0xd9] sm:$0xff]
      %v1186 = vld [vmem:[#allocation2 + $0xe1] sm:$0xff]
      %v1187 = vld [vmem:[#allocation2 + $0xe9] sm:$0xff]
      %v1188 = vld [vmem:[#allocation2 + $0xf1] sm:$0xff]
      %v1189 = vld [vmem:[#allocation2 + $0xf9] sm:$0xff]
      %v1190 = vld [vmem:[#allocation2 + $0x101] sm:$0xff]
      %v1191 = vpack.c.bf16 %v1160, %v1159
      %v1192 = vpack.c.bf16 %v1162, %v1161
      %v1193 = vpack.c.bf16 %v1164, %v1163
      %v1194 = vpack.c.bf16 %v1166, %v1165
      %v1195 = vpack.c.bf16 %v1168, %v1167
      %v1196 = vpack.c.bf16 %v1170, %v1169
      %v1197 = vpack.c.bf16 %v1172, %v1171
      %v1198 = vpack.c.bf16 %v1174, %v1173
      %v1199 = vpack.c.bf16 %v1176, %v1175
      %v1200 = vpack.c.bf16 %v1178, %v1177
      %v1201 = vpack.c.bf16 %v1180, %v1179
      %v1202 = vpack.c.bf16 %v1182, %v1181
      %v1203 = vpack.c.bf16 %v1184, %v1183
      %v1204 = vpack.c.bf16 %v1186, %v1185
      %v1205 = vpack.c.bf16 %v1188, %v1187
      %v1206 = vpack.c.bf16 %v1190, %v1189
      %1208 = vset.pattern.permute.xlu0 0
      %1209 = vperm.xlu0 %1208, %v387
      %v1210 = vpop.permute.xlu0 %1209
      %v1213 = vunpack.c.l.s4 839922192
      %v1214 = vunpack.c.0.s8 %v1213
      %v1215 = vlaneseq
      %v1216 = vshrl.u32 %v1215, 7
      %v1217 = vsub.s32 %v1214, %v1216
      %v1218 = vrot.slane %v1210, %v1217
      %1220 = vset.pattern.permute.xlu0 0
      %1221 = vperm.xlu0 %1220, %v388
      %v1222 = vpop.permute.xlu0 %1221
      %v1225 = vunpack.c.l.s4 839922192
      %v1226 = vunpack.c.0.s8 %v1225
      %v1227 = vlaneseq
      %v1228 = vshrl.u32 %v1227, 7
      %v1229 = vsub.s32 %v1226, %v1228
      %v1230 = vrot.slane %v1222, %v1229
      %1232 = vset.pattern.permute.xlu0 0
      %1233 = vperm.xlu0 %1232, %v389
      %v1234 = vpop.permute.xlu0 %1233
      %v1237 = vunpack.c.l.s4 839922192
      %v1238 = vunpack.c.0.s8 %v1237
      %v1239 = vlaneseq
      %v1240 = vshrl.u32 %v1239, 7
      %v1241 = vsub.s32 %v1238, %v1240
      %v1242 = vrot.slane %v1234, %v1241
      %1244 = vset.pattern.permute.xlu0 0
      %1245 = vperm.xlu0 %1244, %v390
      %v1246 = vpop.permute.xlu0 %1245
      %v1249 = vunpack.c.l.s4 839922192
      %v1250 = vunpack.c.0.s8 %v1249
      %v1251 = vlaneseq
      %v1252 = vshrl.u32 %v1251, 7
      %v1253 = vsub.s32 %v1250, %v1252
      %v1254 = vrot.slane %v1246, %v1253
      %1256 = vset.pattern.permute.xlu0 0
      %1257 = vperm.xlu0 %1256, %v391
      %v1258 = vpop.permute.xlu0 %1257
      %v1261 = vunpack.c.l.s4 839922192
      %v1262 = vunpack.c.0.s8 %v1261
      %v1263 = vlaneseq
      %v1264 = vshrl.u32 %v1263, 7
      %v1265 = vsub.s32 %v1262, %v1264
      %v1266 = vrot.slane %v1258, %v1265
      %1268 = vset.pattern.permute.xlu0 0
      %1269 = vperm.xlu0 %1268, %v392
      %v1270 = vpop.permute.xlu0 %1269
      %v1273 = vunpack.c.l.s4 839922192
      %v1274 = vunpack.c.0.s8 %v1273
      %v1275 = vlaneseq
      %v1276 = vshrl.u32 %v1275, 7
      %v1277 = vsub.s32 %v1274, %v1276
      %v1278 = vrot.slane %v1270, %v1277
      %1280 = vset.pattern.permute.xlu0 0
      %1281 = vperm.xlu0 %1280, %v393
      %v1282 = vpop.permute.xlu0 %1281
      %v1285 = vunpack.c.l.s4 839922192
      %v1286 = vunpack.c.0.s8 %v1285
      %v1287 = vlaneseq
      %v1288 = vshrl.u32 %v1287, 7
      %v1289 = vsub.s32 %v1286, %v1288
      %v1290 = vrot.slane %v1282, %v1289
      %1292 = vset.pattern.permute.xlu0 0
      %1293 = vperm.xlu0 %1292, %v394
      %v1294 = vpop.permute.xlu0 %1293
      %v1297 = vunpack.c.l.s4 839922192
      %v1298 = vunpack.c.0.s8 %v1297
      %v1299 = vlaneseq
      %v1300 = vshrl.u32 %v1299, 7
      %v1301 = vsub.s32 %v1298, %v1300
      %v1302 = vrot.slane %v1294, %v1301
      %1304 = vset.pattern.permute.xlu0 0
      %1305 = vperm.xlu0 %1304, %v395
      %v1306 = vpop.permute.xlu0 %1305
      %v1309 = vunpack.c.l.s4 839922192
      %v1310 = vunpack.c.0.s8 %v1309
      %v1311 = vlaneseq
      %v1312 = vshrl.u32 %v1311, 7
      %v1313 = vsub.s32 %v1310, %v1312
      %v1314 = vrot.slane %v1306, %v1313
      %1316 = vset.pattern.permute.xlu0 0
      %1317 = vperm.xlu0 %1316, %v396
      %v1318 = vpop.permute.xlu0 %1317
      %v1321 = vunpack.c.l.s4 839922192
      %v1322 = vunpack.c.0.s8 %v1321
      %v1323 = vlaneseq
      %v1324 = vshrl.u32 %v1323, 7
      %v1325 = vsub.s32 %v1322, %v1324
      %v1326 = vrot.slane %v1318, %v1325
      %1328 = vset.pattern.permute.xlu0 0
      %1329 = vperm.xlu0 %1328, %v397
      %v1330 = vpop.permute.xlu0 %1329
      %v1333 = vunpack.c.l.s4 839922192
      %v1334 = vunpack.c.0.s8 %v1333
      %v1335 = vlaneseq
      %v1336 = vshrl.u32 %v1335, 7
      %v1337 = vsub.s32 %v1334, %v1336
      %v1338 = vrot.slane %v1330, %v1337
      %1340 = vset.pattern.permute.xlu0 0
      %1341 = vperm.xlu0 %1340, %v398
      %v1342 = vpop.permute.xlu0 %1341
      %v1345 = vunpack.c.l.s4 839922192
      %v1346 = vunpack.c.0.s8 %v1345
      %v1347 = vlaneseq
      %v1348 = vshrl.u32 %v1347, 7
      %v1349 = vsub.s32 %v1346, %v1348
      %v1350 = vrot.slane %v1342, %v1349
      %1352 = vset.pattern.permute.xlu0 0
      %1353 = vperm.xlu0 %1352, %v399
      %v1354 = vpop.permute.xlu0 %1353
      %v1357 = vunpack.c.l.s4 839922192
      %v1358 = vunpack.c.0.s8 %v1357
      %v1359 = vlaneseq
      %v1360 = vshrl.u32 %v1359, 7
      %v1361 = vsub.s32 %v1358, %v1360
      %v1362 = vrot.slane %v1354, %v1361
      %1364 = vset.pattern.permute.xlu0 0
      %1365 = vperm.xlu0 %1364, %v400
      %v1366 = vpop.permute.xlu0 %1365
      %v1369 = vunpack.c.l.s4 839922192
      %v1370 = vunpack.c.0.s8 %v1369
      %v1371 = vlaneseq
      %v1372 = vshrl.u32 %v1371, 7
      %v1373 = vsub.s32 %v1370, %v1372
      %v1374 = vrot.slane %v1366, %v1373
      %1376 = vset.pattern.permute.xlu0 0
      %1377 = vperm.xlu0 %1376, %v401
      %v1378 = vpop.permute.xlu0 %1377
      %v1381 = vunpack.c.l.s4 839922192
      %v1382 = vunpack.c.0.s8 %v1381
      %v1383 = vlaneseq
      %v1384 = vshrl.u32 %v1383, 7
      %v1385 = vsub.s32 %v1382, %v1384
      %v1386 = vrot.slane %v1378, %v1385
      %1388 = vset.pattern.permute.xlu0 0
      %1389 = vperm.xlu0 %1388, %v402
      %v1390 = vpop.permute.xlu0 %1389
      %v1393 = vunpack.c.l.s4 839922192
      %v1394 = vunpack.c.0.s8 %v1393
      %v1395 = vlaneseq
      %v1396 = vshrl.u32 %v1395, 7
      %v1397 = vsub.s32 %v1394, %v1396
      %v1398 = vrot.slane %v1390, %v1397
      %1400 = vset.pattern.permute.xlu0 0
      %1401 = vperm.xlu0 %1400, %v403
      %v1402 = vpop.permute.xlu0 %1401
      %v1405 = vunpack.c.l.s4 839922192
      %v1406 = vunpack.c.0.s8 %v1405
      %v1407 = vlaneseq
      %v1408 = vshrl.u32 %v1407, 7
      %v1409 = vsub.s32 %v1406, %v1408
      %v1410 = vrot.slane %v1402, %v1409
      %1412 = vset.pattern.permute.xlu0 0
      %1413 = vperm.xlu0 %1412, %v404
      %v1414 = vpop.permute.xlu0 %1413
      %v1417 = vunpack.c.l.s4 839922192
      %v1418 = vunpack.c.0.s8 %v1417
      %v1419 = vlaneseq
      %v1420 = vshrl.u32 %v1419, 7
      %v1421 = vsub.s32 %v1418, %v1420
      %v1422 = vrot.slane %v1414, %v1421
      %1424 = vset.pattern.permute.xlu0 0
      %1425 = vperm.xlu0 %1424, %v405
      %v1426 = vpop.permute.xlu0 %1425
      %v1429 = vunpack.c.l.s4 839922192
      %v1430 = vunpack.c.0.s8 %v1429
      %v1431 = vlaneseq
      %v1432 = vshrl.u32 %v1431, 7
      %v1433 = vsub.s32 %v1430, %v1432
      %v1434 = vrot.slane %v1426, %v1433
      %1436 = vset.pattern.permute.xlu0 0
      %1437 = vperm.xlu0 %1436, %v406
      %v1438 = vpop.permute.xlu0 %1437
      %v1441 = vunpack.c.l.s4 839922192
      %v1442 = vunpack.c.0.s8 %v1441
      %v1443 = vlaneseq
      %v1444 = vshrl.u32 %v1443, 7
      %v1445 = vsub.s32 %v1442, %v1444
      %v1446 = vrot.slane %v1438, %v1445
      %1448 = vset.pattern.permute.xlu0 0
      %1449 = vperm.xlu0 %1448, %v407
      %v1450 = vpop.permute.xlu0 %1449
      %v1453 = vunpack.c.l.s4 839922192
      %v1454 = vunpack.c.0.s8 %v1453
      %v1455 = vlaneseq
      %v1456 = vshrl.u32 %v1455, 7
      %v1457 = vsub.s32 %v1454, %v1456
      %v1458 = vrot.slane %v1450, %v1457
      %1460 = vset.pattern.permute.xlu0 0
      %1461 = vperm.xlu0 %1460, %v408
      %v1462 = vpop.permute.xlu0 %1461
      %v1465 = vunpack.c.l.s4 839922192
      %v1466 = vunpack.c.0.s8 %v1465
      %v1467 = vlaneseq
      %v1468 = vshrl.u32 %v1467, 7
      %v1469 = vsub.s32 %v1466, %v1468
      %v1470 = vrot.slane %v1462, %v1469
      %1472 = vset.pattern.permute.xlu0 0
      %1473 = vperm.xlu0 %1472, %v409
      %v1474 = vpop.permute.xlu0 %1473
      %v1477 = vunpack.c.l.s4 839922192
      %v1478 = vunpack.c.0.s8 %v1477
      %v1479 = vlaneseq
      %v1480 = vshrl.u32 %v1479, 7
      %v1481 = vsub.s32 %v1478, %v1480
      %v1482 = vrot.slane %v1474, %v1481
      %1484 = vset.pattern.permute.xlu0 0
      %1485 = vperm.xlu0 %1484, %v410
      %v1486 = vpop.permute.xlu0 %1485
      %v1489 = vunpack.c.l.s4 839922192
      %v1490 = vunpack.c.0.s8 %v1489
      %v1491 = vlaneseq
      %v1492 = vshrl.u32 %v1491, 7
      %v1493 = vsub.s32 %v1490, %v1492
      %v1494 = vrot.slane %v1486, %v1493
      %1496 = vset.pattern.permute.xlu0 0
      %1497 = vperm.xlu0 %1496, %v411
      %v1498 = vpop.permute.xlu0 %1497
      %v1501 = vunpack.c.l.s4 839922192
      %v1502 = vunpack.c.0.s8 %v1501
      %v1503 = vlaneseq
      %v1504 = vshrl.u32 %v1503, 7
      %v1505 = vsub.s32 %v1502, %v1504
      %v1506 = vrot.slane %v1498, %v1505
      %1508 = vset.pattern.permute.xlu0 0
      %1509 = vperm.xlu0 %1508, %v412
      %v1510 = vpop.permute.xlu0 %1509
      %v1513 = vunpack.c.l.s4 839922192
      %v1514 = vunpack.c.0.s8 %v1513
      %v1515 = vlaneseq
      %v1516 = vshrl.u32 %v1515, 7
      %v1517 = vsub.s32 %v1514, %v1516
      %v1518 = vrot.slane %v1510, %v1517
      %1520 = vset.pattern.permute.xlu0 0
      %1521 = vperm.xlu0 %1520, %v413
      %v1522 = vpop.permute.xlu0 %1521
      %v1525 = vunpack.c.l.s4 839922192
      %v1526 = vunpack.c.0.s8 %v1525
      %v1527 = vlaneseq
      %v1528 = vshrl.u32 %v1527, 7
      %v1529 = vsub.s32 %v1526, %v1528
      %v1530 = vrot.slane %v1522, %v1529
      %1532 = vset.pattern.permute.xlu0 0
      %1533 = vperm.xlu0 %1532, %v414
      %v1534 = vpop.permute.xlu0 %1533
      %v1537 = vunpack.c.l.s4 839922192
      %v1538 = vunpack.c.0.s8 %v1537
      %v1539 = vlaneseq
      %v1540 = vshrl.u32 %v1539, 7
      %v1541 = vsub.s32 %v1538, %v1540
      %v1542 = vrot.slane %v1534, %v1541
      %1544 = vset.pattern.permute.xlu0 0
      %1545 = vperm.xlu0 %1544, %v415
      %v1546 = vpop.permute.xlu0 %1545
      %v1549 = vunpack.c.l.s4 839922192
      %v1550 = vunpack.c.0.s8 %v1549
      %v1551 = vlaneseq
      %v1552 = vshrl.u32 %v1551, 7
      %v1553 = vsub.s32 %v1550, %v1552
      %v1554 = vrot.slane %v1546, %v1553
      %1556 = vset.pattern.permute.xlu0 0
      %1557 = vperm.xlu0 %1556, %v416
      %v1558 = vpop.permute.xlu0 %1557
      %v1561 = vunpack.c.l.s4 839922192
      %v1562 = vunpack.c.0.s8 %v1561
      %v1563 = vlaneseq
      %v1564 = vshrl.u32 %v1563, 7
      %v1565 = vsub.s32 %v1562, %v1564
      %v1566 = vrot.slane %v1558, %v1565
      %1568 = vset.pattern.permute.xlu0 0
      %1569 = vperm.xlu0 %1568, %v417
      %v1570 = vpop.permute.xlu0 %1569
      %v1573 = vunpack.c.l.s4 839922192
      %v1574 = vunpack.c.0.s8 %v1573
      %v1575 = vlaneseq
      %v1576 = vshrl.u32 %v1575, 7
      %v1577 = vsub.s32 %v1574, %v1576
      %v1578 = vrot.slane %v1570, %v1577
      %1580 = vset.pattern.permute.xlu0 0
      %1581 = vperm.xlu0 %1580, %v418
      %v1582 = vpop.permute.xlu0 %1581
      %v1585 = vunpack.c.l.s4 839922192
      %v1586 = vunpack.c.0.s8 %v1585
      %v1587 = vlaneseq
      %v1588 = vshrl.u32 %v1587, 7
      %v1589 = vsub.s32 %v1586, %v1588
      %v1590 = vrot.slane %v1582, %v1589
      %v1623 = vunpack.c.l.b16 %v1218
      %v1624 = vunpack.c.l.b16 %v1230
      %v1625 = vunpack.c.l.b16 %v1242
      %v1626 = vunpack.c.l.b16 %v1254
      %v1627 = vunpack.c.l.b16 %v1266
      %v1628 = vunpack.c.l.b16 %v1278
      %v1629 = vunpack.c.l.b16 %v1290
      %v1630 = vunpack.c.l.b16 %v1302
      %v1631 = vunpack.c.l.b16 %v1314
      %v1632 = vunpack.c.l.b16 %v1326
      %v1633 = vunpack.c.l.b16 %v1338
      %v1634 = vunpack.c.l.b16 %v1350
      %v1635 = vunpack.c.l.b16 %v1362
      %v1636 = vunpack.c.l.b16 %v1374
      %v1637 = vunpack.c.l.b16 %v1386
      %v1638 = vunpack.c.l.b16 %v1398
      %v1639 = vunpack.c.l.b16 %v1410
      %v1640 = vunpack.c.l.b16 %v1422
      %v1641 = vunpack.c.l.b16 %v1434
      %v1642 = vunpack.c.l.b16 %v1446
      %v1643 = vunpack.c.l.b16 %v1458
      %v1644 = vunpack.c.l.b16 %v1470
      %v1645 = vunpack.c.l.b16 %v1482
      %v1646 = vunpack.c.l.b16 %v1494
      %v1647 = vunpack.c.l.b16 %v1506
      %v1648 = vunpack.c.l.b16 %v1518
      %v1649 = vunpack.c.l.b16 %v1530
      %v1650 = vunpack.c.l.b16 %v1542
      %v1651 = vunpack.c.l.b16 %v1554
      %v1652 = vunpack.c.l.b16 %v1566
      %v1653 = vunpack.c.l.b16 %v1578
      %v1654 = vunpack.c.l.b16 %v1590
      %v1655 = vpack.c.b16 %v1624, %v1623
      %v1656 = vpack.c.b16 %v1626, %v1625
      %v1657 = vpack.c.b16 %v1628, %v1627
      %v1658 = vpack.c.b16 %v1630, %v1629
      %v1659 = vpack.c.b16 %v1632, %v1631
      %v1660 = vpack.c.b16 %v1634, %v1633
      %v1661 = vpack.c.b16 %v1636, %v1635
      %v1662 = vpack.c.b16 %v1638, %v1637
      %v1663 = vpack.c.b16 %v1640, %v1639
      %v1664 = vpack.c.b16 %v1642, %v1641
      %v1665 = vpack.c.b16 %v1644, %v1643
      %v1666 = vpack.c.b16 %v1646, %v1645
      %v1667 = vpack.c.b16 %v1648, %v1647
      %v1668 = vpack.c.b16 %v1650, %v1649
      %v1669 = vpack.c.b16 %v1652, %v1651
      %v1670 = vpack.c.b16 %v1654, %v1653
      %v1687 = vmul.bf16 %v1191, %v1655
      %v1688 = vmul.bf16 %v1192, %v1656
      %v1689 = vmul.bf16 %v1193, %v1657
      %v1690 = vmul.bf16 %v1194, %v1658
      %v1691 = vmul.bf16 %v1195, %v1659
      %v1692 = vmul.bf16 %v1196, %v1660
      %v1693 = vmul.bf16 %v1197, %v1661
      %v1694 = vmul.bf16 %v1198, %v1662
      %v1695 = vmul.bf16 %v1199, %v1663
      %v1696 = vmul.bf16 %v1200, %v1664
      %v1697 = vmul.bf16 %v1201, %v1665
      %v1698 = vmul.bf16 %v1202, %v1666
      %v1699 = vmul.bf16 %v1203, %v1667
      %v1700 = vmul.bf16 %v1204, %v1668
      %v1701 = vmul.bf16 %v1205, %v1669
      %v1702 = vmul.bf16 %v1206, %v1670
      %v1703 = vld [vmem:[#allocation2 + $0x17] sm:$0xff]
      %v1704 = vld [vmem:[#allocation2 + $0x1f] sm:$0xff]
      %v1705 = vld [vmem:[#allocation2 + $0x27] sm:$0xff]
      %v1706 = vld [vmem:[#allocation2 + $0x2f] sm:$0xff]
      %v1707 = vld [vmem:[#allocation2 + $0x37] sm:$0xff]
      %v1708 = vld [vmem:[#allocation2 + $0x3f] sm:$0xff]
      %v1709 = vld [vmem:[#allocation2 + $0x47] sm:$0xff]
      %v1710 = vld [vmem:[#allocation2 + $0x4f] sm:$0xff]
      %v1711 = vld [vmem:[#allocation2 + $0x57] sm:$0xff]
      %v1712 = vld [vmem:[#allocation2 + $0x5f] sm:$0xff]
      %v1713 = vld [vmem:[#allocation2 + $0x67] sm:$0xff]
      %v1714 = vld [vmem:[#allocation2 + $0x6f] sm:$0xff]
      %v1715 = vld [vmem:[#allocation2 + $0x77] sm:$0xff]
      %v1716 = vld [vmem:[#allocation2 + $0x7f] sm:$0xff]
      %v1717 = vld [vmem:[#allocation2 + $0x87] sm:$0xff]
      %v1718 = vld [vmem:[#allocation2 + $0x8f] sm:$0xff]
      %v1719 = vld [vmem:[#allocation2 + $0x97] sm:$0xff]
      %v1720 = vld [vmem:[#allocation2 + $0x9f] sm:$0xff]
      %v1721 = vld [vmem:[#allocation2 + $0xa7] sm:$0xff]
      %v1722 = vld [vmem:[#allocation2 + $0xaf] sm:$0xff]
      %v1723 = vld [vmem:[#allocation2 + $0xb7] sm:$0xff]
      %v1724 = vld [vmem:[#allocation2 + $0xbf] sm:$0xff]
      %v1725 = vld [vmem:[#allocation2 + $0xc7] sm:$0xff]
      %v1726 = vld [vmem:[#allocation2 + $0xcf] sm:$0xff]
      %v1727 = vld [vmem:[#allocation2 + $0xd7] sm:$0xff]
      %v1728 = vld [vmem:[#allocation2 + $0xdf] sm:$0xff]
      %v1729 = vld [vmem:[#allocation2 + $0xe7] sm:$0xff]
      %v1730 = vld [vmem:[#allocation2 + $0xef] sm:$0xff]
      %v1731 = vld [vmem:[#allocation2 + $0xf7] sm:$0xff]
      %v1732 = vld [vmem:[#allocation2 + $0xff] sm:$0xff]
      %v1733 = vld [vmem:[#allocation2 + $0x107] sm:$0xff]
      %v1734 = vld [vmem:[#allocation2 + $0x10f] sm:$0xff]
      %v1735 = vpack.c.bf16 %v1704, %v1703
      %v1736 = vpack.c.bf16 %v1706, %v1705
      %v1737 = vpack.c.bf16 %v1708, %v1707
      %v1738 = vpack.c.bf16 %v1710, %v1709
      %v1739 = vpack.c.bf16 %v1712, %v1711
      %v1740 = vpack.c.bf16 %v1714, %v1713
      %v1741 = vpack.c.bf16 %v1716, %v1715
      %v1742 = vpack.c.bf16 %v1718, %v1717
      %v1743 = vpack.c.bf16 %v1720, %v1719
      %v1744 = vpack.c.bf16 %v1722, %v1721
      %v1745 = vpack.c.bf16 %v1724, %v1723
      %v1746 = vpack.c.bf16 %v1726, %v1725
      %v1747 = vpack.c.bf16 %v1728, %v1727
      %v1748 = vpack.c.bf16 %v1730, %v1729
      %v1749 = vpack.c.bf16 %v1732, %v1731
      %v1750 = vpack.c.bf16 %v1734, %v1733
      %v1751 = vmul.bf16 %v1735, %v1063
      %v1752 = vmul.bf16 %v1736, %v1064
      %v1753 = vmul.bf16 %v1737, %v1065
      %v1754 = vmul.bf16 %v1738, %v1066
      %v1755 = vmul.bf16 %v1739, %v1067
      %v1756 = vmul.bf16 %v1740, %v1068
      %v1757 = vmul.bf16 %v1741, %v1069
      %v1758 = vmul.bf16 %v1742, %v1070
      %v1759 = vmul.bf16 %v1743, %v1071
      %v1760 = vmul.bf16 %v1744, %v1072
      %v1761 = vmul.bf16 %v1745, %v1073
      %v1762 = vmul.bf16 %v1746, %v1074
      %v1763 = vmul.bf16 %v1747, %v1075
      %v1764 = vmul.bf16 %v1748, %v1076
      %v1765 = vmul.bf16 %v1749, %v1077
      %v1766 = vmul.bf16 %v1750, %v1078
      %v1767 = vld [vmem:[#allocation2 + $0x18] sm:$0xff]
      %v1768 = vld [vmem:[#allocation2 + $0x20] sm:$0xff]
      %v1769 = vld [vmem:[#allocation2 + $0x28] sm:$0xff]
      %v1770 = vld [vmem:[#allocation2 + $0x30] sm:$0xff]
      %v1771 = vld [vmem:[#allocation2 + $0x38] sm:$0xff]
      %v1772 = vld [vmem:[#allocation2 + $0x40] sm:$0xff]
      %v1773 = vld [vmem:[#allocation2 + $0x48] sm:$0xff]
      %v1774 = vld [vmem:[#allocation2 + $0x50] sm:$0xff]
      %v1775 = vld [vmem:[#allocation2 + $0x58] sm:$0xff]
      %v1776 = vld [vmem:[#allocation2 + $0x60] sm:$0xff]
      %v1777 = vld [vmem:[#allocation2 + $0x68] sm:$0xff]
      %v1778 = vld [vmem:[#allocation2 + $0x70] sm:$0xff]
      %v1779 = vld [vmem:[#allocation2 + $0x78] sm:$0xff]
      %v1780 = vld [vmem:[#allocation2 + $0x80] sm:$0xff]
      %v1781 = vld [vmem:[#allocation2 + $0x88] sm:$0xff]
      %v1782 = vld [vmem:[#allocation2 + $0x90] sm:$0xff]
      %v1783 = vld [vmem:[#allocation2 + $0x98] sm:$0xff]
      %v1784 = vld [vmem:[#allocation2 + $0xa0] sm:$0xff]
      %v1785 = vld [vmem:[#allocation2 + $0xa8] sm:$0xff]
      %v1786 = vld [vmem:[#allocation2 + $0xb0] sm:$0xff]
      %v1787 = vld [vmem:[#allocation2 + $0xb8] sm:$0xff]
      %v1788 = vld [vmem:[#allocation2 + $0xc0] sm:$0xff]
      %v1789 = vld [vmem:[#allocation2 + $0xc8] sm:$0xff]
      %v1790 = vld [vmem:[#allocation2 + $0xd0] sm:$0xff]
      %v1791 = vld [vmem:[#allocation2 + $0xd8] sm:$0xff]
      %v1792 = vld [vmem:[#allocation2 + $0xe0] sm:$0xff]
      %v1793 = vld [vmem:[#allocation2 + $0xe8] sm:$0xff]
      %v1794 = vld [vmem:[#allocation2 + $0xf0] sm:$0xff]
      %v1795 = vld [vmem:[#allocation2 + $0xf8] sm:$0xff]
      %v1796 = vld [vmem:[#allocation2 + $0x100] sm:$0xff]
      %v1797 = vld [vmem:[#allocation2 + $0x108] sm:$0xff]
      %v1798 = vld [vmem:[#allocation2 + $0x110] sm:$0xff]
      %v1799 = vpack.c.bf16 %v1768, %v1767
      %v1800 = vpack.c.bf16 %v1770, %v1769
      %v1801 = vpack.c.bf16 %v1772, %v1771
      %v1802 = vpack.c.bf16 %v1774, %v1773
      %v1803 = vpack.c.bf16 %v1776, %v1775
      %v1804 = vpack.c.bf16 %v1778, %v1777
      %v1805 = vpack.c.bf16 %v1780, %v1779
      %v1806 = vpack.c.bf16 %v1782, %v1781
      %v1807 = vpack.c.bf16 %v1784, %v1783
      %v1808 = vpack.c.bf16 %v1786, %v1785
      %v1809 = vpack.c.bf16 %v1788, %v1787
      %v1810 = vpack.c.bf16 %v1790, %v1789
      %v1811 = vpack.c.bf16 %v1792, %v1791
      %v1812 = vpack.c.bf16 %v1794, %v1793
      %v1813 = vpack.c.bf16 %v1796, %v1795
      %v1814 = vpack.c.bf16 %v1798, %v1797
      %v1815 = vld [vmem:[#allocation2 + $0x19] sm:$0xff]
      %v1816 = vld [vmem:[#allocation2 + $0x21] sm:$0xff]
      %v1817 = vld [vmem:[#allocation2 + $0x29] sm:$0xff]
      %v1818 = vld [vmem:[#allocation2 + $0x31] sm:$0xff]
      %v1819 = vld [vmem:[#allocation2 + $0x39] sm:$0xff]
      %v1820 = vld [vmem:[#allocation2 + $0x41] sm:$0xff]
      %v1821 = vld [vmem:[#allocation2 + $0x49] sm:$0xff]
      %v1822 = vld [vmem:[#allocation2 + $0x51] sm:$0xff]
      %v1823 = vld [vmem:[#allocation2 + $0x59] sm:$0xff]
      %v1824 = vld [vmem:[#allocation2 + $0x61] sm:$0xff]
      %v1825 = vld [vmem:[#allocation2 + $0x69] sm:$0xff]
      %v1826 = vld [vmem:[#allocation2 + $0x71] sm:$0xff]
      %v1827 = vld [vmem:[#allocation2 + $0x79] sm:$0xff]
      %v1828 = vld [vmem:[#allocation2 + $0x81] sm:$0xff]
      %v1829 = vld [vmem:[#allocation2 + $0x89] sm:$0xff]
      %v1830 = vld [vmem:[#allocation2 + $0x91] sm:$0xff]
      %v1831 = vld [vmem:[#allocation2 + $0x99] sm:$0xff]
      %v1832 = vld [vmem:[#allocation2 + $0xa1] sm:$0xff]
      %v1833 = vld [vmem:[#allocation2 + $0xa9] sm:$0xff]
      %v1834 = vld [vmem:[#allocation2 + $0xb1] sm:$0xff]
      %v1835 = vld [vmem:[#allocation2 + $0xb9] sm:$0xff]
      %v1836 = vld [vmem:[#allocation2 + $0xc1] sm:$0xff]
      %v1837 = vld [vmem:[#allocation2 + $0xc9] sm:$0xff]
      %v1838 = vld [vmem:[#allocation2 + $0xd1] sm:$0xff]
      %v1839 = vld [vmem:[#allocation2 + $0xd9] sm:$0xff]
      %v1840 = vld [vmem:[#allocation2 + $0xe1] sm:$0xff]
      %v1841 = vld [vmem:[#allocation2 + $0xe9] sm:$0xff]
      %v1842 = vld [vmem:[#allocation2 + $0xf1] sm:$0xff]
      %v1843 = vld [vmem:[#allocation2 + $0xf9] sm:$0xff]
      %v1844 = vld [vmem:[#allocation2 + $0x101] sm:$0xff]
      %v1845 = vld [vmem:[#allocation2 + $0x109] sm:$0xff]
      %v1846 = vld [vmem:[#allocation2 + $0x111] sm:$0xff]
      %v1847 = vpack.c.bf16 %v1816, %v1815
      %v1848 = vpack.c.bf16 %v1818, %v1817
      %v1849 = vpack.c.bf16 %v1820, %v1819
      %v1850 = vpack.c.bf16 %v1822, %v1821
      %v1851 = vpack.c.bf16 %v1824, %v1823
      %v1852 = vpack.c.bf16 %v1826, %v1825
      %v1853 = vpack.c.bf16 %v1828, %v1827
      %v1854 = vpack.c.bf16 %v1830, %v1829
      %v1855 = vpack.c.bf16 %v1832, %v1831
      %v1856 = vpack.c.bf16 %v1834, %v1833
      %v1857 = vpack.c.bf16 %v1836, %v1835
      %v1858 = vpack.c.bf16 %v1838, %v1837
      %v1859 = vpack.c.bf16 %v1840, %v1839
      %v1860 = vpack.c.bf16 %v1842, %v1841
      %v1861 = vpack.c.bf16 %v1844, %v1843
      %v1862 = vpack.c.bf16 %v1846, %v1845
      %v1863 = vmul.bf16 %v1847, %v1655
      %v1864 = vmul.bf16 %v1848, %v1656
      %v1865 = vmul.bf16 %v1849, %v1657
      %v1866 = vmul.bf16 %v1850, %v1658
      %v1867 = vmul.bf16 %v1851, %v1659
      %v1868 = vmul.bf16 %v1852, %v1660
      %v1869 = vmul.bf16 %v1853, %v1661
      %v1870 = vmul.bf16 %v1854, %v1662
      %v1871 = vmul.bf16 %v1855, %v1663
      %v1872 = vmul.bf16 %v1856, %v1664
      %v1873 = vmul.bf16 %v1857, %v1665
      %v1874 = vmul.bf16 %v1858, %v1666
      %v1875 = vmul.bf16 %v1859, %v1667
      %v1876 = vmul.bf16 %v1860, %v1668
      %v1877 = vmul.bf16 %v1861, %v1669
      %v1878 = vmul.bf16 %v1862, %v1670
      %v1879 = vld [vmem:[#allocation2 + $0x117] sm:$0xff]
      %v1880 = vld [vmem:[#allocation2 + $0x11f] sm:$0xff]
      %v1881 = vpack.c.bf16 %v1880, %v1879
      %v1882 = vmul.bf16 %v1736, %v1063
      %v1883 = vmul.bf16 %v1737, %v1064
      %v1884 = vmul.bf16 %v1738, %v1065
      %v1885 = vmul.bf16 %v1739, %v1066
      %v1886 = vmul.bf16 %v1740, %v1067
      %v1887 = vmul.bf16 %v1741, %v1068
      %v1888 = vmul.bf16 %v1742, %v1069
      %v1889 = vmul.bf16 %v1743, %v1070
      %v1890 = vmul.bf16 %v1744, %v1071
      %v1891 = vmul.bf16 %v1745, %v1072
      %v1892 = vmul.bf16 %v1746, %v1073
      %v1893 = vmul.bf16 %v1747, %v1074
      %v1894 = vmul.bf16 %v1748, %v1075
      %v1895 = vmul.bf16 %v1749, %v1076
      %v1896 = vmul.bf16 %v1750, %v1077
      %v1897 = vmul.bf16 %v1881, %v1078
      %v1898 = vld [vmem:[#allocation2 + $0x118] sm:$0xff]
      %v1899 = vld [vmem:[#allocation2 + $0x120] sm:$0xff]
      %v1900 = vpack.c.bf16 %v1899, %v1898
      %v1901 = vld [vmem:[#allocation2 + $0x119] sm:$0xff]
      %v1902 = vld [vmem:[#allocation2 + $0x121] sm:$0xff]
      %v1903 = vpack.c.bf16 %v1902, %v1901
      %v1904 = vmul.bf16 %v1848, %v1655
      %v1905 = vmul.bf16 %v1849, %v1656
      %v1906 = vmul.bf16 %v1850, %v1657
      %v1907 = vmul.bf16 %v1851, %v1658
      %v1908 = vmul.bf16 %v1852, %v1659
      %v1909 = vmul.bf16 %v1853, %v1660
      %v1910 = vmul.bf16 %v1854, %v1661
      %v1911 = vmul.bf16 %v1855, %v1662
      %v1912 = vmul.bf16 %v1856, %v1663
      %v1913 = vmul.bf16 %v1857, %v1664
      %v1914 = vmul.bf16 %v1858, %v1665
      %v1915 = vmul.bf16 %v1859, %v1666
      %v1916 = vmul.bf16 %v1860, %v1667
      %v1917 = vmul.bf16 %v1861, %v1668
      %v1918 = vmul.bf16 %v1862, %v1669
      %v1919 = vmul.bf16 %v1903, %v1670
      %1936 = vrot.lane.b32.xlu0 %v1143, 32
      %v1937 = vpop.permute.xlu0 %1936
      %1938 = vrot.lane.b32.xlu0 %v1144, 32
      %v1939 = vpop.permute.xlu0 %1938
      %1940 = vrot.lane.b32.xlu0 %v1145, 32
      %v1941 = vpop.permute.xlu0 %1940
      %1942 = vrot.lane.b32.xlu0 %v1146, 32
      %v1943 = vpop.permute.xlu0 %1942
      %1944 = vrot.lane.b32.xlu0 %v1147, 32
      %v1945 = vpop.permute.xlu0 %1944
      %1946 = vrot.lane.b32.xlu0 %v1148, 32
      %v1947 = vpop.permute.xlu0 %1946
      %1948 = vrot.lane.b32.xlu0 %v1149, 32
      %v1949 = vpop.permute.xlu0 %1948
      %1950 = vrot.lane.b32.xlu0 %v1150, 32
      %v1951 = vpop.permute.xlu0 %1950
      %1952 = vrot.lane.b32.xlu0 %v1151, 32
      %v1953 = vpop.permute.xlu0 %1952
      %1954 = vrot.lane.b32.xlu0 %v1152, 32
      %v1955 = vpop.permute.xlu0 %1954
      %1956 = vrot.lane.b32.xlu0 %v1153, 32
      %v1957 = vpop.permute.xlu0 %1956
      %1958 = vrot.lane.b32.xlu0 %v1154, 32
      %v1959 = vpop.permute.xlu0 %1958
      %1960 = vrot.lane.b32.xlu0 %v1155, 32
      %v1961 = vpop.permute.xlu0 %1960
      %1962 = vrot.lane.b32.xlu0 %v1156, 32
      %v1963 = vpop.permute.xlu0 %1962
      %1964 = vrot.lane.b32.xlu0 %v1157, 32
      %v1965 = vpop.permute.xlu0 %1964
      %1966 = vrot.lane.b32.xlu0 %v1158, 32
      %v1967 = vpop.permute.xlu0 %1966
      %1984 = vrot.lane.b32.xlu0 %v1687, 64
      %v1985 = vpop.permute.xlu0 %1984
      %1986 = vrot.lane.b32.xlu0 %v1688, 64
      %v1987 = vpop.permute.xlu0 %1986
      %1988 = vrot.lane.b32.xlu0 %v1689, 64
      %v1989 = vpop.permute.xlu0 %1988
      %1990 = vrot.lane.b32.xlu0 %v1690, 64
      %v1991 = vpop.permute.xlu0 %1990
      %1992 = vrot.lane.b32.xlu0 %v1691, 64
      %v1993 = vpop.permute.xlu0 %1992
      %1994 = vrot.lane.b32.xlu0 %v1692, 64
      %v1995 = vpop.permute.xlu0 %1994
      %1996 = vrot.lane.b32.xlu0 %v1693, 64
      %v1997 = vpop.permute.xlu0 %1996
      %1998 = vrot.lane.b32.xlu0 %v1694, 64
      %v1999 = vpop.permute.xlu0 %1998
      %2000 = vrot.lane.b32.xlu0 %v1695, 64
      %v2001 = vpop.permute.xlu0 %2000
      %2002 = vrot.lane.b32.xlu0 %v1696, 64
      %v2003 = vpop.permute.xlu0 %2002
      %2004 = vrot.lane.b32.xlu0 %v1697, 64
      %v2005 = vpop.permute.xlu0 %2004
      %2006 = vrot.lane.b32.xlu0 %v1698, 64
      %v2007 = vpop.permute.xlu0 %2006
      %2008 = vrot.lane.b32.xlu0 %v1699, 64
      %v2009 = vpop.permute.xlu0 %2008
      %2010 = vrot.lane.b32.xlu0 %v1700, 64
      %v2011 = vpop.permute.xlu0 %2010
      %2012 = vrot.lane.b32.xlu0 %v1701, 64
      %v2013 = vpop.permute.xlu0 %2012
      %2014 = vrot.lane.b32.xlu0 %v1702, 64
      %v2015 = vpop.permute.xlu0 %2014
      %2032 = vrot.lane.b32.xlu0 %v1751, 96
      %v2033 = vpop.permute.xlu0 %2032
      %2034 = vrot.lane.b32.xlu0 %v1752, 96
      %v2035 = vpop.permute.xlu0 %2034
      %2036 = vrot.lane.b32.xlu0 %v1753, 96
      %v2037 = vpop.permute.xlu0 %2036
      %2038 = vrot.lane.b32.xlu0 %v1754, 96
      %v2039 = vpop.permute.xlu0 %2038
      %2040 = vrot.lane.b32.xlu0 %v1755, 96
      %v2041 = vpop.permute.xlu0 %2040
      %2042 = vrot.lane.b32.xlu0 %v1756, 96
      %v2043 = vpop.permute.xlu0 %2042
      %2044 = vrot.lane.b32.xlu0 %v1757, 96
      %v2045 = vpop.permute.xlu0 %2044
      %2046 = vrot.lane.b32.xlu0 %v1758, 96
      %v2047 = vpop.permute.xlu0 %2046
      %2048 = vrot.lane.b32.xlu0 %v1759, 96
      %v2049 = vpop.permute.xlu0 %2048
      %2050 = vrot.lane.b32.xlu0 %v1760, 96
      %v2051 = vpop.permute.xlu0 %2050
      %2052 = vrot.lane.b32.xlu0 %v1761, 96
      %v2053 = vpop.permute.xlu0 %2052
      %2054 = vrot.lane.b32.xlu0 %v1762, 96
      %v2055 = vpop.permute.xlu0 %2054
      %2056 = vrot.lane.b32.xlu0 %v1763, 96
      %v2057 = vpop.permute.xlu0 %2056
      %2058 = vrot.lane.b32.xlu0 %v1764, 96
      %v2059 = vpop.permute.xlu0 %2058
      %2060 = vrot.lane.b32.xlu0 %v1765, 96
      %v2061 = vpop.permute.xlu0 %2060
      %2062 = vrot.lane.b32.xlu0 %v1766, 96
      %v2063 = vpop.permute.xlu0 %2062
      %2080 = vrot.lane.b32.xlu0 %v1863, 32
      %v2081 = vpop.permute.xlu0 %2080
      %2082 = vrot.lane.b32.xlu0 %v1864, 32
      %v2083 = vpop.permute.xlu0 %2082
      %2084 = vrot.lane.b32.xlu0 %v1865, 32
      %v2085 = vpop.permute.xlu0 %2084
      %2086 = vrot.lane.b32.xlu0 %v1866, 32
      %v2087 = vpop.permute.xlu0 %2086
      %2088 = vrot.lane.b32.xlu0 %v1867, 32
      %v2089 = vpop.permute.xlu0 %2088
      %2090 = vrot.lane.b32.xlu0 %v1868, 32
      %v2091 = vpop.permute.xlu0 %2090
      %2092 = vrot.lane.b32.xlu0 %v1869, 32
      %v2093 = vpop.permute.xlu0 %2092
      %2094 = vrot.lane.b32.xlu0 %v1870, 32
      %v2095 = vpop.permute.xlu0 %2094
      %2096 = vrot.lane.b32.xlu0 %v1871, 32
      %v2097 = vpop.permute.xlu0 %2096
      %2098 = vrot.lane.b32.xlu0 %v1872, 32
      %v2099 = vpop.permute.xlu0 %2098
      %2100 = vrot.lane.b32.xlu0 %v1873, 32
      %v2101 = vpop.permute.xlu0 %2100
      %2102 = vrot.lane.b32.xlu0 %v1874, 32
      %v2103 = vpop.permute.xlu0 %2102
      %2104 = vrot.lane.b32.xlu0 %v1875, 32
      %v2105 = vpop.permute.xlu0 %2104
      %2106 = vrot.lane.b32.xlu0 %v1876, 32
      %v2107 = vpop.permute.xlu0 %2106
      %2108 = vrot.lane.b32.xlu0 %v1877, 32
      %v2109 = vpop.permute.xlu0 %2108
      %2110 = vrot.lane.b32.xlu0 %v1878, 32
      %v2111 = vpop.permute.xlu0 %2110
      %2128 = vrot.lane.b32.xlu0 %v1882, 64
      %v2129 = vpop.permute.xlu0 %2128
      %2130 = vrot.lane.b32.xlu0 %v1883, 64
      %v2131 = vpop.permute.xlu0 %2130
      %2132 = vrot.lane.b32.xlu0 %v1884, 64
      %v2133 = vpop.permute.xlu0 %2132
      %2134 = vrot.lane.b32.xlu0 %v1885, 64
      %v2135 = vpop.permute.xlu0 %2134
      %2136 = vrot.lane.b32.xlu0 %v1886, 64
      %v2137 = vpop.permute.xlu0 %2136
      %2138 = vrot.lane.b32.xlu0 %v1887, 64
      %v2139 = vpop.permute.xlu0 %2138
      %2140 = vrot.lane.b32.xlu0 %v1888, 64
      %v2141 = vpop.permute.xlu0 %2140
      %2142 = vrot.lane.b32.xlu0 %v1889, 64
      %v2143 = vpop.permute.xlu0 %2142
      %2144 = vrot.lane.b32.xlu0 %v1890, 64
      %v2145 = vpop.permute.xlu0 %2144
      %2146 = vrot.lane.b32.xlu0 %v1891, 64
      %v2147 = vpop.permute.xlu0 %2146
      %2148 = vrot.lane.b32.xlu0 %v1892, 64
      %v2149 = vpop.permute.xlu0 %2148
      %2150 = vrot.lane.b32.xlu0 %v1893, 64
      %v2151 = vpop.permute.xlu0 %2150
      %2152 = vrot.lane.b32.xlu0 %v1894, 64
      %v2153 = vpop.permute.xlu0 %2152
      %2154 = vrot.lane.b32.xlu0 %v1895, 64
      %v2155 = vpop.permute.xlu0 %2154
      %2156 = vrot.lane.b32.xlu0 %v1896, 64
      %v2157 = vpop.permute.xlu0 %2156
      %2158 = vrot.lane.b32.xlu0 %v1897, 64
      %v2159 = vpop.permute.xlu0 %2158
      %2176 = vrot.lane.b32.xlu0 %v1800, 96
      %v2177 = vpop.permute.xlu0 %2176
      %2178 = vrot.lane.b32.xlu0 %v1801, 96
      %v2179 = vpop.permute.xlu0 %2178
      %2180 = vrot.lane.b32.xlu0 %v1802, 96
      %v2181 = vpop.permute.xlu0 %2180
      %2182 = vrot.lane.b32.xlu0 %v1803, 96
      %v2183 = vpop.permute.xlu0 %2182
      %2184 = vrot.lane.b32.xlu0 %v1804, 96
      %v2185 = vpop.permute.xlu0 %2184
      %2186 = vrot.lane.b32.xlu0 %v1805, 96
      %v2187 = vpop.permute.xlu0 %2186
      %2188 = vrot.lane.b32.xlu0 %v1806, 96
      %v2189 = vpop.permute.xlu0 %2188
      %2190 = vrot.lane.b32.xlu0 %v1807, 96
      %v2191 = vpop.permute.xlu0 %2190
      %2192 = vrot.lane.b32.xlu0 %v1808, 96
      %v2193 = vpop.permute.xlu0 %2192
      %2194 = vrot.lane.b32.xlu0 %v1809, 96
      %v2195 = vpop.permute.xlu0 %2194
      %2196 = vrot.lane.b32.xlu0 %v1810, 96
      %v2197 = vpop.permute.xlu0 %2196
      %2198 = vrot.lane.b32.xlu0 %v1811, 96
      %v2199 = vpop.permute.xlu0 %2198
      %2200 = vrot.lane.b32.xlu0 %v1812, 96
      %v2201 = vpop.permute.xlu0 %2200
      %2202 = vrot.lane.b32.xlu0 %v1813, 96
      %v2203 = vpop.permute.xlu0 %2202
      %2204 = vrot.lane.b32.xlu0 %v1814, 96
      %v2205 = vpop.permute.xlu0 %2204
      %2206 = vrot.lane.b32.xlu0 %v1900, 96
      %v2207 = vpop.permute.xlu0 %2206
      %v2210 = vsel %vm342, %v1095, %v1937
      %v2213 = vsel %vm342, %v1096, %v1939
      %v2216 = vsel %vm342, %v1097, %v1941
      %v2219 = vsel %vm342, %v1098, %v1943
      %v2222 = vsel %vm342, %v1099, %v1945
      %v2225 = vsel %vm342, %v1100, %v1947
      %v2228 = vsel %vm342, %v1101, %v1949
      %v2231 = vsel %vm342, %v1102, %v1951
      %v2234 = vsel %vm342, %v1103, %v1953
      %v2237 = vsel %vm342, %v1104, %v1955
      %v2240 = vsel %vm342, %v1105, %v1957
      %v2243 = vsel %vm342, %v1106, %v1959
      %v2246 = vsel %vm342, %v1107, %v1961
      %v2249 = vsel %vm342, %v1108, %v1963
      %v2252 = vsel %vm342, %v1109, %v1965
      %v2255 = vsel %vm342, %v1110, %v1967
      %vm2256 = vcmask 523264
      %v2258 = vsel %vm2256, %v2210, %v1985
      %v2260 = vsel %vm2256, %v2213, %v1987
      %v2262 = vsel %vm2256, %v2216, %v1989
      %v2264 = vsel %vm2256, %v2219, %v1991
      %v2266 = vsel %vm2256, %v2222, %v1993
      %v2268 = vsel %vm2256, %v2225, %v1995
      %v2270 = vsel %vm2256, %v2228, %v1997
      %v2272 = vsel %vm2256, %v2231, %v1999
      %v2274 = vsel %vm2256, %v2234, %v2001
      %v2276 = vsel %vm2256, %v2237, %v2003
      %v2278 = vsel %vm2256, %v2240, %v2005
      %v2280 = vsel %vm2256, %v2243, %v2007
      %v2282 = vsel %vm2256, %v2246, %v2009
      %v2284 = vsel %vm2256, %v2249, %v2011
      %v2286 = vsel %vm2256, %v2252, %v2013
      %v2288 = vsel %vm2256, %v2255, %v2015
      %vm2289 = vcmask 785408
      %v2291 = vsel %vm2289, %v2258, %v2033
      %v2294 = vsel %vm2289, %v2260, %v2035
      %v2297 = vsel %vm2289, %v2262, %v2037
      %v2300 = vsel %vm2289, %v2264, %v2039
      %v2303 = vsel %vm2289, %v2266, %v2041
      %v2306 = vsel %vm2289, %v2268, %v2043
      %v2309 = vsel %vm2289, %v2270, %v2045
      %v2312 = vsel %vm2289, %v2272, %v2047
      %v2315 = vsel %vm2289, %v2274, %v2049
      %v2318 = vsel %vm2289, %v2276, %v2051
      %v2321 = vsel %vm2289, %v2278, %v2053
      %v2324 = vsel %vm2289, %v2280, %v2055
      %v2327 = vsel %vm2289, %v2282, %v2057
      %v2330 = vsel %vm2289, %v2284, %v2059
      %v2333 = vsel %vm2289, %v2286, %v2061
      %v2336 = vsel %vm2289, %v2288, %v2063
      %v2340 = vsel %vm342, %v1799, %v2081
      %v2343 = vsel %vm342, %v1800, %v2083
      %v2346 = vsel %vm342, %v1801, %v2085
      %v2349 = vsel %vm342, %v1802, %v2087
      %v2352 = vsel %vm342, %v1803, %v2089
      %v2355 = vsel %vm342, %v1804, %v2091
      %v2358 = vsel %vm342, %v1805, %v2093
      %v2361 = vsel %vm342, %v1806, %v2095
      %v2364 = vsel %vm342, %v1807, %v2097
      %v2367 = vsel %vm342, %v1808, %v2099
      %v2370 = vsel %vm342, %v1809, %v2101
      %v2373 = vsel %vm342, %v1810, %v2103
      %v2376 = vsel %vm342, %v1811, %v2105
      %v2379 = vsel %vm342, %v1812, %v2107
      %v2382 = vsel %vm342, %v1813, %v2109
      %v2385 = vsel %vm342, %v1814, %v2111
      %v2387 = vsel %vm2256, %v2340, %v2129
      %v2389 = vsel %vm2256, %v2343, %v2131
      %v2391 = vsel %vm2256, %v2346, %v2133
      %v2393 = vsel %vm2256, %v2349, %v2135
      %v2395 = vsel %vm2256, %v2352, %v2137
      %v2397 = vsel %vm2256, %v2355, %v2139
      %v2399 = vsel %vm2256, %v2358, %v2141
      %v2401 = vsel %vm2256, %v2361, %v2143
      %v2403 = vsel %vm2256, %v2364, %v2145
      %v2405 = vsel %vm2256, %v2367, %v2147
      %v2407 = vsel %vm2256, %v2370, %v2149
      %v2409 = vsel %vm2256, %v2373, %v2151
      %v2411 = vsel %vm2256, %v2376, %v2153
      %v2413 = vsel %vm2256, %v2379, %v2155
      %v2415 = vsel %vm2256, %v2382, %v2157
      %v2417 = vsel %vm2256, %v2385, %v2159
      %v2419 = vsel %vm2289, %v2387, %v2177
      %v2422 = vsel %vm2289, %v2389, %v2179
      %v2425 = vsel %vm2289, %v2391, %v2181
      %v2428 = vsel %vm2289, %v2393, %v2183
      %v2431 = vsel %vm2289, %v2395, %v2185
      %v2434 = vsel %vm2289, %v2397, %v2187
      %v2437 = vsel %vm2289, %v2399, %v2189
      %v2440 = vsel %vm2289, %v2401, %v2191
      %v2443 = vsel %vm2289, %v2403, %v2193
      %v2446 = vsel %vm2289, %v2405, %v2195
      %v2449 = vsel %vm2289, %v2407, %v2197
      %v2452 = vsel %vm2289, %v2409, %v2199
      %v2455 = vsel %vm2289, %v2411, %v2201
      %v2458 = vsel %vm2289, %v2413, %v2203
      %v2461 = vsel %vm2289, %v2415, %v2205
      %v2464 = vsel %vm2289, %v2417, %v2207
      %v2466 = vld [vmem:[%s3] sm:$0xf]
      %v2467 = vld [vmem:[%s3 + $0x4] sm:$0xf]
      %v2468 = vld [vmem:[%s3 + $0x8] sm:$0xf]
      %v2469 = vld [vmem:[%s3 + $0xc] sm:$0xf]
      %v2470 = vld [vmem:[%s3 + $0x10] sm:$0xf]
      %v2471 = vld [vmem:[%s3 + $0x14] sm:$0xf]
      %v2472 = vld [vmem:[%s3 + $0x18] sm:$0xf]
      %v2473 = vld [vmem:[%s3 + $0x1c] sm:$0xf]
      %v2474 = vld [vmem:[%s3 + $0x20] sm:$0xf]
      %v2475 = vld [vmem:[%s3 + $0x24] sm:$0xf]
      %v2476 = vld [vmem:[%s3 + $0x28] sm:$0xf]
      %v2477 = vld [vmem:[%s3 + $0x2c] sm:$0xf]
      %v2478 = vld [vmem:[%s3 + $0x30] sm:$0xf]
      %v2479 = vld [vmem:[%s3 + $0x34] sm:$0xf]
      %v2480 = vld [vmem:[%s3 + $0x38] sm:$0xf]
      %v2481 = vld [vmem:[%s3 + $0x3c] sm:$0xf]
      %v2482 = vld [vmem:[%s3 + $0x40] sm:$0xf]
      %v2483 = vld [vmem:[%s3 + $0x44] sm:$0xf]
      %v2484 = vld [vmem:[%s3 + $0x48] sm:$0xf]
      %v2485 = vld [vmem:[%s3 + $0x4c] sm:$0xf]
      %v2486 = vld [vmem:[%s3 + $0x50] sm:$0xf]
      %v2487 = vld [vmem:[%s3 + $0x54] sm:$0xf]
      %v2488 = vld [vmem:[%s3 + $0x58] sm:$0xf]
      %v2489 = vld [vmem:[%s3 + $0x5c] sm:$0xf]
      %v2490 = vld [vmem:[%s3 + $0x60] sm:$0xf]
      %v2491 = vld [vmem:[%s3 + $0x64] sm:$0xf]
      %v2492 = vld [vmem:[%s3 + $0x68] sm:$0xf]
      %v2493 = vld [vmem:[%s3 + $0x6c] sm:$0xf]
      %v2494 = vld [vmem:[%s3 + $0x70] sm:$0xf]
      %v2495 = vld [vmem:[%s3 + $0x74] sm:$0xf]
      %v2496 = vld [vmem:[%s3 + $0x78] sm:$0xf]
      %v2497 = vld [vmem:[%s3 + $0x7c] sm:$0xf]
      %v2498 = vld [vmem:[%s3 + $0x80] sm:$0xf]
      %v2499 = vld [vmem:[%s3 + $0x84] sm:$0xf]
      %v2500 = vld [vmem:[%s3 + $0x88] sm:$0xf]
      %v2501 = vld [vmem:[%s3 + $0x8c] sm:$0xf]
      %v2538 = vunpack.c.l.b16 %v2466
      %v2539 = vunpack.c.l.b16 %v2467
      %v2540 = vunpack.c.l.b16 %v2468
      %v2541 = vunpack.c.l.b16 %v2469
      %v2542 = vunpack.c.l.b16 %v2470
      %v2543 = vunpack.c.l.b16 %v2471
      %v2544 = vunpack.c.l.b16 %v2472
      %v2545 = vunpack.c.l.b16 %v2473
      %v2546 = vunpack.c.l.b16 %v2474
      %v2547 = vunpack.c.l.b16 %v2475
      %v2548 = vunpack.c.l.b16 %v2476
      %v2549 = vunpack.c.l.b16 %v2477
      %v2550 = vunpack.c.l.b16 %v2478
      %v2551 = vunpack.c.l.b16 %v2479
      %v2552 = vunpack.c.l.b16 %v2480
      %v2553 = vunpack.c.l.b16 %v2481
      %v2554 = vunpack.c.l.b16 %v2482
      %v2555 = vunpack.c.l.b16 %v2483
      %v2556 = vunpack.c.l.b16 %v2484
      %v2557 = vunpack.c.l.b16 %v2485
      %v2558 = vunpack.c.l.b16 %v2486
      %v2559 = vunpack.c.l.b16 %v2487
      %v2560 = vunpack.c.l.b16 %v2488
      %v2561 = vunpack.c.l.b16 %v2489
      %v2562 = vunpack.c.l.b16 %v2490
      %v2563 = vunpack.c.l.b16 %v2491
      %v2564 = vunpack.c.l.b16 %v2492
      %v2565 = vunpack.c.l.b16 %v2493
      %v2566 = vunpack.c.l.b16 %v2494
      %v2567 = vunpack.c.l.b16 %v2495
      %v2568 = vunpack.c.l.b16 %v2496
      %v2569 = vunpack.c.l.b16 %v2497
      %v2570 = vunpack.c.l.b16 %v2498
      %v2571 = vunpack.c.l.b16 %v2499
      %v2572 = vunpack.c.l.b16 %v2500
      %v2573 = vunpack.c.l.b16 %v2501
      %v2574 = vpack.c.b16 %v2539, %v2538
      %v2575 = vpack.c.b16 %v2541, %v2540
      %v2576 = vpack.c.b16 %v2543, %v2542
      %v2577 = vpack.c.b16 %v2545, %v2544
      %v2578 = vpack.c.b16 %v2547, %v2546
      %v2579 = vpack.c.b16 %v2549, %v2548
      %v2580 = vpack.c.b16 %v2551, %v2550
      %v2581 = vpack.c.b16 %v2553, %v2552
      %v2582 = vpack.c.b16 %v2555, %v2554
      %v2583 = vpack.c.b16 %v2557, %v2556
      %v2584 = vpack.c.b16 %v2559, %v2558
      %v2585 = vpack.c.b16 %v2561, %v2560
      %v2586 = vpack.c.b16 %v2563, %v2562
      %v2587 = vpack.c.b16 %v2565, %v2564
      %v2588 = vpack.c.b16 %v2567, %v2566
      %v2589 = vpack.c.b16 %v2569, %v2568
      %v2590 = vpack.c.b16 %v2571, %v2570
      %v2591 = vpack.c.b16 %v2573, %v2572
      %v2611 = vsel %vm342, %v1904, 0
      %v2614 = vsel %vm342, %v1905, 0
      %v2617 = vsel %vm342, %v1906, 0
      %v2620 = vsel %vm342, %v1907, 0
      %v2623 = vsel %vm342, %v1908, 0
      %v2626 = vsel %vm342, %v1909, 0
      %v2629 = vsel %vm342, %v1910, 0
      %v2632 = vsel %vm342, %v1911, 0
      %v2635 = vsel %vm342, %v1912, 0
      %v2638 = vsel %vm342, %v1913, 0
      %v2641 = vsel %vm342, %v1914, 0
      %v2644 = vsel %vm342, %v1915, 0
      %v2647 = vsel %vm342, %v1916, 0
      %v2650 = vsel %vm342, %v1917, 0
      %v2653 = vsel %vm342, %v1918, 0
      %v2656 = vsel %vm342, %v1919, 0
      %2658 = vmatprep.subr.bf16.mxu0 0
      %2659 = vmatpush1.bf16.msra.mxu0 %v2581
      %2660 = vmatprep.subr.bf16.mxu0 0
      %2661 = vmatpush1.bf16.msra.mxu0 %v2580
      %2662 = vmatprep.subr.bf16.mxu0 0
      %2663 = vmatpush1.bf16.msra.mxu0 %v2579
      %2664 = vmatprep.subr.bf16.mxu0 0
      %2665 = vmatpush1.bf16.msra.mxu0 %v2578
      %2666 = vmatprep.subr.bf16.mxu0 0
      %2667 = vmatpush1.bf16.msra.mxu0 %v2577
      %2668 = vmatprep.subr.bf16.mxu0 0
      %2669 = vmatpush1.bf16.msra.mxu0 %v2576
      %2670 = vmatprep.subr.bf16.mxu0 0
      %2671 = vmatpush1.bf16.msra.mxu0 %v2575
      %2672 = vmatprep.subr.bf16.mxu0 0
      %2673 = vmatpush1.bf16.msra.mxu0 %v2574
      %2674 = vmatprep.subr.bf16.mxu0 0
      %2675 = vmatpush2.bf16.msra.mxu0 %v2589
      %2676 = vmatprep.subr.bf16.mxu0 0
      %2677 = vmatpush2.bf16.msra.mxu0 %v2588
      %2678 = vmatprep.subr.bf16.mxu0 0
      %2679 = vmatpush2.bf16.msra.mxu0 %v2587
      %2680 = vmatprep.subr.bf16.mxu0 0
      %2681 = vmatpush2.bf16.msra.mxu0 %v2586
      %2682 = vmatprep.subr.bf16.mxu0 0
      %2683 = vmatpush2.bf16.msra.mxu0 %v2585
      %2684 = vmatprep.subr.bf16.mxu0 0
      %2685 = vmatpush2.bf16.msra.mxu0 %v2584
      %2686 = vmatprep.subr.bf16.mxu0 0
      %2687 = vmatpush2.bf16.msra.mxu0 %v2583
      %2688 = vmatprep.subr.bf16.mxu0 0
      %2689 = vmatpush2.bf16.msra.mxu0 %v2582
      %2690 = vmatprep.mubr.bf16.mxu0 %v2419
      %2691 = vmatmul.mubr.bf16.gmra.mxu0 %v2291
      %v2692 = vpop.f32.mrf.mxu0
      %v2693 = vadd.f32 0.0, %v2692
      %v2694 = vpop.f32.mrf.mxu0
      %v2695 = vpop.f32.mrf.mxu0
      %v2696 = vadd.f32 0.0, %v2695
      %v2697 = vpop.f32.mrf.mxu0
      %2698 = vmatprep.mubr.bf16.mxu0 %v2422
      %2699 = vmatmul.mubr.bf16.gmra.mxu0 %v2294
      %v2700 = vpop.f32.mrf.mxu0
      %v2701 = vadd.f32 0.0, %v2700
      %v2702 = vpop.f32.mrf.mxu0
      %v2703 = vpop.f32.mrf.mxu0
      %v2704 = vadd.f32 0.0, %v2703
      %v2705 = vpop.f32.mrf.mxu0
      %2706 = vmatprep.mubr.bf16.mxu0 %v2425
      %2707 = vmatmul.mubr.bf16.gmra.mxu0 %v2297
      %v2708 = vpop.f32.mrf.mxu0
      %v2709 = vadd.f32 0.0, %v2708
      %v2710 = vpop.f32.mrf.mxu0
      %v2711 = vpop.f32.mrf.mxu0
      %v2712 = vadd.f32 0.0, %v2711
      %v2713 = vpop.f32.mrf.mxu0
      %2714 = vmatprep.mubr.bf16.mxu0 %v2428
      %2715 = vmatmul.mubr.bf16.gmra.mxu0 %v2300
      %v2716 = vpop.f32.mrf.mxu0
      %v2717 = vadd.f32 0.0, %v2716
      %v2718 = vpop.f32.mrf.mxu0
      %v2719 = vpop.f32.mrf.mxu0
      %v2720 = vadd.f32 0.0, %v2719
      %v2721 = vpop.f32.mrf.mxu0
      %2722 = vmatprep.mubr.bf16.mxu0 %v2431
      %2723 = vmatmul.mubr.bf16.gmra.mxu0 %v2303
      %v2724 = vpop.f32.mrf.mxu0
      %v2725 = vadd.f32 0.0, %v2724
      %v2726 = vpop.f32.mrf.mxu0
      %v2727 = vpop.f32.mrf.mxu0
      %v2728 = vadd.f32 0.0, %v2727
      %v2729 = vpop.f32.mrf.mxu0
      %2730 = vmatprep.mubr.bf16.mxu0 %v2434
      %2731 = vmatmul.mubr.bf16.gmra.mxu0 %v2306
      %v2732 = vpop.f32.mrf.mxu0
      %v2733 = vadd.f32 0.0, %v2732
      %v2734 = vpop.f32.mrf.mxu0
      %v2735 = vpop.f32.mrf.mxu0
      %v2736 = vadd.f32 0.0, %v2735
      %v2737 = vpop.f32.mrf.mxu0
      %2738 = vmatprep.mubr.bf16.mxu0 %v2437
      %2739 = vmatmul.mubr.bf16.gmra.mxu0 %v2309
      %v2740 = vpop.f32.mrf.mxu0
      %v2741 = vadd.f32 0.0, %v2740
      %v2742 = vpop.f32.mrf.mxu0
      %v2743 = vpop.f32.mrf.mxu0
      %v2744 = vadd.f32 0.0, %v2743
      %v2745 = vpop.f32.mrf.mxu0
      %2746 = vmatprep.mubr.bf16.mxu0 %v2440
      %2747 = vmatmul.mubr.bf16.gmra.mxu0 %v2312
      %v2748 = vpop.f32.mrf.mxu0
      %v2749 = vadd.f32 0.0, %v2748
      %v2750 = vpop.f32.mrf.mxu0
      %v2751 = vpop.f32.mrf.mxu0
      %v2752 = vadd.f32 0.0, %v2751
      %v2753 = vpop.f32.mrf.mxu0
      %2754 = vmatprep.mubr.bf16.mxu0 %v2443
      %2755 = vmatmul.mubr.bf16.gmra.mxu0 %v2315
      %v2756 = vpop.f32.mrf.mxu0
      %v2757 = vadd.f32 0.0, %v2756
      %v2758 = vpop.f32.mrf.mxu0
      %v2759 = vpop.f32.mrf.mxu0
      %v2760 = vadd.f32 0.0, %v2759
      %v2761 = vpop.f32.mrf.mxu0
      %2762 = vmatprep.mubr.bf16.mxu0 %v2446
      %2763 = vmatmul.mubr.bf16.gmra.mxu0 %v2318
      %v2764 = vpop.f32.mrf.mxu0
      %v2765 = vadd.f32 0.0, %v2764
      %v2766 = vpop.f32.mrf.mxu0
      %v2767 = vpop.f32.mrf.mxu0
      %v2768 = vadd.f32 0.0, %v2767
      %v2769 = vpop.f32.mrf.mxu0
      %2770 = vmatprep.mubr.bf16.mxu0 %v2449
      %2771 = vmatmul.mubr.bf16.gmra.mxu0 %v2321
      %v2772 = vpop.f32.mrf.mxu0
      %v2773 = vadd.f32 0.0, %v2772
      %v2774 = vpop.f32.mrf.mxu0
      %v2775 = vpop.f32.mrf.mxu0
      %v2776 = vadd.f32 0.0, %v2775
      %v2777 = vpop.f32.mrf.mxu0
      %2778 = vmatprep.mubr.bf16.mxu0 %v2452
      %2779 = vmatmul.mubr.bf16.gmra.mxu0 %v2324
      %v2780 = vpop.f32.mrf.mxu0
      %v2781 = vadd.f32 0.0, %v2780
      %v2782 = vpop.f32.mrf.mxu0
      %v2783 = vpop.f32.mrf.mxu0
      %v2784 = vadd.f32 0.0, %v2783
      %v2785 = vpop.f32.mrf.mxu0
      %2786 = vmatprep.mubr.bf16.mxu0 %v2455
      %2787 = vmatmul.mubr.bf16.gmra.mxu0 %v2327
      %v2788 = vpop.f32.mrf.mxu0
      %v2789 = vadd.f32 0.0, %v2788
      %v2790 = vpop.f32.mrf.mxu0
      %v2791 = vpop.f32.mrf.mxu0
      %v2792 = vadd.f32 0.0, %v2791
      %v2793 = vpop.f32.mrf.mxu0
      %2794 = vmatprep.mubr.bf16.mxu0 %v2458
      %2795 = vmatmul.mubr.bf16.gmra.mxu0 %v2330
      %v2796 = vpop.f32.mrf.mxu0
      %v2797 = vadd.f32 0.0, %v2796
      %v2798 = vpop.f32.mrf.mxu0
      %v2799 = vpop.f32.mrf.mxu0
      %v2800 = vadd.f32 0.0, %v2799
      %v2801 = vpop.f32.mrf.mxu0
      %2802 = vmatprep.mubr.bf16.mxu0 %v2461
      %2803 = vmatmul.mubr.bf16.gmra.mxu0 %v2333
      %v2804 = vpop.f32.mrf.mxu0
      %v2805 = vadd.f32 0.0, %v2804
      %v2806 = vpop.f32.mrf.mxu0
      %v2807 = vpop.f32.mrf.mxu0
      %v2808 = vadd.f32 0.0, %v2807
      %v2809 = vpop.f32.mrf.mxu0
      %2810 = vmatprep.mubr.bf16.mxu0 %v2464
      %2811 = vmatmul.mubr.bf16.gmra.mxu0 %v2336
      %v2812 = vpop.f32.mrf.mxu0
      %v2813 = vadd.f32 0.0, %v2812
      %v2814 = vpop.f32.mrf.mxu0
      %v2815 = vpop.f32.mrf.mxu0
      %v2816 = vadd.f32 0.0, %v2815
      %v2817 = vpop.f32.mrf.mxu0
      %2818 = vdwg.mxu0
      %2819 = vmatprep.subr.bf16.mxu0 0
      %2820 = vmatpush1.bf16.msra.mxu0 0
      %2821 = vmatprep.subr.bf16.mxu0 0
      %2822 = vmatpush1.bf16.msra.mxu0 0
      %2823 = vmatprep.subr.bf16.mxu0 0
      %2824 = vmatpush1.bf16.msra.mxu0 0
      %2825 = vmatprep.subr.bf16.mxu0 0
      %2826 = vmatpush1.bf16.msra.mxu0 0
      %2827 = vmatprep.subr.bf16.mxu0 0
      %2828 = vmatpush1.bf16.msra.mxu0 0
      %2829 = vmatprep.subr.bf16.mxu0 0
      %2830 = vmatpush1.bf16.msra.mxu0 0
      %2831 = vmatprep.subr.bf16.mxu0 0
      %2832 = vmatpush1.bf16.msra.mxu0 %v2591
      %2833 = vmatprep.subr.bf16.mxu0 0
      %2834 = vmatpush1.bf16.msra.mxu0 %v2590
      %2835 = vmatprep.subr.bf16.mxu0 0
      %2836 = vmatpush2.bf16.msra.mxu0 0
      %2837 = vmatprep.subr.bf16.mxu0 0
      %2838 = vmatpush2.bf16.msra.mxu0 0
      %2839 = vmatprep.subr.bf16.mxu0 0
      %2840 = vmatpush2.bf16.msra.mxu0 0
      %2841 = vmatprep.subr.bf16.mxu0 0
      %2842 = vmatpush2.bf16.msra.mxu0 0
      %2843 = vmatprep.subr.bf16.mxu0 0
      %2844 = vmatpush2.bf16.msra.mxu0 0
      %2845 = vmatprep.subr.bf16.mxu0 0
      %2846 = vmatpush2.bf16.msra.mxu0 0
      %2847 = vmatprep.subr.bf16.mxu0 0
      %2848 = vmatpush2.bf16.msra.mxu0 0
      %2849 = vmatprep.subr.bf16.mxu0 0
      %2850 = vmatpush2.bf16.msra.mxu0 0
      %2851 = vmatprep.mubr.bf16.mxu0 0
      %2852 = vmatmul.mubr.bf16.gmra.mxu0 %v2611
      %v2853 = vpop.f32.mrf.mxu0
      %v2854 = vadd.f32 %v2693, %v2853
      %v2855 = vpop.f32.mrf.mxu0
      %v2856 = vpop.f32.mrf.mxu0
      %v2857 = vadd.f32 %v2696, %v2856
      %v2858 = vpop.f32.mrf.mxu0
      %2859 = vmatprep.mubr.bf16.mxu0 0
      %2860 = vmatmul.mubr.bf16.gmra.mxu0 %v2614
      %v2861 = vpop.f32.mrf.mxu0
      %v2862 = vadd.f32 %v2701, %v2861
      %v2863 = vpop.f32.mrf.mxu0
      %v2864 = vpop.f32.mrf.mxu0
      %v2865 = vadd.f32 %v2704, %v2864
      %v2866 = vpop.f32.mrf.mxu0
      %2867 = vmatprep.mubr.bf16.mxu0 0
      %2868 = vmatmul.mubr.bf16.gmra.mxu0 %v2617
      %v2869 = vpop.f32.mrf.mxu0
      %v2870 = vadd.f32 %v2709, %v2869
      %v2871 = vpop.f32.mrf.mxu0
      %v2872 = vpop.f32.mrf.mxu0
      %v2873 = vadd.f32 %v2712, %v2872
      %v2874 = vpop.f32.mrf.mxu0
      %2875 = vmatprep.mubr.bf16.mxu0 0
      %2876 = vmatmul.mubr.bf16.gmra.mxu0 %v2620
      %v2877 = vpop.f32.mrf.mxu0
      %v2878 = vadd.f32 %v2717, %v2877
      %v2879 = vpop.f32.mrf.mxu0
      %v2880 = vpop.f32.mrf.mxu0
      %v2881 = vadd.f32 %v2720, %v2880
      %v2882 = vpop.f32.mrf.mxu0
      %2883 = vmatprep.mubr.bf16.mxu0 0
      %2884 = vmatmul.mubr.bf16.gmra.mxu0 %v2623
      %v2885 = vpop.f32.mrf.mxu0
      %v2886 = vadd.f32 %v2725, %v2885
      %v2887 = vpop.f32.mrf.mxu0
      %v2888 = vpop.f32.mrf.mxu0
      %v2889 = vadd.f32 %v2728, %v2888
      %v2890 = vpop.f32.mrf.mxu0
      %2891 = vmatprep.mubr.bf16.mxu0 0
      %2892 = vmatmul.mubr.bf16.gmra.mxu0 %v2626
      %v2893 = vpop.f32.mrf.mxu0
      %v2894 = vadd.f32 %v2733, %v2893
      %v2895 = vpop.f32.mrf.mxu0
      %v2896 = vpop.f32.mrf.mxu0
      %v2897 = vadd.f32 %v2736, %v2896
      %v2898 = vpop.f32.mrf.mxu0
      %2899 = vmatprep.mubr.bf16.mxu0 0
      %2900 = vmatmul.mubr.bf16.gmra.mxu0 %v2629
      %v2901 = vpop.f32.mrf.mxu0
      %v2902 = vadd.f32 %v2741, %v2901
      %v2903 = vpop.f32.mrf.mxu0
      %v2904 = vpop.f32.mrf.mxu0
      %v2905 = vadd.f32 %v2744, %v2904
      %v2906 = vpop.f32.mrf.mxu0
      %2907 = vmatprep.mubr.bf16.mxu0 0
      %2908 = vmatmul.mubr.bf16.gmra.mxu0 %v2632
      %v2909 = vpop.f32.mrf.mxu0
      %v2910 = vadd.f32 %v2749, %v2909
      %v2911 = vpop.f32.mrf.mxu0
      %v2912 = vpop.f32.mrf.mxu0
      %v2913 = vadd.f32 %v2752, %v2912
      %v2914 = vpop.f32.mrf.mxu0
      %2915 = vmatprep.mubr.bf16.mxu0 0
      %2916 = vmatmul.mubr.bf16.gmra.mxu0 %v2635
      %v2917 = vpop.f32.mrf.mxu0
      %v2918 = vadd.f32 %v2757, %v2917
      %v2919 = vpop.f32.mrf.mxu0
      %v2920 = vpop.f32.mrf.mxu0
      %v2921 = vadd.f32 %v2760, %v2920
      %v2922 = vpop.f32.mrf.mxu0
      %2923 = vmatprep.mubr.bf16.mxu0 0
      %2924 = vmatmul.mubr.bf16.gmra.mxu0 %v2638
      %v2925 = vpop.f32.mrf.mxu0
      %v2926 = vadd.f32 %v2765, %v2925
      %v2927 = vpop.f32.mrf.mxu0
      %v2928 = vpop.f32.mrf.mxu0
      %v2929 = vadd.f32 %v2768, %v2928
      %v2930 = vpop.f32.mrf.mxu0
      %2931 = vmatprep.mubr.bf16.mxu0 0
      %2932 = vmatmul.mubr.bf16.gmra.mxu0 %v2641
      %v2933 = vpop.f32.mrf.mxu0
      %v2934 = vadd.f32 %v2773, %v2933
      %v2935 = vpop.f32.mrf.mxu0
      %v2936 = vpop.f32.mrf.mxu0
      %v2937 = vadd.f32 %v2776, %v2936
      %v2938 = vpop.f32.mrf.mxu0
      %2939 = vmatprep.mubr.bf16.mxu0 0
      %2940 = vmatmul.mubr.bf16.gmra.mxu0 %v2644
      %v2941 = vpop.f32.mrf.mxu0
      %v2942 = vadd.f32 %v2781, %v2941
      %v2943 = vpop.f32.mrf.mxu0
      %v2944 = vpop.f32.mrf.mxu0
      %v2945 = vadd.f32 %v2784, %v2944
      %v2946 = vpop.f32.mrf.mxu0
      %2947 = vmatprep.mubr.bf16.mxu0 0
      %2948 = vmatmul.mubr.bf16.gmra.mxu0 %v2647
      %v2949 = vpop.f32.mrf.mxu0
      %v2950 = vadd.f32 %v2789, %v2949
      %v2951 = vpop.f32.mrf.mxu0
      %v2952 = vpop.f32.mrf.mxu0
      %v2953 = vadd.f32 %v2792, %v2952
      %v2954 = vpop.f32.mrf.mxu0
      %2955 = vmatprep.mubr.bf16.mxu0 0
      %2956 = vmatmul.mubr.bf16.gmra.mxu0 %v2650
      %v2957 = vpop.f32.mrf.mxu0
      %v2958 = vadd.f32 %v2797, %v2957
      %v2959 = vpop.f32.mrf.mxu0
      %v2960 = vpop.f32.mrf.mxu0
      %v2961 = vadd.f32 %v2800, %v2960
      %v2962 = vpop.f32.mrf.mxu0
      %2963 = vmatprep.mubr.bf16.mxu0 0
      %2964 = vmatmul.mubr.bf16.gmra.mxu0 %v2653
      %v2965 = vpop.f32.mrf.mxu0
      %v2966 = vadd.f32 %v2805, %v2965
      %v2967 = vpop.f32.mrf.mxu0
      %v2968 = vpop.f32.mrf.mxu0
      %v2969 = vadd.f32 %v2808, %v2968
      %v2970 = vpop.f32.mrf.mxu0
      %2971 = vmatprep.mubr.bf16.mxu0 0
      %2972 = vmatmul.mubr.bf16.gmra.mxu0 %v2656
      %v2973 = vpop.f32.mrf.mxu0
      %v2974 = vadd.f32 %v2813, %v2973
      %v2975 = vpop.f32.mrf.mxu0
      %v2976 = vpop.f32.mrf.mxu0
      %v2977 = vadd.f32 %v2816, %v2976
      %v2978 = vpop.f32.mrf.mxu0
      %2979 = vdwg.mxu0
      %v2981 = vlaneseq
      %v2982 = vshrl.u32 %v2981, 7
      %v2983 = vsub.s32 0, %v2982
      %v2984 = vrot.slane %v419, %v2983
      %v2986 = vmul.f32 %v2854, %v2984
      %v2987 = vmul.f32 %v2857, %v2984
      %v2988 = vmul.f32 %v2862, %v2984
      %v2989 = vmul.f32 %v2865, %v2984
      %v2990 = vmul.f32 %v2870, %v2984
      %v2991 = vmul.f32 %v2873, %v2984
      %v2992 = vmul.f32 %v2878, %v2984
      %v2993 = vmul.f32 %v2881, %v2984
      %v2994 = vmul.f32 %v2886, %v2984
      %v2995 = vmul.f32 %v2889, %v2984
      %v2996 = vmul.f32 %v2894, %v2984
      %v2997 = vmul.f32 %v2897, %v2984
      %v2998 = vmul.f32 %v2902, %v2984
      %v2999 = vmul.f32 %v2905, %v2984
      %v3000 = vmul.f32 %v2910, %v2984
      %v3001 = vmul.f32 %v2913, %v2984
      %v3002 = vmul.f32 %v2918, %v2984
      %v3003 = vmul.f32 %v2921, %v2984
      %v3004 = vmul.f32 %v2926, %v2984
      %v3005 = vmul.f32 %v2929, %v2984
      %v3006 = vmul.f32 %v2934, %v2984
      %v3007 = vmul.f32 %v2937, %v2984
      %v3008 = vmul.f32 %v2942, %v2984
      %v3009 = vmul.f32 %v2945, %v2984
      %v3010 = vmul.f32 %v2950, %v2984
      %v3011 = vmul.f32 %v2953, %v2984
      %v3012 = vmul.f32 %v2958, %v2984
      %v3013 = vmul.f32 %v2961, %v2984
      %v3014 = vmul.f32 %v2966, %v2984
      %v3015 = vmul.f32 %v2969, %v2984
      %v3016 = vmul.f32 %v2974, %v2984
      %v3017 = vmul.f32 %v2977, %v2984
      %v3019 = vlaneseq
      %v3020 = vshrl.u32 %v3019, 7
      %v3021 = vsub.s32 0, %v3020
      %v3022 = vrot.slane %v420, %v3021
      %v3024 = vadd.f32 %v2986, %v3022
      %v3025 = vadd.f32 %v2987, %v3022
      %v3026 = vadd.f32 %v2988, %v3022
      %v3027 = vadd.f32 %v2989, %v3022
      %v3028 = vadd.f32 %v2990, %v3022
      %v3029 = vadd.f32 %v2991, %v3022
      %v3030 = vadd.f32 %v2992, %v3022
      %v3031 = vadd.f32 %v2993, %v3022
      %v3032 = vadd.f32 %v2994, %v3022
      %v3033 = vadd.f32 %v2995, %v3022
      %v3034 = vadd.f32 %v2996, %v3022
      %v3035 = vadd.f32 %v2997, %v3022
      %v3036 = vadd.f32 %v2998, %v3022
      %v3037 = vadd.f32 %v2999, %v3022
      %v3038 = vadd.f32 %v3000, %v3022
      %v3039 = vadd.f32 %v3001, %v3022
      %v3040 = vadd.f32 %v3002, %v3022
      %v3041 = vadd.f32 %v3003, %v3022
      %v3042 = vadd.f32 %v3004, %v3022
      %v3043 = vadd.f32 %v3005, %v3022
      %v3044 = vadd.f32 %v3006, %v3022
      %v3045 = vadd.f32 %v3007, %v3022
      %v3046 = vadd.f32 %v3008, %v3022
      %v3047 = vadd.f32 %v3009, %v3022
      %v3048 = vadd.f32 %v3010, %v3022
      %v3049 = vadd.f32 %v3011, %v3022
      %v3050 = vadd.f32 %v3012, %v3022
      %v3051 = vadd.f32 %v3013, %v3022
      %v3052 = vadd.f32 %v3014, %v3022
      %v3053 = vadd.f32 %v3015, %v3022
      %v3054 = vadd.f32 %v3016, %v3022
      %v3055 = vadd.f32 %v3017, %v3022
      %v3056 = vmax.f32 %v3024, 0.0
      %v3057 = vmax.f32 %v3025, 0.0
      %v3058 = vmax.f32 %v3026, 0.0
      %v3059 = vmax.f32 %v3027, 0.0
      %v3060 = vmax.f32 %v3028, 0.0
      %v3061 = vmax.f32 %v3029, 0.0
      %v3062 = vmax.f32 %v3030, 0.0
      %v3063 = vmax.f32 %v3031, 0.0
      %v3064 = vmax.f32 %v3032, 0.0
      %v3065 = vmax.f32 %v3033, 0.0
      %v3066 = vmax.f32 %v3034, 0.0
      %v3067 = vmax.f32 %v3035, 0.0
      %v3068 = vmax.f32 %v3036, 0.0
      %v3069 = vmax.f32 %v3037, 0.0
      %v3070 = vmax.f32 %v3038, 0.0
      %v3071 = vmax.f32 %v3039, 0.0
      %v3072 = vmax.f32 %v3040, 0.0
      %v3073 = vmax.f32 %v3041, 0.0
      %v3074 = vmax.f32 %v3042, 0.0
      %v3075 = vmax.f32 %v3043, 0.0
      %v3076 = vmax.f32 %v3044, 0.0
      %v3077 = vmax.f32 %v3045, 0.0
      %v3078 = vmax.f32 %v3046, 0.0
      %v3079 = vmax.f32 %v3047, 0.0
      %v3080 = vmax.f32 %v3048, 0.0
      %v3081 = vmax.f32 %v3049, 0.0
      %v3082 = vmax.f32 %v3050, 0.0
      %v3083 = vmax.f32 %v3051, 0.0
      %v3084 = vmax.f32 %v3052, 0.0
      %v3085 = vmax.f32 %v3053, 0.0
      %v3086 = vmax.f32 %v3054, 0.0
      %v3087 = vmax.f32 %v3055, 0.0
      %v3088 = vmin.f32 %v3056, 4.0
      %v3089 = vmin.f32 %v3057, 4.0
      %v3090 = vmin.f32 %v3058, 4.0
      %v3091 = vmin.f32 %v3059, 4.0
      %v3092 = vmin.f32 %v3060, 4.0
      %v3093 = vmin.f32 %v3061, 4.0
      %v3094 = vmin.f32 %v3062, 4.0
      %v3095 = vmin.f32 %v3063, 4.0
      %v3096 = vmin.f32 %v3064, 4.0
      %v3097 = vmin.f32 %v3065, 4.0
      %v3098 = vmin.f32 %v3066, 4.0
      %v3099 = vmin.f32 %v3067, 4.0
      %v3100 = vmin.f32 %v3068, 4.0
      %v3101 = vmin.f32 %v3069, 4.0
      %v3102 = vmin.f32 %v3070, 4.0
      %v3103 = vmin.f32 %v3071, 4.0
      %v3104 = vmin.f32 %v3072, 4.0
      %v3105 = vmin.f32 %v3073, 4.0
      %v3106 = vmin.f32 %v3074, 4.0
      %v3107 = vmin.f32 %v3075, 4.0
      %v3108 = vmin.f32 %v3076, 4.0
      %v3109 = vmin.f32 %v3077, 4.0
      %v3110 = vmin.f32 %v3078, 4.0
      %v3111 = vmin.f32 %v3079, 4.0
      %v3112 = vmin.f32 %v3080, 4.0
      %v3113 = vmin.f32 %v3081, 4.0
      %v3114 = vmin.f32 %v3082, 4.0
      %v3115 = vmin.f32 %v3083, 4.0
      %v3116 = vmin.f32 %v3084, 4.0
      %v3117 = vmin.f32 %v3085, 4.0
      %v3118 = vmin.f32 %v3086, 4.0
      %v3119 = vmin.f32 %v3087, 4.0
      %v3120 = vadd.f32 %v3088, 0.5
      %v3121 = vadd.f32 %v3089, 0.5
      %v3122 = vadd.f32 %v3090, 0.5
      %v3123 = vadd.f32 %v3091, 0.5
      %v3124 = vadd.f32 %v3092, 0.5
      %v3125 = vadd.f32 %v3093, 0.5
      %v3126 = vadd.f32 %v3094, 0.5
      %v3127 = vadd.f32 %v3095, 0.5
      %v3128 = vadd.f32 %v3096, 0.5
      %v3129 = vadd.f32 %v3097, 0.5
      %v3130 = vadd.f32 %v3098, 0.5
      %v3131 = vadd.f32 %v3099, 0.5
      %v3132 = vadd.f32 %v3100, 0.5
      %v3133 = vadd.f32 %v3101, 0.5
      %v3134 = vadd.f32 %v3102, 0.5
      %v3135 = vadd.f32 %v3103, 0.5
      %v3136 = vadd.f32 %v3104, 0.5
      %v3137 = vadd.f32 %v3105, 0.5
      %v3138 = vadd.f32 %v3106, 0.5
      %v3139 = vadd.f32 %v3107, 0.5
      %v3140 = vadd.f32 %v3108, 0.5
      %v3141 = vadd.f32 %v3109, 0.5
      %v3142 = vadd.f32 %v3110, 0.5
      %v3143 = vadd.f32 %v3111, 0.5
      %v3144 = vadd.f32 %v3112, 0.5
      %v3145 = vadd.f32 %v3113, 0.5
      %v3146 = vadd.f32 %v3114, 0.5
      %v3147 = vadd.f32 %v3115, 0.5
      %v3148 = vadd.f32 %v3116, 0.5
      %v3149 = vadd.f32 %v3117, 0.5
      %v3150 = vadd.f32 %v3118, 0.5
      %v3151 = vadd.f32 %v3119, 0.5
      %v3152 = vfloor.f32 %v3120
      %v3153 = vfloor.f32 %v3121
      %v3154 = vfloor.f32 %v3122
      %v3155 = vfloor.f32 %v3123
      %v3156 = vfloor.f32 %v3124
      %v3157 = vfloor.f32 %v3125
      %v3158 = vfloor.f32 %v3126
      %v3159 = vfloor.f32 %v3127
      %v3160 = vfloor.f32 %v3128
      %v3161 = vfloor.f32 %v3129
      %v3162 = vfloor.f32 %v3130
      %v3163 = vfloor.f32 %v3131
      %v3164 = vfloor.f32 %v3132
      %v3165 = vfloor.f32 %v3133
      %v3166 = vfloor.f32 %v3134
      %v3167 = vfloor.f32 %v3135
      %v3168 = vfloor.f32 %v3136
      %v3169 = vfloor.f32 %v3137
      %v3170 = vfloor.f32 %v3138
      %v3171 = vfloor.f32 %v3139
      %v3172 = vfloor.f32 %v3140
      %v3173 = vfloor.f32 %v3141
      %v3174 = vfloor.f32 %v3142
      %v3175 = vfloor.f32 %v3143
      %v3176 = vfloor.f32 %v3144
      %v3177 = vfloor.f32 %v3145
      %v3178 = vfloor.f32 %v3146
      %v3179 = vfloor.f32 %v3147
      %v3180 = vfloor.f32 %v3148
      %v3181 = vfloor.f32 %v3149
      %v3182 = vfloor.f32 %v3150
      %v3183 = vfloor.f32 %v3151
      %v3184 = vmul.f32 %v3152, 0.25
      %v3185 = vmul.f32 %v3153, 0.25
      %v3186 = vmul.f32 %v3154, 0.25
      %v3187 = vmul.f32 %v3155, 0.25
      %v3188 = vmul.f32 %v3156, 0.25
      %v3189 = vmul.f32 %v3157, 0.25
      %v3190 = vmul.f32 %v3158, 0.25
      %v3191 = vmul.f32 %v3159, 0.25
      %v3192 = vmul.f32 %v3160, 0.25
      %v3193 = vmul.f32 %v3161, 0.25
      %v3194 = vmul.f32 %v3162, 0.25
      %v3195 = vmul.f32 %v3163, 0.25
      %v3196 = vmul.f32 %v3164, 0.25
      %v3197 = vmul.f32 %v3165, 0.25
      %v3198 = vmul.f32 %v3166, 0.25
      %v3199 = vmul.f32 %v3167, 0.25
      %v3200 = vmul.f32 %v3168, 0.25
      %v3201 = vmul.f32 %v3169, 0.25
      %v3202 = vmul.f32 %v3170, 0.25
      %v3203 = vmul.f32 %v3171, 0.25
      %v3204 = vmul.f32 %v3172, 0.25
      %v3205 = vmul.f32 %v3173, 0.25
      %v3206 = vmul.f32 %v3174, 0.25
      %v3207 = vmul.f32 %v3175, 0.25
      %v3208 = vmul.f32 %v3176, 0.25
      %v3209 = vmul.f32 %v3177, 0.25
      %v3210 = vmul.f32 %v3178, 0.25
      %v3211 = vmul.f32 %v3179, 0.25
      %v3212 = vmul.f32 %v3180, 0.25
      %v3213 = vmul.f32 %v3181, 0.25
      %v3214 = vmul.f32 %v3182, 0.25
      %v3215 = vmul.f32 %v3183, 0.25
      %3216 = vst [vmem:[#allocation3 + $0x18] sm:$0xff] %v3184
      %3217 = vst [vmem:[#allocation3 + $0x20] sm:$0xff] %v3185
      %3218 = vst [vmem:[#allocation3 + $0x28] sm:$0xff] %v3186
      %3219 = vst [vmem:[#allocation3 + $0x30] sm:$0xff] %v3187
      %3220 = vst [vmem:[#allocation3 + $0x38] sm:$0xff] %v3188
      %3221 = vst [vmem:[#allocation3 + $0x40] sm:$0xff] %v3189
      %3222 = vst [vmem:[#allocation3 + $0x48] sm:$0xff] %v3190
      %3223 = vst [vmem:[#allocation3 + $0x50] sm:$0xff] %v3191
      %3224 = vst [vmem:[#allocation3 + $0x58] sm:$0xff] %v3192
      %3225 = vst [vmem:[#allocation3 + $0x60] sm:$0xff] %v3193
      %3226 = vst [vmem:[#allocation3 + $0x68] sm:$0xff] %v3194
      %3227 = vst [vmem:[#allocation3 + $0x70] sm:$0xff] %v3195
      %3228 = vst [vmem:[#allocation3 + $0x78] sm:$0xff] %v3196
      %3229 = vst [vmem:[#allocation3 + $0x80] sm:$0xff] %v3197
      %3230 = vst [vmem:[#allocation3 + $0x88] sm:$0xff] %v3198
      %3231 = vst [vmem:[#allocation3 + $0x90] sm:$0xff] %v3199
      %3232 = vst [vmem:[#allocation3 + $0x98] sm:$0xff] %v3200
      %3233 = vst [vmem:[#allocation3 + $0xa0] sm:$0xff] %v3201
      %3234 = vst [vmem:[#allocation3 + $0xa8] sm:$0xff] %v3202
      %3235 = vst [vmem:[#allocation3 + $0xb0] sm:$0xff] %v3203
      %3236 = vst [vmem:[#allocation3 + $0xb8] sm:$0xff] %v3204
      %3237 = vst [vmem:[#allocation3 + $0xc0] sm:$0xff] %v3205
      %3238 = vst [vmem:[#allocation3 + $0xc8] sm:$0xff] %v3206
      %3239 = vst [vmem:[#allocation3 + $0xd0] sm:$0xff] %v3207
      %3240 = vst [vmem:[#allocation3 + $0xd8] sm:$0xff] %v3208
      %3241 = vst [vmem:[#allocation3 + $0xe0] sm:$0xff] %v3209
      %3242 = vst [vmem:[#allocation3 + $0xe8] sm:$0xff] %v3210
      %3243 = vst [vmem:[#allocation3 + $0xf0] sm:$0xff] %v3211
      %3244 = vst [vmem:[#allocation3 + $0xf8] sm:$0xff] %v3212
      %3245 = vst [vmem:[#allocation3 + $0x100] sm:$0xff] %v3213
      %3246 = vst [vmem:[#allocation3 + $0x108] sm:$0xff] %v3214
      %3247 = vst [vmem:[#allocation3 + $0x110] sm:$0xff] %v3215
      %v3248 = vld [vmem:[#allocation3 + $0x7] sm:$0xff]
      %v3249 = vld [vmem:[#allocation3 + $0xf] sm:$0xff]
      %v3250 = vld [vmem:[#allocation3 + $0x17] sm:$0xff]
      %v3251 = vld [vmem:[#allocation3 + $0x1f] sm:$0xff]
      %v3252 = vld [vmem:[#allocation3 + $0x27] sm:$0xff]
      %v3253 = vld [vmem:[#allocation3 + $0x2f] sm:$0xff]
      %v3254 = vld [vmem:[#allocation3 + $0x37] sm:$0xff]
      %v3255 = vld [vmem:[#allocation3 + $0x3f] sm:$0xff]
      %v3256 = vld [vmem:[#allocation3 + $0x47] sm:$0xff]
      %v3257 = vld [vmem:[#allocation3 + $0x4f] sm:$0xff]
      %v3258 = vld [vmem:[#allocation3 + $0x57] sm:$0xff]
      %v3259 = vld [vmem:[#allocation3 + $0x5f] sm:$0xff]
      %v3260 = vld [vmem:[#allocation3 + $0x67] sm:$0xff]
      %v3261 = vld [vmem:[#allocation3 + $0x6f] sm:$0xff]
      %v3262 = vld [vmem:[#allocation3 + $0x77] sm:$0xff]
      %v3263 = vld [vmem:[#allocation3 + $0x7f] sm:$0xff]
      %v3264 = vld [vmem:[#allocation3 + $0x87] sm:$0xff]
      %v3265 = vld [vmem:[#allocation3 + $0x8f] sm:$0xff]
      %v3266 = vld [vmem:[#allocation3 + $0x97] sm:$0xff]
      %v3267 = vld [vmem:[#allocation3 + $0x9f] sm:$0xff]
      %v3268 = vld [vmem:[#allocation3 + $0xa7] sm:$0xff]
      %v3269 = vld [vmem:[#allocation3 + $0xaf] sm:$0xff]
      %v3270 = vld [vmem:[#allocation3 + $0xb7] sm:$0xff]
      %v3271 = vld [vmem:[#allocation3 + $0xbf] sm:$0xff]
      %v3272 = vld [vmem:[#allocation3 + $0xc7] sm:$0xff]
      %v3273 = vld [vmem:[#allocation3 + $0xcf] sm:$0xff]
      %v3274 = vld [vmem:[#allocation3 + $0xd7] sm:$0xff]
      %v3275 = vld [vmem:[#allocation3 + $0xdf] sm:$0xff]
      %v3276 = vld [vmem:[#allocation3 + $0xe7] sm:$0xff]
      %v3277 = vld [vmem:[#allocation3 + $0xef] sm:$0xff]
      %v3278 = vld [vmem:[#allocation3 + $0xf7] sm:$0xff]
      %v3279 = vld [vmem:[#allocation3 + $0xff] sm:$0xff]
      %v3280 = vpack.c.bf16 %v3249, %v3248
      %v3281 = vpack.c.bf16 %v3251, %v3250
      %v3282 = vpack.c.bf16 %v3253, %v3252
      %v3283 = vpack.c.bf16 %v3255, %v3254
      %v3284 = vpack.c.bf16 %v3257, %v3256
      %v3285 = vpack.c.bf16 %v3259, %v3258
      %v3286 = vpack.c.bf16 %v3261, %v3260
      %v3287 = vpack.c.bf16 %v3263, %v3262
      %v3288 = vpack.c.bf16 %v3265, %v3264
      %v3289 = vpack.c.bf16 %v3267, %v3266
      %v3290 = vpack.c.bf16 %v3269, %v3268
      %v3291 = vpack.c.bf16 %v3271, %v3270
      %v3292 = vpack.c.bf16 %v3273, %v3272
      %v3293 = vpack.c.bf16 %v3275, %v3274
      %v3294 = vpack.c.bf16 %v3277, %v3276
      %v3295 = vpack.c.bf16 %v3279, %v3278
      %v3296 = vmul.bf16 %v3280, %v1063
      %v3297 = vmul.bf16 %v3281, %v1064
      %v3298 = vmul.bf16 %v3282, %v1065
      %v3299 = vmul.bf16 %v3283, %v1066
      %v3300 = vmul.bf16 %v3284, %v1067
      %v3301 = vmul.bf16 %v3285, %v1068
      %v3302 = vmul.bf16 %v3286, %v1069
      %v3303 = vmul.bf16 %v3287, %v1070
      %v3304 = vmul.bf16 %v3288, %v1071
      %v3305 = vmul.bf16 %v3289, %v1072
      %v3306 = vmul.bf16 %v3290, %v1073
      %v3307 = vmul.bf16 %v3291, %v1074
      %v3308 = vmul.bf16 %v3292, %v1075
      %v3309 = vmul.bf16 %v3293, %v1076
      %v3310 = vmul.bf16 %v3294, %v1077
      %v3311 = vmul.bf16 %v3295, %v1078
      %v3312 = vld [vmem:[%s6] sm:$0xf]
      %v3313 = vld [vmem:[%s6 + $0x4] sm:$0xf]
      %v3314 = vld [vmem:[%s6 + $0x8] sm:$0xf]
      %v3315 = vld [vmem:[%s6 + $0xc] sm:$0xf]
      %v3316 = vld [vmem:[%s6 + $0x10] sm:$0xf]
      %v3317 = vld [vmem:[%s6 + $0x14] sm:$0xf]
      %v3318 = vld [vmem:[%s6 + $0x18] sm:$0xf]
      %v3319 = vld [vmem:[%s6 + $0x1c] sm:$0xf]
      %v3320 = vld [vmem:[%s6 + $0x20] sm:$0xf]
      %v3321 = vld [vmem:[%s6 + $0x24] sm:$0xf]
      %v3322 = vld [vmem:[%s6 + $0x28] sm:$0xf]
      %v3323 = vld [vmem:[%s6 + $0x2c] sm:$0xf]
      %v3324 = vld [vmem:[%s6 + $0x30] sm:$0xf]
      %v3325 = vld [vmem:[%s6 + $0x34] sm:$0xf]
      %v3326 = vld [vmem:[%s6 + $0x38] sm:$0xf]
      %v3327 = vld [vmem:[%s6 + $0x3c] sm:$0xf]
      %v3328 = vld [vmem:[#allocation3 + $0x8] sm:$0xff]
      %v3329 = vld [vmem:[#allocation3 + $0x10] sm:$0xff]
      %v3330 = vld [vmem:[#allocation3 + $0x18] sm:$0xff]
      %v3331 = vld [vmem:[#allocation3 + $0x20] sm:$0xff]
      %v3332 = vld [vmem:[#allocation3 + $0x28] sm:$0xff]
      %v3333 = vld [vmem:[#allocation3 + $0x30] sm:$0xff]
      %v3334 = vld [vmem:[#allocation3 + $0x38] sm:$0xff]
      %v3335 = vld [vmem:[#allocation3 + $0x40] sm:$0xff]
      %v3336 = vld [vmem:[#allocation3 + $0x48] sm:$0xff]
      %v3337 = vld [vmem:[#allocation3 + $0x50] sm:$0xff]
      %v3338 = vld [vmem:[#allocation3 + $0x58] sm:$0xff]
      %v3339 = vld [vmem:[#allocation3 + $0x60] sm:$0xff]
      %v3340 = vld [vmem:[#allocation3 + $0x68] sm:$0xff]
      %v3341 = vld [vmem:[#allocation3 + $0x70] sm:$0xff]
      %v3342 = vld [vmem:[#allocation3 + $0x78] sm:$0xff]
      %v3343 = vld [vmem:[#allocation3 + $0x80] sm:$0xff]
      %v3344 = vld [vmem:[#allocation3 + $0x88] sm:$0xff]
      %v3345 = vld [vmem:[#allocation3 + $0x90] sm:$0xff]
      %v3346 = vld [vmem:[#allocation3 + $0x98] sm:$0xff]
      %v3347 = vld [vmem:[#allocation3 + $0xa0] sm:$0xff]
      %v3348 = vld [vmem:[#allocation3 + $0xa8] sm:$0xff]
      %v3349 = vld [vmem:[#allocation3 + $0xb0] sm:$0xff]
      %v3350 = vld [vmem:[#allocation3 + $0xb8] sm:$0xff]
      %v3351 = vld [vmem:[#allocation3 + $0xc0] sm:$0xff]
      %v3352 = vld [vmem:[#allocation3 + $0xc8] sm:$0xff]
      %v3353 = vld [vmem:[#allocation3 + $0xd0] sm:$0xff]
      %v3354 = vld [vmem:[#allocation3 + $0xd8] sm:$0xff]
      %v3355 = vld [vmem:[#allocation3 + $0xe0] sm:$0xff]
      %v3356 = vld [vmem:[#allocation3 + $0xe8] sm:$0xff]
      %v3357 = vld [vmem:[#allocation3 + $0xf0] sm:$0xff]
      %v3358 = vld [vmem:[#allocation3 + $0xf8] sm:$0xff]
      %v3359 = vld [vmem:[#allocation3 + $0x100] sm:$0xff]
      %v3360 = vpack.c.bf16 %v3329, %v3328
      %v3361 = vpack.c.bf16 %v3331, %v3330
      %v3362 = vpack.c.bf16 %v3333, %v3332
      %v3363 = vpack.c.bf16 %v3335, %v3334
      %v3364 = vpack.c.bf16 %v3337, %v3336
      %v3365 = vpack.c.bf16 %v3339, %v3338
      %v3366 = vpack.c.bf16 %v3341, %v3340
      %v3367 = vpack.c.bf16 %v3343, %v3342
      %v3368 = vpack.c.bf16 %v3345, %v3344
      %v3369 = vpack.c.bf16 %v3347, %v3346
      %v3370 = vpack.c.bf16 %v3349, %v3348
      %v3371 = vpack.c.bf16 %v3351, %v3350
      %v3372 = vpack.c.bf16 %v3353, %v3352
      %v3373 = vpack.c.bf16 %v3355, %v3354
      %v3374 = vpack.c.bf16 %v3357, %v3356
      %v3375 = vpack.c.bf16 %v3359, %v3358
      %s3376 = scalar_lea.vmem %s6, 64
      %v3377 = vld [vmem:[%s3376] sm:$0xf]
      %v3378 = vld [vmem:[%s3376 + $0x4] sm:$0xf]
      %v3379 = vld [vmem:[%s3376 + $0x8] sm:$0xf]
      %v3380 = vld [vmem:[%s3376 + $0xc] sm:$0xf]
      %v3381 = vld [vmem:[%s3376 + $0x10] sm:$0xf]
      %v3382 = vld [vmem:[%s3376 + $0x14] sm:$0xf]
      %v3383 = vld [vmem:[%s3376 + $0x18] sm:$0xf]
      %v3384 = vld [vmem:[%s3376 + $0x1c] sm:$0xf]
      %v3385 = vld [vmem:[%s3376 + $0x20] sm:$0xf]
      %v3386 = vld [vmem:[%s3376 + $0x24] sm:$0xf]
      %v3387 = vld [vmem:[%s3376 + $0x28] sm:$0xf]
      %v3388 = vld [vmem:[%s3376 + $0x2c] sm:$0xf]
      %v3389 = vld [vmem:[%s3376 + $0x30] sm:$0xf]
      %v3390 = vld [vmem:[%s3376 + $0x34] sm:$0xf]
      %v3391 = vld [vmem:[%s3376 + $0x38] sm:$0xf]
      %v3392 = vld [vmem:[%s3376 + $0x3c] sm:$0xf]
      %v3409 = vunpack.c.l.b16 %v3377
      %v3410 = vunpack.c.l.b16 %v3378
      %v3411 = vunpack.c.l.b16 %v3379
      %v3412 = vunpack.c.l.b16 %v3380
      %v3413 = vunpack.c.l.b16 %v3381
      %v3414 = vunpack.c.l.b16 %v3382
      %v3415 = vunpack.c.l.b16 %v3383
      %v3416 = vunpack.c.l.b16 %v3384
      %v3417 = vunpack.c.l.b16 %v3385
      %v3418 = vunpack.c.l.b16 %v3386
      %v3419 = vunpack.c.l.b16 %v3387
      %v3420 = vunpack.c.l.b16 %v3388
      %v3421 = vunpack.c.l.b16 %v3389
      %v3422 = vunpack.c.l.b16 %v3390
      %v3423 = vunpack.c.l.b16 %v3391
      %v3424 = vunpack.c.l.b16 %v3392
      %v3425 = vpack.c.b16 %v3410, %v3409
      %v3426 = vpack.c.b16 %v3412, %v3411
      %v3427 = vpack.c.b16 %v3414, %v3413
      %v3428 = vpack.c.b16 %v3416, %v3415
      %v3429 = vpack.c.b16 %v3418, %v3417
      %v3430 = vpack.c.b16 %v3420, %v3419
      %v3431 = vpack.c.b16 %v3422, %v3421
      %v3432 = vpack.c.b16 %v3424, %v3423
      %3441 = vmatprep.subr.bf16.mxu0 0
      %3442 = vmatpush1.bf16.msra.mxu0 %v3432
      %3443 = vmatprep.subr.bf16.mxu0 0
      %3444 = vmatpush1.bf16.msra.mxu0 %v3431
      %3445 = vmatprep.subr.bf16.mxu0 0
      %3446 = vmatpush1.bf16.msra.mxu0 %v3430
      %3447 = vmatprep.subr.bf16.mxu0 0
      %3448 = vmatpush1.bf16.msra.mxu0 %v3429
      %3449 = vmatprep.subr.bf16.mxu0 0
      %3450 = vmatpush1.bf16.msra.mxu0 %v3428
      %3451 = vmatprep.subr.bf16.mxu0 0
      %3452 = vmatpush1.bf16.msra.mxu0 %v3427
      %3453 = vmatprep.subr.bf16.mxu0 0
      %3454 = vmatpush1.bf16.msra.mxu0 %v3426
      %3455 = vmatprep.subr.bf16.mxu0 0
      %3456 = vmatpush1.bf16.msra.mxu0 %v3425
      %3457 = vmatprep.subr.bf16.mxu0 0
      %3458 = vmatpush2.bf16.msra.mxu0 0
      %3459 = vmatprep.subr.bf16.mxu0 0
      %3460 = vmatpush2.bf16.msra.mxu0 0
      %3461 = vmatprep.subr.bf16.mxu0 0
      %3462 = vmatpush2.bf16.msra.mxu0 0
      %3463 = vmatprep.subr.bf16.mxu0 0
      %3464 = vmatpush2.bf16.msra.mxu0 0
      %3465 = vmatprep.subr.bf16.mxu0 0
      %3466 = vmatpush2.bf16.msra.mxu0 0
      %3467 = vmatprep.subr.bf16.mxu0 0
      %3468 = vmatpush2.bf16.msra.mxu0 0
      %3469 = vmatprep.subr.bf16.mxu0 0
      %3470 = vmatpush2.bf16.msra.mxu0 0
      %3471 = vmatprep.subr.bf16.mxu0 0
      %3472 = vmatpush2.bf16.msra.mxu0 0
      %3473 = vmatprep.mubr.bf16.mxu0 0
      %3474 = vmatmul.mubr.bf16.gmra.mxu0 %v3360
      %v3475 = vpop.f32.mrf.mxu0
      %v3476 = vadd.f32 0.0, %v3475
      %v3477 = vpop.f32.mrf.mxu0
      %v3478 = vpop.f32.mrf.mxu0
      %v3479 = vadd.f32 0.0, %v3478
      %v3480 = vpop.f32.mrf.mxu0
      %3481 = vmatprep.mubr.bf16.mxu0 0
      %3482 = vmatmul.mubr.bf16.gmra.mxu0 %v3361
      %v3483 = vpop.f32.mrf.mxu0
      %v3484 = vadd.f32 0.0, %v3483
      %v3485 = vpop.f32.mrf.mxu0
      %v3486 = vpop.f32.mrf.mxu0
      %v3487 = vadd.f32 0.0, %v3486
      %v3488 = vpop.f32.mrf.mxu0
      %3489 = vmatprep.mubr.bf16.mxu0 0
      %3490 = vmatmul.mubr.bf16.gmra.mxu0 %v3362
      %v3491 = vpop.f32.mrf.mxu0
      %v3492 = vadd.f32 0.0, %v3491
      %v3493 = vpop.f32.mrf.mxu0
      %v3494 = vpop.f32.mrf.mxu0
      %v3495 = vadd.f32 0.0, %v3494
      %v3496 = vpop.f32.mrf.mxu0
      %3497 = vmatprep.mubr.bf16.mxu0 0
      %3498 = vmatmul.mubr.bf16.gmra.mxu0 %v3363
      %v3499 = vpop.f32.mrf.mxu0
      %v3500 = vadd.f32 0.0, %v3499
      %v3501 = vpop.f32.mrf.mxu0
      %v3502 = vpop.f32.mrf.mxu0
      %v3503 = vadd.f32 0.0, %v3502
      %v3504 = vpop.f32.mrf.mxu0
      %3505 = vmatprep.mubr.bf16.mxu0 0
      %3506 = vmatmul.mubr.bf16.gmra.mxu0 %v3364
      %v3507 = vpop.f32.mrf.mxu0
      %v3508 = vadd.f32 0.0, %v3507
      %v3509 = vpop.f32.mrf.mxu0
      %v3510 = vpop.f32.mrf.mxu0
      %v3511 = vadd.f32 0.0, %v3510
      %v3512 = vpop.f32.mrf.mxu0
      %3513 = vmatprep.mubr.bf16.mxu0 0
      %3514 = vmatmul.mubr.bf16.gmra.mxu0 %v3365
      %v3515 = vpop.f32.mrf.mxu0
      %v3516 = vadd.f32 0.0, %v3515
      %v3517 = vpop.f32.mrf.mxu0
      %v3518 = vpop.f32.mrf.mxu0
      %v3519 = vadd.f32 0.0, %v3518
      %v3520 = vpop.f32.mrf.mxu0
      %3521 = vmatprep.mubr.bf16.mxu0 0
      %3522 = vmatmul.mubr.bf16.gmra.mxu0 %v3366
      %v3523 = vpop.f32.mrf.mxu0
      %v3524 = vadd.f32 0.0, %v3523
      %v3525 = vpop.f32.mrf.mxu0
      %v3526 = vpop.f32.mrf.mxu0
      %v3527 = vadd.f32 0.0, %v3526
      %v3528 = vpop.f32.mrf.mxu0
      %3529 = vmatprep.mubr.bf16.mxu0 0
      %3530 = vmatmul.mubr.bf16.gmra.mxu0 %v3367
      %v3531 = vpop.f32.mrf.mxu0
      %v3532 = vadd.f32 0.0, %v3531
      %v3533 = vpop.f32.mrf.mxu0
      %v3534 = vpop.f32.mrf.mxu0
      %v3535 = vadd.f32 0.0, %v3534
      %v3536 = vpop.f32.mrf.mxu0
      %3537 = vmatprep.mubr.bf16.mxu0 0
      %3538 = vmatmul.mubr.bf16.gmra.mxu0 %v3368
      %v3539 = vpop.f32.mrf.mxu0
      %v3540 = vadd.f32 0.0, %v3539
      %v3541 = vpop.f32.mrf.mxu0
      %v3542 = vpop.f32.mrf.mxu0
      %v3543 = vadd.f32 0.0, %v3542
      %v3544 = vpop.f32.mrf.mxu0
      %3545 = vmatprep.mubr.bf16.mxu0 0
      %3546 = vmatmul.mubr.bf16.gmra.mxu0 %v3369
      %v3547 = vpop.f32.mrf.mxu0
      %v3548 = vadd.f32 0.0, %v3547
      %v3549 = vpop.f32.mrf.mxu0
      %v3550 = vpop.f32.mrf.mxu0
      %v3551 = vadd.f32 0.0, %v3550
      %v3552 = vpop.f32.mrf.mxu0
      %3553 = vmatprep.mubr.bf16.mxu0 0
      %3554 = vmatmul.mubr.bf16.gmra.mxu0 %v3370
      %v3555 = vpop.f32.mrf.mxu0
      %v3556 = vadd.f32 0.0, %v3555
      %v3557 = vpop.f32.mrf.mxu0
      %v3558 = vpop.f32.mrf.mxu0
      %v3559 = vadd.f32 0.0, %v3558
      %v3560 = vpop.f32.mrf.mxu0
      %3561 = vmatprep.mubr.bf16.mxu0 0
      %3562 = vmatmul.mubr.bf16.gmra.mxu0 %v3371
      %v3563 = vpop.f32.mrf.mxu0
      %v3564 = vadd.f32 0.0, %v3563
      %v3565 = vpop.f32.mrf.mxu0
      %v3566 = vpop.f32.mrf.mxu0
      %v3567 = vadd.f32 0.0, %v3566
      %v3568 = vpop.f32.mrf.mxu0
      %3569 = vmatprep.mubr.bf16.mxu0 0
      %3570 = vmatmul.mubr.bf16.gmra.mxu0 %v3372
      %v3571 = vpop.f32.mrf.mxu0
      %v3572 = vadd.f32 0.0, %v3571
      %v3573 = vpop.f32.mrf.mxu0
      %v3574 = vpop.f32.mrf.mxu0
      %v3575 = vadd.f32 0.0, %v3574
      %v3576 = vpop.f32.mrf.mxu0
      %3577 = vmatprep.mubr.bf16.mxu0 0
      %3578 = vmatmul.mubr.bf16.gmra.mxu0 %v3373
      %v3579 = vpop.f32.mrf.mxu0
      %v3580 = vadd.f32 0.0, %v3579
      %v3581 = vpop.f32.mrf.mxu0
      %v3582 = vpop.f32.mrf.mxu0
      %v3583 = vadd.f32 0.0, %v3582
      %v3584 = vpop.f32.mrf.mxu0
      %3585 = vmatprep.mubr.bf16.mxu0 0
      %3586 = vmatmul.mubr.bf16.gmra.mxu0 %v3374
      %v3587 = vpop.f32.mrf.mxu0
      %v3588 = vadd.f32 0.0, %v3587
      %v3589 = vpop.f32.mrf.mxu0
      %v3590 = vpop.f32.mrf.mxu0
      %v3591 = vadd.f32 0.0, %v3590
      %v3592 = vpop.f32.mrf.mxu0
      %3593 = vmatprep.mubr.bf16.mxu0 0
      %3594 = vmatmul.mubr.bf16.gmra.mxu0 %v3375
      %v3595 = vpop.f32.mrf.mxu0
      %v3596 = vadd.f32 0.0, %v3595
      %v3597 = vpop.f32.mrf.mxu0
      %v3598 = vpop.f32.mrf.mxu0
      %v3599 = vadd.f32 0.0, %v3598
      %v3600 = vpop.f32.mrf.mxu0
      %3601 = vdwg.mxu0
      %v3618 = vunpack.c.l.b16 %v3312
      %v3619 = vunpack.c.l.b16 %v3313
      %v3620 = vunpack.c.l.b16 %v3314
      %v3621 = vunpack.c.l.b16 %v3315
      %v3622 = vunpack.c.l.b16 %v3316
      %v3623 = vunpack.c.l.b16 %v3317
      %v3624 = vunpack.c.l.b16 %v3318
      %v3625 = vunpack.c.l.b16 %v3319
      %v3626 = vunpack.c.l.b16 %v3320
      %v3627 = vunpack.c.l.b16 %v3321
      %v3628 = vunpack.c.l.b16 %v3322
      %v3629 = vunpack.c.l.b16 %v3323
      %v3630 = vunpack.c.l.b16 %v3324
      %v3631 = vunpack.c.l.b16 %v3325
      %v3632 = vunpack.c.l.b16 %v3326
      %v3633 = vunpack.c.l.b16 %v3327
      %v3634 = vpack.c.b16 %v3619, %v3618
      %v3635 = vpack.c.b16 %v3621, %v3620
      %v3636 = vpack.c.b16 %v3623, %v3622
      %v3637 = vpack.c.b16 %v3625, %v3624
      %v3638 = vpack.c.b16 %v3627, %v3626
      %v3639 = vpack.c.b16 %v3629, %v3628
      %v3640 = vpack.c.b16 %v3631, %v3630
      %v3641 = vpack.c.b16 %v3633, %v3632
      %3650 = vmatprep.subr.bf16.mxu0 0
      %3651 = vmatpush1.bf16.msra.mxu0 %v3641
      %3652 = vmatprep.subr.bf16.mxu0 0
      %3653 = vmatpush1.bf16.msra.mxu0 %v3640
      %3654 = vmatprep.subr.bf16.mxu0 0
      %3655 = vmatpush1.bf16.msra.mxu0 %v3639
      %3656 = vmatprep.subr.bf16.mxu0 0
      %3657 = vmatpush1.bf16.msra.mxu0 %v3638
      %3658 = vmatprep.subr.bf16.mxu0 0
      %3659 = vmatpush1.bf16.msra.mxu0 %v3637
      %3660 = vmatprep.subr.bf16.mxu0 0
      %3661 = vmatpush1.bf16.msra.mxu0 %v3636
      %3662 = vmatprep.subr.bf16.mxu0 0
      %3663 = vmatpush1.bf16.msra.mxu0 %v3635
      %3664 = vmatprep.subr.bf16.mxu0 0
      %3665 = vmatpush1.bf16.msra.mxu0 %v3634
      %3666 = vmatprep.subr.bf16.mxu0 0
      %3667 = vmatpush2.bf16.msra.mxu0 0
      %3668 = vmatprep.subr.bf16.mxu0 0
      %3669 = vmatpush2.bf16.msra.mxu0 0
      %3670 = vmatprep.subr.bf16.mxu0 0
      %3671 = vmatpush2.bf16.msra.mxu0 0
      %3672 = vmatprep.subr.bf16.mxu0 0
      %3673 = vmatpush2.bf16.msra.mxu0 0
      %3674 = vmatprep.subr.bf16.mxu0 0
      %3675 = vmatpush2.bf16.msra.mxu0 0
      %3676 = vmatprep.subr.bf16.mxu0 0
      %3677 = vmatpush2.bf16.msra.mxu0 0
      %3678 = vmatprep.subr.bf16.mxu0 0
      %3679 = vmatpush2.bf16.msra.mxu0 0
      %3680 = vmatprep.subr.bf16.mxu0 0
      %3681 = vmatpush2.bf16.msra.mxu0 0
      %3682 = vmatprep.mubr.bf16.mxu0 0
      %3683 = vmatmul.mubr.bf16.gmra.mxu0 %v3296
      %v3684 = vpop.f32.mrf.mxu0
      %v3685 = vadd.f32 %v3476, %v3684
      %v3686 = vpop.f32.mrf.mxu0
      %v3687 = vpop.f32.mrf.mxu0
      %v3688 = vadd.f32 %v3479, %v3687
      %v3689 = vpop.f32.mrf.mxu0
      %3690 = vmatprep.mubr.bf16.mxu0 0
      %3691 = vmatmul.mubr.bf16.gmra.mxu0 %v3297
      %v3692 = vpop.f32.mrf.mxu0
      %v3693 = vadd.f32 %v3484, %v3692
      %v3694 = vpop.f32.mrf.mxu0
      %v3695 = vpop.f32.mrf.mxu0
      %v3696 = vadd.f32 %v3487, %v3695
      %v3697 = vpop.f32.mrf.mxu0
      %3698 = vmatprep.mubr.bf16.mxu0 0
      %3699 = vmatmul.mubr.bf16.gmra.mxu0 %v3298
      %v3700 = vpop.f32.mrf.mxu0
      %v3701 = vadd.f32 %v3492, %v3700
      %v3702 = vpop.f32.mrf.mxu0
      %v3703 = vpop.f32.mrf.mxu0
      %v3704 = vadd.f32 %v3495, %v3703
      %v3705 = vpop.f32.mrf.mxu0
      %3706 = vmatprep.mubr.bf16.mxu0 0
      %3707 = vmatmul.mubr.bf16.gmra.mxu0 %v3299
      %v3708 = vpop.f32.mrf.mxu0
      %v3709 = vadd.f32 %v3500, %v3708
      %v3710 = vpop.f32.mrf.mxu0
      %v3711 = vpop.f32.mrf.mxu0
      %v3712 = vadd.f32 %v3503, %v3711
      %v3713 = vpop.f32.mrf.mxu0
      %3714 = vmatprep.mubr.bf16.mxu0 0
      %3715 = vmatmul.mubr.bf16.gmra.mxu0 %v3300
      %v3716 = vpop.f32.mrf.mxu0
      %v3717 = vadd.f32 %v3508, %v3716
      %v3718 = vpop.f32.mrf.mxu0
      %v3719 = vpop.f32.mrf.mxu0
      %v3720 = vadd.f32 %v3511, %v3719
      %v3721 = vpop.f32.mrf.mxu0
      %3722 = vmatprep.mubr.bf16.mxu0 0
      %3723 = vmatmul.mubr.bf16.gmra.mxu0 %v3301
      %v3724 = vpop.f32.mrf.mxu0
      %v3725 = vadd.f32 %v3516, %v3724
      %v3726 = vpop.f32.mrf.mxu0
      %v3727 = vpop.f32.mrf.mxu0
      %v3728 = vadd.f32 %v3519, %v3727
      %v3729 = vpop.f32.mrf.mxu0
      %3730 = vmatprep.mubr.bf16.mxu0 0
      %3731 = vmatmul.mubr.bf16.gmra.mxu0 %v3302
      %v3732 = vpop.f32.mrf.mxu0
      %v3733 = vadd.f32 %v3524, %v3732
      %v3734 = vpop.f32.mrf.mxu0
      %v3735 = vpop.f32.mrf.mxu0
      %v3736 = vadd.f32 %v3527, %v3735
      %v3737 = vpop.f32.mrf.mxu0
      %3738 = vmatprep.mubr.bf16.mxu0 0
      %3739 = vmatmul.mubr.bf16.gmra.mxu0 %v3303
      %v3740 = vpop.f32.mrf.mxu0
      %v3741 = vadd.f32 %v3532, %v3740
      %v3742 = vpop.f32.mrf.mxu0
      %v3743 = vpop.f32.mrf.mxu0
      %v3744 = vadd.f32 %v3535, %v3743
      %v3745 = vpop.f32.mrf.mxu0
      %3746 = vmatprep.mubr.bf16.mxu0 0
      %3747 = vmatmul.mubr.bf16.gmra.mxu0 %v3304
      %v3748 = vpop.f32.mrf.mxu0
      %v3749 = vadd.f32 %v3540, %v3748
      %v3750 = vpop.f32.mrf.mxu0
      %v3751 = vpop.f32.mrf.mxu0
      %v3752 = vadd.f32 %v3543, %v3751
      %v3753 = vpop.f32.mrf.mxu0
      %3754 = vmatprep.mubr.bf16.mxu0 0
      %3755 = vmatmul.mubr.bf16.gmra.mxu0 %v3305
      %v3756 = vpop.f32.mrf.mxu0
      %v3757 = vadd.f32 %v3548, %v3756
      %v3758 = vpop.f32.mrf.mxu0
      %v3759 = vpop.f32.mrf.mxu0
      %v3760 = vadd.f32 %v3551, %v3759
      %v3761 = vpop.f32.mrf.mxu0
      %3762 = vmatprep.mubr.bf16.mxu0 0
      %3763 = vmatmul.mubr.bf16.gmra.mxu0 %v3306
      %v3764 = vpop.f32.mrf.mxu0
      %v3765 = vadd.f32 %v3556, %v3764
      %v3766 = vpop.f32.mrf.mxu0
      %v3767 = vpop.f32.mrf.mxu0
      %v3768 = vadd.f32 %v3559, %v3767
      %v3769 = vpop.f32.mrf.mxu0
      %3770 = vmatprep.mubr.bf16.mxu0 0
      %3771 = vmatmul.mubr.bf16.gmra.mxu0 %v3307
      %v3772 = vpop.f32.mrf.mxu0
      %v3773 = vadd.f32 %v3564, %v3772
      %v3774 = vpop.f32.mrf.mxu0
      %v3775 = vpop.f32.mrf.mxu0
      %v3776 = vadd.f32 %v3567, %v3775
      %v3777 = vpop.f32.mrf.mxu0
      %3778 = vmatprep.mubr.bf16.mxu0 0
      %3779 = vmatmul.mubr.bf16.gmra.mxu0 %v3308
      %v3780 = vpop.f32.mrf.mxu0
      %v3781 = vadd.f32 %v3572, %v3780
      %v3782 = vpop.f32.mrf.mxu0
      %v3783 = vpop.f32.mrf.mxu0
      %v3784 = vadd.f32 %v3575, %v3783
      %v3785 = vpop.f32.mrf.mxu0
      %3786 = vmatprep.mubr.bf16.mxu0 0
      %3787 = vmatmul.mubr.bf16.gmra.mxu0 %v3309
      %v3788 = vpop.f32.mrf.mxu0
      %v3789 = vadd.f32 %v3580, %v3788
      %v3790 = vpop.f32.mrf.mxu0
      %v3791 = vpop.f32.mrf.mxu0
      %v3792 = vadd.f32 %v3583, %v3791
      %v3793 = vpop.f32.mrf.mxu0
      %3794 = vmatprep.mubr.bf16.mxu0 0
      %3795 = vmatmul.mubr.bf16.gmra.mxu0 %v3310
      %v3796 = vpop.f32.mrf.mxu0
      %v3797 = vadd.f32 %v3588, %v3796
      %v3798 = vpop.f32.mrf.mxu0
      %v3799 = vpop.f32.mrf.mxu0
      %v3800 = vadd.f32 %v3591, %v3799
      %v3801 = vpop.f32.mrf.mxu0
      %3802 = vmatprep.mubr.bf16.mxu0 0
      %3803 = vmatmul.mubr.bf16.gmra.mxu0 %v3311
      %v3804 = vpop.f32.mrf.mxu0
      %v3805 = vadd.f32 %v3596, %v3804
      %v3806 = vpop.f32.mrf.mxu0
      %v3807 = vpop.f32.mrf.mxu0
      %v3808 = vadd.f32 %v3599, %v3807
      %v3809 = vpop.f32.mrf.mxu0
      %3810 = vdwg.mxu0
      %v3811 = vld [vmem:[#allocation3 + $0x9] sm:$0xff]
      %v3812 = vld [vmem:[#allocation3 + $0x11] sm:$0xff]
      %v3813 = vld [vmem:[#allocation3 + $0x19] sm:$0xff]
      %v3814 = vld [vmem:[#allocation3 + $0x21] sm:$0xff]
      %v3815 = vld [vmem:[#allocation3 + $0x29] sm:$0xff]
      %v3816 = vld [vmem:[#allocation3 + $0x31] sm:$0xff]
      %v3817 = vld [vmem:[#allocation3 + $0x39] sm:$0xff]
      %v3818 = vld [vmem:[#allocation3 + $0x41] sm:$0xff]
      %v3819 = vld [vmem:[#allocation3 + $0x49] sm:$0xff]
      %v3820 = vld [vmem:[#allocation3 + $0x51] sm:$0xff]
      %v3821 = vld [vmem:[#allocation3 + $0x59] sm:$0xff]
      %v3822 = vld [vmem:[#allocation3 + $0x61] sm:$0xff]
      %v3823 = vld [vmem:[#allocation3 + $0x69] sm:$0xff]
      %v3824 = vld [vmem:[#allocation3 + $0x71] sm:$0xff]
      %v3825 = vld [vmem:[#allocation3 + $0x79] sm:$0xff]
      %v3826 = vld [vmem:[#allocation3 + $0x81] sm:$0xff]
      %v3827 = vld [vmem:[#allocation3 + $0x89] sm:$0xff]
      %v3828 = vld [vmem:[#allocation3 + $0x91] sm:$0xff]
      %v3829 = vld [vmem:[#allocation3 + $0x99] sm:$0xff]
      %v3830 = vld [vmem:[#allocation3 + $0xa1] sm:$0xff]
      %v3831 = vld [vmem:[#allocation3 + $0xa9] sm:$0xff]
      %v3832 = vld [vmem:[#allocation3 + $0xb1] sm:$0xff]
      %v3833 = vld [vmem:[#allocation3 + $0xb9] sm:$0xff]
      %v3834 = vld [vmem:[#allocation3 + $0xc1] sm:$0xff]
      %v3835 = vld [vmem:[#allocation3 + $0xc9] sm:$0xff]
      %v3836 = vld [vmem:[#allocation3 + $0xd1] sm:$0xff]
      %v3837 = vld [vmem:[#allocation3 + $0xd9] sm:$0xff]
      %v3838 = vld [vmem:[#allocation3 + $0xe1] sm:$0xff]
      %v3839 = vld [vmem:[#allocation3 + $0xe9] sm:$0xff]
      %v3840 = vld [vmem:[#allocation3 + $0xf1] sm:$0xff]
      %v3841 = vld [vmem:[#allocation3 + $0xf9] sm:$0xff]
      %v3842 = vld [vmem:[#allocation3 + $0x101] sm:$0xff]
      %v3843 = vpack.c.bf16 %v3812, %v3811
      %v3844 = vpack.c.bf16 %v3814, %v3813
      %v3845 = vpack.c.bf16 %v3816, %v3815
      %v3846 = vpack.c.bf16 %v3818, %v3817
      %v3847 = vpack.c.bf16 %v3820, %v3819
      %v3848 = vpack.c.bf16 %v3822, %v3821
      %v3849 = vpack.c.bf16 %v3824, %v3823
      %v3850 = vpack.c.bf16 %v3826, %v3825
      %v3851 = vpack.c.bf16 %v3828, %v3827
      %v3852 = vpack.c.bf16 %v3830, %v3829
      %v3853 = vpack.c.bf16 %v3832, %v3831
      %v3854 = vpack.c.bf16 %v3834, %v3833
      %v3855 = vpack.c.bf16 %v3836, %v3835
      %v3856 = vpack.c.bf16 %v3838, %v3837
      %v3857 = vpack.c.bf16 %v3840, %v3839
      %v3858 = vpack.c.bf16 %v3842, %v3841
      %v3859 = vmul.bf16 %v3843, %v1655
      %v3860 = vmul.bf16 %v3844, %v1656
      %v3861 = vmul.bf16 %v3845, %v1657
      %v3862 = vmul.bf16 %v3846, %v1658
      %v3863 = vmul.bf16 %v3847, %v1659
      %v3864 = vmul.bf16 %v3848, %v1660
      %v3865 = vmul.bf16 %v3849, %v1661
      %v3866 = vmul.bf16 %v3850, %v1662
      %v3867 = vmul.bf16 %v3851, %v1663
      %v3868 = vmul.bf16 %v3852, %v1664
      %v3869 = vmul.bf16 %v3853, %v1665
      %v3870 = vmul.bf16 %v3854, %v1666
      %v3871 = vmul.bf16 %v3855, %v1667
      %v3872 = vmul.bf16 %v3856, %v1668
      %v3873 = vmul.bf16 %v3857, %v1669
      %v3874 = vmul.bf16 %v3858, %v1670
      %s3875 = scalar_lea.vmem %s6, 128
      %v3876 = vld [vmem:[%s3875] sm:$0xf]
      %v3877 = vld [vmem:[%s3875 + $0x4] sm:$0xf]
      %v3878 = vld [vmem:[%s3875 + $0x8] sm:$0xf]
      %v3879 = vld [vmem:[%s3875 + $0xc] sm:$0xf]
      %v3880 = vld [vmem:[%s3875 + $0x10] sm:$0xf]
      %v3881 = vld [vmem:[%s3875 + $0x14] sm:$0xf]
      %v3882 = vld [vmem:[%s3875 + $0x18] sm:$0xf]
      %v3883 = vld [vmem:[%s3875 + $0x1c] sm:$0xf]
      %v3884 = vld [vmem:[%s3875 + $0x20] sm:$0xf]
      %v3885 = vld [vmem:[%s3875 + $0x24] sm:$0xf]
      %v3886 = vld [vmem:[%s3875 + $0x28] sm:$0xf]
      %v3887 = vld [vmem:[%s3875 + $0x2c] sm:$0xf]
      %v3888 = vld [vmem:[%s3875 + $0x30] sm:$0xf]
      %v3889 = vld [vmem:[%s3875 + $0x34] sm:$0xf]
      %v3890 = vld [vmem:[%s3875 + $0x38] sm:$0xf]
      %v3891 = vld [vmem:[%s3875 + $0x3c] sm:$0xf]
      %v3908 = vunpack.c.l.b16 %v3876
      %v3909 = vunpack.c.l.b16 %v3877
      %v3910 = vunpack.c.l.b16 %v3878
      %v3911 = vunpack.c.l.b16 %v3879
      %v3912 = vunpack.c.l.b16 %v3880
      %v3913 = vunpack.c.l.b16 %v3881
      %v3914 = vunpack.c.l.b16 %v3882
      %v3915 = vunpack.c.l.b16 %v3883
      %v3916 = vunpack.c.l.b16 %v3884
      %v3917 = vunpack.c.l.b16 %v3885
      %v3918 = vunpack.c.l.b16 %v3886
      %v3919 = vunpack.c.l.b16 %v3887
      %v3920 = vunpack.c.l.b16 %v3888
      %v3921 = vunpack.c.l.b16 %v3889
      %v3922 = vunpack.c.l.b16 %v3890
      %v3923 = vunpack.c.l.b16 %v3891
      %v3924 = vpack.c.b16 %v3909, %v3908
      %v3925 = vpack.c.b16 %v3911, %v3910
      %v3926 = vpack.c.b16 %v3913, %v3912
      %v3927 = vpack.c.b16 %v3915, %v3914
      %v3928 = vpack.c.b16 %v3917, %v3916
      %v3929 = vpack.c.b16 %v3919, %v3918
      %v3930 = vpack.c.b16 %v3921, %v3920
      %v3931 = vpack.c.b16 %v3923, %v3922
      %3940 = vmatprep.subr.bf16.mxu0 0
      %3941 = vmatpush1.bf16.msra.mxu0 %v3931
      %3942 = vmatprep.subr.bf16.mxu0 0
      %3943 = vmatpush1.bf16.msra.mxu0 %v3930
      %3944 = vmatprep.subr.bf16.mxu0 0
      %3945 = vmatpush1.bf16.msra.mxu0 %v3929
      %3946 = vmatprep.subr.bf16.mxu0 0
      %3947 = vmatpush1.bf16.msra.mxu0 %v3928
      %3948 = vmatprep.subr.bf16.mxu0 0
      %3949 = vmatpush1.bf16.msra.mxu0 %v3927
      %3950 = vmatprep.subr.bf16.mxu0 0
      %3951 = vmatpush1.bf16.msra.mxu0 %v3926
      %3952 = vmatprep.subr.bf16.mxu0 0
      %3953 = vmatpush1.bf16.msra.mxu0 %v3925
      %3954 = vmatprep.subr.bf16.mxu0 0
      %3955 = vmatpush1.bf16.msra.mxu0 %v3924
      %3956 = vmatprep.subr.bf16.mxu0 0
      %3957 = vmatpush2.bf16.msra.mxu0 0
      %3958 = vmatprep.subr.bf16.mxu0 0
      %3959 = vmatpush2.bf16.msra.mxu0 0
      %3960 = vmatprep.subr.bf16.mxu0 0
      %3961 = vmatpush2.bf16.msra.mxu0 0
      %3962 = vmatprep.subr.bf16.mxu0 0
      %3963 = vmatpush2.bf16.msra.mxu0 0
      %3964 = vmatprep.subr.bf16.mxu0 0
      %3965 = vmatpush2.bf16.msra.mxu0 0
      %3966 = vmatprep.subr.bf16.mxu0 0
      %3967 = vmatpush2.bf16.msra.mxu0 0
      %3968 = vmatprep.subr.bf16.mxu0 0
      %3969 = vmatpush2.bf16.msra.mxu0 0
      %3970 = vmatprep.subr.bf16.mxu0 0
      %3971 = vmatpush2.bf16.msra.mxu0 0
      %3972 = vmatprep.mubr.bf16.mxu0 0
      %3973 = vmatmul.mubr.bf16.gmra.mxu0 %v3859
      %v3974 = vpop.f32.mrf.mxu0
      %v3975 = vadd.f32 0.0, %v3974
      %v3976 = vpop.f32.mrf.mxu0
      %v3977 = vpop.f32.mrf.mxu0
      %v3978 = vadd.f32 0.0, %v3977
      %v3979 = vpop.f32.mrf.mxu0
      %3980 = vmatprep.mubr.bf16.mxu0 0
      %3981 = vmatmul.mubr.bf16.gmra.mxu0 %v3860
      %v3982 = vpop.f32.mrf.mxu0
      %v3983 = vadd.f32 0.0, %v3982
      %v3984 = vpop.f32.mrf.mxu0
      %v3985 = vpop.f32.mrf.mxu0
      %v3986 = vadd.f32 0.0, %v3985
      %v3987 = vpop.f32.mrf.mxu0
      %3988 = vmatprep.mubr.bf16.mxu0 0
      %3989 = vmatmul.mubr.bf16.gmra.mxu0 %v3861
      %v3990 = vpop.f32.mrf.mxu0
      %v3991 = vadd.f32 0.0, %v3990
      %v3992 = vpop.f32.mrf.mxu0
      %v3993 = vpop.f32.mrf.mxu0
      %v3994 = vadd.f32 0.0, %v3993
      %v3995 = vpop.f32.mrf.mxu0
      %3996 = vmatprep.mubr.bf16.mxu0 0
      %3997 = vmatmul.mubr.bf16.gmra.mxu0 %v3862
      %v3998 = vpop.f32.mrf.mxu0
      %v3999 = vadd.f32 0.0, %v3998
      %v4000 = vpop.f32.mrf.mxu0
      %v4001 = vpop.f32.mrf.mxu0
      %v4002 = vadd.f32 0.0, %v4001
      %v4003 = vpop.f32.mrf.mxu0
      %4004 = vmatprep.mubr.bf16.mxu0 0
      %4005 = vmatmul.mubr.bf16.gmra.mxu0 %v3863
      %v4006 = vpop.f32.mrf.mxu0
      %v4007 = vadd.f32 0.0, %v4006
      %v4008 = vpop.f32.mrf.mxu0
      %v4009 = vpop.f32.mrf.mxu0
      %v4010 = vadd.f32 0.0, %v4009
      %v4011 = vpop.f32.mrf.mxu0
      %4012 = vmatprep.mubr.bf16.mxu0 0
      %4013 = vmatmul.mubr.bf16.gmra.mxu0 %v3864
      %v4014 = vpop.f32.mrf.mxu0
      %v4015 = vadd.f32 0.0, %v4014
      %v4016 = vpop.f32.mrf.mxu0
      %v4017 = vpop.f32.mrf.mxu0
      %v4018 = vadd.f32 0.0, %v4017
      %v4019 = vpop.f32.mrf.mxu0
      %4020 = vmatprep.mubr.bf16.mxu0 0
      %4021 = vmatmul.mubr.bf16.gmra.mxu0 %v3865
      %v4022 = vpop.f32.mrf.mxu0
      %v4023 = vadd.f32 0.0, %v4022
      %v4024 = vpop.f32.mrf.mxu0
      %v4025 = vpop.f32.mrf.mxu0
      %v4026 = vadd.f32 0.0, %v4025
      %v4027 = vpop.f32.mrf.mxu0
      %4028 = vmatprep.mubr.bf16.mxu0 0
      %4029 = vmatmul.mubr.bf16.gmra.mxu0 %v3866
      %v4030 = vpop.f32.mrf.mxu0
      %v4031 = vadd.f32 0.0, %v4030
      %v4032 = vpop.f32.mrf.mxu0
      %v4033 = vpop.f32.mrf.mxu0
      %v4034 = vadd.f32 0.0, %v4033
      %v4035 = vpop.f32.mrf.mxu0
      %4036 = vmatprep.mubr.bf16.mxu0 0
      %4037 = vmatmul.mubr.bf16.gmra.mxu0 %v3867
      %v4038 = vpop.f32.mrf.mxu0
      %v4039 = vadd.f32 0.0, %v4038
      %v4040 = vpop.f32.mrf.mxu0
      %v4041 = vpop.f32.mrf.mxu0
      %v4042 = vadd.f32 0.0, %v4041
      %v4043 = vpop.f32.mrf.mxu0
      %4044 = vmatprep.mubr.bf16.mxu0 0
      %4045 = vmatmul.mubr.bf16.gmra.mxu0 %v3868
      %v4046 = vpop.f32.mrf.mxu0
      %v4047 = vadd.f32 0.0, %v4046
      %v4048 = vpop.f32.mrf.mxu0
      %v4049 = vpop.f32.mrf.mxu0
      %v4050 = vadd.f32 0.0, %v4049
      %v4051 = vpop.f32.mrf.mxu0
      %4052 = vmatprep.mubr.bf16.mxu0 0
      %4053 = vmatmul.mubr.bf16.gmra.mxu0 %v3869
      %v4054 = vpop.f32.mrf.mxu0
      %v4055 = vadd.f32 0.0, %v4054
      %v4056 = vpop.f32.mrf.mxu0
      %v4057 = vpop.f32.mrf.mxu0
      %v4058 = vadd.f32 0.0, %v4057
      %v4059 = vpop.f32.mrf.mxu0
      %4060 = vmatprep.mubr.bf16.mxu0 0
      %4061 = vmatmul.mubr.bf16.gmra.mxu0 %v3870
      %v4062 = vpop.f32.mrf.mxu0
      %v4063 = vadd.f32 0.0, %v4062
      %v4064 = vpop.f32.mrf.mxu0
      %v4065 = vpop.f32.mrf.mxu0
      %v4066 = vadd.f32 0.0, %v4065
      %v4067 = vpop.f32.mrf.mxu0
      %4068 = vmatprep.mubr.bf16.mxu0 0
      %4069 = vmatmul.mubr.bf16.gmra.mxu0 %v3871
      %v4070 = vpop.f32.mrf.mxu0
      %v4071 = vadd.f32 0.0, %v4070
      %v4072 = vpop.f32.mrf.mxu0
      %v4073 = vpop.f32.mrf.mxu0
      %v4074 = vadd.f32 0.0, %v4073
      %v4075 = vpop.f32.mrf.mxu0
      %4076 = vmatprep.mubr.bf16.mxu0 0
      %4077 = vmatmul.mubr.bf16.gmra.mxu0 %v3872
      %v4078 = vpop.f32.mrf.mxu0
      %v4079 = vadd.f32 0.0, %v4078
      %v4080 = vpop.f32.mrf.mxu0
      %v4081 = vpop.f32.mrf.mxu0
      %v4082 = vadd.f32 0.0, %v4081
      %v4083 = vpop.f32.mrf.mxu0
      %4084 = vmatprep.mubr.bf16.mxu0 0
      %4085 = vmatmul.mubr.bf16.gmra.mxu0 %v3873
      %v4086 = vpop.f32.mrf.mxu0
      %v4087 = vadd.f32 0.0, %v4086
      %v4088 = vpop.f32.mrf.mxu0
      %v4089 = vpop.f32.mrf.mxu0
      %v4090 = vadd.f32 0.0, %v4089
      %v4091 = vpop.f32.mrf.mxu0
      %4092 = vmatprep.mubr.bf16.mxu0 0
      %4093 = vmatmul.mubr.bf16.gmra.mxu0 %v3874
      %v4094 = vpop.f32.mrf.mxu0
      %v4095 = vadd.f32 0.0, %v4094
      %v4096 = vpop.f32.mrf.mxu0
      %v4097 = vpop.f32.mrf.mxu0
      %v4098 = vadd.f32 0.0, %v4097
      %v4099 = vpop.f32.mrf.mxu0
      %4100 = vdwg.mxu0
      %v4101 = vadd.f32 %v3685, %v3975
      %v4102 = vadd.f32 %v3688, %v3978
      %v4103 = vadd.f32 %v3693, %v3983
      %v4104 = vadd.f32 %v3696, %v3986
      %v4105 = vadd.f32 %v3701, %v3991
      %v4106 = vadd.f32 %v3704, %v3994
      %v4107 = vadd.f32 %v3709, %v3999
      %v4108 = vadd.f32 %v3712, %v4002
      %v4109 = vadd.f32 %v3717, %v4007
      %v4110 = vadd.f32 %v3720, %v4010
      %v4111 = vadd.f32 %v3725, %v4015
      %v4112 = vadd.f32 %v3728, %v4018
      %v4113 = vadd.f32 %v3733, %v4023
      %v4114 = vadd.f32 %v3736, %v4026
      %v4115 = vadd.f32 %v3741, %v4031
      %v4116 = vadd.f32 %v3744, %v4034
      %v4117 = vadd.f32 %v3749, %v4039
      %v4118 = vadd.f32 %v3752, %v4042
      %v4119 = vadd.f32 %v3757, %v4047
      %v4120 = vadd.f32 %v3760, %v4050
      %v4121 = vadd.f32 %v3765, %v4055
      %v4122 = vadd.f32 %v3768, %v4058
      %v4123 = vadd.f32 %v3773, %v4063
      %v4124 = vadd.f32 %v3776, %v4066
      %v4125 = vadd.f32 %v3781, %v4071
      %v4126 = vadd.f32 %v3784, %v4074
      %v4127 = vadd.f32 %v3789, %v4079
      %v4128 = vadd.f32 %v3792, %v4082
      %v4129 = vadd.f32 %v3797, %v4087
      %v4130 = vadd.f32 %v3800, %v4090
      %v4131 = vadd.f32 %v3805, %v4095
      %v4132 = vadd.f32 %v3808, %v4098
      %v4133 = vld [vmem:[#allocation3 + $0x17] sm:$0xff]
      %v4134 = vld [vmem:[#allocation3 + $0x1f] sm:$0xff]
      %v4135 = vld [vmem:[#allocation3 + $0x27] sm:$0xff]
      %v4136 = vld [vmem:[#allocation3 + $0x2f] sm:$0xff]
      %v4137 = vld [vmem:[#allocation3 + $0x37] sm:$0xff]
      %v4138 = vld [vmem:[#allocation3 + $0x3f] sm:$0xff]
      %v4139 = vld [vmem:[#allocation3 + $0x47] sm:$0xff]
      %v4140 = vld [vmem:[#allocation3 + $0x4f] sm:$0xff]
      %v4141 = vld [vmem:[#allocation3 + $0x57] sm:$0xff]
      %v4142 = vld [vmem:[#allocation3 + $0x5f] sm:$0xff]
      %v4143 = vld [vmem:[#allocation3 + $0x67] sm:$0xff]
      %v4144 = vld [vmem:[#allocation3 + $0x6f] sm:$0xff]
      %v4145 = vld [vmem:[#allocation3 + $0x77] sm:$0xff]
      %v4146 = vld [vmem:[#allocation3 + $0x7f] sm:$0xff]
      %v4147 = vld [vmem:[#allocation3 + $0x87] sm:$0xff]
      %v4148 = vld [vmem:[#allocation3 + $0x8f] sm:$0xff]
      %v4149 = vld [vmem:[#allocation3 + $0x97] sm:$0xff]
      %v4150 = vld [vmem:[#allocation3 + $0x9f] sm:$0xff]
      %v4151 = vld [vmem:[#allocation3 + $0xa7] sm:$0xff]
      %v4152 = vld [vmem:[#allocation3 + $0xaf] sm:$0xff]
      %v4153 = vld [vmem:[#allocation3 + $0xb7] sm:$0xff]
      %v4154 = vld [vmem:[#allocation3 + $0xbf] sm:$0xff]
      %v4155 = vld [vmem:[#allocation3 + $0xc7] sm:$0xff]
      %v4156 = vld [vmem:[#allocation3 + $0xcf] sm:$0xff]
      %v4157 = vld [vmem:[#allocation3 + $0xd7] sm:$0xff]
      %v4158 = vld [vmem:[#allocation3 + $0xdf] sm:$0xff]
      %v4159 = vld [vmem:[#allocation3 + $0xe7] sm:$0xff]
      %v4160 = vld [vmem:[#allocation3 + $0xef] sm:$0xff]
      %v4161 = vld [vmem:[#allocation3 + $0xf7] sm:$0xff]
      %v4162 = vld [vmem:[#allocation3 + $0xff] sm:$0xff]
      %v4163 = vld [vmem:[#allocation3 + $0x107] sm:$0xff]
      %v4164 = vld [vmem:[#allocation3 + $0x10f] sm:$0xff]
      %v4165 = vpack.c.bf16 %v4134, %v4133
      %v4166 = vpack.c.bf16 %v4136, %v4135
      %v4167 = vpack.c.bf16 %v4138, %v4137
      %v4168 = vpack.c.bf16 %v4140, %v4139
      %v4169 = vpack.c.bf16 %v4142, %v4141
      %v4170 = vpack.c.bf16 %v4144, %v4143
      %v4171 = vpack.c.bf16 %v4146, %v4145
      %v4172 = vpack.c.bf16 %v4148, %v4147
      %v4173 = vpack.c.bf16 %v4150, %v4149
      %v4174 = vpack.c.bf16 %v4152, %v4151
      %v4175 = vpack.c.bf16 %v4154, %v4153
      %v4176 = vpack.c.bf16 %v4156, %v4155
      %v4177 = vpack.c.bf16 %v4158, %v4157
      %v4178 = vpack.c.bf16 %v4160, %v4159
      %v4179 = vpack.c.bf16 %v4162, %v4161
      %v4180 = vpack.c.bf16 %v4164, %v4163
      %v4181 = vmul.bf16 %v4165, %v1063
      %v4182 = vmul.bf16 %v4166, %v1064
      %v4183 = vmul.bf16 %v4167, %v1065
      %v4184 = vmul.bf16 %v4168, %v1066
      %v4185 = vmul.bf16 %v4169, %v1067
      %v4186 = vmul.bf16 %v4170, %v1068
      %v4187 = vmul.bf16 %v4171, %v1069
      %v4188 = vmul.bf16 %v4172, %v1070
      %v4189 = vmul.bf16 %v4173, %v1071
      %v4190 = vmul.bf16 %v4174, %v1072
      %v4191 = vmul.bf16 %v4175, %v1073
      %v4192 = vmul.bf16 %v4176, %v1074
      %v4193 = vmul.bf16 %v4177, %v1075
      %v4194 = vmul.bf16 %v4178, %v1076
      %v4195 = vmul.bf16 %v4179, %v1077
      %v4196 = vmul.bf16 %v4180, %v1078
      %s4197 = scalar_lea.vmem %s6, 192
      %v4198 = vld [vmem:[%s4197] sm:$0xf]
      %v4199 = vld [vmem:[%s4197 + $0x4] sm:$0xf]
      %v4200 = vld [vmem:[%s4197 + $0x8] sm:$0xf]
      %v4201 = vld [vmem:[%s4197 + $0xc] sm:$0xf]
      %v4202 = vld [vmem:[%s4197 + $0x10] sm:$0xf]
      %v4203 = vld [vmem:[%s4197 + $0x14] sm:$0xf]
      %v4204 = vld [vmem:[%s4197 + $0x18] sm:$0xf]
      %v4205 = vld [vmem:[%s4197 + $0x1c] sm:$0xf]
      %v4206 = vld [vmem:[%s4197 + $0x20] sm:$0xf]
      %v4207 = vld [vmem:[%s4197 + $0x24] sm:$0xf]
      %v4208 = vld [vmem:[%s4197 + $0x28] sm:$0xf]
      %v4209 = vld [vmem:[%s4197 + $0x2c] sm:$0xf]
      %v4210 = vld [vmem:[%s4197 + $0x30] sm:$0xf]
      %v4211 = vld [vmem:[%s4197 + $0x34] sm:$0xf]
      %v4212 = vld [vmem:[%s4197 + $0x38] sm:$0xf]
      %v4213 = vld [vmem:[%s4197 + $0x3c] sm:$0xf]
      %v4230 = vunpack.c.l.b16 %v4198
      %v4231 = vunpack.c.l.b16 %v4199
      %v4232 = vunpack.c.l.b16 %v4200
      %v4233 = vunpack.c.l.b16 %v4201
      %v4234 = vunpack.c.l.b16 %v4202
      %v4235 = vunpack.c.l.b16 %v4203
      %v4236 = vunpack.c.l.b16 %v4204
      %v4237 = vunpack.c.l.b16 %v4205
      %v4238 = vunpack.c.l.b16 %v4206
      %v4239 = vunpack.c.l.b16 %v4207
      %v4240 = vunpack.c.l.b16 %v4208
      %v4241 = vunpack.c.l.b16 %v4209
      %v4242 = vunpack.c.l.b16 %v4210
      %v4243 = vunpack.c.l.b16 %v4211
      %v4244 = vunpack.c.l.b16 %v4212
      %v4245 = vunpack.c.l.b16 %v4213
      %v4246 = vpack.c.b16 %v4231, %v4230
      %v4247 = vpack.c.b16 %v4233, %v4232
      %v4248 = vpack.c.b16 %v4235, %v4234
      %v4249 = vpack.c.b16 %v4237, %v4236
      %v4250 = vpack.c.b16 %v4239, %v4238
      %v4251 = vpack.c.b16 %v4241, %v4240
      %v4252 = vpack.c.b16 %v4243, %v4242
      %v4253 = vpack.c.b16 %v4245, %v4244
      %4262 = vmatprep.subr.bf16.mxu0 0
      %4263 = vmatpush1.bf16.msra.mxu0 %v4253
      %4264 = vmatprep.subr.bf16.mxu0 0
      %4265 = vmatpush1.bf16.msra.mxu0 %v4252
      %4266 = vmatprep.subr.bf16.mxu0 0
      %4267 = vmatpush1.bf16.msra.mxu0 %v4251
      %4268 = vmatprep.subr.bf16.mxu0 0
      %4269 = vmatpush1.bf16.msra.mxu0 %v4250
      %4270 = vmatprep.subr.bf16.mxu0 0
      %4271 = vmatpush1.bf16.msra.mxu0 %v4249
      %4272 = vmatprep.subr.bf16.mxu0 0
      %4273 = vmatpush1.bf16.msra.mxu0 %v4248
      %4274 = vmatprep.subr.bf16.mxu0 0
      %4275 = vmatpush1.bf16.msra.mxu0 %v4247
      %4276 = vmatprep.subr.bf16.mxu0 0
      %4277 = vmatpush1.bf16.msra.mxu0 %v4246
      %4278 = vmatprep.subr.bf16.mxu0 0
      %4279 = vmatpush2.bf16.msra.mxu0 0
      %4280 = vmatprep.subr.bf16.mxu0 0
      %4281 = vmatpush2.bf16.msra.mxu0 0
      %4282 = vmatprep.subr.bf16.mxu0 0
      %4283 = vmatpush2.bf16.msra.mxu0 0
      %4284 = vmatprep.subr.bf16.mxu0 0
      %4285 = vmatpush2.bf16.msra.mxu0 0
      %4286 = vmatprep.subr.bf16.mxu0 0
      %4287 = vmatpush2.bf16.msra.mxu0 0
      %4288 = vmatprep.subr.bf16.mxu0 0
      %4289 = vmatpush2.bf16.msra.mxu0 0
      %4290 = vmatprep.subr.bf16.mxu0 0
      %4291 = vmatpush2.bf16.msra.mxu0 0
      %4292 = vmatprep.subr.bf16.mxu0 0
      %4293 = vmatpush2.bf16.msra.mxu0 0
      %4294 = vmatprep.mubr.bf16.mxu0 0
      %4295 = vmatmul.mubr.bf16.gmra.mxu0 %v4181
      %v4296 = vpop.f32.mrf.mxu0
      %v4297 = vadd.f32 0.0, %v4296
      %v4298 = vpop.f32.mrf.mxu0
      %v4299 = vpop.f32.mrf.mxu0
      %v4300 = vadd.f32 0.0, %v4299
      %v4301 = vpop.f32.mrf.mxu0
      %4302 = vmatprep.mubr.bf16.mxu0 0
      %4303 = vmatmul.mubr.bf16.gmra.mxu0 %v4182
      %v4304 = vpop.f32.mrf.mxu0
      %v4305 = vadd.f32 0.0, %v4304
      %v4306 = vpop.f32.mrf.mxu0
      %v4307 = vpop.f32.mrf.mxu0
      %v4308 = vadd.f32 0.0, %v4307
      %v4309 = vpop.f32.mrf.mxu0
      %4310 = vmatprep.mubr.bf16.mxu0 0
      %4311 = vmatmul.mubr.bf16.gmra.mxu0 %v4183
      %v4312 = vpop.f32.mrf.mxu0
      %v4313 = vadd.f32 0.0, %v4312
      %v4314 = vpop.f32.mrf.mxu0
      %v4315 = vpop.f32.mrf.mxu0
      %v4316 = vadd.f32 0.0, %v4315
      %v4317 = vpop.f32.mrf.mxu0
      %4318 = vmatprep.mubr.bf16.mxu0 0
      %4319 = vmatmul.mubr.bf16.gmra.mxu0 %v4184
      %v4320 = vpop.f32.mrf.mxu0
      %v4321 = vadd.f32 0.0, %v4320
      %v4322 = vpop.f32.mrf.mxu0
      %v4323 = vpop.f32.mrf.mxu0
      %v4324 = vadd.f32 0.0, %v4323
      %v4325 = vpop.f32.mrf.mxu0
      %4326 = vmatprep.mubr.bf16.mxu0 0
      %4327 = vmatmul.mubr.bf16.gmra.mxu0 %v4185
      %v4328 = vpop.f32.mrf.mxu0
      %v4329 = vadd.f32 0.0, %v4328
      %v4330 = vpop.f32.mrf.mxu0
      %v4331 = vpop.f32.mrf.mxu0
      %v4332 = vadd.f32 0.0, %v4331
      %v4333 = vpop.f32.mrf.mxu0
      %4334 = vmatprep.mubr.bf16.mxu0 0
      %4335 = vmatmul.mubr.bf16.gmra.mxu0 %v4186
      %v4336 = vpop.f32.mrf.mxu0
      %v4337 = vadd.f32 0.0, %v4336
      %v4338 = vpop.f32.mrf.mxu0
      %v4339 = vpop.f32.mrf.mxu0
      %v4340 = vadd.f32 0.0, %v4339
      %v4341 = vpop.f32.mrf.mxu0
      %4342 = vmatprep.mubr.bf16.mxu0 0
      %4343 = vmatmul.mubr.bf16.gmra.mxu0 %v4187
      %v4344 = vpop.f32.mrf.mxu0
      %v4345 = vadd.f32 0.0, %v4344
      %v4346 = vpop.f32.mrf.mxu0
      %v4347 = vpop.f32.mrf.mxu0
      %v4348 = vadd.f32 0.0, %v4347
      %v4349 = vpop.f32.mrf.mxu0
      %4350 = vmatprep.mubr.bf16.mxu0 0
      %4351 = vmatmul.mubr.bf16.gmra.mxu0 %v4188
      %v4352 = vpop.f32.mrf.mxu0
      %v4353 = vadd.f32 0.0, %v4352
      %v4354 = vpop.f32.mrf.mxu0
      %v4355 = vpop.f32.mrf.mxu0
      %v4356 = vadd.f32 0.0, %v4355
      %v4357 = vpop.f32.mrf.mxu0
      %4358 = vmatprep.mubr.bf16.mxu0 0
      %4359 = vmatmul.mubr.bf16.gmra.mxu0 %v4189
      %v4360 = vpop.f32.mrf.mxu0
      %v4361 = vadd.f32 0.0, %v4360
      %v4362 = vpop.f32.mrf.mxu0
      %v4363 = vpop.f32.mrf.mxu0
      %v4364 = vadd.f32 0.0, %v4363
      %v4365 = vpop.f32.mrf.mxu0
      %4366 = vmatprep.mubr.bf16.mxu0 0
      %4367 = vmatmul.mubr.bf16.gmra.mxu0 %v4190
      %v4368 = vpop.f32.mrf.mxu0
      %v4369 = vadd.f32 0.0, %v4368
      %v4370 = vpop.f32.mrf.mxu0
      %v4371 = vpop.f32.mrf.mxu0
      %v4372 = vadd.f32 0.0, %v4371
      %v4373 = vpop.f32.mrf.mxu0
      %4374 = vmatprep.mubr.bf16.mxu0 0
      %4375 = vmatmul.mubr.bf16.gmra.mxu0 %v4191
      %v4376 = vpop.f32.mrf.mxu0
      %v4377 = vadd.f32 0.0, %v4376
      %v4378 = vpop.f32.mrf.mxu0
      %v4379 = vpop.f32.mrf.mxu0
      %v4380 = vadd.f32 0.0, %v4379
      %v4381 = vpop.f32.mrf.mxu0
      %4382 = vmatprep.mubr.bf16.mxu0 0
      %4383 = vmatmul.mubr.bf16.gmra.mxu0 %v4192
      %v4384 = vpop.f32.mrf.mxu0
      %v4385 = vadd.f32 0.0, %v4384
      %v4386 = vpop.f32.mrf.mxu0
      %v4387 = vpop.f32.mrf.mxu0
      %v4388 = vadd.f32 0.0, %v4387
      %v4389 = vpop.f32.mrf.mxu0
      %4390 = vmatprep.mubr.bf16.mxu0 0
      %4391 = vmatmul.mubr.bf16.gmra.mxu0 %v4193
      %v4392 = vpop.f32.mrf.mxu0
      %v4393 = vadd.f32 0.0, %v4392
      %v4394 = vpop.f32.mrf.mxu0
      %v4395 = vpop.f32.mrf.mxu0
      %v4396 = vadd.f32 0.0, %v4395
      %v4397 = vpop.f32.mrf.mxu0
      %4398 = vmatprep.mubr.bf16.mxu0 0
      %4399 = vmatmul.mubr.bf16.gmra.mxu0 %v4194
      %v4400 = vpop.f32.mrf.mxu0
      %v4401 = vadd.f32 0.0, %v4400
      %v4402 = vpop.f32.mrf.mxu0
      %v4403 = vpop.f32.mrf.mxu0
      %v4404 = vadd.f32 0.0, %v4403
      %v4405 = vpop.f32.mrf.mxu0
      %4406 = vmatprep.mubr.bf16.mxu0 0
      %4407 = vmatmul.mubr.bf16.gmra.mxu0 %v4195
      %v4408 = vpop.f32.mrf.mxu0
      %v4409 = vadd.f32 0.0, %v4408
      %v4410 = vpop.f32.mrf.mxu0
      %v4411 = vpop.f32.mrf.mxu0
      %v4412 = vadd.f32 0.0, %v4411
      %v4413 = vpop.f32.mrf.mxu0
      %4414 = vmatprep.mubr.bf16.mxu0 0
      %4415 = vmatmul.mubr.bf16.gmra.mxu0 %v4196
      %v4416 = vpop.f32.mrf.mxu0
      %v4417 = vadd.f32 0.0, %v4416
      %v4418 = vpop.f32.mrf.mxu0
      %v4419 = vpop.f32.mrf.mxu0
      %v4420 = vadd.f32 0.0, %v4419
      %v4421 = vpop.f32.mrf.mxu0
      %4422 = vdwg.mxu0
      %v4423 = vadd.f32 %v4101, %v4297
      %v4424 = vadd.f32 %v4102, %v4300
      %v4425 = vadd.f32 %v4103, %v4305
      %v4426 = vadd.f32 %v4104, %v4308
      %v4427 = vadd.f32 %v4105, %v4313
      %v4428 = vadd.f32 %v4106, %v4316
      %v4429 = vadd.f32 %v4107, %v4321
      %v4430 = vadd.f32 %v4108, %v4324
      %v4431 = vadd.f32 %v4109, %v4329
      %v4432 = vadd.f32 %v4110, %v4332
      %v4433 = vadd.f32 %v4111, %v4337
      %v4434 = vadd.f32 %v4112, %v4340
      %v4435 = vadd.f32 %v4113, %v4345
      %v4436 = vadd.f32 %v4114, %v4348
      %v4437 = vadd.f32 %v4115, %v4353
      %v4438 = vadd.f32 %v4116, %v4356
      %v4439 = vadd.f32 %v4117, %v4361
      %v4440 = vadd.f32 %v4118, %v4364
      %v4441 = vadd.f32 %v4119, %v4369
      %v4442 = vadd.f32 %v4120, %v4372
      %v4443 = vadd.f32 %v4121, %v4377
      %v4444 = vadd.f32 %v4122, %v4380
      %v4445 = vadd.f32 %v4123, %v4385
      %v4446 = vadd.f32 %v4124, %v4388
      %v4447 = vadd.f32 %v4125, %v4393
      %v4448 = vadd.f32 %v4126, %v4396
      %v4449 = vadd.f32 %v4127, %v4401
      %v4450 = vadd.f32 %v4128, %v4404
      %v4451 = vadd.f32 %v4129, %v4409
      %v4452 = vadd.f32 %v4130, %v4412
      %v4453 = vadd.f32 %v4131, %v4417
      %v4454 = vadd.f32 %v4132, %v4420
      %v4455 = vld [vmem:[#allocation3 + $0x18] sm:$0xff]
      %v4456 = vld [vmem:[#allocation3 + $0x20] sm:$0xff]
      %v4457 = vld [vmem:[#allocation3 + $0x28] sm:$0xff]
      %v4458 = vld [vmem:[#allocation3 + $0x30] sm:$0xff]
      %v4459 = vld [vmem:[#allocation3 + $0x38] sm:$0xff]
      %v4460 = vld [vmem:[#allocation3 + $0x40] sm:$0xff]
      %v4461 = vld [vmem:[#allocation3 + $0x48] sm:$0xff]
      %v4462 = vld [vmem:[#allocation3 + $0x50] sm:$0xff]
      %v4463 = vld [vmem:[#allocation3 + $0x58] sm:$0xff]
      %v4464 = vld [vmem:[#allocation3 + $0x60] sm:$0xff]
      %v4465 = vld [vmem:[#allocation3 + $0x68] sm:$0xff]
      %v4466 = vld [vmem:[#allocation3 + $0x70] sm:$0xff]
      %v4467 = vld [vmem:[#allocation3 + $0x78] sm:$0xff]
      %v4468 = vld [vmem:[#allocation3 + $0x80] sm:$0xff]
      %v4469 = vld [vmem:[#allocation3 + $0x88] sm:$0xff]
      %v4470 = vld [vmem:[#allocation3 + $0x90] sm:$0xff]
      %v4471 = vld [vmem:[#allocation3 + $0x98] sm:$0xff]
      %v4472 = vld [vmem:[#allocation3 + $0xa0] sm:$0xff]
      %v4473 = vld [vmem:[#allocation3 + $0xa8] sm:$0xff]
      %v4474 = vld [vmem:[#allocation3 + $0xb0] sm:$0xff]
      %v4475 = vld [vmem:[#allocation3 + $0xb8] sm:$0xff]
      %v4476 = vld [vmem:[#allocation3 + $0xc0] sm:$0xff]
      %v4477 = vld [vmem:[#allocation3 + $0xc8] sm:$0xff]
      %v4478 = vld [vmem:[#allocation3 + $0xd0] sm:$0xff]
      %v4479 = vld [vmem:[#allocation3 + $0xd8] sm:$0xff]
      %v4480 = vld [vmem:[#allocation3 + $0xe0] sm:$0xff]
      %v4481 = vld [vmem:[#allocation3 + $0xe8] sm:$0xff]
      %v4482 = vld [vmem:[#allocation3 + $0xf0] sm:$0xff]
      %v4483 = vld [vmem:[#allocation3 + $0xf8] sm:$0xff]
      %v4484 = vld [vmem:[#allocation3 + $0x100] sm:$0xff]
      %v4485 = vld [vmem:[#allocation3 + $0x108] sm:$0xff]
      %v4486 = vld [vmem:[#allocation3 + $0x110] sm:$0xff]
      %v4487 = vpack.c.bf16 %v4456, %v4455
      %v4488 = vpack.c.bf16 %v4458, %v4457
      %v4489 = vpack.c.bf16 %v4460, %v4459
      %v4490 = vpack.c.bf16 %v4462, %v4461
      %v4491 = vpack.c.bf16 %v4464, %v4463
      %v4492 = vpack.c.bf16 %v4466, %v4465
      %v4493 = vpack.c.bf16 %v4468, %v4467
      %v4494 = vpack.c.bf16 %v4470, %v4469
      %v4495 = vpack.c.bf16 %v4472, %v4471
      %v4496 = vpack.c.bf16 %v4474, %v4473
      %v4497 = vpack.c.bf16 %v4476, %v4475
      %v4498 = vpack.c.bf16 %v4478, %v4477
      %v4499 = vpack.c.bf16 %v4480, %v4479
      %v4500 = vpack.c.bf16 %v4482, %v4481
      %v4501 = vpack.c.bf16 %v4484, %v4483
      %v4502 = vpack.c.bf16 %v4486, %v4485
      %s4503 = scalar_lea.vmem %s6, 256
      %v4504 = vld [vmem:[%s4503] sm:$0xf]
      %v4505 = vld [vmem:[%s4503 + $0x4] sm:$0xf]
      %v4506 = vld [vmem:[%s4503 + $0x8] sm:$0xf]
      %v4507 = vld [vmem:[%s4503 + $0xc] sm:$0xf]
      %v4508 = vld [vmem:[%s4503 + $0x10] sm:$0xf]
      %v4509 = vld [vmem:[%s4503 + $0x14] sm:$0xf]
      %v4510 = vld [vmem:[%s4503 + $0x18] sm:$0xf]
      %v4511 = vld [vmem:[%s4503 + $0x1c] sm:$0xf]
      %v4512 = vld [vmem:[%s4503 + $0x20] sm:$0xf]
      %v4513 = vld [vmem:[%s4503 + $0x24] sm:$0xf]
      %v4514 = vld [vmem:[%s4503 + $0x28] sm:$0xf]
      %v4515 = vld [vmem:[%s4503 + $0x2c] sm:$0xf]
      %v4516 = vld [vmem:[%s4503 + $0x30] sm:$0xf]
      %v4517 = vld [vmem:[%s4503 + $0x34] sm:$0xf]
      %v4518 = vld [vmem:[%s4503 + $0x38] sm:$0xf]
      %v4519 = vld [vmem:[%s4503 + $0x3c] sm:$0xf]
      %v4536 = vunpack.c.l.b16 %v4504
      %v4537 = vunpack.c.l.b16 %v4505
      %v4538 = vunpack.c.l.b16 %v4506
      %v4539 = vunpack.c.l.b16 %v4507
      %v4540 = vunpack.c.l.b16 %v4508
      %v4541 = vunpack.c.l.b16 %v4509
      %v4542 = vunpack.c.l.b16 %v4510
      %v4543 = vunpack.c.l.b16 %v4511
      %v4544 = vunpack.c.l.b16 %v4512
      %v4545 = vunpack.c.l.b16 %v4513
      %v4546 = vunpack.c.l.b16 %v4514
      %v4547 = vunpack.c.l.b16 %v4515
      %v4548 = vunpack.c.l.b16 %v4516
      %v4549 = vunpack.c.l.b16 %v4517
      %v4550 = vunpack.c.l.b16 %v4518
      %v4551 = vunpack.c.l.b16 %v4519
      %v4552 = vpack.c.b16 %v4537, %v4536
      %v4553 = vpack.c.b16 %v4539, %v4538
      %v4554 = vpack.c.b16 %v4541, %v4540
      %v4555 = vpack.c.b16 %v4543, %v4542
      %v4556 = vpack.c.b16 %v4545, %v4544
      %v4557 = vpack.c.b16 %v4547, %v4546
      %v4558 = vpack.c.b16 %v4549, %v4548
      %v4559 = vpack.c.b16 %v4551, %v4550
      %4568 = vmatprep.subr.bf16.mxu0 0
      %4569 = vmatpush1.bf16.msra.mxu0 %v4559
      %4570 = vmatprep.subr.bf16.mxu0 0
      %4571 = vmatpush1.bf16.msra.mxu0 %v4558
      %4572 = vmatprep.subr.bf16.mxu0 0
      %4573 = vmatpush1.bf16.msra.mxu0 %v4557
      %4574 = vmatprep.subr.bf16.mxu0 0
      %4575 = vmatpush1.bf16.msra.mxu0 %v4556
      %4576 = vmatprep.subr.bf16.mxu0 0
      %4577 = vmatpush1.bf16.msra.mxu0 %v4555
      %4578 = vmatprep.subr.bf16.mxu0 0
      %4579 = vmatpush1.bf16.msra.mxu0 %v4554
      %4580 = vmatprep.subr.bf16.mxu0 0
      %4581 = vmatpush1.bf16.msra.mxu0 %v4553
      %4582 = vmatprep.subr.bf16.mxu0 0
      %4583 = vmatpush1.bf16.msra.mxu0 %v4552
      %4584 = vmatprep.subr.bf16.mxu0 0
      %4585 = vmatpush2.bf16.msra.mxu0 0
      %4586 = vmatprep.subr.bf16.mxu0 0
      %4587 = vmatpush2.bf16.msra.mxu0 0
      %4588 = vmatprep.subr.bf16.mxu0 0
      %4589 = vmatpush2.bf16.msra.mxu0 0
      %4590 = vmatprep.subr.bf16.mxu0 0
      %4591 = vmatpush2.bf16.msra.mxu0 0
      %4592 = vmatprep.subr.bf16.mxu0 0
      %4593 = vmatpush2.bf16.msra.mxu0 0
      %4594 = vmatprep.subr.bf16.mxu0 0
      %4595 = vmatpush2.bf16.msra.mxu0 0
      %4596 = vmatprep.subr.bf16.mxu0 0
      %4597 = vmatpush2.bf16.msra.mxu0 0
      %4598 = vmatprep.subr.bf16.mxu0 0
      %4599 = vmatpush2.bf16.msra.mxu0 0
      %4600 = vmatprep.mubr.bf16.mxu0 0
      %4601 = vmatmul.mubr.bf16.gmra.mxu0 %v4487
      %v4602 = vpop.f32.mrf.mxu0
      %v4603 = vadd.f32 0.0, %v4602
      %v4604 = vpop.f32.mrf.mxu0
      %v4605 = vpop.f32.mrf.mxu0
      %v4606 = vadd.f32 0.0, %v4605
      %v4607 = vpop.f32.mrf.mxu0
      %4608 = vmatprep.mubr.bf16.mxu0 0
      %4609 = vmatmul.mubr.bf16.gmra.mxu0 %v4488
      %v4610 = vpop.f32.mrf.mxu0
      %v4611 = vadd.f32 0.0, %v4610
      %v4612 = vpop.f32.mrf.mxu0
      %v4613 = vpop.f32.mrf.mxu0
      %v4614 = vadd.f32 0.0, %v4613
      %v4615 = vpop.f32.mrf.mxu0
      %4616 = vmatprep.mubr.bf16.mxu0 0
      %4617 = vmatmul.mubr.bf16.gmra.mxu0 %v4489
      %v4618 = vpop.f32.mrf.mxu0
      %v4619 = vadd.f32 0.0, %v4618
      %v4620 = vpop.f32.mrf.mxu0
      %v4621 = vpop.f32.mrf.mxu0
      %v4622 = vadd.f32 0.0, %v4621
      %v4623 = vpop.f32.mrf.mxu0
      %4624 = vmatprep.mubr.bf16.mxu0 0
      %4625 = vmatmul.mubr.bf16.gmra.mxu0 %v4490
      %v4626 = vpop.f32.mrf.mxu0
      %v4627 = vadd.f32 0.0, %v4626
      %v4628 = vpop.f32.mrf.mxu0
      %v4629 = vpop.f32.mrf.mxu0
      %v4630 = vadd.f32 0.0, %v4629
      %v4631 = vpop.f32.mrf.mxu0
      %4632 = vmatprep.mubr.bf16.mxu0 0
      %4633 = vmatmul.mubr.bf16.gmra.mxu0 %v4491
      %v4634 = vpop.f32.mrf.mxu0
      %v4635 = vadd.f32 0.0, %v4634
      %v4636 = vpop.f32.mrf.mxu0
      %v4637 = vpop.f32.mrf.mxu0
      %v4638 = vadd.f32 0.0, %v4637
      %v4639 = vpop.f32.mrf.mxu0
      %4640 = vmatprep.mubr.bf16.mxu0 0
      %4641 = vmatmul.mubr.bf16.gmra.mxu0 %v4492
      %v4642 = vpop.f32.mrf.mxu0
      %v4643 = vadd.f32 0.0, %v4642
      %v4644 = vpop.f32.mrf.mxu0
      %v4645 = vpop.f32.mrf.mxu0
      %v4646 = vadd.f32 0.0, %v4645
      %v4647 = vpop.f32.mrf.mxu0
      %4648 = vmatprep.mubr.bf16.mxu0 0
      %4649 = vmatmul.mubr.bf16.gmra.mxu0 %v4493
      %v4650 = vpop.f32.mrf.mxu0
      %v4651 = vadd.f32 0.0, %v4650
      %v4652 = vpop.f32.mrf.mxu0
      %v4653 = vpop.f32.mrf.mxu0
      %v4654 = vadd.f32 0.0, %v4653
      %v4655 = vpop.f32.mrf.mxu0
      %4656 = vmatprep.mubr.bf16.mxu0 0
      %4657 = vmatmul.mubr.bf16.gmra.mxu0 %v4494
      %v4658 = vpop.f32.mrf.mxu0
      %v4659 = vadd.f32 0.0, %v4658
      %v4660 = vpop.f32.mrf.mxu0
      %v4661 = vpop.f32.mrf.mxu0
      %v4662 = vadd.f32 0.0, %v4661
      %v4663 = vpop.f32.mrf.mxu0
      %4664 = vmatprep.mubr.bf16.mxu0 0
      %4665 = vmatmul.mubr.bf16.gmra.mxu0 %v4495
      %v4666 = vpop.f32.mrf.mxu0
      %v4667 = vadd.f32 0.0, %v4666
      %v4668 = vpop.f32.mrf.mxu0
      %v4669 = vpop.f32.mrf.mxu0
      %v4670 = vadd.f32 0.0, %v4669
      %v4671 = vpop.f32.mrf.mxu0
      %4672 = vmatprep.mubr.bf16.mxu0 0
      %4673 = vmatmul.mubr.bf16.gmra.mxu0 %v4496
      %v4674 = vpop.f32.mrf.mxu0
      %v4675 = vadd.f32 0.0, %v4674
      %v4676 = vpop.f32.mrf.mxu0
      %v4677 = vpop.f32.mrf.mxu0
      %v4678 = vadd.f32 0.0, %v4677
      %v4679 = vpop.f32.mrf.mxu0
      %4680 = vmatprep.mubr.bf16.mxu0 0
      %4681 = vmatmul.mubr.bf16.gmra.mxu0 %v4497
      %v4682 = vpop.f32.mrf.mxu0
      %v4683 = vadd.f32 0.0, %v4682
      %v4684 = vpop.f32.mrf.mxu0
      %v4685 = vpop.f32.mrf.mxu0
      %v4686 = vadd.f32 0.0, %v4685
      %v4687 = vpop.f32.mrf.mxu0
      %4688 = vmatprep.mubr.bf16.mxu0 0
      %4689 = vmatmul.mubr.bf16.gmra.mxu0 %v4498
      %v4690 = vpop.f32.mrf.mxu0
      %v4691 = vadd.f32 0.0, %v4690
      %v4692 = vpop.f32.mrf.mxu0
      %v4693 = vpop.f32.mrf.mxu0
      %v4694 = vadd.f32 0.0, %v4693
      %v4695 = vpop.f32.mrf.mxu0
      %4696 = vmatprep.mubr.bf16.mxu0 0
      %4697 = vmatmul.mubr.bf16.gmra.mxu0 %v4499
      %v4698 = vpop.f32.mrf.mxu0
      %v4699 = vadd.f32 0.0, %v4698
      %v4700 = vpop.f32.mrf.mxu0
      %v4701 = vpop.f32.mrf.mxu0
      %v4702 = vadd.f32 0.0, %v4701
      %v4703 = vpop.f32.mrf.mxu0
      %4704 = vmatprep.mubr.bf16.mxu0 0
      %4705 = vmatmul.mubr.bf16.gmra.mxu0 %v4500
      %v4706 = vpop.f32.mrf.mxu0
      %v4707 = vadd.f32 0.0, %v4706
      %v4708 = vpop.f32.mrf.mxu0
      %v4709 = vpop.f32.mrf.mxu0
      %v4710 = vadd.f32 0.0, %v4709
      %v4711 = vpop.f32.mrf.mxu0
      %4712 = vmatprep.mubr.bf16.mxu0 0
      %4713 = vmatmul.mubr.bf16.gmra.mxu0 %v4501
      %v4714 = vpop.f32.mrf.mxu0
      %v4715 = vadd.f32 0.0, %v4714
      %v4716 = vpop.f32.mrf.mxu0
      %v4717 = vpop.f32.mrf.mxu0
      %v4718 = vadd.f32 0.0, %v4717
      %v4719 = vpop.f32.mrf.mxu0
      %4720 = vmatprep.mubr.bf16.mxu0 0
      %4721 = vmatmul.mubr.bf16.gmra.mxu0 %v4502
      %v4722 = vpop.f32.mrf.mxu0
      %v4723 = vadd.f32 0.0, %v4722
      %v4724 = vpop.f32.mrf.mxu0
      %v4725 = vpop.f32.mrf.mxu0
      %v4726 = vadd.f32 0.0, %v4725
      %v4727 = vpop.f32.mrf.mxu0
      %4728 = vdwg.mxu0
      %v4729 = vadd.f32 %v4423, %v4603
      %v4730 = vadd.f32 %v4424, %v4606
      %v4731 = vadd.f32 %v4425, %v4611
      %v4732 = vadd.f32 %v4426, %v4614
      %v4733 = vadd.f32 %v4427, %v4619
      %v4734 = vadd.f32 %v4428, %v4622
      %v4735 = vadd.f32 %v4429, %v4627
      %v4736 = vadd.f32 %v4430, %v4630
      %v4737 = vadd.f32 %v4431, %v4635
      %v4738 = vadd.f32 %v4432, %v4638
      %v4739 = vadd.f32 %v4433, %v4643
      %v4740 = vadd.f32 %v4434, %v4646
      %v4741 = vadd.f32 %v4435, %v4651
      %v4742 = vadd.f32 %v4436, %v4654
      %v4743 = vadd.f32 %v4437, %v4659
      %v4744 = vadd.f32 %v4438, %v4662
      %v4745 = vadd.f32 %v4439, %v4667
      %v4746 = vadd.f32 %v4440, %v4670
      %v4747 = vadd.f32 %v4441, %v4675
      %v4748 = vadd.f32 %v4442, %v4678
      %v4749 = vadd.f32 %v4443, %v4683
      %v4750 = vadd.f32 %v4444, %v4686
      %v4751 = vadd.f32 %v4445, %v4691
      %v4752 = vadd.f32 %v4446, %v4694
      %v4753 = vadd.f32 %v4447, %v4699
      %v4754 = vadd.f32 %v4448, %v4702
      %v4755 = vadd.f32 %v4449, %v4707
      %v4756 = vadd.f32 %v4450, %v4710
      %v4757 = vadd.f32 %v4451, %v4715
      %v4758 = vadd.f32 %v4452, %v4718
      %v4759 = vadd.f32 %v4453, %v4723
      %v4760 = vadd.f32 %v4454, %v4726
      %v4761 = vld [vmem:[#allocation3 + $0x19] sm:$0xff]
      %v4762 = vld [vmem:[#allocation3 + $0x21] sm:$0xff]
      %v4763 = vld [vmem:[#allocation3 + $0x29] sm:$0xff]
      %v4764 = vld [vmem:[#allocation3 + $0x31] sm:$0xff]
      %v4765 = vld [vmem:[#allocation3 + $0x39] sm:$0xff]
      %v4766 = vld [vmem:[#allocation3 + $0x41] sm:$0xff]
      %v4767 = vld [vmem:[#allocation3 + $0x49] sm:$0xff]
      %v4768 = vld [vmem:[#allocation3 + $0x51] sm:$0xff]
      %v4769 = vld [vmem:[#allocation3 + $0x59] sm:$0xff]
      %v4770 = vld [vmem:[#allocation3 + $0x61] sm:$0xff]
      %v4771 = vld [vmem:[#allocation3 + $0x69] sm:$0xff]
      %v4772 = vld [vmem:[#allocation3 + $0x71] sm:$0xff]
      %v4773 = vld [vmem:[#allocation3 + $0x79] sm:$0xff]
      %v4774 = vld [vmem:[#allocation3 + $0x81] sm:$0xff]
      %v4775 = vld [vmem:[#allocation3 + $0x89] sm:$0xff]
      %v4776 = vld [vmem:[#allocation3 + $0x91] sm:$0xff]
      %v4777 = vld [vmem:[#allocation3 + $0x99] sm:$0xff]
      %v4778 = vld [vmem:[#allocation3 + $0xa1] sm:$0xff]
      %v4779 = vld [vmem:[#allocation3 + $0xa9] sm:$0xff]
      %v4780 = vld [vmem:[#allocation3 + $0xb1] sm:$0xff]
      %v4781 = vld [vmem:[#allocation3 + $0xb9] sm:$0xff]
      %v4782 = vld [vmem:[#allocation3 + $0xc1] sm:$0xff]
      %v4783 = vld [vmem:[#allocation3 + $0xc9] sm:$0xff]
      %v4784 = vld [vmem:[#allocation3 + $0xd1] sm:$0xff]
      %v4785 = vld [vmem:[#allocation3 + $0xd9] sm:$0xff]
      %v4786 = vld [vmem:[#allocation3 + $0xe1] sm:$0xff]
      %v4787 = vld [vmem:[#allocation3 + $0xe9] sm:$0xff]
      %v4788 = vld [vmem:[#allocation3 + $0xf1] sm:$0xff]
      %v4789 = vld [vmem:[#allocation3 + $0xf9] sm:$0xff]
      %v4790 = vld [vmem:[#allocation3 + $0x101] sm:$0xff]
      %v4791 = vld [vmem:[#allocation3 + $0x109] sm:$0xff]
      %v4792 = vld [vmem:[#allocation3 + $0x111] sm:$0xff]
      %v4793 = vpack.c.bf16 %v4762, %v4761
      %v4794 = vpack.c.bf16 %v4764, %v4763
      %v4795 = vpack.c.bf16 %v4766, %v4765
      %v4796 = vpack.c.bf16 %v4768, %v4767
      %v4797 = vpack.c.bf16 %v4770, %v4769
      %v4798 = vpack.c.bf16 %v4772, %v4771
      %v4799 = vpack.c.bf16 %v4774, %v4773
      %v4800 = vpack.c.bf16 %v4776, %v4775
      %v4801 = vpack.c.bf16 %v4778, %v4777
      %v4802 = vpack.c.bf16 %v4780, %v4779
      %v4803 = vpack.c.bf16 %v4782, %v4781
      %v4804 = vpack.c.bf16 %v4784, %v4783
      %v4805 = vpack.c.bf16 %v4786, %v4785
      %v4806 = vpack.c.bf16 %v4788, %v4787
      %v4807 = vpack.c.bf16 %v4790, %v4789
      %v4808 = vpack.c.bf16 %v4792, %v4791
      %v4809 = vmul.bf16 %v4793, %v1655
      %v4810 = vmul.bf16 %v4794, %v1656
      %v4811 = vmul.bf16 %v4795, %v1657
      %v4812 = vmul.bf16 %v4796, %v1658
      %v4813 = vmul.bf16 %v4797, %v1659
      %v4814 = vmul.bf16 %v4798, %v1660
      %v4815 = vmul.bf16 %v4799, %v1661
      %v4816 = vmul.bf16 %v4800, %v1662
      %v4817 = vmul.bf16 %v4801, %v1663
      %v4818 = vmul.bf16 %v4802, %v1664
      %v4819 = vmul.bf16 %v4803, %v1665
      %v4820 = vmul.bf16 %v4804, %v1666
      %v4821 = vmul.bf16 %v4805, %v1667
      %v4822 = vmul.bf16 %v4806, %v1668
      %v4823 = vmul.bf16 %v4807, %v1669
      %v4824 = vmul.bf16 %v4808, %v1670
      %s4825 = scalar_lea.vmem %s6, 320
      %v4826 = vld [vmem:[%s4825] sm:$0xf]
      %v4827 = vld [vmem:[%s4825 + $0x4] sm:$0xf]
      %v4828 = vld [vmem:[%s4825 + $0x8] sm:$0xf]
      %v4829 = vld [vmem:[%s4825 + $0xc] sm:$0xf]
      %v4830 = vld [vmem:[%s4825 + $0x10] sm:$0xf]
      %v4831 = vld [vmem:[%s4825 + $0x14] sm:$0xf]
      %v4832 = vld [vmem:[%s4825 + $0x18] sm:$0xf]
      %v4833 = vld [vmem:[%s4825 + $0x1c] sm:$0xf]
      %v4834 = vld [vmem:[%s4825 + $0x20] sm:$0xf]
      %v4835 = vld [vmem:[%s4825 + $0x24] sm:$0xf]
      %v4836 = vld [vmem:[%s4825 + $0x28] sm:$0xf]
      %v4837 = vld [vmem:[%s4825 + $0x2c] sm:$0xf]
      %v4838 = vld [vmem:[%s4825 + $0x30] sm:$0xf]
      %v4839 = vld [vmem:[%s4825 + $0x34] sm:$0xf]
      %v4840 = vld [vmem:[%s4825 + $0x38] sm:$0xf]
      %v4841 = vld [vmem:[%s4825 + $0x3c] sm:$0xf]
      %v4858 = vunpack.c.l.b16 %v4826
      %v4859 = vunpack.c.l.b16 %v4827
      %v4860 = vunpack.c.l.b16 %v4828
      %v4861 = vunpack.c.l.b16 %v4829
      %v4862 = vunpack.c.l.b16 %v4830
      %v4863 = vunpack.c.l.b16 %v4831
      %v4864 = vunpack.c.l.b16 %v4832
      %v4865 = vunpack.c.l.b16 %v4833
      %v4866 = vunpack.c.l.b16 %v4834
      %v4867 = vunpack.c.l.b16 %v4835
      %v4868 = vunpack.c.l.b16 %v4836
      %v4869 = vunpack.c.l.b16 %v4837
      %v4870 = vunpack.c.l.b16 %v4838
      %v4871 = vunpack.c.l.b16 %v4839
      %v4872 = vunpack.c.l.b16 %v4840
      %v4873 = vunpack.c.l.b16 %v4841
      %v4874 = vpack.c.b16 %v4859, %v4858
      %v4875 = vpack.c.b16 %v4861, %v4860
      %v4876 = vpack.c.b16 %v4863, %v4862
      %v4877 = vpack.c.b16 %v4865, %v4864
      %v4878 = vpack.c.b16 %v4867, %v4866
      %v4879 = vpack.c.b16 %v4869, %v4868
      %v4880 = vpack.c.b16 %v4871, %v4870
      %v4881 = vpack.c.b16 %v4873, %v4872
      %4890 = vmatprep.subr.bf16.mxu0 0
      %4891 = vmatpush1.bf16.msra.mxu0 %v4881
      %4892 = vmatprep.subr.bf16.mxu0 0
      %4893 = vmatpush1.bf16.msra.mxu0 %v4880
      %4894 = vmatprep.subr.bf16.mxu0 0
      %4895 = vmatpush1.bf16.msra.mxu0 %v4879
      %4896 = vmatprep.subr.bf16.mxu0 0
      %4897 = vmatpush1.bf16.msra.mxu0 %v4878
      %4898 = vmatprep.subr.bf16.mxu0 0
      %4899 = vmatpush1.bf16.msra.mxu0 %v4877
      %4900 = vmatprep.subr.bf16.mxu0 0
      %4901 = vmatpush1.bf16.msra.mxu0 %v4876
      %4902 = vmatprep.subr.bf16.mxu0 0
      %4903 = vmatpush1.bf16.msra.mxu0 %v4875
      %4904 = vmatprep.subr.bf16.mxu0 0
      %4905 = vmatpush1.bf16.msra.mxu0 %v4874
      %4906 = vmatprep.subr.bf16.mxu0 0
      %4907 = vmatpush2.bf16.msra.mxu0 0
      %4908 = vmatprep.subr.bf16.mxu0 0
      %4909 = vmatpush2.bf16.msra.mxu0 0
      %4910 = vmatprep.subr.bf16.mxu0 0
      %4911 = vmatpush2.bf16.msra.mxu0 0
      %4912 = vmatprep.subr.bf16.mxu0 0
      %4913 = vmatpush2.bf16.msra.mxu0 0
      %4914 = vmatprep.subr.bf16.mxu0 0
      %4915 = vmatpush2.bf16.msra.mxu0 0
      %4916 = vmatprep.subr.bf16.mxu0 0
      %4917 = vmatpush2.bf16.msra.mxu0 0
      %4918 = vmatprep.subr.bf16.mxu0 0
      %4919 = vmatpush2.bf16.msra.mxu0 0
      %4920 = vmatprep.subr.bf16.mxu0 0
      %4921 = vmatpush2.bf16.msra.mxu0 0
      %4922 = vmatprep.mubr.bf16.mxu0 0
      %4923 = vmatmul.mubr.bf16.gmra.mxu0 %v4809
      %v4924 = vpop.f32.mrf.mxu0
      %v4925 = vadd.f32 0.0, %v4924
      %v4926 = vpop.f32.mrf.mxu0
      %v4927 = vpop.f32.mrf.mxu0
      %v4928 = vadd.f32 0.0, %v4927
      %v4929 = vpop.f32.mrf.mxu0
      %4930 = vmatprep.mubr.bf16.mxu0 0
      %4931 = vmatmul.mubr.bf16.gmra.mxu0 %v4810
      %v4932 = vpop.f32.mrf.mxu0
      %v4933 = vadd.f32 0.0, %v4932
      %v4934 = vpop.f32.mrf.mxu0
      %v4935 = vpop.f32.mrf.mxu0
      %v4936 = vadd.f32 0.0, %v4935
      %v4937 = vpop.f32.mrf.mxu0
      %4938 = vmatprep.mubr.bf16.mxu0 0
      %4939 = vmatmul.mubr.bf16.gmra.mxu0 %v4811
      %v4940 = vpop.f32.mrf.mxu0
      %v4941 = vadd.f32 0.0, %v4940
      %v4942 = vpop.f32.mrf.mxu0
      %v4943 = vpop.f32.mrf.mxu0
      %v4944 = vadd.f32 0.0, %v4943
      %v4945 = vpop.f32.mrf.mxu0
      %4946 = vmatprep.mubr.bf16.mxu0 0
      %4947 = vmatmul.mubr.bf16.gmra.mxu0 %v4812
      %v4948 = vpop.f32.mrf.mxu0
      %v4949 = vadd.f32 0.0, %v4948
      %v4950 = vpop.f32.mrf.mxu0
      %v4951 = vpop.f32.mrf.mxu0
      %v4952 = vadd.f32 0.0, %v4951
      %v4953 = vpop.f32.mrf.mxu0
      %4954 = vmatprep.mubr.bf16.mxu0 0
      %4955 = vmatmul.mubr.bf16.gmra.mxu0 %v4813
      %v4956 = vpop.f32.mrf.mxu0
      %v4957 = vadd.f32 0.0, %v4956
      %v4958 = vpop.f32.mrf.mxu0
      %v4959 = vpop.f32.mrf.mxu0
      %v4960 = vadd.f32 0.0, %v4959
      %v4961 = vpop.f32.mrf.mxu0
      %4962 = vmatprep.mubr.bf16.mxu0 0
      %4963 = vmatmul.mubr.bf16.gmra.mxu0 %v4814
      %v4964 = vpop.f32.mrf.mxu0
      %v4965 = vadd.f32 0.0, %v4964
      %v4966 = vpop.f32.mrf.mxu0
      %v4967 = vpop.f32.mrf.mxu0
      %v4968 = vadd.f32 0.0, %v4967
      %v4969 = vpop.f32.mrf.mxu0
      %4970 = vmatprep.mubr.bf16.mxu0 0
      %4971 = vmatmul.mubr.bf16.gmra.mxu0 %v4815
      %v4972 = vpop.f32.mrf.mxu0
      %v4973 = vadd.f32 0.0, %v4972
      %v4974 = vpop.f32.mrf.mxu0
      %v4975 = vpop.f32.mrf.mxu0
      %v4976 = vadd.f32 0.0, %v4975
      %v4977 = vpop.f32.mrf.mxu0
      %4978 = vmatprep.mubr.bf16.mxu0 0
      %4979 = vmatmul.mubr.bf16.gmra.mxu0 %v4816
      %v4980 = vpop.f32.mrf.mxu0
      %v4981 = vadd.f32 0.0, %v4980
      %v4982 = vpop.f32.mrf.mxu0
      %v4983 = vpop.f32.mrf.mxu0
      %v4984 = vadd.f32 0.0, %v4983
      %v4985 = vpop.f32.mrf.mxu0
      %4986 = vmatprep.mubr.bf16.mxu0 0
      %4987 = vmatmul.mubr.bf16.gmra.mxu0 %v4817
      %v4988 = vpop.f32.mrf.mxu0
      %v4989 = vadd.f32 0.0, %v4988
      %v4990 = vpop.f32.mrf.mxu0
      %v4991 = vpop.f32.mrf.mxu0
      %v4992 = vadd.f32 0.0, %v4991
      %v4993 = vpop.f32.mrf.mxu0
      %4994 = vmatprep.mubr.bf16.mxu0 0
      %4995 = vmatmul.mubr.bf16.gmra.mxu0 %v4818
      %v4996 = vpop.f32.mrf.mxu0
      %v4997 = vadd.f32 0.0, %v4996
      %v4998 = vpop.f32.mrf.mxu0
      %v4999 = vpop.f32.mrf.mxu0
      %v5000 = vadd.f32 0.0, %v4999
      %v5001 = vpop.f32.mrf.mxu0
      %5002 = vmatprep.mubr.bf16.mxu0 0
      %5003 = vmatmul.mubr.bf16.gmra.mxu0 %v4819
      %v5004 = vpop.f32.mrf.mxu0
      %v5005 = vadd.f32 0.0, %v5004
      %v5006 = vpop.f32.mrf.mxu0
      %v5007 = vpop.f32.mrf.mxu0
      %v5008 = vadd.f32 0.0, %v5007
      %v5009 = vpop.f32.mrf.mxu0
      %5010 = vmatprep.mubr.bf16.mxu0 0
      %5011 = vmatmul.mubr.bf16.gmra.mxu0 %v4820
      %v5012 = vpop.f32.mrf.mxu0
      %v5013 = vadd.f32 0.0, %v5012
      %v5014 = vpop.f32.mrf.mxu0
      %v5015 = vpop.f32.mrf.mxu0
      %v5016 = vadd.f32 0.0, %v5015
      %v5017 = vpop.f32.mrf.mxu0
      %5018 = vmatprep.mubr.bf16.mxu0 0
      %5019 = vmatmul.mubr.bf16.gmra.mxu0 %v4821
      %v5020 = vpop.f32.mrf.mxu0
      %v5021 = vadd.f32 0.0, %v5020
      %v5022 = vpop.f32.mrf.mxu0
      %v5023 = vpop.f32.mrf.mxu0
      %v5024 = vadd.f32 0.0, %v5023
      %v5025 = vpop.f32.mrf.mxu0
      %5026 = vmatprep.mubr.bf16.mxu0 0
      %5027 = vmatmul.mubr.bf16.gmra.mxu0 %v4822
      %v5028 = vpop.f32.mrf.mxu0
      %v5029 = vadd.f32 0.0, %v5028
      %v5030 = vpop.f32.mrf.mxu0
      %v5031 = vpop.f32.mrf.mxu0
      %v5032 = vadd.f32 0.0, %v5031
      %v5033 = vpop.f32.mrf.mxu0
      %5034 = vmatprep.mubr.bf16.mxu0 0
      %5035 = vmatmul.mubr.bf16.gmra.mxu0 %v4823
      %v5036 = vpop.f32.mrf.mxu0
      %v5037 = vadd.f32 0.0, %v5036
      %v5038 = vpop.f32.mrf.mxu0
      %v5039 = vpop.f32.mrf.mxu0
      %v5040 = vadd.f32 0.0, %v5039
      %v5041 = vpop.f32.mrf.mxu0
      %5042 = vmatprep.mubr.bf16.mxu0 0
      %5043 = vmatmul.mubr.bf16.gmra.mxu0 %v4824
      %v5044 = vpop.f32.mrf.mxu0
      %v5045 = vadd.f32 0.0, %v5044
      %v5046 = vpop.f32.mrf.mxu0
      %v5047 = vpop.f32.mrf.mxu0
      %v5048 = vadd.f32 0.0, %v5047
      %v5049 = vpop.f32.mrf.mxu0
      %5050 = vdwg.mxu0
      %v5051 = vadd.f32 %v4729, %v4925
      %v5052 = vadd.f32 %v4730, %v4928
      %v5053 = vadd.f32 %v4731, %v4933
      %v5054 = vadd.f32 %v4732, %v4936
      %v5055 = vadd.f32 %v4733, %v4941
      %v5056 = vadd.f32 %v4734, %v4944
      %v5057 = vadd.f32 %v4735, %v4949
      %v5058 = vadd.f32 %v4736, %v4952
      %v5059 = vadd.f32 %v4737, %v4957
      %v5060 = vadd.f32 %v4738, %v4960
      %v5061 = vadd.f32 %v4739, %v4965
      %v5062 = vadd.f32 %v4740, %v4968
      %v5063 = vadd.f32 %v4741, %v4973
      %v5064 = vadd.f32 %v4742, %v4976
      %v5065 = vadd.f32 %v4743, %v4981
      %v5066 = vadd.f32 %v4744, %v4984
      %v5067 = vadd.f32 %v4745, %v4989
      %v5068 = vadd.f32 %v4746, %v4992
      %v5069 = vadd.f32 %v4747, %v4997
      %v5070 = vadd.f32 %v4748, %v5000
      %v5071 = vadd.f32 %v4749, %v5005
      %v5072 = vadd.f32 %v4750, %v5008
      %v5073 = vadd.f32 %v4751, %v5013
      %v5074 = vadd.f32 %v4752, %v5016
      %v5075 = vadd.f32 %v4753, %v5021
      %v5076 = vadd.f32 %v4754, %v5024
      %v5077 = vadd.f32 %v4755, %v5029
      %v5078 = vadd.f32 %v4756, %v5032
      %v5079 = vadd.f32 %v4757, %v5037
      %v5080 = vadd.f32 %v4758, %v5040
      %v5081 = vadd.f32 %v4759, %v5045
      %v5082 = vadd.f32 %v4760, %v5048
      %v5083 = vld [vmem:[#allocation3 + $0x27] sm:$0xff]
      %v5084 = vld [vmem:[#allocation3 + $0x2f] sm:$0xff]
      %v5085 = vld [vmem:[#allocation3 + $0x37] sm:$0xff]
      %v5086 = vld [vmem:[#allocation3 + $0x3f] sm:$0xff]
      %v5087 = vld [vmem:[#allocation3 + $0x47] sm:$0xff]
      %v5088 = vld [vmem:[#allocation3 + $0x4f] sm:$0xff]
      %v5089 = vld [vmem:[#allocation3 + $0x57] sm:$0xff]
      %v5090 = vld [vmem:[#allocation3 + $0x5f] sm:$0xff]
      %v5091 = vld [vmem:[#allocation3 + $0x67] sm:$0xff]
      %v5092 = vld [vmem:[#allocation3 + $0x6f] sm:$0xff]
      %v5093 = vld [vmem:[#allocation3 + $0x77] sm:$0xff]
      %v5094 = vld [vmem:[#allocation3 + $0x7f] sm:$0xff]
      %v5095 = vld [vmem:[#allocation3 + $0x87] sm:$0xff]
      %v5096 = vld [vmem:[#allocation3 + $0x8f] sm:$0xff]
      %v5097 = vld [vmem:[#allocation3 + $0x97] sm:$0xff]
      %v5098 = vld [vmem:[#allocation3 + $0x9f] sm:$0xff]
      %v5099 = vld [vmem:[#allocation3 + $0xa7] sm:$0xff]
      %v5100 = vld [vmem:[#allocation3 + $0xaf] sm:$0xff]
      %v5101 = vld [vmem:[#allocation3 + $0xb7] sm:$0xff]
      %v5102 = vld [vmem:[#allocation3 + $0xbf] sm:$0xff]
      %v5103 = vld [vmem:[#allocation3 + $0xc7] sm:$0xff]
      %v5104 = vld [vmem:[#allocation3 + $0xcf] sm:$0xff]
      %v5105 = vld [vmem:[#allocation3 + $0xd7] sm:$0xff]
      %v5106 = vld [vmem:[#allocation3 + $0xdf] sm:$0xff]
      %v5107 = vld [vmem:[#allocation3 + $0xe7] sm:$0xff]
      %v5108 = vld [vmem:[#allocation3 + $0xef] sm:$0xff]
      %v5109 = vld [vmem:[#allocation3 + $0xf7] sm:$0xff]
      %v5110 = vld [vmem:[#allocation3 + $0xff] sm:$0xff]
      %v5111 = vld [vmem:[#allocation3 + $0x107] sm:$0xff]
      %v5112 = vld [vmem:[#allocation3 + $0x10f] sm:$0xff]
      %v5113 = vld [vmem:[#allocation3 + $0x117] sm:$0xff]
      %v5114 = vld [vmem:[#allocation3 + $0x11f] sm:$0xff]
      %v5115 = vpack.c.bf16 %v5084, %v5083
      %v5116 = vpack.c.bf16 %v5086, %v5085
      %v5117 = vpack.c.bf16 %v5088, %v5087
      %v5118 = vpack.c.bf16 %v5090, %v5089
      %v5119 = vpack.c.bf16 %v5092, %v5091
      %v5120 = vpack.c.bf16 %v5094, %v5093
      %v5121 = vpack.c.bf16 %v5096, %v5095
      %v5122 = vpack.c.bf16 %v5098, %v5097
      %v5123 = vpack.c.bf16 %v5100, %v5099
      %v5124 = vpack.c.bf16 %v5102, %v5101
      %v5125 = vpack.c.bf16 %v5104, %v5103
      %v5126 = vpack.c.bf16 %v5106, %v5105
      %v5127 = vpack.c.bf16 %v5108, %v5107
      %v5128 = vpack.c.bf16 %v5110, %v5109
      %v5129 = vpack.c.bf16 %v5112, %v5111
      %v5130 = vpack.c.bf16 %v5114, %v5113
      %v5131 = vmul.bf16 %v5115, %v1063
      %v5132 = vmul.bf16 %v5116, %v1064
      %v5133 = vmul.bf16 %v5117, %v1065
      %v5134 = vmul.bf16 %v5118, %v1066
      %v5135 = vmul.bf16 %v5119, %v1067
      %v5136 = vmul.bf16 %v5120, %v1068
      %v5137 = vmul.bf16 %v5121, %v1069
      %v5138 = vmul.bf16 %v5122, %v1070
      %v5139 = vmul.bf16 %v5123, %v1071
      %v5140 = vmul.bf16 %v5124, %v1072
      %v5141 = vmul.bf16 %v5125, %v1073
      %v5142 = vmul.bf16 %v5126, %v1074
      %v5143 = vmul.bf16 %v5127, %v1075
      %v5144 = vmul.bf16 %v5128, %v1076
      %v5145 = vmul.bf16 %v5129, %v1077
      %v5146 = vmul.bf16 %v5130, %v1078
      %s5147 = scalar_lea.vmem %s6, 384
      %v5148 = vld [vmem:[%s5147] sm:$0xf]
      %v5149 = vld [vmem:[%s5147 + $0x4] sm:$0xf]
      %v5150 = vld [vmem:[%s5147 + $0x8] sm:$0xf]
      %v5151 = vld [vmem:[%s5147 + $0xc] sm:$0xf]
      %v5152 = vld [vmem:[%s5147 + $0x10] sm:$0xf]
      %v5153 = vld [vmem:[%s5147 + $0x14] sm:$0xf]
      %v5154 = vld [vmem:[%s5147 + $0x18] sm:$0xf]
      %v5155 = vld [vmem:[%s5147 + $0x1c] sm:$0xf]
      %v5156 = vld [vmem:[%s5147 + $0x20] sm:$0xf]
      %v5157 = vld [vmem:[%s5147 + $0x24] sm:$0xf]
      %v5158 = vld [vmem:[%s5147 + $0x28] sm:$0xf]
      %v5159 = vld [vmem:[%s5147 + $0x2c] sm:$0xf]
      %v5160 = vld [vmem:[%s5147 + $0x30] sm:$0xf]
      %v5161 = vld [vmem:[%s5147 + $0x34] sm:$0xf]
      %v5162 = vld [vmem:[%s5147 + $0x38] sm:$0xf]
      %v5163 = vld [vmem:[%s5147 + $0x3c] sm:$0xf]
      %v5180 = vunpack.c.l.b16 %v5148
      %v5181 = vunpack.c.l.b16 %v5149
      %v5182 = vunpack.c.l.b16 %v5150
      %v5183 = vunpack.c.l.b16 %v5151
      %v5184 = vunpack.c.l.b16 %v5152
      %v5185 = vunpack.c.l.b16 %v5153
      %v5186 = vunpack.c.l.b16 %v5154
      %v5187 = vunpack.c.l.b16 %v5155
      %v5188 = vunpack.c.l.b16 %v5156
      %v5189 = vunpack.c.l.b16 %v5157
      %v5190 = vunpack.c.l.b16 %v5158
      %v5191 = vunpack.c.l.b16 %v5159
      %v5192 = vunpack.c.l.b16 %v5160
      %v5193 = vunpack.c.l.b16 %v5161
      %v5194 = vunpack.c.l.b16 %v5162
      %v5195 = vunpack.c.l.b16 %v5163
      %v5196 = vpack.c.b16 %v5181, %v5180
      %v5197 = vpack.c.b16 %v5183, %v5182
      %v5198 = vpack.c.b16 %v5185, %v5184
      %v5199 = vpack.c.b16 %v5187, %v5186
      %v5200 = vpack.c.b16 %v5189, %v5188
      %v5201 = vpack.c.b16 %v5191, %v5190
      %v5202 = vpack.c.b16 %v5193, %v5192
      %v5203 = vpack.c.b16 %v5195, %v5194
      %5212 = vmatprep.subr.bf16.mxu0 0
      %5213 = vmatpush1.bf16.msra.mxu0 %v5203
      %5214 = vmatprep.subr.bf16.mxu0 0
      %5215 = vmatpush1.bf16.msra.mxu0 %v5202
      %5216 = vmatprep.subr.bf16.mxu0 0
      %5217 = vmatpush1.bf16.msra.mxu0 %v5201
      %5218 = vmatprep.subr.bf16.mxu0 0
      %5219 = vmatpush1.bf16.msra.mxu0 %v5200
      %5220 = vmatprep.subr.bf16.mxu0 0
      %5221 = vmatpush1.bf16.msra.mxu0 %v5199
      %5222 = vmatprep.subr.bf16.mxu0 0
      %5223 = vmatpush1.bf16.msra.mxu0 %v5198
      %5224 = vmatprep.subr.bf16.mxu0 0
      %5225 = vmatpush1.bf16.msra.mxu0 %v5197
      %5226 = vmatprep.subr.bf16.mxu0 0
      %5227 = vmatpush1.bf16.msra.mxu0 %v5196
      %5228 = vmatprep.subr.bf16.mxu0 0
      %5229 = vmatpush2.bf16.msra.mxu0 0
      %5230 = vmatprep.subr.bf16.mxu0 0
      %5231 = vmatpush2.bf16.msra.mxu0 0
      %5232 = vmatprep.subr.bf16.mxu0 0
      %5233 = vmatpush2.bf16.msra.mxu0 0
      %5234 = vmatprep.subr.bf16.mxu0 0
      %5235 = vmatpush2.bf16.msra.mxu0 0
      %5236 = vmatprep.subr.bf16.mxu0 0
      %5237 = vmatpush2.bf16.msra.mxu0 0
      %5238 = vmatprep.subr.bf16.mxu0 0
      %5239 = vmatpush2.bf16.msra.mxu0 0
      %5240 = vmatprep.subr.bf16.mxu0 0
      %5241 = vmatpush2.bf16.msra.mxu0 0
      %5242 = vmatprep.subr.bf16.mxu0 0
      %5243 = vmatpush2.bf16.msra.mxu0 0
      %5244 = vmatprep.mubr.bf16.mxu0 0
      %5245 = vmatmul.mubr.bf16.gmra.mxu0 %v5131
      %v5246 = vpop.f32.mrf.mxu0
      %v5247 = vadd.f32 0.0, %v5246
      %v5248 = vpop.f32.mrf.mxu0
      %v5249 = vpop.f32.mrf.mxu0
      %v5250 = vadd.f32 0.0, %v5249
      %v5251 = vpop.f32.mrf.mxu0
      %5252 = vmatprep.mubr.bf16.mxu0 0
      %5253 = vmatmul.mubr.bf16.gmra.mxu0 %v5132
      %v5254 = vpop.f32.mrf.mxu0
      %v5255 = vadd.f32 0.0, %v5254
      %v5256 = vpop.f32.mrf.mxu0
      %v5257 = vpop.f32.mrf.mxu0
      %v5258 = vadd.f32 0.0, %v5257
      %v5259 = vpop.f32.mrf.mxu0
      %5260 = vmatprep.mubr.bf16.mxu0 0
      %5261 = vmatmul.mubr.bf16.gmra.mxu0 %v5133
      %v5262 = vpop.f32.mrf.mxu0
      %v5263 = vadd.f32 0.0, %v5262
      %v5264 = vpop.f32.mrf.mxu0
      %v5265 = vpop.f32.mrf.mxu0
      %v5266 = vadd.f32 0.0, %v5265
      %v5267 = vpop.f32.mrf.mxu0
      %5268 = vmatprep.mubr.bf16.mxu0 0
      %5269 = vmatmul.mubr.bf16.gmra.mxu0 %v5134
      %v5270 = vpop.f32.mrf.mxu0
      %v5271 = vadd.f32 0.0, %v5270
      %v5272 = vpop.f32.mrf.mxu0
      %v5273 = vpop.f32.mrf.mxu0
      %v5274 = vadd.f32 0.0, %v5273
      %v5275 = vpop.f32.mrf.mxu0
      %5276 = vmatprep.mubr.bf16.mxu0 0
      %5277 = vmatmul.mubr.bf16.gmra.mxu0 %v5135
      %v5278 = vpop.f32.mrf.mxu0
      %v5279 = vadd.f32 0.0, %v5278
      %v5280 = vpop.f32.mrf.mxu0
      %v5281 = vpop.f32.mrf.mxu0
      %v5282 = vadd.f32 0.0, %v5281
      %v5283 = vpop.f32.mrf.mxu0
      %5284 = vmatprep.mubr.bf16.mxu0 0
      %5285 = vmatmul.mubr.bf16.gmra.mxu0 %v5136
      %v5286 = vpop.f32.mrf.mxu0
      %v5287 = vadd.f32 0.0, %v5286
      %v5288 = vpop.f32.mrf.mxu0
      %v5289 = vpop.f32.mrf.mxu0
      %v5290 = vadd.f32 0.0, %v5289
      %v5291 = vpop.f32.mrf.mxu0
      %5292 = vmatprep.mubr.bf16.mxu0 0
      %5293 = vmatmul.mubr.bf16.gmra.mxu0 %v5137
      %v5294 = vpop.f32.mrf.mxu0
      %v5295 = vadd.f32 0.0, %v5294
      %v5296 = vpop.f32.mrf.mxu0
      %v5297 = vpop.f32.mrf.mxu0
      %v5298 = vadd.f32 0.0, %v5297
      %v5299 = vpop.f32.mrf.mxu0
      %5300 = vmatprep.mubr.bf16.mxu0 0
      %5301 = vmatmul.mubr.bf16.gmra.mxu0 %v5138
      %v5302 = vpop.f32.mrf.mxu0
      %v5303 = vadd.f32 0.0, %v5302
      %v5304 = vpop.f32.mrf.mxu0
      %v5305 = vpop.f32.mrf.mxu0
      %v5306 = vadd.f32 0.0, %v5305
      %v5307 = vpop.f32.mrf.mxu0
      %5308 = vmatprep.mubr.bf16.mxu0 0
      %5309 = vmatmul.mubr.bf16.gmra.mxu0 %v5139
      %v5310 = vpop.f32.mrf.mxu0
      %v5311 = vadd.f32 0.0, %v5310
      %v5312 = vpop.f32.mrf.mxu0
      %v5313 = vpop.f32.mrf.mxu0
      %v5314 = vadd.f32 0.0, %v5313
      %v5315 = vpop.f32.mrf.mxu0
      %5316 = vmatprep.mubr.bf16.mxu0 0
      %5317 = vmatmul.mubr.bf16.gmra.mxu0 %v5140
      %v5318 = vpop.f32.mrf.mxu0
      %v5319 = vadd.f32 0.0, %v5318
      %v5320 = vpop.f32.mrf.mxu0
      %v5321 = vpop.f32.mrf.mxu0
      %v5322 = vadd.f32 0.0, %v5321
      %v5323 = vpop.f32.mrf.mxu0
      %5324 = vmatprep.mubr.bf16.mxu0 0
      %5325 = vmatmul.mubr.bf16.gmra.mxu0 %v5141
      %v5326 = vpop.f32.mrf.mxu0
      %v5327 = vadd.f32 0.0, %v5326
      %v5328 = vpop.f32.mrf.mxu0
      %v5329 = vpop.f32.mrf.mxu0
      %v5330 = vadd.f32 0.0, %v5329
      %v5331 = vpop.f32.mrf.mxu0
      %5332 = vmatprep.mubr.bf16.mxu0 0
      %5333 = vmatmul.mubr.bf16.gmra.mxu0 %v5142
      %v5334 = vpop.f32.mrf.mxu0
      %v5335 = vadd.f32 0.0, %v5334
      %v5336 = vpop.f32.mrf.mxu0
      %v5337 = vpop.f32.mrf.mxu0
      %v5338 = vadd.f32 0.0, %v5337
      %v5339 = vpop.f32.mrf.mxu0
      %5340 = vmatprep.mubr.bf16.mxu0 0
      %5341 = vmatmul.mubr.bf16.gmra.mxu0 %v5143
      %v5342 = vpop.f32.mrf.mxu0
      %v5343 = vadd.f32 0.0, %v5342
      %v5344 = vpop.f32.mrf.mxu0
      %v5345 = vpop.f32.mrf.mxu0
      %v5346 = vadd.f32 0.0, %v5345
      %v5347 = vpop.f32.mrf.mxu0
      %5348 = vmatprep.mubr.bf16.mxu0 0
      %5349 = vmatmul.mubr.bf16.gmra.mxu0 %v5144
      %v5350 = vpop.f32.mrf.mxu0
      %v5351 = vadd.f32 0.0, %v5350
      %v5352 = vpop.f32.mrf.mxu0
      %v5353 = vpop.f32.mrf.mxu0
      %v5354 = vadd.f32 0.0, %v5353
      %v5355 = vpop.f32.mrf.mxu0
      %5356 = vmatprep.mubr.bf16.mxu0 0
      %5357 = vmatmul.mubr.bf16.gmra.mxu0 %v5145
      %v5358 = vpop.f32.mrf.mxu0
      %v5359 = vadd.f32 0.0, %v5358
      %v5360 = vpop.f32.mrf.mxu0
      %v5361 = vpop.f32.mrf.mxu0
      %v5362 = vadd.f32 0.0, %v5361
      %v5363 = vpop.f32.mrf.mxu0
      %5364 = vmatprep.mubr.bf16.mxu0 0
      %5365 = vmatmul.mubr.bf16.gmra.mxu0 %v5146
      %v5366 = vpop.f32.mrf.mxu0
      %v5367 = vadd.f32 0.0, %v5366
      %v5368 = vpop.f32.mrf.mxu0
      %v5369 = vpop.f32.mrf.mxu0
      %v5370 = vadd.f32 0.0, %v5369
      %v5371 = vpop.f32.mrf.mxu0
      %5372 = vdwg.mxu0
      %v5373 = vadd.f32 %v5051, %v5247
      %v5374 = vadd.f32 %v5052, %v5250
      %v5375 = vadd.f32 %v5053, %v5255
      %v5376 = vadd.f32 %v5054, %v5258
      %v5377 = vadd.f32 %v5055, %v5263
      %v5378 = vadd.f32 %v5056, %v5266
      %v5379 = vadd.f32 %v5057, %v5271
      %v5380 = vadd.f32 %v5058, %v5274
      %v5381 = vadd.f32 %v5059, %v5279
      %v5382 = vadd.f32 %v5060, %v5282
      %v5383 = vadd.f32 %v5061, %v5287
      %v5384 = vadd.f32 %v5062, %v5290
      %v5385 = vadd.f32 %v5063, %v5295
      %v5386 = vadd.f32 %v5064, %v5298
      %v5387 = vadd.f32 %v5065, %v5303
      %v5388 = vadd.f32 %v5066, %v5306
      %v5389 = vadd.f32 %v5067, %v5311
      %v5390 = vadd.f32 %v5068, %v5314
      %v5391 = vadd.f32 %v5069, %v5319
      %v5392 = vadd.f32 %v5070, %v5322
      %v5393 = vadd.f32 %v5071, %v5327
      %v5394 = vadd.f32 %v5072, %v5330
      %v5395 = vadd.f32 %v5073, %v5335
      %v5396 = vadd.f32 %v5074, %v5338
      %v5397 = vadd.f32 %v5075, %v5343
      %v5398 = vadd.f32 %v5076, %v5346
      %v5399 = vadd.f32 %v5077, %v5351
      %v5400 = vadd.f32 %v5078, %v5354
      %v5401 = vadd.f32 %v5079, %v5359
      %v5402 = vadd.f32 %v5080, %v5362
      %v5403 = vadd.f32 %v5081, %v5367
      %v5404 = vadd.f32 %v5082, %v5370
      %v5405 = vld [vmem:[#allocation3 + $0x28] sm:$0xff]
      %v5406 = vld [vmem:[#allocation3 + $0x30] sm:$0xff]
      %v5407 = vld [vmem:[#allocation3 + $0x38] sm:$0xff]
      %v5408 = vld [vmem:[#allocation3 + $0x40] sm:$0xff]
      %v5409 = vld [vmem:[#allocation3 + $0x48] sm:$0xff]
      %v5410 = vld [vmem:[#allocation3 + $0x50] sm:$0xff]
      %v5411 = vld [vmem:[#allocation3 + $0x58] sm:$0xff]
      %v5412 = vld [vmem:[#allocation3 + $0x60] sm:$0xff]
      %v5413 = vld [vmem:[#allocation3 + $0x68] sm:$0xff]
      %v5414 = vld [vmem:[#allocation3 + $0x70] sm:$0xff]
      %v5415 = vld [vmem:[#allocation3 + $0x78] sm:$0xff]
      %v5416 = vld [vmem:[#allocation3 + $0x80] sm:$0xff]
      %v5417 = vld [vmem:[#allocation3 + $0x88] sm:$0xff]
      %v5418 = vld [vmem:[#allocation3 + $0x90] sm:$0xff]
      %v5419 = vld [vmem:[#allocation3 + $0x98] sm:$0xff]
      %v5420 = vld [vmem:[#allocation3 + $0xa0] sm:$0xff]
      %v5421 = vld [vmem:[#allocation3 + $0xa8] sm:$0xff]
      %v5422 = vld [vmem:[#allocation3 + $0xb0] sm:$0xff]
      %v5423 = vld [vmem:[#allocation3 + $0xb8] sm:$0xff]
      %v5424 = vld [vmem:[#allocation3 + $0xc0] sm:$0xff]
      %v5425 = vld [vmem:[#allocation3 + $0xc8] sm:$0xff]
      %v5426 = vld [vmem:[#allocation3 + $0xd0] sm:$0xff]
      %v5427 = vld [vmem:[#allocation3 + $0xd8] sm:$0xff]
      %v5428 = vld [vmem:[#allocation3 + $0xe0] sm:$0xff]
      %v5429 = vld [vmem:[#allocation3 + $0xe8] sm:$0xff]
      %v5430 = vld [vmem:[#allocation3 + $0xf0] sm:$0xff]
      %v5431 = vld [vmem:[#allocation3 + $0xf8] sm:$0xff]
      %v5432 = vld [vmem:[#allocation3 + $0x100] sm:$0xff]
      %v5433 = vld [vmem:[#allocation3 + $0x108] sm:$0xff]
      %v5434 = vld [vmem:[#allocation3 + $0x110] sm:$0xff]
      %v5435 = vld [vmem:[#allocation3 + $0x118] sm:$0xff]
      %v5436 = vld [vmem:[#allocation3 + $0x120] sm:$0xff]
      %v5437 = vpack.c.bf16 %v5406, %v5405
      %v5438 = vpack.c.bf16 %v5408, %v5407
      %v5439 = vpack.c.bf16 %v5410, %v5409
      %v5440 = vpack.c.bf16 %v5412, %v5411
      %v5441 = vpack.c.bf16 %v5414, %v5413
      %v5442 = vpack.c.bf16 %v5416, %v5415
      %v5443 = vpack.c.bf16 %v5418, %v5417
      %v5444 = vpack.c.bf16 %v5420, %v5419
      %v5445 = vpack.c.bf16 %v5422, %v5421
      %v5446 = vpack.c.bf16 %v5424, %v5423
      %v5447 = vpack.c.bf16 %v5426, %v5425
      %v5448 = vpack.c.bf16 %v5428, %v5427
      %v5449 = vpack.c.bf16 %v5430, %v5429
      %v5450 = vpack.c.bf16 %v5432, %v5431
      %v5451 = vpack.c.bf16 %v5434, %v5433
      %v5452 = vpack.c.bf16 %v5436, %v5435
      %s5453 = scalar_lea.vmem %s6, 448
      %v5454 = vld [vmem:[%s5453] sm:$0xf]
      %v5455 = vld [vmem:[%s5453 + $0x4] sm:$0xf]
      %v5456 = vld [vmem:[%s5453 + $0x8] sm:$0xf]
      %v5457 = vld [vmem:[%s5453 + $0xc] sm:$0xf]
      %v5458 = vld [vmem:[%s5453 + $0x10] sm:$0xf]
      %v5459 = vld [vmem:[%s5453 + $0x14] sm:$0xf]
      %v5460 = vld [vmem:[%s5453 + $0x18] sm:$0xf]
      %v5461 = vld [vmem:[%s5453 + $0x1c] sm:$0xf]
      %v5462 = vld [vmem:[%s5453 + $0x20] sm:$0xf]
      %v5463 = vld [vmem:[%s5453 + $0x24] sm:$0xf]
      %v5464 = vld [vmem:[%s5453 + $0x28] sm:$0xf]
      %v5465 = vld [vmem:[%s5453 + $0x2c] sm:$0xf]
      %v5466 = vld [vmem:[%s5453 + $0x30] sm:$0xf]
      %v5467 = vld [vmem:[%s5453 + $0x34] sm:$0xf]
      %v5468 = vld [vmem:[%s5453 + $0x38] sm:$0xf]
      %v5469 = vld [vmem:[%s5453 + $0x3c] sm:$0xf]
      %v5486 = vunpack.c.l.b16 %v5454
      %v5487 = vunpack.c.l.b16 %v5455
      %v5488 = vunpack.c.l.b16 %v5456
      %v5489 = vunpack.c.l.b16 %v5457
      %v5490 = vunpack.c.l.b16 %v5458
      %v5491 = vunpack.c.l.b16 %v5459
      %v5492 = vunpack.c.l.b16 %v5460
      %v5493 = vunpack.c.l.b16 %v5461
      %v5494 = vunpack.c.l.b16 %v5462
      %v5495 = vunpack.c.l.b16 %v5463
      %v5496 = vunpack.c.l.b16 %v5464
      %v5497 = vunpack.c.l.b16 %v5465
      %v5498 = vunpack.c.l.b16 %v5466
      %v5499 = vunpack.c.l.b16 %v5467
      %v5500 = vunpack.c.l.b16 %v5468
      %v5501 = vunpack.c.l.b16 %v5469
      %v5502 = vpack.c.b16 %v5487, %v5486
      %v5503 = vpack.c.b16 %v5489, %v5488
      %v5504 = vpack.c.b16 %v5491, %v5490
      %v5505 = vpack.c.b16 %v5493, %v5492
      %v5506 = vpack.c.b16 %v5495, %v5494
      %v5507 = vpack.c.b16 %v5497, %v5496
      %v5508 = vpack.c.b16 %v5499, %v5498
      %v5509 = vpack.c.b16 %v5501, %v5500
      %5518 = vmatprep.subr.bf16.mxu0 0
      %5519 = vmatpush1.bf16.msra.mxu0 %v5509
      %5520 = vmatprep.subr.bf16.mxu0 0
      %5521 = vmatpush1.bf16.msra.mxu0 %v5508
      %5522 = vmatprep.subr.bf16.mxu0 0
      %5523 = vmatpush1.bf16.msra.mxu0 %v5507
      %5524 = vmatprep.subr.bf16.mxu0 0
      %5525 = vmatpush1.bf16.msra.mxu0 %v5506
      %5526 = vmatprep.subr.bf16.mxu0 0
      %5527 = vmatpush1.bf16.msra.mxu0 %v5505
      %5528 = vmatprep.subr.bf16.mxu0 0
      %5529 = vmatpush1.bf16.msra.mxu0 %v5504
      %5530 = vmatprep.subr.bf16.mxu0 0
      %5531 = vmatpush1.bf16.msra.mxu0 %v5503
      %5532 = vmatprep.subr.bf16.mxu0 0
      %5533 = vmatpush1.bf16.msra.mxu0 %v5502
      %5534 = vmatprep.subr.bf16.mxu0 0
      %5535 = vmatpush2.bf16.msra.mxu0 0
      %5536 = vmatprep.subr.bf16.mxu0 0
      %5537 = vmatpush2.bf16.msra.mxu0 0
      %5538 = vmatprep.subr.bf16.mxu0 0
      %5539 = vmatpush2.bf16.msra.mxu0 0
      %5540 = vmatprep.subr.bf16.mxu0 0
      %5541 = vmatpush2.bf16.msra.mxu0 0
      %5542 = vmatprep.subr.bf16.mxu0 0
      %5543 = vmatpush2.bf16.msra.mxu0 0
      %5544 = vmatprep.subr.bf16.mxu0 0
      %5545 = vmatpush2.bf16.msra.mxu0 0
      %5546 = vmatprep.subr.bf16.mxu0 0
      %5547 = vmatpush2.bf16.msra.mxu0 0
      %5548 = vmatprep.subr.bf16.mxu0 0
      %5549 = vmatpush2.bf16.msra.mxu0 0
      %5550 = vmatprep.mubr.bf16.mxu0 0
      %5551 = vmatmul.mubr.bf16.gmra.mxu0 %v5437
      %v5552 = vpop.f32.mrf.mxu0
      %v5553 = vadd.f32 0.0, %v5552
      %v5554 = vpop.f32.mrf.mxu0
      %v5555 = vpop.f32.mrf.mxu0
      %v5556 = vadd.f32 0.0, %v5555
      %v5557 = vpop.f32.mrf.mxu0
      %5558 = vmatprep.mubr.bf16.mxu0 0
      %5559 = vmatmul.mubr.bf16.gmra.mxu0 %v5438
      %v5560 = vpop.f32.mrf.mxu0
      %v5561 = vadd.f32 0.0, %v5560
      %v5562 = vpop.f32.mrf.mxu0
      %v5563 = vpop.f32.mrf.mxu0
      %v5564 = vadd.f32 0.0, %v5563
      %v5565 = vpop.f32.mrf.mxu0
      %5566 = vmatprep.mubr.bf16.mxu0 0
      %5567 = vmatmul.mubr.bf16.gmra.mxu0 %v5439
      %v5568 = vpop.f32.mrf.mxu0
      %v5569 = vadd.f32 0.0, %v5568
      %v5570 = vpop.f32.mrf.mxu0
      %v5571 = vpop.f32.mrf.mxu0
      %v5572 = vadd.f32 0.0, %v5571
      %v5573 = vpop.f32.mrf.mxu0
      %5574 = vmatprep.mubr.bf16.mxu0 0
      %5575 = vmatmul.mubr.bf16.gmra.mxu0 %v5440
      %v5576 = vpop.f32.mrf.mxu0
      %v5577 = vadd.f32 0.0, %v5576
      %v5578 = vpop.f32.mrf.mxu0
      %v5579 = vpop.f32.mrf.mxu0
      %v5580 = vadd.f32 0.0, %v5579
      %v5581 = vpop.f32.mrf.mxu0
      %5582 = vmatprep.mubr.bf16.mxu0 0
      %5583 = vmatmul.mubr.bf16.gmra.mxu0 %v5441
      %v5584 = vpop.f32.mrf.mxu0
      %v5585 = vadd.f32 0.0, %v5584
      %v5586 = vpop.f32.mrf.mxu0
      %v5587 = vpop.f32.mrf.mxu0
      %v5588 = vadd.f32 0.0, %v5587
      %v5589 = vpop.f32.mrf.mxu0
      %5590 = vmatprep.mubr.bf16.mxu0 0
      %5591 = vmatmul.mubr.bf16.gmra.mxu0 %v5442
      %v5592 = vpop.f32.mrf.mxu0
      %v5593 = vadd.f32 0.0, %v5592
      %v5594 = vpop.f32.mrf.mxu0
      %v5595 = vpop.f32.mrf.mxu0
      %v5596 = vadd.f32 0.0, %v5595
      %v5597 = vpop.f32.mrf.mxu0
      %5598 = vmatprep.mubr.bf16.mxu0 0
      %5599 = vmatmul.mubr.bf16.gmra.mxu0 %v5443
      %v5600 = vpop.f32.mrf.mxu0
      %v5601 = vadd.f32 0.0, %v5600
      %v5602 = vpop.f32.mrf.mxu0
      %v5603 = vpop.f32.mrf.mxu0
      %v5604 = vadd.f32 0.0, %v5603
      %v5605 = vpop.f32.mrf.mxu0
      %5606 = vmatprep.mubr.bf16.mxu0 0
      %5607 = vmatmul.mubr.bf16.gmra.mxu0 %v5444
      %v5608 = vpop.f32.mrf.mxu0
      %v5609 = vadd.f32 0.0, %v5608
      %v5610 = vpop.f32.mrf.mxu0
      %v5611 = vpop.f32.mrf.mxu0
      %v5612 = vadd.f32 0.0, %v5611
      %v5613 = vpop.f32.mrf.mxu0
      %5614 = vmatprep.mubr.bf16.mxu0 0
      %5615 = vmatmul.mubr.bf16.gmra.mxu0 %v5445
      %v5616 = vpop.f32.mrf.mxu0
      %v5617 = vadd.f32 0.0, %v5616
      %v5618 = vpop.f32.mrf.mxu0
      %v5619 = vpop.f32.mrf.mxu0
      %v5620 = vadd.f32 0.0, %v5619
      %v5621 = vpop.f32.mrf.mxu0
      %5622 = vmatprep.mubr.bf16.mxu0 0
      %5623 = vmatmul.mubr.bf16.gmra.mxu0 %v5446
      %v5624 = vpop.f32.mrf.mxu0
      %v5625 = vadd.f32 0.0, %v5624
      %v5626 = vpop.f32.mrf.mxu0
      %v5627 = vpop.f32.mrf.mxu0
      %v5628 = vadd.f32 0.0, %v5627
      %v5629 = vpop.f32.mrf.mxu0
      %5630 = vmatprep.mubr.bf16.mxu0 0
      %5631 = vmatmul.mubr.bf16.gmra.mxu0 %v5447
      %v5632 = vpop.f32.mrf.mxu0
      %v5633 = vadd.f32 0.0, %v5632
      %v5634 = vpop.f32.mrf.mxu0
      %v5635 = vpop.f32.mrf.mxu0
      %v5636 = vadd.f32 0.0, %v5635
      %v5637 = vpop.f32.mrf.mxu0
      %5638 = vmatprep.mubr.bf16.mxu0 0
      %5639 = vmatmul.mubr.bf16.gmra.mxu0 %v5448
      %v5640 = vpop.f32.mrf.mxu0
      %v5641 = vadd.f32 0.0, %v5640
      %v5642 = vpop.f32.mrf.mxu0
      %v5643 = vpop.f32.mrf.mxu0
      %v5644 = vadd.f32 0.0, %v5643
      %v5645 = vpop.f32.mrf.mxu0
      %5646 = vmatprep.mubr.bf16.mxu0 0
      %5647 = vmatmul.mubr.bf16.gmra.mxu0 %v5449
      %v5648 = vpop.f32.mrf.mxu0
      %v5649 = vadd.f32 0.0, %v5648
      %v5650 = vpop.f32.mrf.mxu0
      %v5651 = vpop.f32.mrf.mxu0
      %v5652 = vadd.f32 0.0, %v5651
      %v5653 = vpop.f32.mrf.mxu0
      %5654 = vmatprep.mubr.bf16.mxu0 0
      %5655 = vmatmul.mubr.bf16.gmra.mxu0 %v5450
      %v5656 = vpop.f32.mrf.mxu0
      %v5657 = vadd.f32 0.0, %v5656
      %v5658 = vpop.f32.mrf.mxu0
      %v5659 = vpop.f32.mrf.mxu0
      %v5660 = vadd.f32 0.0, %v5659
      %v5661 = vpop.f32.mrf.mxu0
      %5662 = vmatprep.mubr.bf16.mxu0 0
      %5663 = vmatmul.mubr.bf16.gmra.mxu0 %v5451
      %v5664 = vpop.f32.mrf.mxu0
      %v5665 = vadd.f32 0.0, %v5664
      %v5666 = vpop.f32.mrf.mxu0
      %v5667 = vpop.f32.mrf.mxu0
      %v5668 = vadd.f32 0.0, %v5667
      %v5669 = vpop.f32.mrf.mxu0
      %5670 = vmatprep.mubr.bf16.mxu0 0
      %5671 = vmatmul.mubr.bf16.gmra.mxu0 %v5452
      %v5672 = vpop.f32.mrf.mxu0
      %v5673 = vadd.f32 0.0, %v5672
      %v5674 = vpop.f32.mrf.mxu0
      %v5675 = vpop.f32.mrf.mxu0
      %v5676 = vadd.f32 0.0, %v5675
      %v5677 = vpop.f32.mrf.mxu0
      %5678 = vdwg.mxu0
      %v5679 = vadd.f32 %v5373, %v5553
      %v5680 = vadd.f32 %v5374, %v5556
      %v5681 = vadd.f32 %v5375, %v5561
      %v5682 = vadd.f32 %v5376, %v5564
      %v5683 = vadd.f32 %v5377, %v5569
      %v5684 = vadd.f32 %v5378, %v5572
      %v5685 = vadd.f32 %v5379, %v5577
      %v5686 = vadd.f32 %v5380, %v5580
      %v5687 = vadd.f32 %v5381, %v5585
      %v5688 = vadd.f32 %v5382, %v5588
      %v5689 = vadd.f32 %v5383, %v5593
      %v5690 = vadd.f32 %v5384, %v5596
      %v5691 = vadd.f32 %v5385, %v5601
      %v5692 = vadd.f32 %v5386, %v5604
      %v5693 = vadd.f32 %v5387, %v5609
      %v5694 = vadd.f32 %v5388, %v5612
      %v5695 = vadd.f32 %v5389, %v5617
      %v5696 = vadd.f32 %v5390, %v5620
      %v5697 = vadd.f32 %v5391, %v5625
      %v5698 = vadd.f32 %v5392, %v5628
      %v5699 = vadd.f32 %v5393, %v5633
      %v5700 = vadd.f32 %v5394, %v5636
      %v5701 = vadd.f32 %v5395, %v5641
      %v5702 = vadd.f32 %v5396, %v5644
      %v5703 = vadd.f32 %v5397, %v5649
      %v5704 = vadd.f32 %v5398, %v5652
      %v5705 = vadd.f32 %v5399, %v5657
      %v5706 = vadd.f32 %v5400, %v5660
      %v5707 = vadd.f32 %v5401, %v5665
      %v5708 = vadd.f32 %v5402, %v5668
      %v5709 = vadd.f32 %v5403, %v5673
      %v5710 = vadd.f32 %v5404, %v5676
      %v5711 = vld [vmem:[#allocation3 + $0x29] sm:$0xff]
      %v5712 = vld [vmem:[#allocation3 + $0x31] sm:$0xff]
      %v5713 = vld [vmem:[#allocation3 + $0x39] sm:$0xff]
      %v5714 = vld [vmem:[#allocation3 + $0x41] sm:$0xff]
      %v5715 = vld [vmem:[#allocation3 + $0x49] sm:$0xff]
      %v5716 = vld [vmem:[#allocation3 + $0x51] sm:$0xff]
      %v5717 = vld [vmem:[#allocation3 + $0x59] sm:$0xff]
      %v5718 = vld [vmem:[#allocation3 + $0x61] sm:$0xff]
      %v5719 = vld [vmem:[#allocation3 + $0x69] sm:$0xff]
      %v5720 = vld [vmem:[#allocation3 + $0x71] sm:$0xff]
      %v5721 = vld [vmem:[#allocation3 + $0x79] sm:$0xff]
      %v5722 = vld [vmem:[#allocation3 + $0x81] sm:$0xff]
      %v5723 = vld [vmem:[#allocation3 + $0x89] sm:$0xff]
      %v5724 = vld [vmem:[#allocation3 + $0x91] sm:$0xff]
      %v5725 = vld [vmem:[#allocation3 + $0x99] sm:$0xff]
      %v5726 = vld [vmem:[#allocation3 + $0xa1] sm:$0xff]
      %v5727 = vld [vmem:[#allocation3 + $0xa9] sm:$0xff]
      %v5728 = vld [vmem:[#allocation3 + $0xb1] sm:$0xff]
      %v5729 = vld [vmem:[#allocation3 + $0xb9] sm:$0xff]
      %v5730 = vld [vmem:[#allocation3 + $0xc1] sm:$0xff]
      %v5731 = vld [vmem:[#allocation3 + $0xc9] sm:$0xff]
      %v5732 = vld [vmem:[#allocation3 + $0xd1] sm:$0xff]
      %v5733 = vld [vmem:[#allocation3 + $0xd9] sm:$0xff]
      %v5734 = vld [vmem:[#allocation3 + $0xe1] sm:$0xff]
      %v5735 = vld [vmem:[#allocation3 + $0xe9] sm:$0xff]
      %v5736 = vld [vmem:[#allocation3 + $0xf1] sm:$0xff]
      %v5737 = vld [vmem:[#allocation3 + $0xf9] sm:$0xff]
      %v5738 = vld [vmem:[#allocation3 + $0x101] sm:$0xff]
      %v5739 = vld [vmem:[#allocation3 + $0x109] sm:$0xff]
      %v5740 = vld [vmem:[#allocation3 + $0x111] sm:$0xff]
      %v5741 = vld [vmem:[#allocation3 + $0x119] sm:$0xff]
      %v5742 = vld [vmem:[#allocation3 + $0x121] sm:$0xff]
      %v5743 = vpack.c.bf16 %v5712, %v5711
      %v5744 = vpack.c.bf16 %v5714, %v5713
      %v5745 = vpack.c.bf16 %v5716, %v5715
      %v5746 = vpack.c.bf16 %v5718, %v5717
      %v5747 = vpack.c.bf16 %v5720, %v5719
      %v5748 = vpack.c.bf16 %v5722, %v5721
      %v5749 = vpack.c.bf16 %v5724, %v5723
      %v5750 = vpack.c.bf16 %v5726, %v5725
      %v5751 = vpack.c.bf16 %v5728, %v5727
      %v5752 = vpack.c.bf16 %v5730, %v5729
      %v5753 = vpack.c.bf16 %v5732, %v5731
      %v5754 = vpack.c.bf16 %v5734, %v5733
      %v5755 = vpack.c.bf16 %v5736, %v5735
      %v5756 = vpack.c.bf16 %v5738, %v5737
      %v5757 = vpack.c.bf16 %v5740, %v5739
      %v5758 = vpack.c.bf16 %v5742, %v5741
      %v5759 = vmul.bf16 %v5743, %v1655
      %v5760 = vmul.bf16 %v5744, %v1656
      %v5761 = vmul.bf16 %v5745, %v1657
      %v5762 = vmul.bf16 %v5746, %v1658
      %v5763 = vmul.bf16 %v5747, %v1659
      %v5764 = vmul.bf16 %v5748, %v1660
      %v5765 = vmul.bf16 %v5749, %v1661
      %v5766 = vmul.bf16 %v5750, %v1662
      %v5767 = vmul.bf16 %v5751, %v1663
      %v5768 = vmul.bf16 %v5752, %v1664
      %v5769 = vmul.bf16 %v5753, %v1665
      %v5770 = vmul.bf16 %v5754, %v1666
      %v5771 = vmul.bf16 %v5755, %v1667
      %v5772 = vmul.bf16 %v5756, %v1668
      %v5773 = vmul.bf16 %v5757, %v1669
      %v5774 = vmul.bf16 %v5758, %v1670
      %s5775 = scalar_lea.vmem %s6, 512
      %v5776 = vld [vmem:[%s5775] sm:$0xf]
      %v5777 = vld [vmem:[%s5775 + $0x4] sm:$0xf]
      %v5778 = vld [vmem:[%s5775 + $0x8] sm:$0xf]
      %v5779 = vld [vmem:[%s5775 + $0xc] sm:$0xf]
      %v5780 = vld [vmem:[%s5775 + $0x10] sm:$0xf]
      %v5781 = vld [vmem:[%s5775 + $0x14] sm:$0xf]
      %v5782 = vld [vmem:[%s5775 + $0x18] sm:$0xf]
      %v5783 = vld [vmem:[%s5775 + $0x1c] sm:$0xf]
      %v5784 = vld [vmem:[%s5775 + $0x20] sm:$0xf]
      %v5785 = vld [vmem:[%s5775 + $0x24] sm:$0xf]
      %v5786 = vld [vmem:[%s5775 + $0x28] sm:$0xf]
      %v5787 = vld [vmem:[%s5775 + $0x2c] sm:$0xf]
      %v5788 = vld [vmem:[%s5775 + $0x30] sm:$0xf]
      %v5789 = vld [vmem:[%s5775 + $0x34] sm:$0xf]
      %v5790 = vld [vmem:[%s5775 + $0x38] sm:$0xf]
      %v5791 = vld [vmem:[%s5775 + $0x3c] sm:$0xf]
      %v5808 = vunpack.c.l.b16 %v5776
      %v5809 = vunpack.c.l.b16 %v5777
      %v5810 = vunpack.c.l.b16 %v5778
      %v5811 = vunpack.c.l.b16 %v5779
      %v5812 = vunpack.c.l.b16 %v5780
      %v5813 = vunpack.c.l.b16 %v5781
      %v5814 = vunpack.c.l.b16 %v5782
      %v5815 = vunpack.c.l.b16 %v5783
      %v5816 = vunpack.c.l.b16 %v5784
      %v5817 = vunpack.c.l.b16 %v5785
      %v5818 = vunpack.c.l.b16 %v5786
      %v5819 = vunpack.c.l.b16 %v5787
      %v5820 = vunpack.c.l.b16 %v5788
      %v5821 = vunpack.c.l.b16 %v5789
      %v5822 = vunpack.c.l.b16 %v5790
      %v5823 = vunpack.c.l.b16 %v5791
      %v5824 = vpack.c.b16 %v5809, %v5808
      %v5825 = vpack.c.b16 %v5811, %v5810
      %v5826 = vpack.c.b16 %v5813, %v5812
      %v5827 = vpack.c.b16 %v5815, %v5814
      %v5828 = vpack.c.b16 %v5817, %v5816
      %v5829 = vpack.c.b16 %v5819, %v5818
      %v5830 = vpack.c.b16 %v5821, %v5820
      %v5831 = vpack.c.b16 %v5823, %v5822
      %5840 = vmatprep.subr.bf16.mxu0 0
      %5841 = vmatpush1.bf16.msra.mxu0 %v5831
      %5842 = vmatprep.subr.bf16.mxu0 0
      %5843 = vmatpush1.bf16.msra.mxu0 %v5830
      %5844 = vmatprep.subr.bf16.mxu0 0
      %5845 = vmatpush1.bf16.msra.mxu0 %v5829
      %5846 = vmatprep.subr.bf16.mxu0 0
      %5847 = vmatpush1.bf16.msra.mxu0 %v5828
      %5848 = vmatprep.subr.bf16.mxu0 0
      %5849 = vmatpush1.bf16.msra.mxu0 %v5827
      %5850 = vmatprep.subr.bf16.mxu0 0
      %5851 = vmatpush1.bf16.msra.mxu0 %v5826
      %5852 = vmatprep.subr.bf16.mxu0 0
      %5853 = vmatpush1.bf16.msra.mxu0 %v5825
      %5854 = vmatprep.subr.bf16.mxu0 0
      %5855 = vmatpush1.bf16.msra.mxu0 %v5824
      %5856 = vmatprep.subr.bf16.mxu0 0
      %5857 = vmatpush2.bf16.msra.mxu0 0
      %5858 = vmatprep.subr.bf16.mxu0 0
      %5859 = vmatpush2.bf16.msra.mxu0 0
      %5860 = vmatprep.subr.bf16.mxu0 0
      %5861 = vmatpush2.bf16.msra.mxu0 0
      %5862 = vmatprep.subr.bf16.mxu0 0
      %5863 = vmatpush2.bf16.msra.mxu0 0
      %5864 = vmatprep.subr.bf16.mxu0 0
      %5865 = vmatpush2.bf16.msra.mxu0 0
      %5866 = vmatprep.subr.bf16.mxu0 0
      %5867 = vmatpush2.bf16.msra.mxu0 0
      %5868 = vmatprep.subr.bf16.mxu0 0
      %5869 = vmatpush2.bf16.msra.mxu0 0
      %5870 = vmatprep.subr.bf16.mxu0 0
      %5871 = vmatpush2.bf16.msra.mxu0 0
      %5872 = vmatprep.mubr.bf16.mxu0 0
      %5873 = vmatmul.mubr.bf16.gmra.mxu0 %v5759
      %v5874 = vpop.f32.mrf.mxu0
      %v5875 = vadd.f32 0.0, %v5874
      %v5876 = vpop.f32.mrf.mxu0
      %v5877 = vpop.f32.mrf.mxu0
      %v5878 = vadd.f32 0.0, %v5877
      %v5879 = vpop.f32.mrf.mxu0
      %5880 = vmatprep.mubr.bf16.mxu0 0
      %5881 = vmatmul.mubr.bf16.gmra.mxu0 %v5760
      %v5882 = vpop.f32.mrf.mxu0
      %v5883 = vadd.f32 0.0, %v5882
      %v5884 = vpop.f32.mrf.mxu0
      %v5885 = vpop.f32.mrf.mxu0
      %v5886 = vadd.f32 0.0, %v5885
      %v5887 = vpop.f32.mrf.mxu0
      %5888 = vmatprep.mubr.bf16.mxu0 0
      %5889 = vmatmul.mubr.bf16.gmra.mxu0 %v5761
      %v5890 = vpop.f32.mrf.mxu0
      %v5891 = vadd.f32 0.0, %v5890
      %v5892 = vpop.f32.mrf.mxu0
      %v5893 = vpop.f32.mrf.mxu0
      %v5894 = vadd.f32 0.0, %v5893
      %v5895 = vpop.f32.mrf.mxu0
      %5896 = vmatprep.mubr.bf16.mxu0 0
      %5897 = vmatmul.mubr.bf16.gmra.mxu0 %v5762
      %v5898 = vpop.f32.mrf.mxu0
      %v5899 = vadd.f32 0.0, %v5898
      %v5900 = vpop.f32.mrf.mxu0
      %v5901 = vpop.f32.mrf.mxu0
      %v5902 = vadd.f32 0.0, %v5901
      %v5903 = vpop.f32.mrf.mxu0
      %5904 = vmatprep.mubr.bf16.mxu0 0
      %5905 = vmatmul.mubr.bf16.gmra.mxu0 %v5763
      %v5906 = vpop.f32.mrf.mxu0
      %v5907 = vadd.f32 0.0, %v5906
      %v5908 = vpop.f32.mrf.mxu0
      %v5909 = vpop.f32.mrf.mxu0
      %v5910 = vadd.f32 0.0, %v5909
      %v5911 = vpop.f32.mrf.mxu0
      %5912 = vmatprep.mubr.bf16.mxu0 0
      %5913 = vmatmul.mubr.bf16.gmra.mxu0 %v5764
      %v5914 = vpop.f32.mrf.mxu0
      %v5915 = vadd.f32 0.0, %v5914
      %v5916 = vpop.f32.mrf.mxu0
      %v5917 = vpop.f32.mrf.mxu0
      %v5918 = vadd.f32 0.0, %v5917
      %v5919 = vpop.f32.mrf.mxu0
      %5920 = vmatprep.mubr.bf16.mxu0 0
      %5921 = vmatmul.mubr.bf16.gmra.mxu0 %v5765
      %v5922 = vpop.f32.mrf.mxu0
      %v5923 = vadd.f32 0.0, %v5922
      %v5924 = vpop.f32.mrf.mxu0
      %v5925 = vpop.f32.mrf.mxu0
      %v5926 = vadd.f32 0.0, %v5925
      %v5927 = vpop.f32.mrf.mxu0
      %5928 = vmatprep.mubr.bf16.mxu0 0
      %5929 = vmatmul.mubr.bf16.gmra.mxu0 %v5766
      %v5930 = vpop.f32.mrf.mxu0
      %v5931 = vadd.f32 0.0, %v5930
      %v5932 = vpop.f32.mrf.mxu0
      %v5933 = vpop.f32.mrf.mxu0
      %v5934 = vadd.f32 0.0, %v5933
      %v5935 = vpop.f32.mrf.mxu0
      %5936 = vmatprep.mubr.bf16.mxu0 0
      %5937 = vmatmul.mubr.bf16.gmra.mxu0 %v5767
      %v5938 = vpop.f32.mrf.mxu0
      %v5939 = vadd.f32 0.0, %v5938
      %v5940 = vpop.f32.mrf.mxu0
      %v5941 = vpop.f32.mrf.mxu0
      %v5942 = vadd.f32 0.0, %v5941
      %v5943 = vpop.f32.mrf.mxu0
      %5944 = vmatprep.mubr.bf16.mxu0 0
      %5945 = vmatmul.mubr.bf16.gmra.mxu0 %v5768
      %v5946 = vpop.f32.mrf.mxu0
      %v5947 = vadd.f32 0.0, %v5946
      %v5948 = vpop.f32.mrf.mxu0
      %v5949 = vpop.f32.mrf.mxu0
      %v5950 = vadd.f32 0.0, %v5949
      %v5951 = vpop.f32.mrf.mxu0
      %5952 = vmatprep.mubr.bf16.mxu0 0
      %5953 = vmatmul.mubr.bf16.gmra.mxu0 %v5769
      %v5954 = vpop.f32.mrf.mxu0
      %v5955 = vadd.f32 0.0, %v5954
      %v5956 = vpop.f32.mrf.mxu0
      %v5957 = vpop.f32.mrf.mxu0
      %v5958 = vadd.f32 0.0, %v5957
      %v5959 = vpop.f32.mrf.mxu0
      %5960 = vmatprep.mubr.bf16.mxu0 0
      %5961 = vmatmul.mubr.bf16.gmra.mxu0 %v5770
      %v5962 = vpop.f32.mrf.mxu0
      %v5963 = vadd.f32 0.0, %v5962
      %v5964 = vpop.f32.mrf.mxu0
      %v5965 = vpop.f32.mrf.mxu0
      %v5966 = vadd.f32 0.0, %v5965
      %v5967 = vpop.f32.mrf.mxu0
      %5968 = vmatprep.mubr.bf16.mxu0 0
      %5969 = vmatmul.mubr.bf16.gmra.mxu0 %v5771
      %v5970 = vpop.f32.mrf.mxu0
      %v5971 = vadd.f32 0.0, %v5970
      %v5972 = vpop.f32.mrf.mxu0
      %v5973 = vpop.f32.mrf.mxu0
      %v5974 = vadd.f32 0.0, %v5973
      %v5975 = vpop.f32.mrf.mxu0
      %5976 = vmatprep.mubr.bf16.mxu0 0
      %5977 = vmatmul.mubr.bf16.gmra.mxu0 %v5772
      %v5978 = vpop.f32.mrf.mxu0
      %v5979 = vadd.f32 0.0, %v5978
      %v5980 = vpop.f32.mrf.mxu0
      %v5981 = vpop.f32.mrf.mxu0
      %v5982 = vadd.f32 0.0, %v5981
      %v5983 = vpop.f32.mrf.mxu0
      %5984 = vmatprep.mubr.bf16.mxu0 0
      %5985 = vmatmul.mubr.bf16.gmra.mxu0 %v5773
      %v5986 = vpop.f32.mrf.mxu0
      %v5987 = vadd.f32 0.0, %v5986
      %v5988 = vpop.f32.mrf.mxu0
      %v5989 = vpop.f32.mrf.mxu0
      %v5990 = vadd.f32 0.0, %v5989
      %v5991 = vpop.f32.mrf.mxu0
      %5992 = vmatprep.mubr.bf16.mxu0 0
      %5993 = vmatmul.mubr.bf16.gmra.mxu0 %v5774
      %v5994 = vpop.f32.mrf.mxu0
      %v5995 = vadd.f32 0.0, %v5994
      %v5996 = vpop.f32.mrf.mxu0
      %v5997 = vpop.f32.mrf.mxu0
      %v5998 = vadd.f32 0.0, %v5997
      %v5999 = vpop.f32.mrf.mxu0
      %6000 = vdwg.mxu0
      %v6001 = vadd.f32 %v5679, %v5875
      %v6002 = vadd.f32 %v5680, %v5878
      %v6003 = vadd.f32 %v5681, %v5883
      %v6004 = vadd.f32 %v5682, %v5886
      %v6005 = vadd.f32 %v5683, %v5891
      %v6006 = vadd.f32 %v5684, %v5894
      %v6007 = vadd.f32 %v5685, %v5899
      %v6008 = vadd.f32 %v5686, %v5902
      %v6009 = vadd.f32 %v5687, %v5907
      %v6010 = vadd.f32 %v5688, %v5910
      %v6011 = vadd.f32 %v5689, %v5915
      %v6012 = vadd.f32 %v5690, %v5918
      %v6013 = vadd.f32 %v5691, %v5923
      %v6014 = vadd.f32 %v5692, %v5926
      %v6015 = vadd.f32 %v5693, %v5931
      %v6016 = vadd.f32 %v5694, %v5934
      %v6017 = vadd.f32 %v5695, %v5939
      %v6018 = vadd.f32 %v5696, %v5942
      %v6019 = vadd.f32 %v5697, %v5947
      %v6020 = vadd.f32 %v5698, %v5950
      %v6021 = vadd.f32 %v5699, %v5955
      %v6022 = vadd.f32 %v5700, %v5958
      %v6023 = vadd.f32 %v5701, %v5963
      %v6024 = vadd.f32 %v5702, %v5966
      %v6025 = vadd.f32 %v5703, %v5971
      %v6026 = vadd.f32 %v5704, %v5974
      %v6027 = vadd.f32 %v5705, %v5979
      %v6028 = vadd.f32 %v5706, %v5982
      %v6029 = vadd.f32 %v5707, %v5987
      %v6030 = vadd.f32 %v5708, %v5990
      %v6031 = vadd.f32 %v5709, %v5995
      %v6032 = vadd.f32 %v5710, %v5998
      %v6034 = vlaneseq
      %v6035 = vshrl.u32 %v6034, 7
      %v6036 = vsub.s32 0, %v6035
      %v6037 = vrot.slane %v421, %v6036
      %v6039 = vmul.f32 %v6001, %v6037
      %v6040 = vmul.f32 %v6002, %v6037
      %v6041 = vmul.f32 %v6003, %v6037
      %v6042 = vmul.f32 %v6004, %v6037
      %v6043 = vmul.f32 %v6005, %v6037
      %v6044 = vmul.f32 %v6006, %v6037
      %v6045 = vmul.f32 %v6007, %v6037
      %v6046 = vmul.f32 %v6008, %v6037
      %v6047 = vmul.f32 %v6009, %v6037
      %v6048 = vmul.f32 %v6010, %v6037
      %v6049 = vmul.f32 %v6011, %v6037
      %v6050 = vmul.f32 %v6012, %v6037
      %v6051 = vmul.f32 %v6013, %v6037
      %v6052 = vmul.f32 %v6014, %v6037
      %v6053 = vmul.f32 %v6015, %v6037
      %v6054 = vmul.f32 %v6016, %v6037
      %v6055 = vmul.f32 %v6017, %v6037
      %v6056 = vmul.f32 %v6018, %v6037
      %v6057 = vmul.f32 %v6019, %v6037
      %v6058 = vmul.f32 %v6020, %v6037
      %v6059 = vmul.f32 %v6021, %v6037
      %v6060 = vmul.f32 %v6022, %v6037
      %v6061 = vmul.f32 %v6023, %v6037
      %v6062 = vmul.f32 %v6024, %v6037
      %v6063 = vmul.f32 %v6025, %v6037
      %v6064 = vmul.f32 %v6026, %v6037
      %v6065 = vmul.f32 %v6027, %v6037
      %v6066 = vmul.f32 %v6028, %v6037
      %v6067 = vmul.f32 %v6029, %v6037
      %v6068 = vmul.f32 %v6030, %v6037
      %v6069 = vmul.f32 %v6031, %v6037
      %v6070 = vmul.f32 %v6032, %v6037
      %v6072 = vlaneseq
      %v6073 = vshrl.u32 %v6072, 7
      %v6074 = vsub.s32 0, %v6073
      %v6075 = vrot.slane %v422, %v6074
      %v6077 = vadd.f32 %v6039, %v6075
      %v6078 = vadd.f32 %v6040, %v6075
      %v6079 = vadd.f32 %v6041, %v6075
      %v6080 = vadd.f32 %v6042, %v6075
      %v6081 = vadd.f32 %v6043, %v6075
      %v6082 = vadd.f32 %v6044, %v6075
      %v6083 = vadd.f32 %v6045, %v6075
      %v6084 = vadd.f32 %v6046, %v6075
      %v6085 = vadd.f32 %v6047, %v6075
      %v6086 = vadd.f32 %v6048, %v6075
      %v6087 = vadd.f32 %v6049, %v6075
      %v6088 = vadd.f32 %v6050, %v6075
      %v6089 = vadd.f32 %v6051, %v6075
      %v6090 = vadd.f32 %v6052, %v6075
      %v6091 = vadd.f32 %v6053, %v6075
      %v6092 = vadd.f32 %v6054, %v6075
      %v6093 = vadd.f32 %v6055, %v6075
      %v6094 = vadd.f32 %v6056, %v6075
      %v6095 = vadd.f32 %v6057, %v6075
      %v6096 = vadd.f32 %v6058, %v6075
      %v6097 = vadd.f32 %v6059, %v6075
      %v6098 = vadd.f32 %v6060, %v6075
      %v6099 = vadd.f32 %v6061, %v6075
      %v6100 = vadd.f32 %v6062, %v6075
      %v6101 = vadd.f32 %v6063, %v6075
      %v6102 = vadd.f32 %v6064, %v6075
      %v6103 = vadd.f32 %v6065, %v6075
      %v6104 = vadd.f32 %v6066, %v6075
      %v6105 = vadd.f32 %v6067, %v6075
      %v6106 = vadd.f32 %v6068, %v6075
      %v6107 = vadd.f32 %v6069, %v6075
      %v6108 = vadd.f32 %v6070, %v6075
      %6109 = vxpose.xlu0.b32.start [1/16] %v6077, 128
      %6110 = vxpose.xlu0.b32.cont [2/16] %v6078, 128
      %6111 = vxpose.xlu0.b32.cont [3/16] %v6079, 128
      %6112 = vxpose.xlu0.b32.cont [4/16] %v6080, 128
      %6113 = vxpose.xlu0.b32.cont [5/16] %v6081, 128
      %6114 = vxpose.xlu0.b32.cont [6/16] %v6082, 128
      %6115 = vxpose.xlu0.b32.cont [7/16] %v6083, 128
      %6116 = vxpose.xlu0.b32.cont [8/16] %v6084, 128
      %6117 = vxpose.xlu0.b32.cont [9/16] %v6085, 128
      %6118 = vxpose.xlu0.b32.cont [10/16] %v6086, 128
      %6119 = vxpose.xlu0.b32.cont [11/16] %v6087, 128
      %6120 = vxpose.xlu0.b32.cont [12/16] %v6088, 128
      %6121 = vxpose.xlu0.b32.cont [13/16] %v6089, 128
      %6122 = vxpose.xlu0.b32.cont [14/16] %v6090, 128
      %6123 = vxpose.xlu0.b32.cont [15/16] %v6091, 128
      %6124 = vxpose.xlu0.b32.end [16/16] %v6092, 128
      %v6125 = vpop.trf.xlu0
      %v6126 = vpop.trf.xlu0
      %v6127 = vpop.trf.xlu0
      %v6128 = vpop.trf.xlu0
      %v6129 = vpop.trf.xlu0
      %v6130 = vpop.trf.xlu0
      %v6131 = vpop.trf.xlu0
      %v6132 = vpop.trf.xlu0
      %v6133 = vpop.trf.xlu0
      %v6134 = vpop.trf.xlu0
      %v6135 = vpop.trf.xlu0
      %v6136 = vpop.trf.xlu0
      %v6137 = vpop.trf.xlu0
      %v6138 = vpop.trf.xlu0
      %v6139 = vpop.trf.xlu0
      %v6140 = vpop.trf.xlu0
      %6141 = vxpose.xlu0.b32.start [1/16] %v6093, 128
      %6142 = vxpose.xlu0.b32.cont [2/16] %v6094, 128
      %6143 = vxpose.xlu0.b32.cont [3/16] %v6095, 128
      %6144 = vxpose.xlu0.b32.cont [4/16] %v6096, 128
      %6145 = vxpose.xlu0.b32.cont [5/16] %v6097, 128
      %6146 = vxpose.xlu0.b32.cont [6/16] %v6098, 128
      %6147 = vxpose.xlu0.b32.cont [7/16] %v6099, 128
      %6148 = vxpose.xlu0.b32.cont [8/16] %v6100, 128
      %6149 = vxpose.xlu0.b32.cont [9/16] %v6101, 128
      %6150 = vxpose.xlu0.b32.cont [10/16] %v6102, 128
      %6151 = vxpose.xlu0.b32.cont [11/16] %v6103, 128
      %6152 = vxpose.xlu0.b32.cont [12/16] %v6104, 128
      %6153 = vxpose.xlu0.b32.cont [13/16] %v6105, 128
      %6154 = vxpose.xlu0.b32.cont [14/16] %v6106, 128
      %6155 = vxpose.xlu0.b32.cont [15/16] %v6107, 128
      %6156 = vxpose.xlu0.b32.end [16/16] %v6108, 128
      %v6157 = vpop.trf.xlu0
      %v6158 = vpop.trf.xlu0
      %v6159 = vpop.trf.xlu0
      %v6160 = vpop.trf.xlu0
      %v6161 = vpop.trf.xlu0
      %v6162 = vpop.trf.xlu0
      %v6163 = vpop.trf.xlu0
      %v6164 = vpop.trf.xlu0
      %v6165 = vpop.trf.xlu0
      %v6166 = vpop.trf.xlu0
      %v6167 = vpop.trf.xlu0
      %v6168 = vpop.trf.xlu0
      %v6169 = vpop.trf.xlu0
      %v6170 = vpop.trf.xlu0
      %v6171 = vpop.trf.xlu0
      %v6172 = vpop.trf.xlu0
      %v6173 = vadd.f32 %v6125, %v423
      %v6174 = vadd.f32 %v6157, %v424
      %v6175 = vadd.f32 %v6126, %v425
      %v6176 = vadd.f32 %v6158, %v426
      %v6177 = vadd.f32 %v6127, %v427
      %v6178 = vadd.f32 %v6159, %v428
      %v6179 = vadd.f32 %v6128, %v429
      %v6180 = vadd.f32 %v6160, %v430
      %6181 = vst [vmem:[%s339] sm:$0xff] %v6173
      %6182 = vst [vmem:[%s339 + $0x8] sm:$0xff] %v6174
      %6183 = vst [vmem:[%s339 + $0x10] sm:$0xff] %v6175
      %6184 = vst [vmem:[%s339 + $0x18] sm:$0xff] %v6176
      %6185 = vst [vmem:[%s339 + $0x20] sm:$0xff] %v6177
      %6186 = vst [vmem:[%s339 + $0x28] sm:$0xff] %v6178
      %6187 = vst [vmem:[%s339 + $0x30] sm:$0xff] %v6179
      %6188 = vst [vmem:[%s339 + $0x38] sm:$0xff] %v6180
      %s6189 = scalar_lea.vmem %s332, 64
      %v6190 = vld [vmem:[%s6189] sm:$0xff]
      %v6191 = vld [vmem:[%s6189 + $0x8] sm:$0xff]
      %v6192 = vld [vmem:[%s6189 + $0x10] sm:$0xff]
      %v6193 = vld [vmem:[%s6189 + $0x18] sm:$0xff]
      %v6194 = vld [vmem:[%s6189 + $0x20] sm:$0xff]
      %v6195 = vld [vmem:[%s6189 + $0x28] sm:$0xff]
      %v6196 = vld [vmem:[%s6189 + $0x30] sm:$0xff]
      %v6197 = vld [vmem:[%s6189 + $0x38] sm:$0xff]
      %v6198 = vmax.f32 %v6190, 0.0
      %v6199 = vmax.f32 %v6191, 0.0
      %v6200 = vmax.f32 %v6192, 0.0
      %v6201 = vmax.f32 %v6193, 0.0
      %v6202 = vmax.f32 %v6194, 0.0
      %v6203 = vmax.f32 %v6195, 0.0
      %v6204 = vmax.f32 %v6196, 0.0
      %v6205 = vmax.f32 %v6197, 0.0
      %v6206 = vmin.f32 %v6198, 4.0
      %v6207 = vmin.f32 %v6199, 4.0
      %v6208 = vmin.f32 %v6200, 4.0
      %v6209 = vmin.f32 %v6201, 4.0
      %v6210 = vmin.f32 %v6202, 4.0
      %v6211 = vmin.f32 %v6203, 4.0
      %v6212 = vmin.f32 %v6204, 4.0
      %v6213 = vmin.f32 %v6205, 4.0
      %v6214 = vadd.f32 %v6206, 0.5
      %v6215 = vadd.f32 %v6207, 0.5
      %v6216 = vadd.f32 %v6208, 0.5
      %v6217 = vadd.f32 %v6209, 0.5
      %v6218 = vadd.f32 %v6210, 0.5
      %v6219 = vadd.f32 %v6211, 0.5
      %v6220 = vadd.f32 %v6212, 0.5
      %v6221 = vadd.f32 %v6213, 0.5
      %v6222 = vfloor.f32 %v6214
      %v6223 = vfloor.f32 %v6215
      %v6224 = vfloor.f32 %v6216
      %v6225 = vfloor.f32 %v6217
      %v6226 = vfloor.f32 %v6218
      %v6227 = vfloor.f32 %v6219
      %v6228 = vfloor.f32 %v6220
      %v6229 = vfloor.f32 %v6221
      %v6230 = vmul.f32 %v6222, 0.25
      %v6231 = vmul.f32 %v6223, 0.25
      %v6232 = vmul.f32 %v6224, 0.25
      %v6233 = vmul.f32 %v6225, 0.25
      %v6234 = vmul.f32 %v6226, 0.25
      %v6235 = vmul.f32 %v6227, 0.25
      %v6236 = vmul.f32 %v6228, 0.25
      %v6237 = vmul.f32 %v6229, 0.25
      %6238 = vxpose.xlu0.b32.start [1/16] %v6230, 128
      %6239 = vxpose.xlu0.b32.cont [2/16] %v6232, 128
      %6240 = vxpose.xlu0.b32.cont [3/16] %v6234, 128
      %6241 = vxpose.xlu0.b32.cont [4/16] %v6236, 128
      %6242 = vxpose.xlu0.b32.cont [5/16] 0.0, 128
      %6243 = vxpose.xlu0.b32.cont [6/16] 0.0, 128
      %6244 = vxpose.xlu0.b32.cont [7/16] 0.0, 128
      %6245 = vxpose.xlu0.b32.cont [8/16] 0.0, 128
      %6246 = vxpose.xlu0.b32.cont [9/16] 0.0, 128
      %6247 = vxpose.xlu0.b32.cont [10/16] 0.0, 128
      %6248 = vxpose.xlu0.b32.cont [11/16] 0.0, 128
      %6249 = vxpose.xlu0.b32.cont [12/16] 0.0, 128
      %6250 = vxpose.xlu0.b32.cont [13/16] 0.0, 128
      %6251 = vxpose.xlu0.b32.cont [14/16] 0.0, 128
      %6252 = vxpose.xlu0.b32.cont [15/16] 0.0, 128
      %6253 = vxpose.xlu0.b32.end [16/16] 0.0, 128
      %v6254 = vpop.trf.xlu0
      %v6255 = vpop.trf.xlu0
      %v6256 = vpop.trf.xlu0
      %v6257 = vpop.trf.xlu0
      %v6258 = vpop.trf.xlu0
      %v6259 = vpop.trf.xlu0
      %v6260 = vpop.trf.xlu0
      %v6261 = vpop.trf.xlu0
      %v6262 = vpop.trf.xlu0
      %v6263 = vpop.trf.xlu0
      %v6264 = vpop.trf.xlu0
      %v6265 = vpop.trf.xlu0
      %v6266 = vpop.trf.xlu0
      %v6267 = vpop.trf.xlu0
      %v6268 = vpop.trf.xlu0
      %v6269 = vpop.trf.xlu0
      %6270 = vxpose.xlu0.b32.start [1/16] %v6231, 128
      %6271 = vxpose.xlu0.b32.cont [2/16] %v6233, 128
      %6272 = vxpose.xlu0.b32.cont [3/16] %v6235, 128
      %6273 = vxpose.xlu0.b32.cont [4/16] %v6237, 128
      %6274 = vxpose.xlu0.b32.cont [5/16] 0.0, 128
      %6275 = vxpose.xlu0.b32.cont [6/16] 0.0, 128
      %6276 = vxpose.xlu0.b32.cont [7/16] 0.0, 128
      %6277 = vxpose.xlu0.b32.cont [8/16] 0.0, 128
      %6278 = vxpose.xlu0.b32.cont [9/16] 0.0, 128
      %6279 = vxpose.xlu0.b32.cont [10/16] 0.0, 128
      %6280 = vxpose.xlu0.b32.cont [11/16] 0.0, 128
      %6281 = vxpose.xlu0.b32.cont [12/16] 0.0, 128
      %6282 = vxpose.xlu0.b32.cont [13/16] 0.0, 128
      %6283 = vxpose.xlu0.b32.cont [14/16] 0.0, 128
      %6284 = vxpose.xlu0.b32.cont [15/16] 0.0, 128
      %6285 = vxpose.xlu0.b32.end [16/16] 0.0, 128
      %v6286 = vpop.trf.xlu0
      %v6287 = vpop.trf.xlu0
      %v6288 = vpop.trf.xlu0
      %v6289 = vpop.trf.xlu0
      %v6290 = vpop.trf.xlu0
      %v6291 = vpop.trf.xlu0
      %v6292 = vpop.trf.xlu0
      %v6293 = vpop.trf.xlu0
      %v6294 = vpop.trf.xlu0
      %v6295 = vpop.trf.xlu0
      %v6296 = vpop.trf.xlu0
      %v6297 = vpop.trf.xlu0
      %v6298 = vpop.trf.xlu0
      %v6299 = vpop.trf.xlu0
      %v6300 = vpop.trf.xlu0
      %v6301 = vpop.trf.xlu0
      %6302 = vst.msk [vmem:[#allocation2 + $0x18] sm:$0xff] %vm342, %v6254
      %6303 = vst.msk [vmem:[#allocation2 + $0x20] sm:$0xff] %vm342, %v6255
      %6304 = vst.msk [vmem:[#allocation2 + $0x28] sm:$0xff] %vm342, %v6256
      %6305 = vst.msk [vmem:[#allocation2 + $0x30] sm:$0xff] %vm342, %v6257
      %6306 = vst.msk [vmem:[#allocation2 + $0x38] sm:$0xff] %vm342, %v6258
      %6307 = vst.msk [vmem:[#allocation2 + $0x40] sm:$0xff] %vm342, %v6259
      %6308 = vst.msk [vmem:[#allocation2 + $0x48] sm:$0xff] %vm342, %v6260
      %6309 = vst.msk [vmem:[#allocation2 + $0x50] sm:$0xff] %vm342, %v6261
      %6310 = vst.msk [vmem:[#allocation2 + $0x58] sm:$0xff] %vm342, %v6262
      %6311 = vst.msk [vmem:[#allocation2 + $0x60] sm:$0xff] %vm342, %v6263
      %6312 = vst.msk [vmem:[#allocation2 + $0x68] sm:$0xff] %vm342, %v6264
      %6313 = vst.msk [vmem:[#allocation2 + $0x70] sm:$0xff] %vm342, %v6265
      %6314 = vst.msk [vmem:[#allocation2 + $0x78] sm:$0xff] %vm342, %v6266
      %6315 = vst.msk [vmem:[#allocation2 + $0x80] sm:$0xff] %vm342, %v6267
      %6316 = vst.msk [vmem:[#allocation2 + $0x88] sm:$0xff] %vm342, %v6268
      %6317 = vst.msk [vmem:[#allocation2 + $0x90] sm:$0xff] %vm342, %v6269
      %6318 = vst.msk [vmem:[#allocation2 + $0x98] sm:$0xff] %vm342, %v6286
      %6319 = vst.msk [vmem:[#allocation2 + $0xa0] sm:$0xff] %vm342, %v6287
      %6320 = vst.msk [vmem:[#allocation2 + $0xa8] sm:$0xff] %vm342, %v6288
      %6321 = vst.msk [vmem:[#allocation2 + $0xb0] sm:$0xff] %vm342, %v6289
      %6322 = vst.msk [vmem:[#allocation2 + $0xb8] sm:$0xff] %vm342, %v6290
      %6323 = vst.msk [vmem:[#allocation2 + $0xc0] sm:$0xff] %vm342, %v6291
      %6324 = vst.msk [vmem:[#allocation2 + $0xc8] sm:$0xff] %vm342, %v6292
      %6325 = vst.msk [vmem:[#allocation2 + $0xd0] sm:$0xff] %vm342, %v6293
      %6326 = vst.msk [vmem:[#allocation2 + $0xd8] sm:$0xff] %vm342, %v6294
      %6327 = vst.msk [vmem:[#allocation2 + $0xe0] sm:$0xff] %vm342, %v6295
      %6328 = vst.msk [vmem:[#allocation2 + $0xe8] sm:$0xff] %vm342, %v6296
      %6329 = vst.msk [vmem:[#allocation2 + $0xf0] sm:$0xff] %vm342, %v6297
      %6330 = vst.msk [vmem:[#allocation2 + $0xf8] sm:$0xff] %vm342, %v6298
      %6331 = vst.msk [vmem:[#allocation2 + $0x100] sm:$0xff] %vm342, %v6299
      %6332 = vst.msk [vmem:[#allocation2 + $0x108] sm:$0xff] %vm342, %v6300
      %6333 = vst.msk [vmem:[#allocation2 + $0x110] sm:$0xff] %vm342, %v6301
      %v6334 = vld [vmem:[#allocation2 + $0x7] sm:$0xff]
      %v6335 = vld [vmem:[#allocation2 + $0xf] sm:$0xff]
      %v6336 = vld [vmem:[#allocation2 + $0x17] sm:$0xff]
      %v6337 = vld [vmem:[#allocation2 + $0x1f] sm:$0xff]
      %v6338 = vld [vmem:[#allocation2 + $0x27] sm:$0xff]
      %v6339 = vld [vmem:[#allocation2 + $0x2f] sm:$0xff]
      %v6340 = vld [vmem:[#allocation2 + $0x37] sm:$0xff]
      %v6341 = vld [vmem:[#allocation2 + $0x3f] sm:$0xff]
      %v6342 = vld [vmem:[#allocation2 + $0x47] sm:$0xff]
      %v6343 = vld [vmem:[#allocation2 + $0x4f] sm:$0xff]
      %v6344 = vld [vmem:[#allocation2 + $0x57] sm:$0xff]
      %v6345 = vld [vmem:[#allocation2 + $0x5f] sm:$0xff]
      %v6346 = vld [vmem:[#allocation2 + $0x67] sm:$0xff]
      %v6347 = vld [vmem:[#allocation2 + $0x6f] sm:$0xff]
      %v6348 = vld [vmem:[#allocation2 + $0x77] sm:$0xff]
      %v6349 = vld [vmem:[#allocation2 + $0x7f] sm:$0xff]
      %v6350 = vld [vmem:[#allocation2 + $0x87] sm:$0xff]
      %v6351 = vld [vmem:[#allocation2 + $0x8f] sm:$0xff]
      %v6352 = vld [vmem:[#allocation2 + $0x97] sm:$0xff]
      %v6353 = vld [vmem:[#allocation2 + $0x9f] sm:$0xff]
      %v6354 = vld [vmem:[#allocation2 + $0xa7] sm:$0xff]
      %v6355 = vld [vmem:[#allocation2 + $0xaf] sm:$0xff]
      %v6356 = vld [vmem:[#allocation2 + $0xb7] sm:$0xff]
      %v6357 = vld [vmem:[#allocation2 + $0xbf] sm:$0xff]
      %v6358 = vld [vmem:[#allocation2 + $0xc7] sm:$0xff]
      %v6359 = vld [vmem:[#allocation2 + $0xcf] sm:$0xff]
      %v6360 = vld [vmem:[#allocation2 + $0xd7] sm:$0xff]
      %v6361 = vld [vmem:[#allocation2 + $0xdf] sm:$0xff]
      %v6362 = vld [vmem:[#allocation2 + $0xe7] sm:$0xff]
      %v6363 = vld [vmem:[#allocation2 + $0xef] sm:$0xff]
      %v6364 = vld [vmem:[#allocation2 + $0xf7] sm:$0xff]
      %v6365 = vld [vmem:[#allocation2 + $0xff] sm:$0xff]
      %v6366 = vpack.c.bf16 %v6335, %v6334
      %v6367 = vpack.c.bf16 %v6337, %v6336
      %v6368 = vpack.c.bf16 %v6339, %v6338
      %v6369 = vpack.c.bf16 %v6341, %v6340
      %v6370 = vpack.c.bf16 %v6343, %v6342
      %v6371 = vpack.c.bf16 %v6345, %v6344
      %v6372 = vpack.c.bf16 %v6347, %v6346
      %v6373 = vpack.c.bf16 %v6349, %v6348
      %v6374 = vpack.c.bf16 %v6351, %v6350
      %v6375 = vpack.c.bf16 %v6353, %v6352
      %v6376 = vpack.c.bf16 %v6355, %v6354
      %v6377 = vpack.c.bf16 %v6357, %v6356
      %v6378 = vpack.c.bf16 %v6359, %v6358
      %v6379 = vpack.c.bf16 %v6361, %v6360
      %v6380 = vpack.c.bf16 %v6363, %v6362
      %v6381 = vpack.c.bf16 %v6365, %v6364
      %v6382 = vmul.bf16 %v6366, %v1063
      %v6383 = vmul.bf16 %v6367, %v1064
      %v6384 = vmul.bf16 %v6368, %v1065
      %v6385 = vmul.bf16 %v6369, %v1066
      %v6386 = vmul.bf16 %v6370, %v1067
      %v6387 = vmul.bf16 %v6371, %v1068
      %v6388 = vmul.bf16 %v6372, %v1069
      %v6389 = vmul.bf16 %v6373, %v1070
      %v6390 = vmul.bf16 %v6374, %v1071
      %v6391 = vmul.bf16 %v6375, %v1072
      %v6392 = vmul.bf16 %v6376, %v1073
      %v6393 = vmul.bf16 %v6377, %v1074
      %v6394 = vmul.bf16 %v6378, %v1075
      %v6395 = vmul.bf16 %v6379, %v1076
      %v6396 = vmul.bf16 %v6380, %v1077
      %v6397 = vmul.bf16 %v6381, %v1078
      %v6398 = vld [vmem:[#allocation2 + $0x8] sm:$0xff]
      %v6399 = vld [vmem:[#allocation2 + $0x10] sm:$0xff]
      %v6400 = vld [vmem:[#allocation2 + $0x18] sm:$0xff]
      %v6401 = vld [vmem:[#allocation2 + $0x20] sm:$0xff]
      %v6402 = vld [vmem:[#allocation2 + $0x28] sm:$0xff]
      %v6403 = vld [vmem:[#allocation2 + $0x30] sm:$0xff]
      %v6404 = vld [vmem:[#allocation2 + $0x38] sm:$0xff]
      %v6405 = vld [vmem:[#allocation2 + $0x40] sm:$0xff]
      %v6406 = vld [vmem:[#allocation2 + $0x48] sm:$0xff]
      %v6407 = vld [vmem:[#allocation2 + $0x50] sm:$0xff]
      %v6408 = vld [vmem:[#allocation2 + $0x58] sm:$0xff]
      %v6409 = vld [vmem:[#allocation2 + $0x60] sm:$0xff]
      %v6410 = vld [vmem:[#allocation2 + $0x68] sm:$0xff]
      %v6411 = vld [vmem:[#allocation2 + $0x70] sm:$0xff]
      %v6412 = vld [vmem:[#allocation2 + $0x78] sm:$0xff]
      %v6413 = vld [vmem:[#allocation2 + $0x80] sm:$0xff]
      %v6414 = vld [vmem:[#allocation2 + $0x88] sm:$0xff]
      %v6415 = vld [vmem:[#allocation2 + $0x90] sm:$0xff]
      %v6416 = vld [vmem:[#allocation2 + $0x98] sm:$0xff]
      %v6417 = vld [vmem:[#allocation2 + $0xa0] sm:$0xff]
      %v6418 = vld [vmem:[#allocation2 + $0xa8] sm:$0xff]
      %v6419 = vld [vmem:[#allocation2 + $0xb0] sm:$0xff]
      %v6420 = vld [vmem:[#allocation2 + $0xb8] sm:$0xff]
      %v6421 = vld [vmem:[#allocation2 + $0xc0] sm:$0xff]
      %v6422 = vld [vmem:[#allocation2 + $0xc8] sm:$0xff]
      %v6423 = vld [vmem:[#allocation2 + $0xd0] sm:$0xff]
      %v6424 = vld [vmem:[#allocation2 + $0xd8] sm:$0xff]
      %v6425 = vld [vmem:[#allocation2 + $0xe0] sm:$0xff]
      %v6426 = vld [vmem:[#allocation2 + $0xe8] sm:$0xff]
      %v6427 = vld [vmem:[#allocation2 + $0xf0] sm:$0xff]
      %v6428 = vld [vmem:[#allocation2 + $0xf8] sm:$0xff]
      %v6429 = vld [vmem:[#allocation2 + $0x100] sm:$0xff]
      %v6430 = vpack.c.bf16 %v6399, %v6398
      %v6431 = vpack.c.bf16 %v6401, %v6400
      %v6432 = vpack.c.bf16 %v6403, %v6402
      %v6433 = vpack.c.bf16 %v6405, %v6404
      %v6434 = vpack.c.bf16 %v6407, %v6406
      %v6435 = vpack.c.bf16 %v6409, %v6408
      %v6436 = vpack.c.bf16 %v6411, %v6410
      %v6437 = vpack.c.bf16 %v6413, %v6412
      %v6438 = vpack.c.bf16 %v6415, %v6414
      %v6439 = vpack.c.bf16 %v6417, %v6416
      %v6440 = vpack.c.bf16 %v6419, %v6418
      %v6441 = vpack.c.bf16 %v6421, %v6420
      %v6442 = vpack.c.bf16 %v6423, %v6422
      %v6443 = vpack.c.bf16 %v6425, %v6424
      %v6444 = vpack.c.bf16 %v6427, %v6426
      %v6445 = vpack.c.bf16 %v6429, %v6428
      %v6446 = vld [vmem:[#allocation2 + $0x9] sm:$0xff]
      %v6447 = vld [vmem:[#allocation2 + $0x11] sm:$0xff]
      %v6448 = vld [vmem:[#allocation2 + $0x19] sm:$0xff]
      %v6449 = vld [vmem:[#allocation2 + $0x21] sm:$0xff]
      %v6450 = vld [vmem:[#allocation2 + $0x29] sm:$0xff]
      %v6451 = vld [vmem:[#allocation2 + $0x31] sm:$0xff]
      %v6452 = vld [vmem:[#allocation2 + $0x39] sm:$0xff]
      %v6453 = vld [vmem:[#allocation2 + $0x41] sm:$0xff]
      %v6454 = vld [vmem:[#allocation2 + $0x49] sm:$0xff]
      %v6455 = vld [vmem:[#allocation2 + $0x51] sm:$0xff]
      %v6456 = vld [vmem:[#allocation2 + $0x59] sm:$0xff]
      %v6457 = vld [vmem:[#allocation2 + $0x61] sm:$0xff]
      %v6458 = vld [vmem:[#allocation2 + $0x69] sm:$0xff]
      %v6459 = vld [vmem:[#allocation2 + $0x71] sm:$0xff]
      %v6460 = vld [vmem:[#allocation2 + $0x79] sm:$0xff]
      %v6461 = vld [vmem:[#allocation2 + $0x81] sm:$0xff]
      %v6462 = vld [vmem:[#allocation2 + $0x89] sm:$0xff]
      %v6463 = vld [vmem:[#allocation2 + $0x91] sm:$0xff]
      %v6464 = vld [vmem:[#allocation2 + $0x99] sm:$0xff]
      %v6465 = vld [vmem:[#allocation2 + $0xa1] sm:$0xff]
      %v6466 = vld [vmem:[#allocation2 + $0xa9] sm:$0xff]
      %v6467 = vld [vmem:[#allocation2 + $0xb1] sm:$0xff]
      %v6468 = vld [vmem:[#allocation2 + $0xb9] sm:$0xff]
      %v6469 = vld [vmem:[#allocation2 + $0xc1] sm:$0xff]
      %v6470 = vld [vmem:[#allocation2 + $0xc9] sm:$0xff]
      %v6471 = vld [vmem:[#allocation2 + $0xd1] sm:$0xff]
      %v6472 = vld [vmem:[#allocation2 + $0xd9] sm:$0xff]
      %v6473 = vld [vmem:[#allocation2 + $0xe1] sm:$0xff]
      %v6474 = vld [vmem:[#allocation2 + $0xe9] sm:$0xff]
      %v6475 = vld [vmem:[#allocation2 + $0xf1] sm:$0xff]
      %v6476 = vld [vmem:[#allocation2 + $0xf9] sm:$0xff]
      %v6477 = vld [vmem:[#allocation2 + $0x101] sm:$0xff]
      %v6478 = vpack.c.bf16 %v6447, %v6446
      %v6479 = vpack.c.bf16 %v6449, %v6448
      %v6480 = vpack.c.bf16 %v6451, %v6450
      %v6481 = vpack.c.bf16 %v6453, %v6452
      %v6482 = vpack.c.bf16 %v6455, %v6454
      %v6483 = vpack.c.bf16 %v6457, %v6456
      %v6484 = vpack.c.bf16 %v6459, %v6458
      %v6485 = vpack.c.bf16 %v6461, %v6460
      %v6486 = vpack.c.bf16 %v6463, %v6462
      %v6487 = vpack.c.bf16 %v6465, %v6464
      %v6488 = vpack.c.bf16 %v6467, %v6466
      %v6489 = vpack.c.bf16 %v6469, %v6468
      %v6490 = vpack.c.bf16 %v6471, %v6470
      %v6491 = vpack.c.bf16 %v6473, %v6472
      %v6492 = vpack.c.bf16 %v6475, %v6474
      %v6493 = vpack.c.bf16 %v6477, %v6476
      %v6494 = vmul.bf16 %v6478, %v1655
      %v6495 = vmul.bf16 %v6479, %v1656
      %v6496 = vmul.bf16 %v6480, %v1657
      %v6497 = vmul.bf16 %v6481, %v1658
      %v6498 = vmul.bf16 %v6482, %v1659
      %v6499 = vmul.bf16 %v6483, %v1660
      %v6500 = vmul.bf16 %v6484, %v1661
      %v6501 = vmul.bf16 %v6485, %v1662
      %v6502 = vmul.bf16 %v6486, %v1663
      %v6503 = vmul.bf16 %v6487, %v1664
      %v6504 = vmul.bf16 %v6488, %v1665
      %v6505 = vmul.bf16 %v6489, %v1666
      %v6506 = vmul.bf16 %v6490, %v1667
      %v6507 = vmul.bf16 %v6491, %v1668
      %v6508 = vmul.bf16 %v6492, %v1669
      %v6509 = vmul.bf16 %v6493, %v1670
      %v6510 = vld [vmem:[#allocation2 + $0x107] sm:$0xff]
      %v6511 = vld [vmem:[#allocation2 + $0x10f] sm:$0xff]
      %v6512 = vpack.c.bf16 %v6511, %v6510
      %v6513 = vmul.bf16 %v6367, %v1063
      %v6514 = vmul.bf16 %v6368, %v1064
      %v6515 = vmul.bf16 %v6369, %v1065
      %v6516 = vmul.bf16 %v6370, %v1066
      %v6517 = vmul.bf16 %v6371, %v1067
      %v6518 = vmul.bf16 %v6372, %v1068
      %v6519 = vmul.bf16 %v6373, %v1069
      %v6520 = vmul.bf16 %v6374, %v1070
      %v6521 = vmul.bf16 %v6375, %v1071
      %v6522 = vmul.bf16 %v6376, %v1072
      %v6523 = vmul.bf16 %v6377, %v1073
      %v6524 = vmul.bf16 %v6378, %v1074
      %v6525 = vmul.bf16 %v6379, %v1075
      %v6526 = vmul.bf16 %v6380, %v1076
      %v6527 = vmul.bf16 %v6381, %v1077
      %v6528 = vmul.bf16 %v6512, %v1078
      %v6529 = vld [vmem:[#allocation2 + $0x108] sm:$0xff]
      %v6530 = vld [vmem:[#allocation2 + $0x110] sm:$0xff]
      %v6531 = vpack.c.bf16 %v6530, %v6529
      %v6532 = vld [vmem:[#allocation2 + $0x109] sm:$0xff]
      %v6533 = vld [vmem:[#allocation2 + $0x111] sm:$0xff]
      %v6534 = vpack.c.bf16 %v6533, %v6532
      %v6535 = vmul.bf16 %v6479, %v1655
      %v6536 = vmul.bf16 %v6480, %v1656
      %v6537 = vmul.bf16 %v6481, %v1657
      %v6538 = vmul.bf16 %v6482, %v1658
      %v6539 = vmul.bf16 %v6483, %v1659
      %v6540 = vmul.bf16 %v6484, %v1660
      %v6541 = vmul.bf16 %v6485, %v1661
      %v6542 = vmul.bf16 %v6486, %v1662
      %v6543 = vmul.bf16 %v6487, %v1663
      %v6544 = vmul.bf16 %v6488, %v1664
      %v6545 = vmul.bf16 %v6489, %v1665
      %v6546 = vmul.bf16 %v6490, %v1666
      %v6547 = vmul.bf16 %v6491, %v1667
      %v6548 = vmul.bf16 %v6492, %v1668
      %v6549 = vmul.bf16 %v6493, %v1669
      %v6550 = vmul.bf16 %v6534, %v1670
      %v6551 = vld [vmem:[#allocation2 + $0x117] sm:$0xff]
      %v6552 = vld [vmem:[#allocation2 + $0x11f] sm:$0xff]
      %v6553 = vpack.c.bf16 %v6552, %v6551
      %v6554 = vmul.bf16 %v6368, %v1063
      %v6555 = vmul.bf16 %v6369, %v1064
      %v6556 = vmul.bf16 %v6370, %v1065
      %v6557 = vmul.bf16 %v6371, %v1066
      %v6558 = vmul.bf16 %v6372, %v1067
      %v6559 = vmul.bf16 %v6373, %v1068
      %v6560 = vmul.bf16 %v6374, %v1069
      %v6561 = vmul.bf16 %v6375, %v1070
      %v6562 = vmul.bf16 %v6376, %v1071
      %v6563 = vmul.bf16 %v6377, %v1072
      %v6564 = vmul.bf16 %v6378, %v1073
      %v6565 = vmul.bf16 %v6379, %v1074
      %v6566 = vmul.bf16 %v6380, %v1075
      %v6567 = vmul.bf16 %v6381, %v1076
      %v6568 = vmul.bf16 %v6512, %v1077
      %v6569 = vmul.bf16 %v6553, %v1078
      %v6570 = vld [vmem:[#allocation2 + $0x118] sm:$0xff]
      %v6571 = vld [vmem:[#allocation2 + $0x120] sm:$0xff]
      %v6572 = vpack.c.bf16 %v6571, %v6570
      %v6573 = vld [vmem:[#allocation2 + $0x119] sm:$0xff]
      %v6574 = vld [vmem:[#allocation2 + $0x121] sm:$0xff]
      %v6575 = vpack.c.bf16 %v6574, %v6573
      %v6576 = vmul.bf16 %v6480, %v1655
      %v6577 = vmul.bf16 %v6481, %v1656
      %v6578 = vmul.bf16 %v6482, %v1657
      %v6579 = vmul.bf16 %v6483, %v1658
      %v6580 = vmul.bf16 %v6484, %v1659
      %v6581 = vmul.bf16 %v6485, %v1660
      %v6582 = vmul.bf16 %v6486, %v1661
      %v6583 = vmul.bf16 %v6487, %v1662
      %v6584 = vmul.bf16 %v6488, %v1663
      %v6585 = vmul.bf16 %v6489, %v1664
      %v6586 = vmul.bf16 %v6490, %v1665
      %v6587 = vmul.bf16 %v6491, %v1666
      %v6588 = vmul.bf16 %v6492, %v1667
      %v6589 = vmul.bf16 %v6493, %v1668
      %v6590 = vmul.bf16 %v6534, %v1669
      %v6591 = vmul.bf16 %v6575, %v1670
      %6608 = vrot.lane.b32.xlu0 %v6430, 32
      %v6609 = vpop.permute.xlu0 %6608
      %6610 = vrot.lane.b32.xlu0 %v6431, 32
      %v6611 = vpop.permute.xlu0 %6610
      %6612 = vrot.lane.b32.xlu0 %v6432, 32
      %v6613 = vpop.permute.xlu0 %6612
      %6614 = vrot.lane.b32.xlu0 %v6433, 32
      %v6615 = vpop.permute.xlu0 %6614
      %6616 = vrot.lane.b32.xlu0 %v6434, 32
      %v6617 = vpop.permute.xlu0 %6616
      %6618 = vrot.lane.b32.xlu0 %v6435, 32
      %v6619 = vpop.permute.xlu0 %6618
      %6620 = vrot.lane.b32.xlu0 %v6436, 32
      %v6621 = vpop.permute.xlu0 %6620
      %6622 = vrot.lane.b32.xlu0 %v6437, 32
      %v6623 = vpop.permute.xlu0 %6622
      %6624 = vrot.lane.b32.xlu0 %v6438, 32
      %v6625 = vpop.permute.xlu0 %6624
      %6626 = vrot.lane.b32.xlu0 %v6439, 32
      %v6627 = vpop.permute.xlu0 %6626
      %6628 = vrot.lane.b32.xlu0 %v6440, 32
      %v6629 = vpop.permute.xlu0 %6628
      %6630 = vrot.lane.b32.xlu0 %v6441, 32
      %v6631 = vpop.permute.xlu0 %6630
      %6632 = vrot.lane.b32.xlu0 %v6442, 32
      %v6633 = vpop.permute.xlu0 %6632
      %6634 = vrot.lane.b32.xlu0 %v6443, 32
      %v6635 = vpop.permute.xlu0 %6634
      %6636 = vrot.lane.b32.xlu0 %v6444, 32
      %v6637 = vpop.permute.xlu0 %6636
      %6638 = vrot.lane.b32.xlu0 %v6445, 32
      %v6639 = vpop.permute.xlu0 %6638
      %6656 = vrot.lane.b32.xlu0 %v6494, 64
      %v6657 = vpop.permute.xlu0 %6656
      %6658 = vrot.lane.b32.xlu0 %v6495, 64
      %v6659 = vpop.permute.xlu0 %6658
      %6660 = vrot.lane.b32.xlu0 %v6496, 64
      %v6661 = vpop.permute.xlu0 %6660
      %6662 = vrot.lane.b32.xlu0 %v6497, 64
      %v6663 = vpop.permute.xlu0 %6662
      %6664 = vrot.lane.b32.xlu0 %v6498, 64
      %v6665 = vpop.permute.xlu0 %6664
      %6666 = vrot.lane.b32.xlu0 %v6499, 64
      %v6667 = vpop.permute.xlu0 %6666
      %6668 = vrot.lane.b32.xlu0 %v6500, 64
      %v6669 = vpop.permute.xlu0 %6668
      %6670 = vrot.lane.b32.xlu0 %v6501, 64
      %v6671 = vpop.permute.xlu0 %6670
      %6672 = vrot.lane.b32.xlu0 %v6502, 64
      %v6673 = vpop.permute.xlu0 %6672
      %6674 = vrot.lane.b32.xlu0 %v6503, 64
      %v6675 = vpop.permute.xlu0 %6674
      %6676 = vrot.lane.b32.xlu0 %v6504, 64
      %v6677 = vpop.permute.xlu0 %6676
      %6678 = vrot.lane.b32.xlu0 %v6505, 64
      %v6679 = vpop.permute.xlu0 %6678
      %6680 = vrot.lane.b32.xlu0 %v6506, 64
      %v6681 = vpop.permute.xlu0 %6680
      %6682 = vrot.lane.b32.xlu0 %v6507, 64
      %v6683 = vpop.permute.xlu0 %6682
      %6684 = vrot.lane.b32.xlu0 %v6508, 64
      %v6685 = vpop.permute.xlu0 %6684
      %6686 = vrot.lane.b32.xlu0 %v6509, 64
      %v6687 = vpop.permute.xlu0 %6686
      %6704 = vrot.lane.b32.xlu0 %v6513, 96
      %v6705 = vpop.permute.xlu0 %6704
      %6706 = vrot.lane.b32.xlu0 %v6514, 96
      %v6707 = vpop.permute.xlu0 %6706
      %6708 = vrot.lane.b32.xlu0 %v6515, 96
      %v6709 = vpop.permute.xlu0 %6708
      %6710 = vrot.lane.b32.xlu0 %v6516, 96
      %v6711 = vpop.permute.xlu0 %6710
      %6712 = vrot.lane.b32.xlu0 %v6517, 96
      %v6713 = vpop.permute.xlu0 %6712
      %6714 = vrot.lane.b32.xlu0 %v6518, 96
      %v6715 = vpop.permute.xlu0 %6714
      %6716 = vrot.lane.b32.xlu0 %v6519, 96
      %v6717 = vpop.permute.xlu0 %6716
      %6718 = vrot.lane.b32.xlu0 %v6520, 96
      %v6719 = vpop.permute.xlu0 %6718
      %6720 = vrot.lane.b32.xlu0 %v6521, 96
      %v6721 = vpop.permute.xlu0 %6720
      %6722 = vrot.lane.b32.xlu0 %v6522, 96
      %v6723 = vpop.permute.xlu0 %6722
      %6724 = vrot.lane.b32.xlu0 %v6523, 96
      %v6725 = vpop.permute.xlu0 %6724
      %6726 = vrot.lane.b32.xlu0 %v6524, 96
      %v6727 = vpop.permute.xlu0 %6726
      %6728 = vrot.lane.b32.xlu0 %v6525, 96
      %v6729 = vpop.permute.xlu0 %6728
      %6730 = vrot.lane.b32.xlu0 %v6526, 96
      %v6731 = vpop.permute.xlu0 %6730
      %6732 = vrot.lane.b32.xlu0 %v6527, 96
      %v6733 = vpop.permute.xlu0 %6732
      %6734 = vrot.lane.b32.xlu0 %v6528, 96
      %v6735 = vpop.permute.xlu0 %6734
      %6752 = vrot.lane.b32.xlu0 %v6535, 32
      %v6753 = vpop.permute.xlu0 %6752
      %6754 = vrot.lane.b32.xlu0 %v6536, 32
      %v6755 = vpop.permute.xlu0 %6754
      %6756 = vrot.lane.b32.xlu0 %v6537, 32
      %v6757 = vpop.permute.xlu0 %6756
      %6758 = vrot.lane.b32.xlu0 %v6538, 32
      %v6759 = vpop.permute.xlu0 %6758
      %6760 = vrot.lane.b32.xlu0 %v6539, 32
      %v6761 = vpop.permute.xlu0 %6760
      %6762 = vrot.lane.b32.xlu0 %v6540, 32
      %v6763 = vpop.permute.xlu0 %6762
      %6764 = vrot.lane.b32.xlu0 %v6541, 32
      %v6765 = vpop.permute.xlu0 %6764
      %6766 = vrot.lane.b32.xlu0 %v6542, 32
      %v6767 = vpop.permute.xlu0 %6766
      %6768 = vrot.lane.b32.xlu0 %v6543, 32
      %v6769 = vpop.permute.xlu0 %6768
      %6770 = vrot.lane.b32.xlu0 %v6544, 32
      %v6771 = vpop.permute.xlu0 %6770
      %6772 = vrot.lane.b32.xlu0 %v6545, 32
      %v6773 = vpop.permute.xlu0 %6772
      %6774 = vrot.lane.b32.xlu0 %v6546, 32
      %v6775 = vpop.permute.xlu0 %6774
      %6776 = vrot.lane.b32.xlu0 %v6547, 32
      %v6777 = vpop.permute.xlu0 %6776
      %6778 = vrot.lane.b32.xlu0 %v6548, 32
      %v6779 = vpop.permute.xlu0 %6778
      %6780 = vrot.lane.b32.xlu0 %v6549, 32
      %v6781 = vpop.permute.xlu0 %6780
      %6782 = vrot.lane.b32.xlu0 %v6550, 32
      %v6783 = vpop.permute.xlu0 %6782
      %6800 = vrot.lane.b32.xlu0 %v6554, 64
      %v6801 = vpop.permute.xlu0 %6800
      %6802 = vrot.lane.b32.xlu0 %v6555, 64
      %v6803 = vpop.permute.xlu0 %6802
      %6804 = vrot.lane.b32.xlu0 %v6556, 64
      %v6805 = vpop.permute.xlu0 %6804
      %6806 = vrot.lane.b32.xlu0 %v6557, 64
      %v6807 = vpop.permute.xlu0 %6806
      %6808 = vrot.lane.b32.xlu0 %v6558, 64
      %v6809 = vpop.permute.xlu0 %6808
      %6810 = vrot.lane.b32.xlu0 %v6559, 64
      %v6811 = vpop.permute.xlu0 %6810
      %6812 = vrot.lane.b32.xlu0 %v6560, 64
      %v6813 = vpop.permute.xlu0 %6812
      %6814 = vrot.lane.b32.xlu0 %v6561, 64
      %v6815 = vpop.permute.xlu0 %6814
      %6816 = vrot.lane.b32.xlu0 %v6562, 64
      %v6817 = vpop.permute.xlu0 %6816
      %6818 = vrot.lane.b32.xlu0 %v6563, 64
      %v6819 = vpop.permute.xlu0 %6818
      %6820 = vrot.lane.b32.xlu0 %v6564, 64
      %v6821 = vpop.permute.xlu0 %6820
      %6822 = vrot.lane.b32.xlu0 %v6565, 64
      %v6823 = vpop.permute.xlu0 %6822
      %6824 = vrot.lane.b32.xlu0 %v6566, 64
      %v6825 = vpop.permute.xlu0 %6824
      %6826 = vrot.lane.b32.xlu0 %v6567, 64
      %v6827 = vpop.permute.xlu0 %6826
      %6828 = vrot.lane.b32.xlu0 %v6568, 64
      %v6829 = vpop.permute.xlu0 %6828
      %6830 = vrot.lane.b32.xlu0 %v6569, 64
      %v6831 = vpop.permute.xlu0 %6830
      %6834 = vrot.lane.b32.xlu0 %v6432, 96
      %v6835 = vpop.permute.xlu0 %6834
      %6836 = vrot.lane.b32.xlu0 %v6433, 96
      %v6837 = vpop.permute.xlu0 %6836
      %6838 = vrot.lane.b32.xlu0 %v6434, 96
      %v6839 = vpop.permute.xlu0 %6838
      %6840 = vrot.lane.b32.xlu0 %v6435, 96
      %v6841 = vpop.permute.xlu0 %6840
      %6842 = vrot.lane.b32.xlu0 %v6436, 96
      %v6843 = vpop.permute.xlu0 %6842
      %6844 = vrot.lane.b32.xlu0 %v6437, 96
      %v6845 = vpop.permute.xlu0 %6844
      %6846 = vrot.lane.b32.xlu0 %v6438, 96
      %v6847 = vpop.permute.xlu0 %6846
      %6848 = vrot.lane.b32.xlu0 %v6439, 96
      %v6849 = vpop.permute.xlu0 %6848
      %6850 = vrot.lane.b32.xlu0 %v6440, 96
      %v6851 = vpop.permute.xlu0 %6850
      %6852 = vrot.lane.b32.xlu0 %v6441, 96
      %v6853 = vpop.permute.xlu0 %6852
      %6854 = vrot.lane.b32.xlu0 %v6442, 96
      %v6855 = vpop.permute.xlu0 %6854
      %6856 = vrot.lane.b32.xlu0 %v6443, 96
      %v6857 = vpop.permute.xlu0 %6856
      %6858 = vrot.lane.b32.xlu0 %v6444, 96
      %v6859 = vpop.permute.xlu0 %6858
      %6860 = vrot.lane.b32.xlu0 %v6445, 96
      %v6861 = vpop.permute.xlu0 %6860
      %6862 = vrot.lane.b32.xlu0 %v6531, 96
      %v6863 = vpop.permute.xlu0 %6862
      %6864 = vrot.lane.b32.xlu0 %v6572, 96
      %v6865 = vpop.permute.xlu0 %6864
      %v6868 = vsel %vm342, %v6382, %v6609
      %v6871 = vsel %vm342, %v6383, %v6611
      %v6874 = vsel %vm342, %v6384, %v6613
      %v6877 = vsel %vm342, %v6385, %v6615
      %v6880 = vsel %vm342, %v6386, %v6617
      %v6883 = vsel %vm342, %v6387, %v6619
      %v6886 = vsel %vm342, %v6388, %v6621
      %v6889 = vsel %vm342, %v6389, %v6623
      %v6892 = vsel %vm342, %v6390, %v6625
      %v6895 = vsel %vm342, %v6391, %v6627
      %v6898 = vsel %vm342, %v6392, %v6629
      %v6901 = vsel %vm342, %v6393, %v6631
      %v6904 = vsel %vm342, %v6394, %v6633
      %v6907 = vsel %vm342, %v6395, %v6635
      %v6910 = vsel %vm342, %v6396, %v6637
      %v6913 = vsel %vm342, %v6397, %v6639
      %v6915 = vsel %vm2256, %v6868, %v6657
      %v6917 = vsel %vm2256, %v6871, %v6659
      %v6919 = vsel %vm2256, %v6874, %v6661
      %v6921 = vsel %vm2256, %v6877, %v6663
      %v6923 = vsel %vm2256, %v6880, %v6665
      %v6925 = vsel %vm2256, %v6883, %v6667
      %v6927 = vsel %vm2256, %v6886, %v6669
      %v6929 = vsel %vm2256, %v6889, %v6671
      %v6931 = vsel %vm2256, %v6892, %v6673
      %v6933 = vsel %vm2256, %v6895, %v6675
      %v6935 = vsel %vm2256, %v6898, %v6677
      %v6937 = vsel %vm2256, %v6901, %v6679
      %v6939 = vsel %vm2256, %v6904, %v6681
      %v6941 = vsel %vm2256, %v6907, %v6683
      %v6943 = vsel %vm2256, %v6910, %v6685
      %v6945 = vsel %vm2256, %v6913, %v6687
      %v6947 = vsel %vm2289, %v6915, %v6705
      %v6950 = vsel %vm2289, %v6917, %v6707
      %v6953 = vsel %vm2289, %v6919, %v6709
      %v6956 = vsel %vm2289, %v6921, %v6711
      %v6959 = vsel %vm2289, %v6923, %v6713
      %v6962 = vsel %vm2289, %v6925, %v6715
      %v6965 = vsel %vm2289, %v6927, %v6717
      %v6968 = vsel %vm2289, %v6929, %v6719
      %v6971 = vsel %vm2289, %v6931, %v6721
      %v6974 = vsel %vm2289, %v6933, %v6723
      %v6977 = vsel %vm2289, %v6935, %v6725
      %v6980 = vsel %vm2289, %v6937, %v6727
      %v6983 = vsel %vm2289, %v6939, %v6729
      %v6986 = vsel %vm2289, %v6941, %v6731
      %v6989 = vsel %vm2289, %v6943, %v6733
      %v6992 = vsel %vm2289, %v6945, %v6735
      %v6996 = vsel %vm342, %v6431, %v6753
      %v6999 = vsel %vm342, %v6432, %v6755
      %v7002 = vsel %vm342, %v6433, %v6757
      %v7005 = vsel %vm342, %v6434, %v6759
      %v7008 = vsel %vm342, %v6435, %v6761
      %v7011 = vsel %vm342, %v6436, %v6763
      %v7014 = vsel %vm342, %v6437, %v6765
      %v7017 = vsel %vm342, %v6438, %v6767
      %v7020 = vsel %vm342, %v6439, %v6769
      %v7023 = vsel %vm342, %v6440, %v6771
      %v7026 = vsel %vm342, %v6441, %v6773
      %v7029 = vsel %vm342, %v6442, %v6775
      %v7032 = vsel %vm342, %v6443, %v6777
      %v7035 = vsel %vm342, %v6444, %v6779
      %v7038 = vsel %vm342, %v6445, %v6781
      %v7041 = vsel %vm342, %v6531, %v6783
      %v7043 = vsel %vm2256, %v6996, %v6801
      %v7045 = vsel %vm2256, %v6999, %v6803
      %v7047 = vsel %vm2256, %v7002, %v6805
      %v7049 = vsel %vm2256, %v7005, %v6807
      %v7051 = vsel %vm2256, %v7008, %v6809
      %v7053 = vsel %vm2256, %v7011, %v6811
      %v7055 = vsel %vm2256, %v7014, %v6813
      %v7057 = vsel %vm2256, %v7017, %v6815
      %v7059 = vsel %vm2256, %v7020, %v6817
      %v7061 = vsel %vm2256, %v7023, %v6819
      %v7063 = vsel %vm2256, %v7026, %v6821
      %v7065 = vsel %vm2256, %v7029, %v6823
      %v7067 = vsel %vm2256, %v7032, %v6825
      %v7069 = vsel %vm2256, %v7035, %v6827
      %v7071 = vsel %vm2256, %v7038, %v6829
      %v7073 = vsel %vm2256, %v7041, %v6831
      %v7075 = vsel %vm2289, %v7043, %v6835
      %v7078 = vsel %vm2289, %v7045, %v6837
      %v7081 = vsel %vm2289, %v7047, %v6839
      %v7084 = vsel %vm2289, %v7049, %v6841
      %v7087 = vsel %vm2289, %v7051, %v6843
      %v7090 = vsel %vm2289, %v7053, %v6845
      %v7093 = vsel %vm2289, %v7055, %v6847
      %v7096 = vsel %vm2289, %v7057, %v6849
      %v7099 = vsel %vm2289, %v7059, %v6851
      %v7102 = vsel %vm2289, %v7061, %v6853
      %v7105 = vsel %vm2289, %v7063, %v6855
      %v7108 = vsel %vm2289, %v7065, %v6857
      %v7111 = vsel %vm2289, %v7067, %v6859
      %v7114 = vsel %vm2289, %v7069, %v6861
      %v7117 = vsel %vm2289, %v7071, %v6863
      %v7120 = vsel %vm2289, %v7073, %v6865
      %v7122 = vld [vmem:[%s3] sm:$0xf]
      %v7123 = vld [vmem:[%s3 + $0x4] sm:$0xf]
      %v7124 = vld [vmem:[%s3 + $0x8] sm:$0xf]
      %v7125 = vld [vmem:[%s3 + $0xc] sm:$0xf]
      %v7126 = vld [vmem:[%s3 + $0x10] sm:$0xf]
      %v7127 = vld [vmem:[%s3 + $0x14] sm:$0xf]
      %v7128 = vld [vmem:[%s3 + $0x18] sm:$0xf]
      %v7129 = vld [vmem:[%s3 + $0x1c] sm:$0xf]
      %v7130 = vld [vmem:[%s3 + $0x20] sm:$0xf]
      %v7131 = vld [vmem:[%s3 + $0x24] sm:$0xf]
      %v7132 = vld [vmem:[%s3 + $0x28] sm:$0xf]
      %v7133 = vld [vmem:[%s3 + $0x2c] sm:$0xf]
      %v7134 = vld [vmem:[%s3 + $0x30] sm:$0xf]
      %v7135 = vld [vmem:[%s3 + $0x34] sm:$0xf]
      %v7136 = vld [vmem:[%s3 + $0x38] sm:$0xf]
      %v7137 = vld [vmem:[%s3 + $0x3c] sm:$0xf]
      %v7138 = vld [vmem:[%s3 + $0x40] sm:$0xf]
      %v7139 = vld [vmem:[%s3 + $0x44] sm:$0xf]
      %v7140 = vld [vmem:[%s3 + $0x48] sm:$0xf]
      %v7141 = vld [vmem:[%s3 + $0x4c] sm:$0xf]
      %v7142 = vld [vmem:[%s3 + $0x50] sm:$0xf]
      %v7143 = vld [vmem:[%s3 + $0x54] sm:$0xf]
      %v7144 = vld [vmem:[%s3 + $0x58] sm:$0xf]
      %v7145 = vld [vmem:[%s3 + $0x5c] sm:$0xf]
      %v7146 = vld [vmem:[%s3 + $0x60] sm:$0xf]
      %v7147 = vld [vmem:[%s3 + $0x64] sm:$0xf]
      %v7148 = vld [vmem:[%s3 + $0x68] sm:$0xf]
      %v7149 = vld [vmem:[%s3 + $0x6c] sm:$0xf]
      %v7150 = vld [vmem:[%s3 + $0x70] sm:$0xf]
      %v7151 = vld [vmem:[%s3 + $0x74] sm:$0xf]
      %v7152 = vld [vmem:[%s3 + $0x78] sm:$0xf]
      %v7153 = vld [vmem:[%s3 + $0x7c] sm:$0xf]
      %v7154 = vld [vmem:[%s3 + $0x80] sm:$0xf]
      %v7155 = vld [vmem:[%s3 + $0x84] sm:$0xf]
      %v7156 = vld [vmem:[%s3 + $0x88] sm:$0xf]
      %v7157 = vld [vmem:[%s3 + $0x8c] sm:$0xf]
      %v7194 = vunpack.c.l.b16 %v7122
      %v7195 = vunpack.c.l.b16 %v7123
      %v7196 = vunpack.c.l.b16 %v7124
      %v7197 = vunpack.c.l.b16 %v7125
      %v7198 = vunpack.c.l.b16 %v7126
      %v7199 = vunpack.c.l.b16 %v7127
      %v7200 = vunpack.c.l.b16 %v7128
      %v7201 = vunpack.c.l.b16 %v7129
      %v7202 = vunpack.c.l.b16 %v7130
      %v7203 = vunpack.c.l.b16 %v7131
      %v7204 = vunpack.c.l.b16 %v7132
      %v7205 = vunpack.c.l.b16 %v7133
      %v7206 = vunpack.c.l.b16 %v7134
      %v7207 = vunpack.c.l.b16 %v7135
      %v7208 = vunpack.c.l.b16 %v7136
      %v7209 = vunpack.c.l.b16 %v7137
      %v7210 = vunpack.c.l.b16 %v7138
      %v7211 = vunpack.c.l.b16 %v7139
      %v7212 = vunpack.c.l.b16 %v7140
      %v7213 = vunpack.c.l.b16 %v7141
      %v7214 = vunpack.c.l.b16 %v7142
      %v7215 = vunpack.c.l.b16 %v7143
      %v7216 = vunpack.c.l.b16 %v7144
      %v7217 = vunpack.c.l.b16 %v7145
      %v7218 = vunpack.c.l.b16 %v7146
      %v7219 = vunpack.c.l.b16 %v7147
      %v7220 = vunpack.c.l.b16 %v7148
      %v7221 = vunpack.c.l.b16 %v7149
      %v7222 = vunpack.c.l.b16 %v7150
      %v7223 = vunpack.c.l.b16 %v7151
      %v7224 = vunpack.c.l.b16 %v7152
      %v7225 = vunpack.c.l.b16 %v7153
      %v7226 = vunpack.c.l.b16 %v7154
      %v7227 = vunpack.c.l.b16 %v7155
      %v7228 = vunpack.c.l.b16 %v7156
      %v7229 = vunpack.c.l.b16 %v7157
      %v7230 = vpack.c.b16 %v7195, %v7194
      %v7231 = vpack.c.b16 %v7197, %v7196
      %v7232 = vpack.c.b16 %v7199, %v7198
      %v7233 = vpack.c.b16 %v7201, %v7200
      %v7234 = vpack.c.b16 %v7203, %v7202
      %v7235 = vpack.c.b16 %v7205, %v7204
      %v7236 = vpack.c.b16 %v7207, %v7206
      %v7237 = vpack.c.b16 %v7209, %v7208
      %v7238 = vpack.c.b16 %v7211, %v7210
      %v7239 = vpack.c.b16 %v7213, %v7212
      %v7240 = vpack.c.b16 %v7215, %v7214
      %v7241 = vpack.c.b16 %v7217, %v7216
      %v7242 = vpack.c.b16 %v7219, %v7218
      %v7243 = vpack.c.b16 %v7221, %v7220
      %v7244 = vpack.c.b16 %v7223, %v7222
      %v7245 = vpack.c.b16 %v7225, %v7224
      %v7246 = vpack.c.b16 %v7227, %v7226
      %v7247 = vpack.c.b16 %v7229, %v7228
      %v7267 = vsel %vm342, %v6576, 0
      %v7270 = vsel %vm342, %v6577, 0
      %v7273 = vsel %vm342, %v6578, 0
      %v7276 = vsel %vm342, %v6579, 0
      %v7279 = vsel %vm342, %v6580, 0
      %v7282 = vsel %vm342, %v6581, 0
      %v7285 = vsel %vm342, %v6582, 0
      %v7288 = vsel %vm342, %v6583, 0
      %v7291 = vsel %vm342, %v6584, 0
      %v7294 = vsel %vm342, %v6585, 0
      %v7297 = vsel %vm342, %v6586, 0
      %v7300 = vsel %vm342, %v6587, 0
      %v7303 = vsel %vm342, %v6588, 0
      %v7306 = vsel %vm342, %v6589, 0
      %v7309 = vsel %vm342, %v6590, 0
      %v7312 = vsel %vm342, %v6591, 0
      %7314 = vmatprep.subr.bf16.mxu0 0
      %7315 = vmatpush1.bf16.msra.mxu0 %v7237
      %7316 = vmatprep.subr.bf16.mxu0 0
      %7317 = vmatpush1.bf16.msra.mxu0 %v7236
      %7318 = vmatprep.subr.bf16.mxu0 0
      %7319 = vmatpush1.bf16.msra.mxu0 %v7235
      %7320 = vmatprep.subr.bf16.mxu0 0
      %7321 = vmatpush1.bf16.msra.mxu0 %v7234
      %7322 = vmatprep.subr.bf16.mxu0 0
      %7323 = vmatpush1.bf16.msra.mxu0 %v7233
      %7324 = vmatprep.subr.bf16.mxu0 0
      %7325 = vmatpush1.bf16.msra.mxu0 %v7232
      %7326 = vmatprep.subr.bf16.mxu0 0
      %7327 = vmatpush1.bf16.msra.mxu0 %v7231
      %7328 = vmatprep.subr.bf16.mxu0 0
      %7329 = vmatpush1.bf16.msra.mxu0 %v7230
      %7330 = vmatprep.subr.bf16.mxu0 0
      %7331 = vmatpush2.bf16.msra.mxu0 %v7245
      %7332 = vmatprep.subr.bf16.mxu0 0
      %7333 = vmatpush2.bf16.msra.mxu0 %v7244
      %7334 = vmatprep.subr.bf16.mxu0 0
      %7335 = vmatpush2.bf16.msra.mxu0 %v7243
      %7336 = vmatprep.subr.bf16.mxu0 0
      %7337 = vmatpush2.bf16.msra.mxu0 %v7242
      %7338 = vmatprep.subr.bf16.mxu0 0
      %7339 = vmatpush2.bf16.msra.mxu0 %v7241
      %7340 = vmatprep.subr.bf16.mxu0 0
      %7341 = vmatpush2.bf16.msra.mxu0 %v7240
      %7342 = vmatprep.subr.bf16.mxu0 0
      %7343 = vmatpush2.bf16.msra.mxu0 %v7239
      %7344 = vmatprep.subr.bf16.mxu0 0
      %7345 = vmatpush2.bf16.msra.mxu0 %v7238
      %7346 = vmatprep.mubr.bf16.mxu0 %v7075
      %7347 = vmatmul.mubr.bf16.gmra.mxu0 %v6947
      %v7348 = vpop.f32.mrf.mxu0
      %v7349 = vadd.f32 0.0, %v7348
      %v7350 = vpop.f32.mrf.mxu0
      %v7351 = vpop.f32.mrf.mxu0
      %v7352 = vadd.f32 0.0, %v7351
      %v7353 = vpop.f32.mrf.mxu0
      %7354 = vmatprep.mubr.bf16.mxu0 %v7078
      %7355 = vmatmul.mubr.bf16.gmra.mxu0 %v6950
      %v7356 = vpop.f32.mrf.mxu0
      %v7357 = vadd.f32 0.0, %v7356
      %v7358 = vpop.f32.mrf.mxu0
      %v7359 = vpop.f32.mrf.mxu0
      %v7360 = vadd.f32 0.0, %v7359
      %v7361 = vpop.f32.mrf.mxu0
      %7362 = vmatprep.mubr.bf16.mxu0 %v7081
      %7363 = vmatmul.mubr.bf16.gmra.mxu0 %v6953
      %v7364 = vpop.f32.mrf.mxu0
      %v7365 = vadd.f32 0.0, %v7364
      %v7366 = vpop.f32.mrf.mxu0
      %v7367 = vpop.f32.mrf.mxu0
      %v7368 = vadd.f32 0.0, %v7367
      %v7369 = vpop.f32.mrf.mxu0
      %7370 = vmatprep.mubr.bf16.mxu0 %v7084
      %7371 = vmatmul.mubr.bf16.gmra.mxu0 %v6956
      %v7372 = vpop.f32.mrf.mxu0
      %v7373 = vadd.f32 0.0, %v7372
      %v7374 = vpop.f32.mrf.mxu0
      %v7375 = vpop.f32.mrf.mxu0
      %v7376 = vadd.f32 0.0, %v7375
      %v7377 = vpop.f32.mrf.mxu0
      %7378 = vmatprep.mubr.bf16.mxu0 %v7087
      %7379 = vmatmul.mubr.bf16.gmra.mxu0 %v6959
      %v7380 = vpop.f32.mrf.mxu0
      %v7381 = vadd.f32 0.0, %v7380
      %v7382 = vpop.f32.mrf.mxu0
      %v7383 = vpop.f32.mrf.mxu0
      %v7384 = vadd.f32 0.0, %v7383
      %v7385 = vpop.f32.mrf.mxu0
      %7386 = vmatprep.mubr.bf16.mxu0 %v7090
      %7387 = vmatmul.mubr.bf16.gmra.mxu0 %v6962
      %v7388 = vpop.f32.mrf.mxu0
      %v7389 = vadd.f32 0.0, %v7388
      %v7390 = vpop.f32.mrf.mxu0
      %v7391 = vpop.f32.mrf.mxu0
      %v7392 = vadd.f32 0.0, %v7391
      %v7393 = vpop.f32.mrf.mxu0
      %7394 = vmatprep.mubr.bf16.mxu0 %v7093
      %7395 = vmatmul.mubr.bf16.gmra.mxu0 %v6965
      %v7396 = vpop.f32.mrf.mxu0
      %v7397 = vadd.f32 0.0, %v7396
      %v7398 = vpop.f32.mrf.mxu0
      %v7399 = vpop.f32.mrf.mxu0
      %v7400 = vadd.f32 0.0, %v7399
      %v7401 = vpop.f32.mrf.mxu0
      %7402 = vmatprep.mubr.bf16.mxu0 %v7096
      %7403 = vmatmul.mubr.bf16.gmra.mxu0 %v6968
      %v7404 = vpop.f32.mrf.mxu0
      %v7405 = vadd.f32 0.0, %v7404
      %v7406 = vpop.f32.mrf.mxu0
      %v7407 = vpop.f32.mrf.mxu0
      %v7408 = vadd.f32 0.0, %v7407
      %v7409 = vpop.f32.mrf.mxu0
      %7410 = vmatprep.mubr.bf16.mxu0 %v7099
      %7411 = vmatmul.mubr.bf16.gmra.mxu0 %v6971
      %v7412 = vpop.f32.mrf.mxu0
      %v7413 = vadd.f32 0.0, %v7412
      %v7414 = vpop.f32.mrf.mxu0
      %v7415 = vpop.f32.mrf.mxu0
      %v7416 = vadd.f32 0.0, %v7415
      %v7417 = vpop.f32.mrf.mxu0
      %7418 = vmatprep.mubr.bf16.mxu0 %v7102
      %7419 = vmatmul.mubr.bf16.gmra.mxu0 %v6974
      %v7420 = vpop.f32.mrf.mxu0
      %v7421 = vadd.f32 0.0, %v7420
      %v7422 = vpop.f32.mrf.mxu0
      %v7423 = vpop.f32.mrf.mxu0
      %v7424 = vadd.f32 0.0, %v7423
      %v7425 = vpop.f32.mrf.mxu0
      %7426 = vmatprep.mubr.bf16.mxu0 %v7105
      %7427 = vmatmul.mubr.bf16.gmra.mxu0 %v6977
      %v7428 = vpop.f32.mrf.mxu0
      %v7429 = vadd.f32 0.0, %v7428
      %v7430 = vpop.f32.mrf.mxu0
      %v7431 = vpop.f32.mrf.mxu0
      %v7432 = vadd.f32 0.0, %v7431
      %v7433 = vpop.f32.mrf.mxu0
      %7434 = vmatprep.mubr.bf16.mxu0 %v7108
      %7435 = vmatmul.mubr.bf16.gmra.mxu0 %v6980
      %v7436 = vpop.f32.mrf.mxu0
      %v7437 = vadd.f32 0.0, %v7436
      %v7438 = vpop.f32.mrf.mxu0
      %v7439 = vpop.f32.mrf.mxu0
      %v7440 = vadd.f32 0.0, %v7439
      %v7441 = vpop.f32.mrf.mxu0
      %7442 = vmatprep.mubr.bf16.mxu0 %v7111
      %7443 = vmatmul.mubr.bf16.gmra.mxu0 %v6983
      %v7444 = vpop.f32.mrf.mxu0
      %v7445 = vadd.f32 0.0, %v7444
      %v7446 = vpop.f32.mrf.mxu0
      %v7447 = vpop.f32.mrf.mxu0
      %v7448 = vadd.f32 0.0, %v7447
      %v7449 = vpop.f32.mrf.mxu0
      %7450 = vmatprep.mubr.bf16.mxu0 %v7114
      %7451 = vmatmul.mubr.bf16.gmra.mxu0 %v6986
      %v7452 = vpop.f32.mrf.mxu0
      %v7453 = vadd.f32 0.0, %v7452
      %v7454 = vpop.f32.mrf.mxu0
      %v7455 = vpop.f32.mrf.mxu0
      %v7456 = vadd.f32 0.0, %v7455
      %v7457 = vpop.f32.mrf.mxu0
      %7458 = vmatprep.mubr.bf16.mxu0 %v7117
      %7459 = vmatmul.mubr.bf16.gmra.mxu0 %v6989
      %v7460 = vpop.f32.mrf.mxu0
      %v7461 = vadd.f32 0.0, %v7460
      %v7462 = vpop.f32.mrf.mxu0
      %v7463 = vpop.f32.mrf.mxu0
      %v7464 = vadd.f32 0.0, %v7463
      %v7465 = vpop.f32.mrf.mxu0
      %7466 = vmatprep.mubr.bf16.mxu0 %v7120
      %7467 = vmatmul.mubr.bf16.gmra.mxu0 %v6992
      %v7468 = vpop.f32.mrf.mxu0
      %v7469 = vadd.f32 0.0, %v7468
      %v7470 = vpop.f32.mrf.mxu0
      %v7471 = vpop.f32.mrf.mxu0
      %v7472 = vadd.f32 0.0, %v7471
      %v7473 = vpop.f32.mrf.mxu0
      %7474 = vdwg.mxu0
      %7475 = vmatprep.subr.bf16.mxu0 0
      %7476 = vmatpush1.bf16.msra.mxu0 0
      %7477 = vmatprep.subr.bf16.mxu0 0
      %7478 = vmatpush1.bf16.msra.mxu0 0
      %7479 = vmatprep.subr.bf16.mxu0 0
      %7480 = vmatpush1.bf16.msra.mxu0 0
      %7481 = vmatprep.subr.bf16.mxu0 0
      %7482 = vmatpush1.bf16.msra.mxu0 0
      %7483 = vmatprep.subr.bf16.mxu0 0
      %7484 = vmatpush1.bf16.msra.mxu0 0
      %7485 = vmatprep.subr.bf16.mxu0 0
      %7486 = vmatpush1.bf16.msra.mxu0 0
      %7487 = vmatprep.subr.bf16.mxu0 0
      %7488 = vmatpush1.bf16.msra.mxu0 %v7247
      %7489 = vmatprep.subr.bf16.mxu0 0
      %7490 = vmatpush1.bf16.msra.mxu0 %v7246
      %7491 = vmatprep.subr.bf16.mxu0 0
      %7492 = vmatpush2.bf16.msra.mxu0 0
      %7493 = vmatprep.subr.bf16.mxu0 0
      %7494 = vmatpush2.bf16.msra.mxu0 0
      %7495 = vmatprep.subr.bf16.mxu0 0
      %7496 = vmatpush2.bf16.msra.mxu0 0
      %7497 = vmatprep.subr.bf16.mxu0 0
      %7498 = vmatpush2.bf16.msra.mxu0 0
      %7499 = vmatprep.subr.bf16.mxu0 0
      %7500 = vmatpush2.bf16.msra.mxu0 0
      %7501 = vmatprep.subr.bf16.mxu0 0
      %7502 = vmatpush2.bf16.msra.mxu0 0
      %7503 = vmatprep.subr.bf16.mxu0 0
      %7504 = vmatpush2.bf16.msra.mxu0 0
      %7505 = vmatprep.subr.bf16.mxu0 0
      %7506 = vmatpush2.bf16.msra.mxu0 0
      %7507 = vmatprep.mubr.bf16.mxu0 0
      %7508 = vmatmul.mubr.bf16.gmra.mxu0 %v7267
      %v7509 = vpop.f32.mrf.mxu0
      %v7510 = vadd.f32 %v7349, %v7509
      %v7511 = vpop.f32.mrf.mxu0
      %v7512 = vpop.f32.mrf.mxu0
      %v7513 = vadd.f32 %v7352, %v7512
      %v7514 = vpop.f32.mrf.mxu0
      %7515 = vmatprep.mubr.bf16.mxu0 0
      %7516 = vmatmul.mubr.bf16.gmra.mxu0 %v7270
      %v7517 = vpop.f32.mrf.mxu0
      %v7518 = vadd.f32 %v7357, %v7517
      %v7519 = vpop.f32.mrf.mxu0
      %v7520 = vpop.f32.mrf.mxu0
      %v7521 = vadd.f32 %v7360, %v7520
      %v7522 = vpop.f32.mrf.mxu0
      %7523 = vmatprep.mubr.bf16.mxu0 0
      %7524 = vmatmul.mubr.bf16.gmra.mxu0 %v7273
      %v7525 = vpop.f32.mrf.mxu0
      %v7526 = vadd.f32 %v7365, %v7525
      %v7527 = vpop.f32.mrf.mxu0
      %v7528 = vpop.f32.mrf.mxu0
      %v7529 = vadd.f32 %v7368, %v7528
      %v7530 = vpop.f32.mrf.mxu0
      %7531 = vmatprep.mubr.bf16.mxu0 0
      %7532 = vmatmul.mubr.bf16.gmra.mxu0 %v7276
      %v7533 = vpop.f32.mrf.mxu0
      %v7534 = vadd.f32 %v7373, %v7533
      %v7535 = vpop.f32.mrf.mxu0
      %v7536 = vpop.f32.mrf.mxu0
      %v7537 = vadd.f32 %v7376, %v7536
      %v7538 = vpop.f32.mrf.mxu0
      %7539 = vmatprep.mubr.bf16.mxu0 0
      %7540 = vmatmul.mubr.bf16.gmra.mxu0 %v7279
      %v7541 = vpop.f32.mrf.mxu0
      %v7542 = vadd.f32 %v7381, %v7541
      %v7543 = vpop.f32.mrf.mxu0
      %v7544 = vpop.f32.mrf.mxu0
      %v7545 = vadd.f32 %v7384, %v7544
      %v7546 = vpop.f32.mrf.mxu0
      %7547 = vmatprep.mubr.bf16.mxu0 0
      %7548 = vmatmul.mubr.bf16.gmra.mxu0 %v7282
      %v7549 = vpop.f32.mrf.mxu0
      %v7550 = vadd.f32 %v7389, %v7549
      %v7551 = vpop.f32.mrf.mxu0
      %v7552 = vpop.f32.mrf.mxu0
      %v7553 = vadd.f32 %v7392, %v7552
      %v7554 = vpop.f32.mrf.mxu0
      %7555 = vmatprep.mubr.bf16.mxu0 0
      %7556 = vmatmul.mubr.bf16.gmra.mxu0 %v7285
      %v7557 = vpop.f32.mrf.mxu0
      %v7558 = vadd.f32 %v7397, %v7557
      %v7559 = vpop.f32.mrf.mxu0
      %v7560 = vpop.f32.mrf.mxu0
      %v7561 = vadd.f32 %v7400, %v7560
      %v7562 = vpop.f32.mrf.mxu0
      %7563 = vmatprep.mubr.bf16.mxu0 0
      %7564 = vmatmul.mubr.bf16.gmra.mxu0 %v7288
      %v7565 = vpop.f32.mrf.mxu0
      %v7566 = vadd.f32 %v7405, %v7565
      %v7567 = vpop.f32.mrf.mxu0
      %v7568 = vpop.f32.mrf.mxu0
      %v7569 = vadd.f32 %v7408, %v7568
      %v7570 = vpop.f32.mrf.mxu0
      %7571 = vmatprep.mubr.bf16.mxu0 0
      %7572 = vmatmul.mubr.bf16.gmra.mxu0 %v7291
      %v7573 = vpop.f32.mrf.mxu0
      %v7574 = vadd.f32 %v7413, %v7573
      %v7575 = vpop.f32.mrf.mxu0
      %v7576 = vpop.f32.mrf.mxu0
      %v7577 = vadd.f32 %v7416, %v7576
      %v7578 = vpop.f32.mrf.mxu0
      %7579 = vmatprep.mubr.bf16.mxu0 0
      %7580 = vmatmul.mubr.bf16.gmra.mxu0 %v7294
      %v7581 = vpop.f32.mrf.mxu0
      %v7582 = vadd.f32 %v7421, %v7581
      %v7583 = vpop.f32.mrf.mxu0
      %v7584 = vpop.f32.mrf.mxu0
      %v7585 = vadd.f32 %v7424, %v7584
      %v7586 = vpop.f32.mrf.mxu0
      %7587 = vmatprep.mubr.bf16.mxu0 0
      %7588 = vmatmul.mubr.bf16.gmra.mxu0 %v7297
      %v7589 = vpop.f32.mrf.mxu0
      %v7590 = vadd.f32 %v7429, %v7589
      %v7591 = vpop.f32.mrf.mxu0
      %v7592 = vpop.f32.mrf.mxu0
      %v7593 = vadd.f32 %v7432, %v7592
      %v7594 = vpop.f32.mrf.mxu0
      %7595 = vmatprep.mubr.bf16.mxu0 0
      %7596 = vmatmul.mubr.bf16.gmra.mxu0 %v7300
      %v7597 = vpop.f32.mrf.mxu0
      %v7598 = vadd.f32 %v7437, %v7597
      %v7599 = vpop.f32.mrf.mxu0
      %v7600 = vpop.f32.mrf.mxu0
      %v7601 = vadd.f32 %v7440, %v7600
      %v7602 = vpop.f32.mrf.mxu0
      %7603 = vmatprep.mubr.bf16.mxu0 0
      %7604 = vmatmul.mubr.bf16.gmra.mxu0 %v7303
      %v7605 = vpop.f32.mrf.mxu0
      %v7606 = vadd.f32 %v7445, %v7605
      %v7607 = vpop.f32.mrf.mxu0
      %v7608 = vpop.f32.mrf.mxu0
      %v7609 = vadd.f32 %v7448, %v7608
      %v7610 = vpop.f32.mrf.mxu0
      %7611 = vmatprep.mubr.bf16.mxu0 0
      %7612 = vmatmul.mubr.bf16.gmra.mxu0 %v7306
      %v7613 = vpop.f32.mrf.mxu0
      %v7614 = vadd.f32 %v7453, %v7613
      %v7615 = vpop.f32.mrf.mxu0
      %v7616 = vpop.f32.mrf.mxu0
      %v7617 = vadd.f32 %v7456, %v7616
      %v7618 = vpop.f32.mrf.mxu0
      %7619 = vmatprep.mubr.bf16.mxu0 0
      %7620 = vmatmul.mubr.bf16.gmra.mxu0 %v7309
      %v7621 = vpop.f32.mrf.mxu0
      %v7622 = vadd.f32 %v7461, %v7621
      %v7623 = vpop.f32.mrf.mxu0
      %v7624 = vpop.f32.mrf.mxu0
      %v7625 = vadd.f32 %v7464, %v7624
      %v7626 = vpop.f32.mrf.mxu0
      %7627 = vmatprep.mubr.bf16.mxu0 0
      %7628 = vmatmul.mubr.bf16.gmra.mxu0 %v7312
      %v7629 = vpop.f32.mrf.mxu0
      %v7630 = vadd.f32 %v7469, %v7629
      %v7631 = vpop.f32.mrf.mxu0
      %v7632 = vpop.f32.mrf.mxu0
      %v7633 = vadd.f32 %v7472, %v7632
      %v7634 = vpop.f32.mrf.mxu0
      %7635 = vdwg.mxu0
      %v7636 = vmul.f32 %v7510, %v2984
      %v7637 = vmul.f32 %v7513, %v2984
      %v7638 = vmul.f32 %v7518, %v2984
      %v7639 = vmul.f32 %v7521, %v2984
      %v7640 = vmul.f32 %v7526, %v2984
      %v7641 = vmul.f32 %v7529, %v2984
      %v7642 = vmul.f32 %v7534, %v2984
      %v7643 = vmul.f32 %v7537, %v2984
      %v7644 = vmul.f32 %v7542, %v2984
      %v7645 = vmul.f32 %v7545, %v2984
      %v7646 = vmul.f32 %v7550, %v2984
      %v7647 = vmul.f32 %v7553, %v2984
      %v7648 = vmul.f32 %v7558, %v2984
      %v7649 = vmul.f32 %v7561, %v2984
      %v7650 = vmul.f32 %v7566, %v2984
      %v7651 = vmul.f32 %v7569, %v2984
      %v7652 = vmul.f32 %v7574, %v2984
      %v7653 = vmul.f32 %v7577, %v2984
      %v7654 = vmul.f32 %v7582, %v2984
      %v7655 = vmul.f32 %v7585, %v2984
      %v7656 = vmul.f32 %v7590, %v2984
      %v7657 = vmul.f32 %v7593, %v2984
      %v7658 = vmul.f32 %v7598, %v2984
      %v7659 = vmul.f32 %v7601, %v2984
      %v7660 = vmul.f32 %v7606, %v2984
      %v7661 = vmul.f32 %v7609, %v2984
      %v7662 = vmul.f32 %v7614, %v2984
      %v7663 = vmul.f32 %v7617, %v2984
      %v7664 = vmul.f32 %v7622, %v2984
      %v7665 = vmul.f32 %v7625, %v2984
      %v7666 = vmul.f32 %v7630, %v2984
      %v7667 = vmul.f32 %v7633, %v2984
      %v7668 = vadd.f32 %v7636, %v3022
      %v7669 = vadd.f32 %v7637, %v3022
      %v7670 = vadd.f32 %v7638, %v3022
      %v7671 = vadd.f32 %v7639, %v3022
      %v7672 = vadd.f32 %v7640, %v3022
      %v7673 = vadd.f32 %v7641, %v3022
      %v7674 = vadd.f32 %v7642, %v3022
      %v7675 = vadd.f32 %v7643, %v3022
      %v7676 = vadd.f32 %v7644, %v3022
      %v7677 = vadd.f32 %v7645, %v3022
      %v7678 = vadd.f32 %v7646, %v3022
      %v7679 = vadd.f32 %v7647, %v3022
      %v7680 = vadd.f32 %v7648, %v3022
      %v7681 = vadd.f32 %v7649, %v3022
      %v7682 = vadd.f32 %v7650, %v3022
      %v7683 = vadd.f32 %v7651, %v3022
      %v7684 = vadd.f32 %v7652, %v3022
      %v7685 = vadd.f32 %v7653, %v3022
      %v7686 = vadd.f32 %v7654, %v3022
      %v7687 = vadd.f32 %v7655, %v3022
      %v7688 = vadd.f32 %v7656, %v3022
      %v7689 = vadd.f32 %v7657, %v3022
      %v7690 = vadd.f32 %v7658, %v3022
      %v7691 = vadd.f32 %v7659, %v3022
      %v7692 = vadd.f32 %v7660, %v3022
      %v7693 = vadd.f32 %v7661, %v3022
      %v7694 = vadd.f32 %v7662, %v3022
      %v7695 = vadd.f32 %v7663, %v3022
      %v7696 = vadd.f32 %v7664, %v3022
      %v7697 = vadd.f32 %v7665, %v3022
      %v7698 = vadd.f32 %v7666, %v3022
      %v7699 = vadd.f32 %v7667, %v3022
      %v7700 = vmax.f32 %v7668, 0.0
      %v7701 = vmax.f32 %v7669, 0.0
      %v7702 = vmax.f32 %v7670, 0.0
      %v7703 = vmax.f32 %v7671, 0.0
      %v7704 = vmax.f32 %v7672, 0.0
      %v7705 = vmax.f32 %v7673, 0.0
      %v7706 = vmax.f32 %v7674, 0.0
      %v7707 = vmax.f32 %v7675, 0.0
      %v7708 = vmax.f32 %v7676, 0.0
      %v7709 = vmax.f32 %v7677, 0.0
      %v7710 = vmax.f32 %v7678, 0.0
      %v7711 = vmax.f32 %v7679, 0.0
      %v7712 = vmax.f32 %v7680, 0.0
      %v7713 = vmax.f32 %v7681, 0.0
      %v7714 = vmax.f32 %v7682, 0.0
      %v7715 = vmax.f32 %v7683, 0.0
      %v7716 = vmax.f32 %v7684, 0.0
      %v7717 = vmax.f32 %v7685, 0.0
      %v7718 = vmax.f32 %v7686, 0.0
      %v7719 = vmax.f32 %v7687, 0.0
      %v7720 = vmax.f32 %v7688, 0.0
      %v7721 = vmax.f32 %v7689, 0.0
      %v7722 = vmax.f32 %v7690, 0.0
      %v7723 = vmax.f32 %v7691, 0.0
      %v7724 = vmax.f32 %v7692, 0.0
      %v7725 = vmax.f32 %v7693, 0.0
      %v7726 = vmax.f32 %v7694, 0.0
      %v7727 = vmax.f32 %v7695, 0.0
      %v7728 = vmax.f32 %v7696, 0.0
      %v7729 = vmax.f32 %v7697, 0.0
      %v7730 = vmax.f32 %v7698, 0.0
      %v7731 = vmax.f32 %v7699, 0.0
      %v7732 = vmin.f32 %v7700, 4.0
      %v7733 = vmin.f32 %v7701, 4.0
      %v7734 = vmin.f32 %v7702, 4.0
      %v7735 = vmin.f32 %v7703, 4.0
      %v7736 = vmin.f32 %v7704, 4.0
      %v7737 = vmin.f32 %v7705, 4.0
      %v7738 = vmin.f32 %v7706, 4.0
      %v7739 = vmin.f32 %v7707, 4.0
      %v7740 = vmin.f32 %v7708, 4.0
      %v7741 = vmin.f32 %v7709, 4.0
      %v7742 = vmin.f32 %v7710, 4.0
      %v7743 = vmin.f32 %v7711, 4.0
      %v7744 = vmin.f32 %v7712, 4.0
      %v7745 = vmin.f32 %v7713, 4.0
      %v7746 = vmin.f32 %v7714, 4.0
      %v7747 = vmin.f32 %v7715, 4.0
      %v7748 = vmin.f32 %v7716, 4.0
      %v7749 = vmin.f32 %v7717, 4.0
      %v7750 = vmin.f32 %v7718, 4.0
      %v7751 = vmin.f32 %v7719, 4.0
      %v7752 = vmin.f32 %v7720, 4.0
      %v7753 = vmin.f32 %v7721, 4.0
      %v7754 = vmin.f32 %v7722, 4.0
      %v7755 = vmin.f32 %v7723, 4.0
      %v7756 = vmin.f32 %v7724, 4.0
      %v7757 = vmin.f32 %v7725, 4.0
      %v7758 = vmin.f32 %v7726, 4.0
      %v7759 = vmin.f32 %v7727, 4.0
      %v7760 = vmin.f32 %v7728, 4.0
      %v7761 = vmin.f32 %v7729, 4.0
      %v7762 = vmin.f32 %v7730, 4.0
      %v7763 = vmin.f32 %v7731, 4.0
      %v7764 = vadd.f32 %v7732, 0.5
      %v7765 = vadd.f32 %v7733, 0.5
      %v7766 = vadd.f32 %v7734, 0.5
      %v7767 = vadd.f32 %v7735, 0.5
      %v7768 = vadd.f32 %v7736, 0.5
      %v7769 = vadd.f32 %v7737, 0.5
      %v7770 = vadd.f32 %v7738, 0.5
      %v7771 = vadd.f32 %v7739, 0.5
      %v7772 = vadd.f32 %v7740, 0.5
      %v7773 = vadd.f32 %v7741, 0.5
      %v7774 = vadd.f32 %v7742, 0.5
      %v7775 = vadd.f32 %v7743, 0.5
      %v7776 = vadd.f32 %v7744, 0.5
      %v7777 = vadd.f32 %v7745, 0.5
      %v7778 = vadd.f32 %v7746, 0.5
      %v7779 = vadd.f32 %v7747, 0.5
      %v7780 = vadd.f32 %v7748, 0.5
      %v7781 = vadd.f32 %v7749, 0.5
      %v7782 = vadd.f32 %v7750, 0.5
      %v7783 = vadd.f32 %v7751, 0.5
      %v7784 = vadd.f32 %v7752, 0.5
      %v7785 = vadd.f32 %v7753, 0.5
      %v7786 = vadd.f32 %v7754, 0.5
      %v7787 = vadd.f32 %v7755, 0.5
      %v7788 = vadd.f32 %v7756, 0.5
      %v7789 = vadd.f32 %v7757, 0.5
      %v7790 = vadd.f32 %v7758, 0.5
      %v7791 = vadd.f32 %v7759, 0.5
      %v7792 = vadd.f32 %v7760, 0.5
      %v7793 = vadd.f32 %v7761, 0.5
      %v7794 = vadd.f32 %v7762, 0.5
      %v7795 = vadd.f32 %v7763, 0.5
      %v7796 = vfloor.f32 %v7764
      %v7797 = vfloor.f32 %v7765
      %v7798 = vfloor.f32 %v7766
      %v7799 = vfloor.f32 %v7767
      %v7800 = vfloor.f32 %v7768
      %v7801 = vfloor.f32 %v7769
      %v7802 = vfloor.f32 %v7770
      %v7803 = vfloor.f32 %v7771
      %v7804 = vfloor.f32 %v7772
      %v7805 = vfloor.f32 %v7773
      %v7806 = vfloor.f32 %v7774
      %v7807 = vfloor.f32 %v7775
      %v7808 = vfloor.f32 %v7776
      %v7809 = vfloor.f32 %v7777
      %v7810 = vfloor.f32 %v7778
      %v7811 = vfloor.f32 %v7779
      %v7812 = vfloor.f32 %v7780
      %v7813 = vfloor.f32 %v7781
      %v7814 = vfloor.f32 %v7782
      %v7815 = vfloor.f32 %v7783
      %v7816 = vfloor.f32 %v7784
      %v7817 = vfloor.f32 %v7785
      %v7818 = vfloor.f32 %v7786
      %v7819 = vfloor.f32 %v7787
      %v7820 = vfloor.f32 %v7788
      %v7821 = vfloor.f32 %v7789
      %v7822 = vfloor.f32 %v7790
      %v7823 = vfloor.f32 %v7791
      %v7824 = vfloor.f32 %v7792
      %v7825 = vfloor.f32 %v7793
      %v7826 = vfloor.f32 %v7794
      %v7827 = vfloor.f32 %v7795
      %v7828 = vmul.f32 %v7796, 0.25
      %v7829 = vmul.f32 %v7797, 0.25
      %v7830 = vmul.f32 %v7798, 0.25
      %v7831 = vmul.f32 %v7799, 0.25
      %v7832 = vmul.f32 %v7800, 0.25
      %v7833 = vmul.f32 %v7801, 0.25
      %v7834 = vmul.f32 %v7802, 0.25
      %v7835 = vmul.f32 %v7803, 0.25
      %v7836 = vmul.f32 %v7804, 0.25
      %v7837 = vmul.f32 %v7805, 0.25
      %v7838 = vmul.f32 %v7806, 0.25
      %v7839 = vmul.f32 %v7807, 0.25
      %v7840 = vmul.f32 %v7808, 0.25
      %v7841 = vmul.f32 %v7809, 0.25
      %v7842 = vmul.f32 %v7810, 0.25
      %v7843 = vmul.f32 %v7811, 0.25
      %v7844 = vmul.f32 %v7812, 0.25
      %v7845 = vmul.f32 %v7813, 0.25
      %v7846 = vmul.f32 %v7814, 0.25
      %v7847 = vmul.f32 %v7815, 0.25
      %v7848 = vmul.f32 %v7816, 0.25
      %v7849 = vmul.f32 %v7817, 0.25
      %v7850 = vmul.f32 %v7818, 0.25
      %v7851 = vmul.f32 %v7819, 0.25
      %v7852 = vmul.f32 %v7820, 0.25
      %v7853 = vmul.f32 %v7821, 0.25
      %v7854 = vmul.f32 %v7822, 0.25
      %v7855 = vmul.f32 %v7823, 0.25
      %v7856 = vmul.f32 %v7824, 0.25
      %v7857 = vmul.f32 %v7825, 0.25
      %v7858 = vmul.f32 %v7826, 0.25
      %v7859 = vmul.f32 %v7827, 0.25
      %7860 = vst [vmem:[#allocation3 + $0x18] sm:$0xff] %v7828
      %7861 = vst [vmem:[#allocation3 + $0x20] sm:$0xff] %v7829
      %7862 = vst [vmem:[#allocation3 + $0x28] sm:$0xff] %v7830
      %7863 = vst [vmem:[#allocation3 + $0x30] sm:$0xff] %v7831
      %7864 = vst [vmem:[#allocation3 + $0x38] sm:$0xff] %v7832
      %7865 = vst [vmem:[#allocation3 + $0x40] sm:$0xff] %v7833
      %7866 = vst [vmem:[#allocation3 + $0x48] sm:$0xff] %v7834
      %7867 = vst [vmem:[#allocation3 + $0x50] sm:$0xff] %v7835
      %7868 = vst [vmem:[#allocation3 + $0x58] sm:$0xff] %v7836
      %7869 = vst [vmem:[#allocation3 + $0x60] sm:$0xff] %v7837
      %7870 = vst [vmem:[#allocation3 + $0x68] sm:$0xff] %v7838
      %7871 = vst [vmem:[#allocation3 + $0x70] sm:$0xff] %v7839
      %7872 = vst [vmem:[#allocation3 + $0x78] sm:$0xff] %v7840
      %7873 = vst [vmem:[#allocation3 + $0x80] sm:$0xff] %v7841
      %7874 = vst [vmem:[#allocation3 + $0x88] sm:$0xff] %v7842
      %7875 = vst [vmem:[#allocation3 + $0x90] sm:$0xff] %v7843
      %7876 = vst [vmem:[#allocation3 + $0x98] sm:$0xff] %v7844
      %7877 = vst [vmem:[#allocation3 + $0xa0] sm:$0xff] %v7845
      %7878 = vst [vmem:[#allocation3 + $0xa8] sm:$0xff] %v7846
      %7879 = vst [vmem:[#allocation3 + $0xb0] sm:$0xff] %v7847
      %7880 = vst [vmem:[#allocation3 + $0xb8] sm:$0xff] %v7848
      %7881 = vst [vmem:[#allocation3 + $0xc0] sm:$0xff] %v7849
      %7882 = vst [vmem:[#allocation3 + $0xc8] sm:$0xff] %v7850
      %7883 = vst [vmem:[#allocation3 + $0xd0] sm:$0xff] %v7851
      %7884 = vst [vmem:[#allocation3 + $0xd8] sm:$0xff] %v7852
      %7885 = vst [vmem:[#allocation3 + $0xe0] sm:$0xff] %v7853
      %7886 = vst [vmem:[#allocation3 + $0xe8] sm:$0xff] %v7854
      %7887 = vst [vmem:[#allocation3 + $0xf0] sm:$0xff] %v7855
      %7888 = vst [vmem:[#allocation3 + $0xf8] sm:$0xff] %v7856
      %7889 = vst [vmem:[#allocation3 + $0x100] sm:$0xff] %v7857
      %7890 = vst [vmem:[#allocation3 + $0x108] sm:$0xff] %v7858
      %7891 = vst [vmem:[#allocation3 + $0x110] sm:$0xff] %v7859
      %v7892 = vld [vmem:[#allocation3 + $0x7] sm:$0xff]
      %v7893 = vld [vmem:[#allocation3 + $0xf] sm:$0xff]
      %v7894 = vld [vmem:[#allocation3 + $0x17] sm:$0xff]
      %v7895 = vld [vmem:[#allocation3 + $0x1f] sm:$0xff]
      %v7896 = vld [vmem:[#allocation3 + $0x27] sm:$0xff]
      %v7897 = vld [vmem:[#allocation3 + $0x2f] sm:$0xff]
      %v7898 = vld [vmem:[#allocation3 + $0x37] sm:$0xff]
      %v7899 = vld [vmem:[#allocation3 + $0x3f] sm:$0xff]
      %v7900 = vld [vmem:[#allocation3 + $0x47] sm:$0xff]
      %v7901 = vld [vmem:[#allocation3 + $0x4f] sm:$0xff]
      %v7902 = vld [vmem:[#allocation3 + $0x57] sm:$0xff]
      %v7903 = vld [vmem:[#allocation3 + $0x5f] sm:$0xff]
      %v7904 = vld [vmem:[#allocation3 + $0x67] sm:$0xff]
      %v7905 = vld [vmem:[#allocation3 + $0x6f] sm:$0xff]
      %v7906 = vld [vmem:[#allocation3 + $0x77] sm:$0xff]
      %v7907 = vld [vmem:[#allocation3 + $0x7f] sm:$0xff]
      %v7908 = vld [vmem:[#allocation3 + $0x87] sm:$0xff]
      %v7909 = vld [vmem:[#allocation3 + $0x8f] sm:$0xff]
      %v7910 = vld [vmem:[#allocation3 + $0x97] sm:$0xff]
      %v7911 = vld [vmem:[#allocation3 + $0x9f] sm:$0xff]
      %v7912 = vld [vmem:[#allocation3 + $0xa7] sm:$0xff]
      %v7913 = vld [vmem:[#allocation3 + $0xaf] sm:$0xff]
      %v7914 = vld [vmem:[#allocation3 + $0xb7] sm:$0xff]
      %v7915 = vld [vmem:[#allocation3 + $0xbf] sm:$0xff]
      %v7916 = vld [vmem:[#allocation3 + $0xc7] sm:$0xff]
      %v7917 = vld [vmem:[#allocation3 + $0xcf] sm:$0xff]
      %v7918 = vld [vmem:[#allocation3 + $0xd7] sm:$0xff]
      %v7919 = vld [vmem:[#allocation3 + $0xdf] sm:$0xff]
      %v7920 = vld [vmem:[#allocation3 + $0xe7] sm:$0xff]
      %v7921 = vld [vmem:[#allocation3 + $0xef] sm:$0xff]
      %v7922 = vld [vmem:[#allocation3 + $0xf7] sm:$0xff]
      %v7923 = vld [vmem:[#allocation3 + $0xff] sm:$0xff]
      %v7924 = vpack.c.bf16 %v7893, %v7892
      %v7925 = vpack.c.bf16 %v7895, %v7894
      %v7926 = vpack.c.bf16 %v7897, %v7896
      %v7927 = vpack.c.bf16 %v7899, %v7898
      %v7928 = vpack.c.bf16 %v7901, %v7900
      %v7929 = vpack.c.bf16 %v7903, %v7902
      %v7930 = vpack.c.bf16 %v7905, %v7904
      %v7931 = vpack.c.bf16 %v7907, %v7906
      %v7932 = vpack.c.bf16 %v7909, %v7908
      %v7933 = vpack.c.bf16 %v7911, %v7910
      %v7934 = vpack.c.bf16 %v7913, %v7912
      %v7935 = vpack.c.bf16 %v7915, %v7914
      %v7936 = vpack.c.bf16 %v7917, %v7916
      %v7937 = vpack.c.bf16 %v7919, %v7918
      %v7938 = vpack.c.bf16 %v7921, %v7920
      %v7939 = vpack.c.bf16 %v7923, %v7922
      %v7940 = vmul.bf16 %v7924, %v1063
      %v7941 = vmul.bf16 %v7925, %v1064
      %v7942 = vmul.bf16 %v7926, %v1065
      %v7943 = vmul.bf16 %v7927, %v1066
      %v7944 = vmul.bf16 %v7928, %v1067
      %v7945 = vmul.bf16 %v7929, %v1068
      %v7946 = vmul.bf16 %v7930, %v1069
      %v7947 = vmul.bf16 %v7931, %v1070
      %v7948 = vmul.bf16 %v7932, %v1071
      %v7949 = vmul.bf16 %v7933, %v1072
      %v7950 = vmul.bf16 %v7934, %v1073
      %v7951 = vmul.bf16 %v7935, %v1074
      %v7952 = vmul.bf16 %v7936, %v1075
      %v7953 = vmul.bf16 %v7937, %v1076
      %v7954 = vmul.bf16 %v7938, %v1077
      %v7955 = vmul.bf16 %v7939, %v1078
      %v7956 = vld [vmem:[%s6] sm:$0xf]
      %v7957 = vld [vmem:[%s6 + $0x4] sm:$0xf]
      %v7958 = vld [vmem:[%s6 + $0x8] sm:$0xf]
      %v7959 = vld [vmem:[%s6 + $0xc] sm:$0xf]
      %v7960 = vld [vmem:[%s6 + $0x10] sm:$0xf]
      %v7961 = vld [vmem:[%s6 + $0x14] sm:$0xf]
      %v7962 = vld [vmem:[%s6 + $0x18] sm:$0xf]
      %v7963 = vld [vmem:[%s6 + $0x1c] sm:$0xf]
      %v7964 = vld [vmem:[%s6 + $0x20] sm:$0xf]
      %v7965 = vld [vmem:[%s6 + $0x24] sm:$0xf]
      %v7966 = vld [vmem:[%s6 + $0x28] sm:$0xf]
      %v7967 = vld [vmem:[%s6 + $0x2c] sm:$0xf]
      %v7968 = vld [vmem:[%s6 + $0x30] sm:$0xf]
      %v7969 = vld [vmem:[%s6 + $0x34] sm:$0xf]
      %v7970 = vld [vmem:[%s6 + $0x38] sm:$0xf]
      %v7971 = vld [vmem:[%s6 + $0x3c] sm:$0xf]
      %v7972 = vld [vmem:[#allocation3 + $0x8] sm:$0xff]
      %v7973 = vld [vmem:[#allocation3 + $0x10] sm:$0xff]
      %v7974 = vld [vmem:[#allocation3 + $0x18] sm:$0xff]
      %v7975 = vld [vmem:[#allocation3 + $0x20] sm:$0xff]
      %v7976 = vld [vmem:[#allocation3 + $0x28] sm:$0xff]
      %v7977 = vld [vmem:[#allocation3 + $0x30] sm:$0xff]
      %v7978 = vld [vmem:[#allocation3 + $0x38] sm:$0xff]
      %v7979 = vld [vmem:[#allocation3 + $0x40] sm:$0xff]
      %v7980 = vld [vmem:[#allocation3 + $0x48] sm:$0xff]
      %v7981 = vld [vmem:[#allocation3 + $0x50] sm:$0xff]
      %v7982 = vld [vmem:[#allocation3 + $0x58] sm:$0xff]
      %v7983 = vld [vmem:[#allocation3 + $0x60] sm:$0xff]
      %v7984 = vld [vmem:[#allocation3 + $0x68] sm:$0xff]
      %v7985 = vld [vmem:[#allocation3 + $0x70] sm:$0xff]
      %v7986 = vld [vmem:[#allocation3 + $0x78] sm:$0xff]
      %v7987 = vld [vmem:[#allocation3 + $0x80] sm:$0xff]
      %v7988 = vld [vmem:[#allocation3 + $0x88] sm:$0xff]
      %v7989 = vld [vmem:[#allocation3 + $0x90] sm:$0xff]
      %v7990 = vld [vmem:[#allocation3 + $0x98] sm:$0xff]
      %v7991 = vld [vmem:[#allocation3 + $0xa0] sm:$0xff]
      %v7992 = vld [vmem:[#allocation3 + $0xa8] sm:$0xff]
      %v7993 = vld [vmem:[#allocation3 + $0xb0] sm:$0xff]
      %v7994 = vld [vmem:[#allocation3 + $0xb8] sm:$0xff]
      %v7995 = vld [vmem:[#allocation3 + $0xc0] sm:$0xff]
      %v7996 = vld [vmem:[#allocation3 + $0xc8] sm:$0xff]
      %v7997 = vld [vmem:[#allocation3 + $0xd0] sm:$0xff]
      %v7998 = vld [vmem:[#allocation3 + $0xd8] sm:$0xff]
      %v7999 = vld [vmem:[#allocation3 + $0xe0] sm:$0xff]
      %v8000 = vld [vmem:[#allocation3 + $0xe8] sm:$0xff]
      %v8001 = vld [vmem:[#allocation3 + $0xf0] sm:$0xff]
      %v8002 = vld [vmem:[#allocation3 + $0xf8] sm:$0xff]
      %v8003 = vld [vmem:[#allocation3 + $0x100] sm:$0xff]
      %v8004 = vpack.c.bf16 %v7973, %v7972
      %v8005 = vpack.c.bf16 %v7975, %v7974
      %v8006 = vpack.c.bf16 %v7977, %v7976
      %v8007 = vpack.c.bf16 %v7979, %v7978
      %v8008 = vpack.c.bf16 %v7981, %v7980
      %v8009 = vpack.c.bf16 %v7983, %v7982
      %v8010 = vpack.c.bf16 %v7985, %v7984
      %v8011 = vpack.c.bf16 %v7987, %v7986
      %v8012 = vpack.c.bf16 %v7989, %v7988
      %v8013 = vpack.c.bf16 %v7991, %v7990
      %v8014 = vpack.c.bf16 %v7993, %v7992
      %v8015 = vpack.c.bf16 %v7995, %v7994
      %v8016 = vpack.c.bf16 %v7997, %v7996
      %v8017 = vpack.c.bf16 %v7999, %v7998
      %v8018 = vpack.c.bf16 %v8001, %v8000
      %v8019 = vpack.c.bf16 %v8003, %v8002
      %v8020 = vld [vmem:[%s3376] sm:$0xf]
      %v8021 = vld [vmem:[%s3376 + $0x4] sm:$0xf]
      %v8022 = vld [vmem:[%s3376 + $0x8] sm:$0xf]
      %v8023 = vld [vmem:[%s3376 + $0xc] sm:$0xf]
      %v8024 = vld [vmem:[%s3376 + $0x10] sm:$0xf]
      %v8025 = vld [vmem:[%s3376 + $0x14] sm:$0xf]
      %v8026 = vld [vmem:[%s3376 + $0x18] sm:$0xf]
      %v8027 = vld [vmem:[%s3376 + $0x1c] sm:$0xf]
      %v8028 = vld [vmem:[%s3376 + $0x20] sm:$0xf]
      %v8029 = vld [vmem:[%s3376 + $0x24] sm:$0xf]
      %v8030 = vld [vmem:[%s3376 + $0x28] sm:$0xf]
      %v8031 = vld [vmem:[%s3376 + $0x2c] sm:$0xf]
      %v8032 = vld [vmem:[%s3376 + $0x30] sm:$0xf]
      %v8033 = vld [vmem:[%s3376 + $0x34] sm:$0xf]
      %v8034 = vld [vmem:[%s3376 + $0x38] sm:$0xf]
      %v8035 = vld [vmem:[%s3376 + $0x3c] sm:$0xf]
      %v8052 = vunpack.c.l.b16 %v8020
      %v8053 = vunpack.c.l.b16 %v8021
      %v8054 = vunpack.c.l.b16 %v8022
      %v8055 = vunpack.c.l.b16 %v8023
      %v8056 = vunpack.c.l.b16 %v8024
      %v8057 = vunpack.c.l.b16 %v8025
      %v8058 = vunpack.c.l.b16 %v8026
      %v8059 = vunpack.c.l.b16 %v8027
      %v8060 = vunpack.c.l.b16 %v8028
      %v8061 = vunpack.c.l.b16 %v8029
      %v8062 = vunpack.c.l.b16 %v8030
      %v8063 = vunpack.c.l.b16 %v8031
      %v8064 = vunpack.c.l.b16 %v8032
      %v8065 = vunpack.c.l.b16 %v8033
      %v8066 = vunpack.c.l.b16 %v8034
      %v8067 = vunpack.c.l.b16 %v8035
      %v8068 = vpack.c.b16 %v8053, %v8052
      %v8069 = vpack.c.b16 %v8055, %v8054
      %v8070 = vpack.c.b16 %v8057, %v8056
      %v8071 = vpack.c.b16 %v8059, %v8058
      %v8072 = vpack.c.b16 %v8061, %v8060
      %v8073 = vpack.c.b16 %v8063, %v8062
      %v8074 = vpack.c.b16 %v8065, %v8064
      %v8075 = vpack.c.b16 %v8067, %v8066
      %8084 = vmatprep.subr.bf16.mxu0 0
      %8085 = vmatpush1.bf16.msra.mxu0 %v8075
      %8086 = vmatprep.subr.bf16.mxu0 0
      %8087 = vmatpush1.bf16.msra.mxu0 %v8074
      %8088 = vmatprep.subr.bf16.mxu0 0
      %8089 = vmatpush1.bf16.msra.mxu0 %v8073
      %8090 = vmatprep.subr.bf16.mxu0 0
      %8091 = vmatpush1.bf16.msra.mxu0 %v8072
      %8092 = vmatprep.subr.bf16.mxu0 0
      %8093 = vmatpush1.bf16.msra.mxu0 %v8071
      %8094 = vmatprep.subr.bf16.mxu0 0
      %8095 = vmatpush1.bf16.msra.mxu0 %v8070
      %8096 = vmatprep.subr.bf16.mxu0 0
      %8097 = vmatpush1.bf16.msra.mxu0 %v8069
      %8098 = vmatprep.subr.bf16.mxu0 0
      %8099 = vmatpush1.bf16.msra.mxu0 %v8068
      %8100 = vmatprep.subr.bf16.mxu0 0
      %8101 = vmatpush2.bf16.msra.mxu0 0
      %8102 = vmatprep.subr.bf16.mxu0 0
      %8103 = vmatpush2.bf16.msra.mxu0 0
      %8104 = vmatprep.subr.bf16.mxu0 0
      %8105 = vmatpush2.bf16.msra.mxu0 0
      %8106 = vmatprep.subr.bf16.mxu0 0
      %8107 = vmatpush2.bf16.msra.mxu0 0
      %8108 = vmatprep.subr.bf16.mxu0 0
      %8109 = vmatpush2.bf16.msra.mxu0 0
      %8110 = vmatprep.subr.bf16.mxu0 0
      %8111 = vmatpush2.bf16.msra.mxu0 0
      %8112 = vmatprep.subr.bf16.mxu0 0
      %8113 = vmatpush2.bf16.msra.mxu0 0
      %8114 = vmatprep.subr.bf16.mxu0 0
      %8115 = vmatpush2.bf16.msra.mxu0 0
      %8116 = vmatprep.mubr.bf16.mxu0 0
      %8117 = vmatmul.mubr.bf16.gmra.mxu0 %v8004
      %v8118 = vpop.f32.mrf.mxu0
      %v8119 = vadd.f32 0.0, %v8118
      %v8120 = vpop.f32.mrf.mxu0
      %v8121 = vpop.f32.mrf.mxu0
      %v8122 = vadd.f32 0.0, %v8121
      %v8123 = vpop.f32.mrf.mxu0
      %8124 = vmatprep.mubr.bf16.mxu0 0
      %8125 = vmatmul.mubr.bf16.gmra.mxu0 %v8005
      %v8126 = vpop.f32.mrf.mxu0
      %v8127 = vadd.f32 0.0, %v8126
      %v8128 = vpop.f32.mrf.mxu0
      %v8129 = vpop.f32.mrf.mxu0
      %v8130 = vadd.f32 0.0, %v8129
      %v8131 = vpop.f32.mrf.mxu0
      %8132 = vmatprep.mubr.bf16.mxu0 0
      %8133 = vmatmul.mubr.bf16.gmra.mxu0 %v8006
      %v8134 = vpop.f32.mrf.mxu0
      %v8135 = vadd.f32 0.0, %v8134
      %v8136 = vpop.f32.mrf.mxu0
      %v8137 = vpop.f32.mrf.mxu0
      %v8138 = vadd.f32 0.0, %v8137
      %v8139 = vpop.f32.mrf.mxu0
      %8140 = vmatprep.mubr.bf16.mxu0 0
      %8141 = vmatmul.mubr.bf16.gmra.mxu0 %v8007
      %v8142 = vpop.f32.mrf.mxu0
      %v8143 = vadd.f32 0.0, %v8142
      %v8144 = vpop.f32.mrf.mxu0
      %v8145 = vpop.f32.mrf.mxu0
      %v8146 = vadd.f32 0.0, %v8145
      %v8147 = vpop.f32.mrf.mxu0
      %8148 = vmatprep.mubr.bf16.mxu0 0
      %8149 = vmatmul.mubr.bf16.gmra.mxu0 %v8008
      %v8150 = vpop.f32.mrf.mxu0
      %v8151 = vadd.f32 0.0, %v8150
      %v8152 = vpop.f32.mrf.mxu0
      %v8153 = vpop.f32.mrf.mxu0
      %v8154 = vadd.f32 0.0, %v8153
      %v8155 = vpop.f32.mrf.mxu0
      %8156 = vmatprep.mubr.bf16.mxu0 0
      %8157 = vmatmul.mubr.bf16.gmra.mxu0 %v8009
      %v8158 = vpop.f32.mrf.mxu0
      %v8159 = vadd.f32 0.0, %v8158
      %v8160 = vpop.f32.mrf.mxu0
      %v8161 = vpop.f32.mrf.mxu0
      %v8162 = vadd.f32 0.0, %v8161
      %v8163 = vpop.f32.mrf.mxu0
      %8164 = vmatprep.mubr.bf16.mxu0 0
      %8165 = vmatmul.mubr.bf16.gmra.mxu0 %v8010
      %v8166 = vpop.f32.mrf.mxu0
      %v8167 = vadd.f32 0.0, %v8166
      %v8168 = vpop.f32.mrf.mxu0
      %v8169 = vpop.f32.mrf.mxu0
      %v8170 = vadd.f32 0.0, %v8169
      %v8171 = vpop.f32.mrf.mxu0
      %8172 = vmatprep.mubr.bf16.mxu0 0
      %8173 = vmatmul.mubr.bf16.gmra.mxu0 %v8011
      %v8174 = vpop.f32.mrf.mxu0
      %v8175 = vadd.f32 0.0, %v8174
      %v8176 = vpop.f32.mrf.mxu0
      %v8177 = vpop.f32.mrf.mxu0
      %v8178 = vadd.f32 0.0, %v8177
      %v8179 = vpop.f32.mrf.mxu0
      %8180 = vmatprep.mubr.bf16.mxu0 0
      %8181 = vmatmul.mubr.bf16.gmra.mxu0 %v8012
      %v8182 = vpop.f32.mrf.mxu0
      %v8183 = vadd.f32 0.0, %v8182
      %v8184 = vpop.f32.mrf.mxu0
      %v8185 = vpop.f32.mrf.mxu0
      %v8186 = vadd.f32 0.0, %v8185
      %v8187 = vpop.f32.mrf.mxu0
      %8188 = vmatprep.mubr.bf16.mxu0 0
      %8189 = vmatmul.mubr.bf16.gmra.mxu0 %v8013
      %v8190 = vpop.f32.mrf.mxu0
      %v8191 = vadd.f32 0.0, %v8190
      %v8192 = vpop.f32.mrf.mxu0
      %v8193 = vpop.f32.mrf.mxu0
      %v8194 = vadd.f32 0.0, %v8193
      %v8195 = vpop.f32.mrf.mxu0
      %8196 = vmatprep.mubr.bf16.mxu0 0
      %8197 = vmatmul.mubr.bf16.gmra.mxu0 %v8014
      %v8198 = vpop.f32.mrf.mxu0
      %v8199 = vadd.f32 0.0, %v8198
      %v8200 = vpop.f32.mrf.mxu0
      %v8201 = vpop.f32.mrf.mxu0
      %v8202 = vadd.f32 0.0, %v8201
      %v8203 = vpop.f32.mrf.mxu0
      %8204 = vmatprep.mubr.bf16.mxu0 0
      %8205 = vmatmul.mubr.bf16.gmra.mxu0 %v8015
      %v8206 = vpop.f32.mrf.mxu0
      %v8207 = vadd.f32 0.0, %v8206
      %v8208 = vpop.f32.mrf.mxu0
      %v8209 = vpop.f32.mrf.mxu0
      %v8210 = vadd.f32 0.0, %v8209
      %v8211 = vpop.f32.mrf.mxu0
      %8212 = vmatprep.mubr.bf16.mxu0 0
      %8213 = vmatmul.mubr.bf16.gmra.mxu0 %v8016
      %v8214 = vpop.f32.mrf.mxu0
      %v8215 = vadd.f32 0.0, %v8214
      %v8216 = vpop.f32.mrf.mxu0
      %v8217 = vpop.f32.mrf.mxu0
      %v8218 = vadd.f32 0.0, %v8217
      %v8219 = vpop.f32.mrf.mxu0
      %8220 = vmatprep.mubr.bf16.mxu0 0
      %8221 = vmatmul.mubr.bf16.gmra.mxu0 %v8017
      %v8222 = vpop.f32.mrf.mxu0
      %v8223 = vadd.f32 0.0, %v8222
      %v8224 = vpop.f32.mrf.mxu0
      %v8225 = vpop.f32.mrf.mxu0
      %v8226 = vadd.f32 0.0, %v8225
      %v8227 = vpop.f32.mrf.mxu0
      %8228 = vmatprep.mubr.bf16.mxu0 0
      %8229 = vmatmul.mubr.bf16.gmra.mxu0 %v8018
      %v8230 = vpop.f32.mrf.mxu0
      %v8231 = vadd.f32 0.0, %v8230
      %v8232 = vpop.f32.mrf.mxu0
      %v8233 = vpop.f32.mrf.mxu0
      %v8234 = vadd.f32 0.0, %v8233
      %v8235 = vpop.f32.mrf.mxu0
      %8236 = vmatprep.mubr.bf16.mxu0 0
      %8237 = vmatmul.mubr.bf16.gmra.mxu0 %v8019
      %v8238 = vpop.f32.mrf.mxu0
      %v8239 = vadd.f32 0.0, %v8238
      %v8240 = vpop.f32.mrf.mxu0
      %v8241 = vpop.f32.mrf.mxu0
      %v8242 = vadd.f32 0.0, %v8241
      %v8243 = vpop.f32.mrf.mxu0
      %8244 = vdwg.mxu0
      %v8261 = vunpack.c.l.b16 %v7956
      %v8262 = vunpack.c.l.b16 %v7957
      %v8263 = vunpack.c.l.b16 %v7958
      %v8264 = vunpack.c.l.b16 %v7959
      %v8265 = vunpack.c.l.b16 %v7960
      %v8266 = vunpack.c.l.b16 %v7961
      %v8267 = vunpack.c.l.b16 %v7962
      %v8268 = vunpack.c.l.b16 %v7963
      %v8269 = vunpack.c.l.b16 %v7964
      %v8270 = vunpack.c.l.b16 %v7965
      %v8271 = vunpack.c.l.b16 %v7966
      %v8272 = vunpack.c.l.b16 %v7967
      %v8273 = vunpack.c.l.b16 %v7968
      %v8274 = vunpack.c.l.b16 %v7969
      %v8275 = vunpack.c.l.b16 %v7970
      %v8276 = vunpack.c.l.b16 %v7971
      %v8277 = vpack.c.b16 %v8262, %v8261
      %v8278 = vpack.c.b16 %v8264, %v8263
      %v8279 = vpack.c.b16 %v8266, %v8265
      %v8280 = vpack.c.b16 %v8268, %v8267
      %v8281 = vpack.c.b16 %v8270, %v8269
      %v8282 = vpack.c.b16 %v8272, %v8271
      %v8283 = vpack.c.b16 %v8274, %v8273
      %v8284 = vpack.c.b16 %v8276, %v8275
      %8293 = vmatprep.subr.bf16.mxu0 0
      %8294 = vmatpush1.bf16.msra.mxu0 %v8284
      %8295 = vmatprep.subr.bf16.mxu0 0
      %8296 = vmatpush1.bf16.msra.mxu0 %v8283
      %8297 = vmatprep.subr.bf16.mxu0 0
      %8298 = vmatpush1.bf16.msra.mxu0 %v8282
      %8299 = vmatprep.subr.bf16.mxu0 0
      %8300 = vmatpush1.bf16.msra.mxu0 %v8281
      %8301 = vmatprep.subr.bf16.mxu0 0
      %8302 = vmatpush1.bf16.msra.mxu0 %v8280
      %8303 = vmatprep.subr.bf16.mxu0 0
      %8304 = vmatpush1.bf16.msra.mxu0 %v8279
      %8305 = vmatprep.subr.bf16.mxu0 0
      %8306 = vmatpush1.bf16.msra.mxu0 %v8278
      %8307 = vmatprep.subr.bf16.mxu0 0
      %8308 = vmatpush1.bf16.msra.mxu0 %v8277
      %8309 = vmatprep.subr.bf16.mxu0 0
      %8310 = vmatpush2.bf16.msra.mxu0 0
      %8311 = vmatprep.subr.bf16.mxu0 0
      %8312 = vmatpush2.bf16.msra.mxu0 0
      %8313 = vmatprep.subr.bf16.mxu0 0
      %8314 = vmatpush2.bf16.msra.mxu0 0
      %8315 = vmatprep.subr.bf16.mxu0 0
      %8316 = vmatpush2.bf16.msra.mxu0 0
      %8317 = vmatprep.subr.bf16.mxu0 0
      %8318 = vmatpush2.bf16.msra.mxu0 0
      %8319 = vmatprep.subr.bf16.mxu0 0
      %8320 = vmatpush2.bf16.msra.mxu0 0
      %8321 = vmatprep.subr.bf16.mxu0 0
      %8322 = vmatpush2.bf16.msra.mxu0 0
      %8323 = vmatprep.subr.bf16.mxu0 0
      %8324 = vmatpush2.bf16.msra.mxu0 0
      %8325 = vmatprep.mubr.bf16.mxu0 0
      %8326 = vmatmul.mubr.bf16.gmra.mxu0 %v7940
      %v8327 = vpop.f32.mrf.mxu0
      %v8328 = vadd.f32 %v8119, %v8327
      %v8329 = vpop.f32.mrf.mxu0
      %v8330 = vpop.f32.mrf.mxu0
      %v8331 = vadd.f32 %v8122, %v8330
      %v8332 = vpop.f32.mrf.mxu0
      %8333 = vmatprep.mubr.bf16.mxu0 0
      %8334 = vmatmul.mubr.bf16.gmra.mxu0 %v7941
      %v8335 = vpop.f32.mrf.mxu0
      %v8336 = vadd.f32 %v8127, %v8335
      %v8337 = vpop.f32.mrf.mxu0
      %v8338 = vpop.f32.mrf.mxu0
      %v8339 = vadd.f32 %v8130, %v8338
      %v8340 = vpop.f32.mrf.mxu0
      %8341 = vmatprep.mubr.bf16.mxu0 0
      %8342 = vmatmul.mubr.bf16.gmra.mxu0 %v7942
      %v8343 = vpop.f32.mrf.mxu0
      %v8344 = vadd.f32 %v8135, %v8343
      %v8345 = vpop.f32.mrf.mxu0
      %v8346 = vpop.f32.mrf.mxu0
      %v8347 = vadd.f32 %v8138, %v8346
      %v8348 = vpop.f32.mrf.mxu0
      %8349 = vmatprep.mubr.bf16.mxu0 0
      %8350 = vmatmul.mubr.bf16.gmra.mxu0 %v7943
      %v8351 = vpop.f32.mrf.mxu0
      %v8352 = vadd.f32 %v8143, %v8351
      %v8353 = vpop.f32.mrf.mxu0
      %v8354 = vpop.f32.mrf.mxu0
      %v8355 = vadd.f32 %v8146, %v8354
      %v8356 = vpop.f32.mrf.mxu0
      %8357 = vmatprep.mubr.bf16.mxu0 0
      %8358 = vmatmul.mubr.bf16.gmra.mxu0 %v7944
      %v8359 = vpop.f32.mrf.mxu0
      %v8360 = vadd.f32 %v8151, %v8359
      %v8361 = vpop.f32.mrf.mxu0
      %v8362 = vpop.f32.mrf.mxu0
      %v8363 = vadd.f32 %v8154, %v8362
      %v8364 = vpop.f32.mrf.mxu0
      %8365 = vmatprep.mubr.bf16.mxu0 0
      %8366 = vmatmul.mubr.bf16.gmra.mxu0 %v7945
      %v8367 = vpop.f32.mrf.mxu0
      %v8368 = vadd.f32 %v8159, %v8367
      %v8369 = vpop.f32.mrf.mxu0
      %v8370 = vpop.f32.mrf.mxu0
      %v8371 = vadd.f32 %v8162, %v8370
      %v8372 = vpop.f32.mrf.mxu0
      %8373 = vmatprep.mubr.bf16.mxu0 0
      %8374 = vmatmul.mubr.bf16.gmra.mxu0 %v7946
      %v8375 = vpop.f32.mrf.mxu0
      %v8376 = vadd.f32 %v8167, %v8375
      %v8377 = vpop.f32.mrf.mxu0
      %v8378 = vpop.f32.mrf.mxu0
      %v8379 = vadd.f32 %v8170, %v8378
      %v8380 = vpop.f32.mrf.mxu0
      %8381 = vmatprep.mubr.bf16.mxu0 0
      %8382 = vmatmul.mubr.bf16.gmra.mxu0 %v7947
      %v8383 = vpop.f32.mrf.mxu0
      %v8384 = vadd.f32 %v8175, %v8383
      %v8385 = vpop.f32.mrf.mxu0
      %v8386 = vpop.f32.mrf.mxu0
      %v8387 = vadd.f32 %v8178, %v8386
      %v8388 = vpop.f32.mrf.mxu0
      %8389 = vmatprep.mubr.bf16.mxu0 0
      %8390 = vmatmul.mubr.bf16.gmra.mxu0 %v7948
      %v8391 = vpop.f32.mrf.mxu0
      %v8392 = vadd.f32 %v8183, %v8391
      %v8393 = vpop.f32.mrf.mxu0
      %v8394 = vpop.f32.mrf.mxu0
      %v8395 = vadd.f32 %v8186, %v8394
      %v8396 = vpop.f32.mrf.mxu0
      %8397 = vmatprep.mubr.bf16.mxu0 0
      %8398 = vmatmul.mubr.bf16.gmra.mxu0 %v7949
      %v8399 = vpop.f32.mrf.mxu0
      %v8400 = vadd.f32 %v8191, %v8399
      %v8401 = vpop.f32.mrf.mxu0
      %v8402 = vpop.f32.mrf.mxu0
      %v8403 = vadd.f32 %v8194, %v8402
      %v8404 = vpop.f32.mrf.mxu0
      %8405 = vmatprep.mubr.bf16.mxu0 0
      %8406 = vmatmul.mubr.bf16.gmra.mxu0 %v7950
      %v8407 = vpop.f32.mrf.mxu0
      %v8408 = vadd.f32 %v8199, %v8407
      %v8409 = vpop.f32.mrf.mxu0
      %v8410 = vpop.f32.mrf.mxu0
      %v8411 = vadd.f32 %v8202, %v8410
      %v8412 = vpop.f32.mrf.mxu0
      %8413 = vmatprep.mubr.bf16.mxu0 0
      %8414 = vmatmul.mubr.bf16.gmra.mxu0 %v7951
      %v8415 = vpop.f32.mrf.mxu0
      %v8416 = vadd.f32 %v8207, %v8415
      %v8417 = vpop.f32.mrf.mxu0
      %v8418 = vpop.f32.mrf.mxu0
      %v8419 = vadd.f32 %v8210, %v8418
      %v8420 = vpop.f32.mrf.mxu0
      %8421 = vmatprep.mubr.bf16.mxu0 0
      %8422 = vmatmul.mubr.bf16.gmra.mxu0 %v7952
      %v8423 = vpop.f32.mrf.mxu0
      %v8424 = vadd.f32 %v8215, %v8423
      %v8425 = vpop.f32.mrf.mxu0
      %v8426 = vpop.f32.mrf.mxu0
      %v8427 = vadd.f32 %v8218, %v8426
      %v8428 = vpop.f32.mrf.mxu0
      %8429 = vmatprep.mubr.bf16.mxu0 0
      %8430 = vmatmul.mubr.bf16.gmra.mxu0 %v7953
      %v8431 = vpop.f32.mrf.mxu0
      %v8432 = vadd.f32 %v8223, %v8431
      %v8433 = vpop.f32.mrf.mxu0
      %v8434 = vpop.f32.mrf.mxu0
      %v8435 = vadd.f32 %v8226, %v8434
      %v8436 = vpop.f32.mrf.mxu0
      %8437 = vmatprep.mubr.bf16.mxu0 0
      %8438 = vmatmul.mubr.bf16.gmra.mxu0 %v7954
      %v8439 = vpop.f32.mrf.mxu0
      %v8440 = vadd.f32 %v8231, %v8439
      %v8441 = vpop.f32.mrf.mxu0
      %v8442 = vpop.f32.mrf.mxu0
      %v8443 = vadd.f32 %v8234, %v8442
      %v8444 = vpop.f32.mrf.mxu0
      %8445 = vmatprep.mubr.bf16.mxu0 0
      %8446 = vmatmul.mubr.bf16.gmra.mxu0 %v7955
      %v8447 = vpop.f32.mrf.mxu0
      %v8448 = vadd.f32 %v8239, %v8447
      %v8449 = vpop.f32.mrf.mxu0
      %v8450 = vpop.f32.mrf.mxu0
      %v8451 = vadd.f32 %v8242, %v8450
      %v8452 = vpop.f32.mrf.mxu0
      %8453 = vdwg.mxu0
      %v8454 = vld [vmem:[#allocation3 + $0x9] sm:$0xff]
      %v8455 = vld [vmem:[#allocation3 + $0x11] sm:$0xff]
      %v8456 = vld [vmem:[#allocation3 + $0x19] sm:$0xff]
      %v8457 = vld [vmem:[#allocation3 + $0x21] sm:$0xff]
      %v8458 = vld [vmem:[#allocation3 + $0x29] sm:$0xff]
      %v8459 = vld [vmem:[#allocation3 + $0x31] sm:$0xff]
      %v8460 = vld [vmem:[#allocation3 + $0x39] sm:$0xff]
      %v8461 = vld [vmem:[#allocation3 + $0x41] sm:$0xff]
      %v8462 = vld [vmem:[#allocation3 + $0x49] sm:$0xff]
      %v8463 = vld [vmem:[#allocation3 + $0x51] sm:$0xff]
      %v8464 = vld [vmem:[#allocation3 + $0x59] sm:$0xff]
      %v8465 = vld [vmem:[#allocation3 + $0x61] sm:$0xff]
      %v8466 = vld [vmem:[#allocation3 + $0x69] sm:$0xff]
      %v8467 = vld [vmem:[#allocation3 + $0x71] sm:$0xff]
      %v8468 = vld [vmem:[#allocation3 + $0x79] sm:$0xff]
      %v8469 = vld [vmem:[#allocation3 + $0x81] sm:$0xff]
      %v8470 = vld [vmem:[#allocation3 + $0x89] sm:$0xff]
      %v8471 = vld [vmem:[#allocation3 + $0x91] sm:$0xff]
      %v8472 = vld [vmem:[#allocation3 + $0x99] sm:$0xff]
      %v8473 = vld [vmem:[#allocation3 + $0xa1] sm:$0xff]
      %v8474 = vld [vmem:[#allocation3 + $0xa9] sm:$0xff]
      %v8475 = vld [vmem:[#allocation3 + $0xb1] sm:$0xff]
      %v8476 = vld [vmem:[#allocation3 + $0xb9] sm:$0xff]
      %v8477 = vld [vmem:[#allocation3 + $0xc1] sm:$0xff]
      %v8478 = vld [vmem:[#allocation3 + $0xc9] sm:$0xff]
      %v8479 = vld [vmem:[#allocation3 + $0xd1] sm:$0xff]
      %v8480 = vld [vmem:[#allocation3 + $0xd9] sm:$0xff]
      %v8481 = vld [vmem:[#allocation3 + $0xe1] sm:$0xff]
      %v8482 = vld [vmem:[#allocation3 + $0xe9] sm:$0xff]
      %v8483 = vld [vmem:[#allocation3 + $0xf1] sm:$0xff]
      %v8484 = vld [vmem:[#allocation3 + $0xf9] sm:$0xff]
      %v8485 = vld [vmem:[#allocation3 + $0x101] sm:$0xff]
      %v8486 = vpack.c.bf16 %v8455, %v8454
      %v8487 = vpack.c.bf16 %v8457, %v8456
      %v8488 = vpack.c.bf16 %v8459, %v8458
      %v8489 = vpack.c.bf16 %v8461, %v8460
      %v8490 = vpack.c.bf16 %v8463, %v8462
      %v8491 = vpack.c.bf16 %v8465, %v8464
      %v8492 = vpack.c.bf16 %v8467, %v8466
      %v8493 = vpack.c.bf16 %v8469, %v8468
      %v8494 = vpack.c.bf16 %v8471, %v8470
      %v8495 = vpack.c.bf16 %v8473, %v8472
      %v8496 = vpack.c.bf16 %v8475, %v8474
      %v8497 = vpack.c.bf16 %v8477, %v8476
      %v8498 = vpack.c.bf16 %v8479, %v8478
      %v8499 = vpack.c.bf16 %v8481, %v8480
      %v8500 = vpack.c.bf16 %v8483, %v8482
      %v8501 = vpack.c.bf16 %v8485, %v8484
      %v8502 = vmul.bf16 %v8486, %v1655
      %v8503 = vmul.bf16 %v8487, %v1656
      %v8504 = vmul.bf16 %v8488, %v1657
      %v8505 = vmul.bf16 %v8489, %v1658
      %v8506 = vmul.bf16 %v8490, %v1659
      %v8507 = vmul.bf16 %v8491, %v1660
      %v8508 = vmul.bf16 %v8492, %v1661
      %v8509 = vmul.bf16 %v8493, %v1662
      %v8510 = vmul.bf16 %v8494, %v1663
      %v8511 = vmul.bf16 %v8495, %v1664
      %v8512 = vmul.bf16 %v8496, %v1665
      %v8513 = vmul.bf16 %v8497, %v1666
      %v8514 = vmul.bf16 %v8498, %v1667
      %v8515 = vmul.bf16 %v8499, %v1668
      %v8516 = vmul.bf16 %v8500, %v1669
      %v8517 = vmul.bf16 %v8501, %v1670
      %v8518 = vld [vmem:[%s3875] sm:$0xf]
      %v8519 = vld [vmem:[%s3875 + $0x4] sm:$0xf]
      %v8520 = vld [vmem:[%s3875 + $0x8] sm:$0xf]
      %v8521 = vld [vmem:[%s3875 + $0xc] sm:$0xf]
      %v8522 = vld [vmem:[%s3875 + $0x10] sm:$0xf]
      %v8523 = vld [vmem:[%s3875 + $0x14] sm:$0xf]
      %v8524 = vld [vmem:[%s3875 + $0x18] sm:$0xf]
      %v8525 = vld [vmem:[%s3875 + $0x1c] sm:$0xf]
      %v8526 = vld [vmem:[%s3875 + $0x20] sm:$0xf]
      %v8527 = vld [vmem:[%s3875 + $0x24] sm:$0xf]
      %v8528 = vld [vmem:[%s3875 + $0x28] sm:$0xf]
      %v8529 = vld [vmem:[%s3875 + $0x2c] sm:$0xf]
      %v8530 = vld [vmem:[%s3875 + $0x30] sm:$0xf]
      %v8531 = vld [vmem:[%s3875 + $0x34] sm:$0xf]
      %v8532 = vld [vmem:[%s3875 + $0x38] sm:$0xf]
      %v8533 = vld [vmem:[%s3875 + $0x3c] sm:$0xf]
      %v8550 = vunpack.c.l.b16 %v8518
      %v8551 = vunpack.c.l.b16 %v8519
      %v8552 = vunpack.c.l.b16 %v8520
      %v8553 = vunpack.c.l.b16 %v8521
      %v8554 = vunpack.c.l.b16 %v8522
      %v8555 = vunpack.c.l.b16 %v8523
      %v8556 = vunpack.c.l.b16 %v8524
      %v8557 = vunpack.c.l.b16 %v8525
      %v8558 = vunpack.c.l.b16 %v8526
      %v8559 = vunpack.c.l.b16 %v8527
      %v8560 = vunpack.c.l.b16 %v8528
      %v8561 = vunpack.c.l.b16 %v8529
      %v8562 = vunpack.c.l.b16 %v8530
      %v8563 = vunpack.c.l.b16 %v8531
      %v8564 = vunpack.c.l.b16 %v8532
      %v8565 = vunpack.c.l.b16 %v8533
      %v8566 = vpack.c.b16 %v8551, %v8550
      %v8567 = vpack.c.b16 %v8553, %v8552
      %v8568 = vpack.c.b16 %v8555, %v8554
      %v8569 = vpack.c.b16 %v8557, %v8556
      %v8570 = vpack.c.b16 %v8559, %v8558
      %v8571 = vpack.c.b16 %v8561, %v8560
      %v8572 = vpack.c.b16 %v8563, %v8562
      %v8573 = vpack.c.b16 %v8565, %v8564
      %8582 = vmatprep.subr.bf16.mxu0 0
      %8583 = vmatpush1.bf16.msra.mxu0 %v8573
      %8584 = vmatprep.subr.bf16.mxu0 0
      %8585 = vmatpush1.bf16.msra.mxu0 %v8572
      %8586 = vmatprep.subr.bf16.mxu0 0
      %8587 = vmatpush1.bf16.msra.mxu0 %v8571
      %8588 = vmatprep.subr.bf16.mxu0 0
      %8589 = vmatpush1.bf16.msra.mxu0 %v8570
      %8590 = vmatprep.subr.bf16.mxu0 0
      %8591 = vmatpush1.bf16.msra.mxu0 %v8569
      %8592 = vmatprep.subr.bf16.mxu0 0
      %8593 = vmatpush1.bf16.msra.mxu0 %v8568
      %8594 = vmatprep.subr.bf16.mxu0 0
      %8595 = vmatpush1.bf16.msra.mxu0 %v8567
      %8596 = vmatprep.subr.bf16.mxu0 0
      %8597 = vmatpush1.bf16.msra.mxu0 %v8566
      %8598 = vmatprep.subr.bf16.mxu0 0
      %8599 = vmatpush2.bf16.msra.mxu0 0
      %8600 = vmatprep.subr.bf16.mxu0 0
      %8601 = vmatpush2.bf16.msra.mxu0 0
      %8602 = vmatprep.subr.bf16.mxu0 0
      %8603 = vmatpush2.bf16.msra.mxu0 0
      %8604 = vmatprep.subr.bf16.mxu0 0
      %8605 = vmatpush2.bf16.msra.mxu0 0
      %8606 = vmatprep.subr.bf16.mxu0 0
      %8607 = vmatpush2.bf16.msra.mxu0 0
      %8608 = vmatprep.subr.bf16.mxu0 0
      %8609 = vmatpush2.bf16.msra.mxu0 0
      %8610 = vmatprep.subr.bf16.mxu0 0
      %8611 = vmatpush2.bf16.msra.mxu0 0
      %8612 = vmatprep.subr.bf16.mxu0 0
      %8613 = vmatpush2.bf16.msra.mxu0 0
      %8614 = vmatprep.mubr.bf16.mxu0 0
      %8615 = vmatmul.mubr.bf16.gmra.mxu0 %v8502
      %v8616 = vpop.f32.mrf.mxu0
      %v8617 = vadd.f32 0.0, %v8616
      %v8618 = vpop.f32.mrf.mxu0
      %v8619 = vpop.f32.mrf.mxu0
      %v8620 = vadd.f32 0.0, %v8619
      %v8621 = vpop.f32.mrf.mxu0
      %8622 = vmatprep.mubr.bf16.mxu0 0
      %8623 = vmatmul.mubr.bf16.gmra.mxu0 %v8503
      %v8624 = vpop.f32.mrf.mxu0
      %v8625 = vadd.f32 0.0, %v8624
      %v8626 = vpop.f32.mrf.mxu0
      %v8627 = vpop.f32.mrf.mxu0
      %v8628 = vadd.f32 0.0, %v8627
      %v8629 = vpop.f32.mrf.mxu0
      %8630 = vmatprep.mubr.bf16.mxu0 0
      %8631 = vmatmul.mubr.bf16.gmra.mxu0 %v8504
      %v8632 = vpop.f32.mrf.mxu0
      %v8633 = vadd.f32 0.0, %v8632
      %v8634 = vpop.f32.mrf.mxu0
      %v8635 = vpop.f32.mrf.mxu0
      %v8636 = vadd.f32 0.0, %v8635
      %v8637 = vpop.f32.mrf.mxu0
      %8638 = vmatprep.mubr.bf16.mxu0 0
      %8639 = vmatmul.mubr.bf16.gmra.mxu0 %v8505
      %v8640 = vpop.f32.mrf.mxu0
      %v8641 = vadd.f32 0.0, %v8640
      %v8642 = vpop.f32.mrf.mxu0
      %v8643 = vpop.f32.mrf.mxu0
      %v8644 = vadd.f32 0.0, %v8643
      %v8645 = vpop.f32.mrf.mxu0
      %8646 = vmatprep.mubr.bf16.mxu0 0
      %8647 = vmatmul.mubr.bf16.gmra.mxu0 %v8506
      %v8648 = vpop.f32.mrf.mxu0
      %v8649 = vadd.f32 0.0, %v8648
      %v8650 = vpop.f32.mrf.mxu0
      %v8651 = vpop.f32.mrf.mxu0
      %v8652 = vadd.f32 0.0, %v8651
      %v8653 = vpop.f32.mrf.mxu0
      %8654 = vmatprep.mubr.bf16.mxu0 0
      %8655 = vmatmul.mubr.bf16.gmra.mxu0 %v8507
      %v8656 = vpop.f32.mrf.mxu0
      %v8657 = vadd.f32 0.0, %v8656
      %v8658 = vpop.f32.mrf.mxu0
      %v8659 = vpop.f32.mrf.mxu0
      %v8660 = vadd.f32 0.0, %v8659
      %v8661 = vpop.f32.mrf.mxu0
      %8662 = vmatprep.mubr.bf16.mxu0 0
      %8663 = vmatmul.mubr.bf16.gmra.mxu0 %v8508
      %v8664 = vpop.f32.mrf.mxu0
      %v8665 = vadd.f32 0.0, %v8664
      %v8666 = vpop.f32.mrf.mxu0
      %v8667 = vpop.f32.mrf.mxu0
      %v8668 = vadd.f32 0.0, %v8667
      %v8669 = vpop.f32.mrf.mxu0
      %8670 = vmatprep.mubr.bf16.mxu0 0
      %8671 = vmatmul.mubr.bf16.gmra.mxu0 %v8509
      %v8672 = vpop.f32.mrf.mxu0
      %v8673 = vadd.f32 0.0, %v8672
      %v8674 = vpop.f32.mrf.mxu0
      %v8675 = vpop.f32.mrf.mxu0
      %v8676 = vadd.f32 0.0, %v8675
      %v8677 = vpop.f32.mrf.mxu0
      %8678 = vmatprep.mubr.bf16.mxu0 0
      %8679 = vmatmul.mubr.bf16.gmra.mxu0 %v8510
      %v8680 = vpop.f32.mrf.mxu0
      %v8681 = vadd.f32 0.0, %v8680
      %v8682 = vpop.f32.mrf.mxu0
      %v8683 = vpop.f32.mrf.mxu0
      %v8684 = vadd.f32 0.0, %v8683
      %v8685 = vpop.f32.mrf.mxu0
      %8686 = vmatprep.mubr.bf16.mxu0 0
      %8687 = vmatmul.mubr.bf16.gmra.mxu0 %v8511
      %v8688 = vpop.f32.mrf.mxu0
      %v8689 = vadd.f32 0.0, %v8688
      %v8690 = vpop.f32.mrf.mxu0
      %v8691 = vpop.f32.mrf.mxu0
      %v8692 = vadd.f32 0.0, %v8691
      %v8693 = vpop.f32.mrf.mxu0
      %8694 = vmatprep.mubr.bf16.mxu0 0
      %8695 = vmatmul.mubr.bf16.gmra.mxu0 %v8512
      %v8696 = vpop.f32.mrf.mxu0
      %v8697 = vadd.f32 0.0, %v8696
      %v8698 = vpop.f32.mrf.mxu0
      %v8699 = vpop.f32.mrf.mxu0
      %v8700 = vadd.f32 0.0, %v8699
      %v8701 = vpop.f32.mrf.mxu0
      %8702 = vmatprep.mubr.bf16.mxu0 0
      %8703 = vmatmul.mubr.bf16.gmra.mxu0 %v8513
      %v8704 = vpop.f32.mrf.mxu0
      %v8705 = vadd.f32 0.0, %v8704
      %v8706 = vpop.f32.mrf.mxu0
      %v8707 = vpop.f32.mrf.mxu0
      %v8708 = vadd.f32 0.0, %v8707
      %v8709 = vpop.f32.mrf.mxu0
      %8710 = vmatprep.mubr.bf16.mxu0 0
      %8711 = vmatmul.mubr.bf16.gmra.mxu0 %v8514
      %v8712 = vpop.f32.mrf.mxu0
      %v8713 = vadd.f32 0.0, %v8712
      %v8714 = vpop.f32.mrf.mxu0
      %v8715 = vpop.f32.mrf.mxu0
      %v8716 = vadd.f32 0.0, %v8715
      %v8717 = vpop.f32.mrf.mxu0
      %8718 = vmatprep.mubr.bf16.mxu0 0
      %8719 = vmatmul.mubr.bf16.gmra.mxu0 %v8515
      %v8720 = vpop.f32.mrf.mxu0
      %v8721 = vadd.f32 0.0, %v8720
      %v8722 = vpop.f32.mrf.mxu0
      %v8723 = vpop.f32.mrf.mxu0
      %v8724 = vadd.f32 0.0, %v8723
      %v8725 = vpop.f32.mrf.mxu0
      %8726 = vmatprep.mubr.bf16.mxu0 0
      %8727 = vmatmul.mubr.bf16.gmra.mxu0 %v8516
      %v8728 = vpop.f32.mrf.mxu0
      %v8729 = vadd.f32 0.0, %v8728
      %v8730 = vpop.f32.mrf.mxu0
      %v8731 = vpop.f32.mrf.mxu0
      %v8732 = vadd.f32 0.0, %v8731
      %v8733 = vpop.f32.mrf.mxu0
      %8734 = vmatprep.mubr.bf16.mxu0 0
      %8735 = vmatmul.mubr.bf16.gmra.mxu0 %v8517
      %v8736 = vpop.f32.mrf.mxu0
      %v8737 = vadd.f32 0.0, %v8736
      %v8738 = vpop.f32.mrf.mxu0
      %v8739 = vpop.f32.mrf.mxu0
      %v8740 = vadd.f32 0.0, %v8739
      %v8741 = vpop.f32.mrf.mxu0
      %8742 = vdwg.mxu0
      %v8743 = vadd.f32 %v8328, %v8617
      %v8744 = vadd.f32 %v8331, %v8620
      %v8745 = vadd.f32 %v8336, %v8625
      %v8746 = vadd.f32 %v8339, %v8628
      %v8747 = vadd.f32 %v8344, %v8633
      %v8748 = vadd.f32 %v8347, %v8636
      %v8749 = vadd.f32 %v8352, %v8641
      %v8750 = vadd.f32 %v8355, %v8644
      %v8751 = vadd.f32 %v8360, %v8649
      %v8752 = vadd.f32 %v8363, %v8652
      %v8753 = vadd.f32 %v8368, %v8657
      %v8754 = vadd.f32 %v8371, %v8660
      %v8755 = vadd.f32 %v8376, %v8665
      %v8756 = vadd.f32 %v8379, %v8668
      %v8757 = vadd.f32 %v8384, %v8673
      %v8758 = vadd.f32 %v8387, %v8676
      %v8759 = vadd.f32 %v8392, %v8681
      %v8760 = vadd.f32 %v8395, %v8684
      %v8761 = vadd.f32 %v8400, %v8689
      %v8762 = vadd.f32 %v8403, %v8692
      %v8763 = vadd.f32 %v8408, %v8697
      %v8764 = vadd.f32 %v8411, %v8700
      %v8765 = vadd.f32 %v8416, %v8705
      %v8766 = vadd.f32 %v8419, %v8708
      %v8767 = vadd.f32 %v8424, %v8713
      %v8768 = vadd.f32 %v8427, %v8716
      %v8769 = vadd.f32 %v8432, %v8721
      %v8770 = vadd.f32 %v8435, %v8724
      %v8771 = vadd.f32 %v8440, %v8729
      %v8772 = vadd.f32 %v8443, %v8732
      %v8773 = vadd.f32 %v8448, %v8737
      %v8774 = vadd.f32 %v8451, %v8740
      %v8775 = vld [vmem:[#allocation3 + $0x17] sm:$0xff]
      %v8776 = vld [vmem:[#allocation3 + $0x1f] sm:$0xff]
      %v8777 = vld [vmem:[#allocation3 + $0x27] sm:$0xff]
      %v8778 = vld [vmem:[#allocation3 + $0x2f] sm:$0xff]
      %v8779 = vld [vmem:[#allocation3 + $0x37] sm:$0xff]
      %v8780 = vld [vmem:[#allocation3 + $0x3f] sm:$0xff]
      %v8781 = vld [vmem:[#allocation3 + $0x47] sm:$0xff]
      %v8782 = vld [vmem:[#allocation3 + $0x4f] sm:$0xff]
      %v8783 = vld [vmem:[#allocation3 + $0x57] sm:$0xff]
      %v8784 = vld [vmem:[#allocation3 + $0x5f] sm:$0xff]
      %v8785 = vld [vmem:[#allocation3 + $0x67] sm:$0xff]
      %v8786 = vld [vmem:[#allocation3 + $0x6f] sm:$0xff]
      %v8787 = vld [vmem:[#allocation3 + $0x77] sm:$0xff]
      %v8788 = vld [vmem:[#allocation3 + $0x7f] sm:$0xff]
      %v8789 = vld [vmem:[#allocation3 + $0x87] sm:$0xff]
      %v8790 = vld [vmem:[#allocation3 + $0x8f] sm:$0xff]
      %v8791 = vld [vmem:[#allocation3 + $0x97] sm:$0xff]
      %v8792 = vld [vmem:[#allocation3 + $0x9f] sm:$0xff]
      %v8793 = vld [vmem:[#allocation3 + $0xa7] sm:$0xff]
      %v8794 = vld [vmem:[#allocation3 + $0xaf] sm:$0xff]
      %v8795 = vld [vmem:[#allocation3 + $0xb7] sm:$0xff]
      %v8796 = vld [vmem:[#allocation3 + $0xbf] sm:$0xff]
      %v8797 = vld [vmem:[#allocation3 + $0xc7] sm:$0xff]
      %v8798 = vld [vmem:[#allocation3 + $0xcf] sm:$0xff]
      %v8799 = vld [vmem:[#allocation3 + $0xd7] sm:$0xff]
      %v8800 = vld [vmem:[#allocation3 + $0xdf] sm:$0xff]
      %v8801 = vld [vmem:[#allocation3 + $0xe7] sm:$0xff]
      %v8802 = vld [vmem:[#allocation3 + $0xef] sm:$0xff]
      %v8803 = vld [vmem:[#allocation3 + $0xf7] sm:$0xff]
      %v8804 = vld [vmem:[#allocation3 + $0xff] sm:$0xff]
      %v8805 = vld [vmem:[#allocation3 + $0x107] sm:$0xff]
      %v8806 = vld [vmem:[#allocation3 + $0x10f] sm:$0xff]
      %v8807 = vpack.c.bf16 %v8776, %v8775
      %v8808 = vpack.c.bf16 %v8778, %v8777
      %v8809 = vpack.c.bf16 %v8780, %v8779
      %v8810 = vpack.c.bf16 %v8782, %v8781
      %v8811 = vpack.c.bf16 %v8784, %v8783
      %v8812 = vpack.c.bf16 %v8786, %v8785
      %v8813 = vpack.c.bf16 %v8788, %v8787
      %v8814 = vpack.c.bf16 %v8790, %v8789
      %v8815 = vpack.c.bf16 %v8792, %v8791
      %v8816 = vpack.c.bf16 %v8794, %v8793
      %v8817 = vpack.c.bf16 %v8796, %v8795
      %v8818 = vpack.c.bf16 %v8798, %v8797
      %v8819 = vpack.c.bf16 %v8800, %v8799
      %v8820 = vpack.c.bf16 %v8802, %v8801
      %v8821 = vpack.c.bf16 %v8804, %v8803
      %v8822 = vpack.c.bf16 %v8806, %v8805
      %v8823 = vmul.bf16 %v8807, %v1063
      %v8824 = vmul.bf16 %v8808, %v1064
      %v8825 = vmul.bf16 %v8809, %v1065
      %v8826 = vmul.bf16 %v8810, %v1066
      %v8827 = vmul.bf16 %v8811, %v1067
      %v8828 = vmul.bf16 %v8812, %v1068
      %v8829 = vmul.bf16 %v8813, %v1069
      %v8830 = vmul.bf16 %v8814, %v1070
      %v8831 = vmul.bf16 %v8815, %v1071
      %v8832 = vmul.bf16 %v8816, %v1072
      %v8833 = vmul.bf16 %v8817, %v1073
      %v8834 = vmul.bf16 %v8818, %v1074
      %v8835 = vmul.bf16 %v8819, %v1075
      %v8836 = vmul.bf16 %v8820, %v1076
      %v8837 = vmul.bf16 %v8821, %v1077
      %v8838 = vmul.bf16 %v8822, %v1078
      %v8839 = vld [vmem:[%s4197] sm:$0xf]
      %v8840 = vld [vmem:[%s4197 + $0x4] sm:$0xf]
      %v8841 = vld [vmem:[%s4197 + $0x8] sm:$0xf]
      %v8842 = vld [vmem:[%s4197 + $0xc] sm:$0xf]
      %v8843 = vld [vmem:[%s4197 + $0x10] sm:$0xf]
      %v8844 = vld [vmem:[%s4197 + $0x14] sm:$0xf]
      %v8845 = vld [vmem:[%s4197 + $0x18] sm:$0xf]
      %v8846 = vld [vmem:[%s4197 + $0x1c] sm:$0xf]
      %v8847 = vld [vmem:[%s4197 + $0x20] sm:$0xf]
      %v8848 = vld [vmem:[%s4197 + $0x24] sm:$0xf]
      %v8849 = vld [vmem:[%s4197 + $0x28] sm:$0xf]
      %v8850 = vld [vmem:[%s4197 + $0x2c] sm:$0xf]
      %v8851 = vld [vmem:[%s4197 + $0x30] sm:$0xf]
      %v8852 = vld [vmem:[%s4197 + $0x34] sm:$0xf]
      %v8853 = vld [vmem:[%s4197 + $0x38] sm:$0xf]
      %v8854 = vld [vmem:[%s4197 + $0x3c] sm:$0xf]
      %v8871 = vunpack.c.l.b16 %v8839
      %v8872 = vunpack.c.l.b16 %v8840
      %v8873 = vunpack.c.l.b16 %v8841
      %v8874 = vunpack.c.l.b16 %v8842
      %v8875 = vunpack.c.l.b16 %v8843
      %v8876 = vunpack.c.l.b16 %v8844
      %v8877 = vunpack.c.l.b16 %v8845
      %v8878 = vunpack.c.l.b16 %v8846
      %v8879 = vunpack.c.l.b16 %v8847
      %v8880 = vunpack.c.l.b16 %v8848
      %v8881 = vunpack.c.l.b16 %v8849
      %v8882 = vunpack.c.l.b16 %v8850
      %v8883 = vunpack.c.l.b16 %v8851
      %v8884 = vunpack.c.l.b16 %v8852
      %v8885 = vunpack.c.l.b16 %v8853
      %v8886 = vunpack.c.l.b16 %v8854
      %v8887 = vpack.c.b16 %v8872, %v8871
      %v8888 = vpack.c.b16 %v8874, %v8873
      %v8889 = vpack.c.b16 %v8876, %v8875
      %v8890 = vpack.c.b16 %v8878, %v8877
      %v8891 = vpack.c.b16 %v8880, %v8879
      %v8892 = vpack.c.b16 %v8882, %v8881
      %v8893 = vpack.c.b16 %v8884, %v8883
      %v8894 = vpack.c.b16 %v8886, %v8885
      %8903 = vmatprep.subr.bf16.mxu0 0
      %8904 = vmatpush1.bf16.msra.mxu0 %v8894
      %8905 = vmatprep.subr.bf16.mxu0 0
      %8906 = vmatpush1.bf16.msra.mxu0 %v8893
      %8907 = vmatprep.subr.bf16.mxu0 0
      %8908 = vmatpush1.bf16.msra.mxu0 %v8892
      %8909 = vmatprep.subr.bf16.mxu0 0
      %8910 = vmatpush1.bf16.msra.mxu0 %v8891
      %8911 = vmatprep.subr.bf16.mxu0 0
      %8912 = vmatpush1.bf16.msra.mxu0 %v8890
      %8913 = vmatprep.subr.bf16.mxu0 0
      %8914 = vmatpush1.bf16.msra.mxu0 %v8889
      %8915 = vmatprep.subr.bf16.mxu0 0
      %8916 = vmatpush1.bf16.msra.mxu0 %v8888
      %8917 = vmatprep.subr.bf16.mxu0 0
      %8918 = vmatpush1.bf16.msra.mxu0 %v8887
      %8919 = vmatprep.subr.bf16.mxu0 0
      %8920 = vmatpush2.bf16.msra.mxu0 0
      %8921 = vmatprep.subr.bf16.mxu0 0
      %8922 = vmatpush2.bf16.msra.mxu0 0
      %8923 = vmatprep.subr.bf16.mxu0 0
      %8924 = vmatpush2.bf16.msra.mxu0 0
      %8925 = vmatprep.subr.bf16.mxu0 0
      %8926 = vmatpush2.bf16.msra.mxu0 0
      %8927 = vmatprep.subr.bf16.mxu0 0
      %8928 = vmatpush2.bf16.msra.mxu0 0
      %8929 = vmatprep.subr.bf16.mxu0 0
      %8930 = vmatpush2.bf16.msra.mxu0 0
      %8931 = vmatprep.subr.bf16.mxu0 0
      %8932 = vmatpush2.bf16.msra.mxu0 0
      %8933 = vmatprep.subr.bf16.mxu0 0
      %8934 = vmatpush2.bf16.msra.mxu0 0
      %8935 = vmatprep.mubr.bf16.mxu0 0
      %8936 = vmatmul.mubr.bf16.gmra.mxu0 %v8823
      %v8937 = vpop.f32.mrf.mxu0
      %v8938 = vadd.f32 0.0, %v8937
      %v8939 = vpop.f32.mrf.mxu0
      %v8940 = vpop.f32.mrf.mxu0
      %v8941 = vadd.f32 0.0, %v8940
      %v8942 = vpop.f32.mrf.mxu0
      %8943 = vmatprep.mubr.bf16.mxu0 0
      %8944 = vmatmul.mubr.bf16.gmra.mxu0 %v8824
      %v8945 = vpop.f32.mrf.mxu0
      %v8946 = vadd.f32 0.0, %v8945
      %v8947 = vpop.f32.mrf.mxu0
      %v8948 = vpop.f32.mrf.mxu0
      %v8949 = vadd.f32 0.0, %v8948
      %v8950 = vpop.f32.mrf.mxu0
      %8951 = vmatprep.mubr.bf16.mxu0 0
      %8952 = vmatmul.mubr.bf16.gmra.mxu0 %v8825
      %v8953 = vpop.f32.mrf.mxu0
      %v8954 = vadd.f32 0.0, %v8953
      %v8955 = vpop.f32.mrf.mxu0
      %v8956 = vpop.f32.mrf.mxu0
      %v8957 = vadd.f32 0.0, %v8956
      %v8958 = vpop.f32.mrf.mxu0
      %8959 = vmatprep.mubr.bf16.mxu0 0
      %8960 = vmatmul.mubr.bf16.gmra.mxu0 %v8826
      %v8961 = vpop.f32.mrf.mxu0
      %v8962 = vadd.f32 0.0, %v8961
      %v8963 = vpop.f32.mrf.mxu0
      %v8964 = vpop.f32.mrf.mxu0
      %v8965 = vadd.f32 0.0, %v8964
      %v8966 = vpop.f32.mrf.mxu0
      %8967 = vmatprep.mubr.bf16.mxu0 0
      %8968 = vmatmul.mubr.bf16.gmra.mxu0 %v8827
      %v8969 = vpop.f32.mrf.mxu0
      %v8970 = vadd.f32 0.0, %v8969
      %v8971 = vpop.f32.mrf.mxu0
      %v8972 = vpop.f32.mrf.mxu0
      %v8973 = vadd.f32 0.0, %v8972
      %v8974 = vpop.f32.mrf.mxu0
      %8975 = vmatprep.mubr.bf16.mxu0 0
      %8976 = vmatmul.mubr.bf16.gmra.mxu0 %v8828
      %v8977 = vpop.f32.mrf.mxu0
      %v8978 = vadd.f32 0.0, %v8977
      %v8979 = vpop.f32.mrf.mxu0
      %v8980 = vpop.f32.mrf.mxu0
      %v8981 = vadd.f32 0.0, %v8980
      %v8982 = vpop.f32.mrf.mxu0
      %8983 = vmatprep.mubr.bf16.mxu0 0
      %8984 = vmatmul.mubr.bf16.gmra.mxu0 %v8829
      %v8985 = vpop.f32.mrf.mxu0
      %v8986 = vadd.f32 0.0, %v8985
      %v8987 = vpop.f32.mrf.mxu0
      %v8988 = vpop.f32.mrf.mxu0
      %v8989 = vadd.f32 0.0, %v8988
      %v8990 = vpop.f32.mrf.mxu0
      %8991 = vmatprep.mubr.bf16.mxu0 0
      %8992 = vmatmul.mubr.bf16.gmra.mxu0 %v8830
      %v8993 = vpop.f32.mrf.mxu0
      %v8994 = vadd.f32 0.0, %v8993
      %v8995 = vpop.f32.mrf.mxu0
      %v8996 = vpop.f32.mrf.mxu0
      %v8997 = vadd.f32 0.0, %v8996
      %v8998 = vpop.f32.mrf.mxu0
      %8999 = vmatprep.mubr.bf16.mxu0 0
      %9000 = vmatmul.mubr.bf16.gmra.mxu0 %v8831
      %v9001 = vpop.f32.mrf.mxu0
      %v9002 = vadd.f32 0.0, %v9001
      %v9003 = vpop.f32.mrf.mxu0
      %v9004 = vpop.f32.mrf.mxu0
      %v9005 = vadd.f32 0.0, %v9004
      %v9006 = vpop.f32.mrf.mxu0
      %9007 = vmatprep.mubr.bf16.mxu0 0
      %9008 = vmatmul.mubr.bf16.gmra.mxu0 %v8832
      %v9009 = vpop.f32.mrf.mxu0
      %v9010 = vadd.f32 0.0, %v9009
      %v9011 = vpop.f32.mrf.mxu0
      %v9012 = vpop.f32.mrf.mxu0
      %v9013 = vadd.f32 0.0, %v9012
      %v9014 = vpop.f32.mrf.mxu0
      %9015 = vmatprep.mubr.bf16.mxu0 0
      %9016 = vmatmul.mubr.bf16.gmra.mxu0 %v8833
      %v9017 = vpop.f32.mrf.mxu0
      %v9018 = vadd.f32 0.0, %v9017
      %v9019 = vpop.f32.mrf.mxu0
      %v9020 = vpop.f32.mrf.mxu0
      %v9021 = vadd.f32 0.0, %v9020
      %v9022 = vpop.f32.mrf.mxu0
      %9023 = vmatprep.mubr.bf16.mxu0 0
      %9024 = vmatmul.mubr.bf16.gmra.mxu0 %v8834
      %v9025 = vpop.f32.mrf.mxu0
      %v9026 = vadd.f32 0.0, %v9025
      %v9027 = vpop.f32.mrf.mxu0
      %v9028 = vpop.f32.mrf.mxu0
      %v9029 = vadd.f32 0.0, %v9028
      %v9030 = vpop.f32.mrf.mxu0
      %9031 = vmatprep.mubr.bf16.mxu0 0
      %9032 = vmatmul.mubr.bf16.gmra.mxu0 %v8835
      %v9033 = vpop.f32.mrf.mxu0
      %v9034 = vadd.f32 0.0, %v9033
      %v9035 = vpop.f32.mrf.mxu0
      %v9036 = vpop.f32.mrf.mxu0
      %v9037 = vadd.f32 0.0, %v9036
      %v9038 = vpop.f32.mrf.mxu0
      %9039 = vmatprep.mubr.bf16.mxu0 0
      %9040 = vmatmul.mubr.bf16.gmra.mxu0 %v8836
      %v9041 = vpop.f32.mrf.mxu0
      %v9042 = vadd.f32 0.0, %v9041
      %v9043 = vpop.f32.mrf.mxu0
      %v9044 = vpop.f32.mrf.mxu0
      %v9045 = vadd.f32 0.0, %v9044
      %v9046 = vpop.f32.mrf.mxu0
      %9047 = vmatprep.mubr.bf16.mxu0 0
      %9048 = vmatmul.mubr.bf16.gmra.mxu0 %v8837
      %v9049 = vpop.f32.mrf.mxu0
      %v9050 = vadd.f32 0.0, %v9049
      %v9051 = vpop.f32.mrf.mxu0
      %v9052 = vpop.f32.mrf.mxu0
      %v9053 = vadd.f32 0.0, %v9052
      %v9054 = vpop.f32.mrf.mxu0
      %9055 = vmatprep.mubr.bf16.mxu0 0
      %9056 = vmatmul.mubr.bf16.gmra.mxu0 %v8838
      %v9057 = vpop.f32.mrf.mxu0
      %v9058 = vadd.f32 0.0, %v9057
      %v9059 = vpop.f32.mrf.mxu0
      %v9060 = vpop.f32.mrf.mxu0
      %v9061 = vadd.f32 0.0, %v9060
      %v9062 = vpop.f32.mrf.mxu0
      %9063 = vdwg.mxu0
      %v9064 = vadd.f32 %v8743, %v8938
      %v9065 = vadd.f32 %v8744, %v8941
      %v9066 = vadd.f32 %v8745, %v8946
      %v9067 = vadd.f32 %v8746, %v8949
      %v9068 = vadd.f32 %v8747, %v8954
      %v9069 = vadd.f32 %v8748, %v8957
      %v9070 = vadd.f32 %v8749, %v8962
      %v9071 = vadd.f32 %v8750, %v8965
      %v9072 = vadd.f32 %v8751, %v8970
      %v9073 = vadd.f32 %v8752, %v8973
      %v9074 = vadd.f32 %v8753, %v8978
      %v9075 = vadd.f32 %v8754, %v8981
      %v9076 = vadd.f32 %v8755, %v8986
      %v9077 = vadd.f32 %v8756, %v8989
      %v9078 = vadd.f32 %v8757, %v8994
      %v9079 = vadd.f32 %v8758, %v8997
      %v9080 = vadd.f32 %v8759, %v9002
      %v9081 = vadd.f32 %v8760, %v9005
      %v9082 = vadd.f32 %v8761, %v9010
      %v9083 = vadd.f32 %v8762, %v9013
      %v9084 = vadd.f32 %v8763, %v9018
      %v9085 = vadd.f32 %v8764, %v9021
      %v9086 = vadd.f32 %v8765, %v9026
      %v9087 = vadd.f32 %v8766, %v9029
      %v9088 = vadd.f32 %v8767, %v9034
      %v9089 = vadd.f32 %v8768, %v9037
      %v9090 = vadd.f32 %v8769, %v9042
      %v9091 = vadd.f32 %v8770, %v9045
      %v9092 = vadd.f32 %v8771, %v9050
      %v9093 = vadd.f32 %v8772, %v9053
      %v9094 = vadd.f32 %v8773, %v9058
      %v9095 = vadd.f32 %v8774, %v9061
      %v9096 = vld [vmem:[#allocation3 + $0x18] sm:$0xff]
      %v9097 = vld [vmem:[#allocation3 + $0x20] sm:$0xff]
      %v9098 = vld [vmem:[#allocation3 + $0x28] sm:$0xff]
      %v9099 = vld [vmem:[#allocation3 + $0x30] sm:$0xff]
      %v9100 = vld [vmem:[#allocation3 + $0x38] sm:$0xff]
      %v9101 = vld [vmem:[#allocation3 + $0x40] sm:$0xff]
      %v9102 = vld [vmem:[#allocation3 + $0x48] sm:$0xff]
      %v9103 = vld [vmem:[#allocation3 + $0x50] sm:$0xff]
      %v9104 = vld [vmem:[#allocation3 + $0x58] sm:$0xff]
      %v9105 = vld [vmem:[#allocation3 + $0x60] sm:$0xff]
      %v9106 = vld [vmem:[#allocation3 + $0x68] sm:$0xff]
      %v9107 = vld [vmem:[#allocation3 + $0x70] sm:$0xff]
      %v9108 = vld [vmem:[#allocation3 + $0x78] sm:$0xff]
      %v9109 = vld [vmem:[#allocation3 + $0x80] sm:$0xff]
      %v9110 = vld [vmem:[#allocation3 + $0x88] sm:$0xff]
      %v9111 = vld [vmem:[#allocation3 + $0x90] sm:$0xff]
      %v9112 = vld [vmem:[#allocation3 + $0x98] sm:$0xff]
      %v9113 = vld [vmem:[#allocation3 + $0xa0] sm:$0xff]
      %v9114 = vld [vmem:[#allocation3 + $0xa8] sm:$0xff]
      %v9115 = vld [vmem:[#allocation3 + $0xb0] sm:$0xff]
      %v9116 = vld [vmem:[#allocation3 + $0xb8] sm:$0xff]
      %v9117 = vld [vmem:[#allocation3 + $0xc0] sm:$0xff]
      %v9118 = vld [vmem:[#allocation3 + $0xc8] sm:$0xff]
      %v9119 = vld [vmem:[#allocation3 + $0xd0] sm:$0xff]
      %v9120 = vld [vmem:[#allocation3 + $0xd8] sm:$0xff]
      %v9121 = vld [vmem:[#allocation3 + $0xe0] sm:$0xff]
      %v9122 = vld [vmem:[#allocation3 + $0xe8] sm:$0xff]
      %v9123 = vld [vmem:[#allocation3 + $0xf0] sm:$0xff]
      %v9124 = vld [vmem:[#allocation3 + $0xf8] sm:$0xff]
      %v9125 = vld [vmem:[#allocation3 + $0x100] sm:$0xff]
      %v9126 = vld [vmem:[#allocation3 + $0x108] sm:$0xff]
      %v9127 = vld [vmem:[#allocation3 + $0x110] sm:$0xff]
      %v9128 = vpack.c.bf16 %v9097, %v9096
      %v9129 = vpack.c.bf16 %v9099, %v9098
      %v9130 = vpack.c.bf16 %v9101, %v9100
      %v9131 = vpack.c.bf16 %v9103, %v9102
      %v9132 = vpack.c.bf16 %v9105, %v9104
      %v9133 = vpack.c.bf16 %v9107, %v9106
      %v9134 = vpack.c.bf16 %v9109, %v9108
      %v9135 = vpack.c.bf16 %v9111, %v9110
      %v9136 = vpack.c.bf16 %v9113, %v9112
      %v9137 = vpack.c.bf16 %v9115, %v9114
      %v9138 = vpack.c.bf16 %v9117, %v9116
      %v9139 = vpack.c.bf16 %v9119, %v9118
      %v9140 = vpack.c.bf16 %v9121, %v9120
      %v9141 = vpack.c.bf16 %v9123, %v9122
      %v9142 = vpack.c.bf16 %v9125, %v9124
      %v9143 = vpack.c.bf16 %v9127, %v9126
      %v9144 = vld [vmem:[%s4503] sm:$0xf]
      %v9145 = vld [vmem:[%s4503 + $0x4] sm:$0xf]
      %v9146 = vld [vmem:[%s4503 + $0x8] sm:$0xf]
      %v9147 = vld [vmem:[%s4503 + $0xc] sm:$0xf]
      %v9148 = vld [vmem:[%s4503 + $0x10] sm:$0xf]
      %v9149 = vld [vmem:[%s4503 + $0x14] sm:$0xf]
      %v9150 = vld [vmem:[%s4503 + $0x18] sm:$0xf]
      %v9151 = vld [vmem:[%s4503 + $0x1c] sm:$0xf]
      %v9152 = vld [vmem:[%s4503 + $0x20] sm:$0xf]
      %v9153 = vld [vmem:[%s4503 + $0x24] sm:$0xf]
      %v9154 = vld [vmem:[%s4503 + $0x28] sm:$0xf]
      %v9155 = vld [vmem:[%s4503 + $0x2c] sm:$0xf]
      %v9156 = vld [vmem:[%s4503 + $0x30] sm:$0xf]
      %v9157 = vld [vmem:[%s4503 + $0x34] sm:$0xf]
      %v9158 = vld [vmem:[%s4503 + $0x38] sm:$0xf]
      %v9159 = vld [vmem:[%s4503 + $0x3c] sm:$0xf]
      %v9176 = vunpack.c.l.b16 %v9144
      %v9177 = vunpack.c.l.b16 %v9145
      %v9178 = vunpack.c.l.b16 %v9146
      %v9179 = vunpack.c.l.b16 %v9147
      %v9180 = vunpack.c.l.b16 %v9148
      %v9181 = vunpack.c.l.b16 %v9149
      %v9182 = vunpack.c.l.b16 %v9150
      %v9183 = vunpack.c.l.b16 %v9151
      %v9184 = vunpack.c.l.b16 %v9152
      %v9185 = vunpack.c.l.b16 %v9153
      %v9186 = vunpack.c.l.b16 %v9154
      %v9187 = vunpack.c.l.b16 %v9155
      %v9188 = vunpack.c.l.b16 %v9156
      %v9189 = vunpack.c.l.b16 %v9157
      %v9190 = vunpack.c.l.b16 %v9158
      %v9191 = vunpack.c.l.b16 %v9159
      %v9192 = vpack.c.b16 %v9177, %v9176
      %v9193 = vpack.c.b16 %v9179, %v9178
      %v9194 = vpack.c.b16 %v9181, %v9180
      %v9195 = vpack.c.b16 %v9183, %v9182
      %v9196 = vpack.c.b16 %v9185, %v9184
      %v9197 = vpack.c.b16 %v9187, %v9186
      %v9198 = vpack.c.b16 %v9189, %v9188
      %v9199 = vpack.c.b16 %v9191, %v9190
      %9208 = vmatprep.subr.bf16.mxu0 0
      %9209 = vmatpush1.bf16.msra.mxu0 %v9199
      %9210 = vmatprep.subr.bf16.mxu0 0
      %9211 = vmatpush1.bf16.msra.mxu0 %v9198
      %9212 = vmatprep.subr.bf16.mxu0 0
      %9213 = vmatpush1.bf16.msra.mxu0 %v9197
      %9214 = vmatprep.subr.bf16.mxu0 0
      %9215 = vmatpush1.bf16.msra.mxu0 %v9196
      %9216 = vmatprep.subr.bf16.mxu0 0
      %9217 = vmatpush1.bf16.msra.mxu0 %v9195
      %9218 = vmatprep.subr.bf16.mxu0 0
      %9219 = vmatpush1.bf16.msra.mxu0 %v9194
      %9220 = vmatprep.subr.bf16.mxu0 0
      %9221 = vmatpush1.bf16.msra.mxu0 %v9193
      %9222 = vmatprep.subr.bf16.mxu0 0
      %9223 = vmatpush1.bf16.msra.mxu0 %v9192
      %9224 = vmatprep.subr.bf16.mxu0 0
      %9225 = vmatpush2.bf16.msra.mxu0 0
      %9226 = vmatprep.subr.bf16.mxu0 0
      %9227 = vmatpush2.bf16.msra.mxu0 0
      %9228 = vmatprep.subr.bf16.mxu0 0
      %9229 = vmatpush2.bf16.msra.mxu0 0
      %9230 = vmatprep.subr.bf16.mxu0 0
      %9231 = vmatpush2.bf16.msra.mxu0 0
      %9232 = vmatprep.subr.bf16.mxu0 0
      %9233 = vmatpush2.bf16.msra.mxu0 0
      %9234 = vmatprep.subr.bf16.mxu0 0
      %9235 = vmatpush2.bf16.msra.mxu0 0
      %9236 = vmatprep.subr.bf16.mxu0 0
      %9237 = vmatpush2.bf16.msra.mxu0 0
      %9238 = vmatprep.subr.bf16.mxu0 0
      %9239 = vmatpush2.bf16.msra.mxu0 0
      %9240 = vmatprep.mubr.bf16.mxu0 0
      %9241 = vmatmul.mubr.bf16.gmra.mxu0 %v9128
      %v9242 = vpop.f32.mrf.mxu0
      %v9243 = vadd.f32 0.0, %v9242
      %v9244 = vpop.f32.mrf.mxu0
      %v9245 = vpop.f32.mrf.mxu0
      %v9246 = vadd.f32 0.0, %v9245
      %v9247 = vpop.f32.mrf.mxu0
      %9248 = vmatprep.mubr.bf16.mxu0 0
      %9249 = vmatmul.mubr.bf16.gmra.mxu0 %v9129
      %v9250 = vpop.f32.mrf.mxu0
      %v9251 = vadd.f32 0.0, %v9250
      %v9252 = vpop.f32.mrf.mxu0
      %v9253 = vpop.f32.mrf.mxu0
      %v9254 = vadd.f32 0.0, %v9253
      %v9255 = vpop.f32.mrf.mxu0
      %9256 = vmatprep.mubr.bf16.mxu0 0
      %9257 = vmatmul.mubr.bf16.gmra.mxu0 %v9130
      %v9258 = vpop.f32.mrf.mxu0
      %v9259 = vadd.f32 0.0, %v9258
      %v9260 = vpop.f32.mrf.mxu0
      %v9261 = vpop.f32.mrf.mxu0
      %v9262 = vadd.f32 0.0, %v9261
      %v9263 = vpop.f32.mrf.mxu0
      %9264 = vmatprep.mubr.bf16.mxu0 0
      %9265 = vmatmul.mubr.bf16.gmra.mxu0 %v9131
      %v9266 = vpop.f32.mrf.mxu0
      %v9267 = vadd.f32 0.0, %v9266
      %v9268 = vpop.f32.mrf.mxu0
      %v9269 = vpop.f32.mrf.mxu0
      %v9270 = vadd.f32 0.0, %v9269
      %v9271 = vpop.f32.mrf.mxu0
      %9272 = vmatprep.mubr.bf16.mxu0 0
      %9273 = vmatmul.mubr.bf16.gmra.mxu0 %v9132
      %v9274 = vpop.f32.mrf.mxu0
      %v9275 = vadd.f32 0.0, %v9274
      %v9276 = vpop.f32.mrf.mxu0
      %v9277 = vpop.f32.mrf.mxu0
      %v9278 = vadd.f32 0.0, %v9277
      %v9279 = vpop.f32.mrf.mxu0
      %9280 = vmatprep.mubr.bf16.mxu0 0
      %9281 = vmatmul.mubr.bf16.gmra.mxu0 %v9133
      %v9282 = vpop.f32.mrf.mxu0
      %v9283 = vadd.f32 0.0, %v9282
      %v9284 = vpop.f32.mrf.mxu0
      %v9285 = vpop.f32.mrf.mxu0
      %v9286 = vadd.f32 0.0, %v9285
      %v9287 = vpop.f32.mrf.mxu0
      %9288 = vmatprep.mubr.bf16.mxu0 0
      %9289 = vmatmul.mubr.bf16.gmra.mxu0 %v9134
      %v9290 = vpop.f32.mrf.mxu0
      %v9291 = vadd.f32 0.0, %v9290
      %v9292 = vpop.f32.mrf.mxu0
      %v9293 = vpop.f32.mrf.mxu0
      %v9294 = vadd.f32 0.0, %v9293
      %v9295 = vpop.f32.mrf.mxu0
      %9296 = vmatprep.mubr.bf16.mxu0 0
      %9297 = vmatmul.mubr.bf16.gmra.mxu0 %v9135
      %v9298 = vpop.f32.mrf.mxu0
      %v9299 = vadd.f32 0.0, %v9298
      %v9300 = vpop.f32.mrf.mxu0
      %v9301 = vpop.f32.mrf.mxu0
      %v9302 = vadd.f32 0.0, %v9301
      %v9303 = vpop.f32.mrf.mxu0
      %9304 = vmatprep.mubr.bf16.mxu0 0
      %9305 = vmatmul.mubr.bf16.gmra.mxu0 %v9136
      %v9306 = vpop.f32.mrf.mxu0
      %v9307 = vadd.f32 0.0, %v9306
      %v9308 = vpop.f32.mrf.mxu0
      %v9309 = vpop.f32.mrf.mxu0
      %v9310 = vadd.f32 0.0, %v9309
      %v9311 = vpop.f32.mrf.mxu0
      %9312 = vmatprep.mubr.bf16.mxu0 0
      %9313 = vmatmul.mubr.bf16.gmra.mxu0 %v9137
      %v9314 = vpop.f32.mrf.mxu0
      %v9315 = vadd.f32 0.0, %v9314
      %v9316 = vpop.f32.mrf.mxu0
      %v9317 = vpop.f32.mrf.mxu0
      %v9318 = vadd.f32 0.0, %v9317
      %v9319 = vpop.f32.mrf.mxu0
      %9320 = vmatprep.mubr.bf16.mxu0 0
      %9321 = vmatmul.mubr.bf16.gmra.mxu0 %v9138
      %v9322 = vpop.f32.mrf.mxu0
      %v9323 = vadd.f32 0.0, %v9322
      %v9324 = vpop.f32.mrf.mxu0
      %v9325 = vpop.f32.mrf.mxu0
      %v9326 = vadd.f32 0.0, %v9325
      %v9327 = vpop.f32.mrf.mxu0
      %9328 = vmatprep.mubr.bf16.mxu0 0
      %9329 = vmatmul.mubr.bf16.gmra.mxu0 %v9139
      %v9330 = vpop.f32.mrf.mxu0
      %v9331 = vadd.f32 0.0, %v9330
      %v9332 = vpop.f32.mrf.mxu0
      %v9333 = vpop.f32.mrf.mxu0
      %v9334 = vadd.f32 0.0, %v9333
      %v9335 = vpop.f32.mrf.mxu0
      %9336 = vmatprep.mubr.bf16.mxu0 0
      %9337 = vmatmul.mubr.bf16.gmra.mxu0 %v9140
      %v9338 = vpop.f32.mrf.mxu0
      %v9339 = vadd.f32 0.0, %v9338
      %v9340 = vpop.f32.mrf.mxu0
      %v9341 = vpop.f32.mrf.mxu0
      %v9342 = vadd.f32 0.0, %v9341
      %v9343 = vpop.f32.mrf.mxu0
      %9344 = vmatprep.mubr.bf16.mxu0 0
      %9345 = vmatmul.mubr.bf16.gmra.mxu0 %v9141
      %v9346 = vpop.f32.mrf.mxu0
      %v9347 = vadd.f32 0.0, %v9346
      %v9348 = vpop.f32.mrf.mxu0
      %v9349 = vpop.f32.mrf.mxu0
      %v9350 = vadd.f32 0.0, %v9349
      %v9351 = vpop.f32.mrf.mxu0
      %9352 = vmatprep.mubr.bf16.mxu0 0
      %9353 = vmatmul.mubr.bf16.gmra.mxu0 %v9142
      %v9354 = vpop.f32.mrf.mxu0
      %v9355 = vadd.f32 0.0, %v9354
      %v9356 = vpop.f32.mrf.mxu0
      %v9357 = vpop.f32.mrf.mxu0
      %v9358 = vadd.f32 0.0, %v9357
      %v9359 = vpop.f32.mrf.mxu0
      %9360 = vmatprep.mubr.bf16.mxu0 0
      %9361 = vmatmul.mubr.bf16.gmra.mxu0 %v9143
      %v9362 = vpop.f32.mrf.mxu0
      %v9363 = vadd.f32 0.0, %v9362
      %v9364 = vpop.f32.mrf.mxu0
      %v9365 = vpop.f32.mrf.mxu0
      %v9366 = vadd.f32 0.0, %v9365
      %v9367 = vpop.f32.mrf.mxu0
      %9368 = vdwg.mxu0
      %v9369 = vadd.f32 %v9064, %v9243
      %v9370 = vadd.f32 %v9065, %v9246
      %v9371 = vadd.f32 %v9066, %v9251
      %v9372 = vadd.f32 %v9067, %v9254
      %v9373 = vadd.f32 %v9068, %v9259
      %v9374 = vadd.f32 %v9069, %v9262
      %v9375 = vadd.f32 %v9070, %v9267
      %v9376 = vadd.f32 %v9071, %v9270
      %v9377 = vadd.f32 %v9072, %v9275
      %v9378 = vadd.f32 %v9073, %v9278
      %v9379 = vadd.f32 %v9074, %v9283
      %v9380 = vadd.f32 %v9075, %v9286
      %v9381 = vadd.f32 %v9076, %v9291
      %v9382 = vadd.f32 %v9077, %v9294
      %v9383 = vadd.f32 %v9078, %v9299
      %v9384 = vadd.f32 %v9079, %v9302
      %v9385 = vadd.f32 %v9080, %v9307
      %v9386 = vadd.f32 %v9081, %v9310
      %v9387 = vadd.f32 %v9082, %v9315
      %v9388 = vadd.f32 %v9083, %v9318
      %v9389 = vadd.f32 %v9084, %v9323
      %v9390 = vadd.f32 %v9085, %v9326
      %v9391 = vadd.f32 %v9086, %v9331
      %v9392 = vadd.f32 %v9087, %v9334
      %v9393 = vadd.f32 %v9088, %v9339
      %v9394 = vadd.f32 %v9089, %v9342
      %v9395 = vadd.f32 %v9090, %v9347
      %v9396 = vadd.f32 %v9091, %v9350
      %v9397 = vadd.f32 %v9092, %v9355
      %v9398 = vadd.f32 %v9093, %v9358
      %v9399 = vadd.f32 %v9094, %v9363
      %v9400 = vadd.f32 %v9095, %v9366
      %v9401 = vld [vmem:[#allocation3 + $0x19] sm:$0xff]
      %v9402 = vld [vmem:[#allocation3 + $0x21] sm:$0xff]
      %v9403 = vld [vmem:[#allocation3 + $0x29] sm:$0xff]
      %v9404 = vld [vmem:[#allocation3 + $0x31] sm:$0xff]
      %v9405 = vld [vmem:[#allocation3 + $0x39] sm:$0xff]
      %v9406 = vld [vmem:[#allocation3 + $0x41] sm:$0xff]
      %v9407 = vld [vmem:[#allocation3 + $0x49] sm:$0xff]
      %v9408 = vld [vmem:[#allocation3 + $0x51] sm:$0xff]
      %v9409 = vld [vmem:[#allocation3 + $0x59] sm:$0xff]
      %v9410 = vld [vmem:[#allocation3 + $0x61] sm:$0xff]
      %v9411 = vld [vmem:[#allocation3 + $0x69] sm:$0xff]
      %v9412 = vld [vmem:[#allocation3 + $0x71] sm:$0xff]
      %v9413 = vld [vmem:[#allocation3 + $0x79] sm:$0xff]
      %v9414 = vld [vmem:[#allocation3 + $0x81] sm:$0xff]
      %v9415 = vld [vmem:[#allocation3 + $0x89] sm:$0xff]
      %v9416 = vld [vmem:[#allocation3 + $0x91] sm:$0xff]
      %v9417 = vld [vmem:[#allocation3 + $0x99] sm:$0xff]
      %v9418 = vld [vmem:[#allocation3 + $0xa1] sm:$0xff]
      %v9419 = vld [vmem:[#allocation3 + $0xa9] sm:$0xff]
      %v9420 = vld [vmem:[#allocation3 + $0xb1] sm:$0xff]
      %v9421 = vld [vmem:[#allocation3 + $0xb9] sm:$0xff]
      %v9422 = vld [vmem:[#allocation3 + $0xc1] sm:$0xff]
      %v9423 = vld [vmem:[#allocation3 + $0xc9] sm:$0xff]
      %v9424 = vld [vmem:[#allocation3 + $0xd1] sm:$0xff]
      %v9425 = vld [vmem:[#allocation3 + $0xd9] sm:$0xff]
      %v9426 = vld [vmem:[#allocation3 + $0xe1] sm:$0xff]
      %v9427 = vld [vmem:[#allocation3 + $0xe9] sm:$0xff]
      %v9428 = vld [vmem:[#allocation3 + $0xf1] sm:$0xff]
      %v9429 = vld [vmem:[#allocation3 + $0xf9] sm:$0xff]
      %v9430 = vld [vmem:[#allocation3 + $0x101] sm:$0xff]
      %v9431 = vld [vmem:[#allocation3 + $0x109] sm:$0xff]
      %v9432 = vld [vmem:[#allocation3 + $0x111] sm:$0xff]
      %v9433 = vpack.c.bf16 %v9402, %v9401
      %v9434 = vpack.c.bf16 %v9404, %v9403
      %v9435 = vpack.c.bf16 %v9406, %v9405
      %v9436 = vpack.c.bf16 %v9408, %v9407
      %v9437 = vpack.c.bf16 %v9410, %v9409
      %v9438 = vpack.c.bf16 %v9412, %v9411
      %v9439 = vpack.c.bf16 %v9414, %v9413
      %v9440 = vpack.c.bf16 %v9416, %v9415
      %v9441 = vpack.c.bf16 %v9418, %v9417
      %v9442 = vpack.c.bf16 %v9420, %v9419
      %v9443 = vpack.c.bf16 %v9422, %v9421
      %v9444 = vpack.c.bf16 %v9424, %v9423
      %v9445 = vpack.c.bf16 %v9426, %v9425
      %v9446 = vpack.c.bf16 %v9428, %v9427
      %v9447 = vpack.c.bf16 %v9430, %v9429
      %v9448 = vpack.c.bf16 %v9432, %v9431
      %v9449 = vmul.bf16 %v9433, %v1655
      %v9450 = vmul.bf16 %v9434, %v1656
      %v9451 = vmul.bf16 %v9435, %v1657
      %v9452 = vmul.bf16 %v9436, %v1658
      %v9453 = vmul.bf16 %v9437, %v1659
      %v9454 = vmul.bf16 %v9438, %v1660
      %v9455 = vmul.bf16 %v9439, %v1661
      %v9456 = vmul.bf16 %v9440, %v1662
      %v9457 = vmul.bf16 %v9441, %v1663
      %v9458 = vmul.bf16 %v9442, %v1664
      %v9459 = vmul.bf16 %v9443, %v1665
      %v9460 = vmul.bf16 %v9444, %v1666
      %v9461 = vmul.bf16 %v9445, %v1667
      %v9462 = vmul.bf16 %v9446, %v1668
      %v9463 = vmul.bf16 %v9447, %v1669
      %v9464 = vmul.bf16 %v9448, %v1670
      %v9465 = vld [vmem:[%s4825] sm:$0xf]
      %v9466 = vld [vmem:[%s4825 + $0x4] sm:$0xf]
      %v9467 = vld [vmem:[%s4825 + $0x8] sm:$0xf]
      %v9468 = vld [vmem:[%s4825 + $0xc] sm:$0xf]
      %v9469 = vld [vmem:[%s4825 + $0x10] sm:$0xf]
      %v9470 = vld [vmem:[%s4825 + $0x14] sm:$0xf]
      %v9471 = vld [vmem:[%s4825 + $0x18] sm:$0xf]
      %v9472 = vld [vmem:[%s4825 + $0x1c] sm:$0xf]
      %v9473 = vld [vmem:[%s4825 + $0x20] sm:$0xf]
      %v9474 = vld [vmem:[%s4825 + $0x24] sm:$0xf]
      %v9475 = vld [vmem:[%s4825 + $0x28] sm:$0xf]
      %v9476 = vld [vmem:[%s4825 + $0x2c] sm:$0xf]
      %v9477 = vld [vmem:[%s4825 + $0x30] sm:$0xf]
      %v9478 = vld [vmem:[%s4825 + $0x34] sm:$0xf]
      %v9479 = vld [vmem:[%s4825 + $0x38] sm:$0xf]
      %v9480 = vld [vmem:[%s4825 + $0x3c] sm:$0xf]
      %v9497 = vunpack.c.l.b16 %v9465
      %v9498 = vunpack.c.l.b16 %v9466
      %v9499 = vunpack.c.l.b16 %v9467
      %v9500 = vunpack.c.l.b16 %v9468
      %v9501 = vunpack.c.l.b16 %v9469
      %v9502 = vunpack.c.l.b16 %v9470
      %v9503 = vunpack.c.l.b16 %v9471
      %v9504 = vunpack.c.l.b16 %v9472
      %v9505 = vunpack.c.l.b16 %v9473
      %v9506 = vunpack.c.l.b16 %v9474
      %v9507 = vunpack.c.l.b16 %v9475
      %v9508 = vunpack.c.l.b16 %v9476
      %v9509 = vunpack.c.l.b16 %v9477
      %v9510 = vunpack.c.l.b16 %v9478
      %v9511 = vunpack.c.l.b16 %v9479
      %v9512 = vunpack.c.l.b16 %v9480
      %v9513 = vpack.c.b16 %v9498, %v9497
      %v9514 = vpack.c.b16 %v9500, %v9499
      %v9515 = vpack.c.b16 %v9502, %v9501
      %v9516 = vpack.c.b16 %v9504, %v9503
      %v9517 = vpack.c.b16 %v9506, %v9505
      %v9518 = vpack.c.b16 %v9508, %v9507
      %v9519 = vpack.c.b16 %v9510, %v9509
      %v9520 = vpack.c.b16 %v9512, %v9511
      %9529 = vmatprep.subr.bf16.mxu0 0
      %9530 = vmatpush1.bf16.msra.mxu0 %v9520
      %9531 = vmatprep.subr.bf16.mxu0 0
      %9532 = vmatpush1.bf16.msra.mxu0 %v9519
      %9533 = vmatprep.subr.bf16.mxu0 0
      %9534 = vmatpush1.bf16.msra.mxu0 %v9518
      %9535 = vmatprep.subr.bf16.mxu0 0
      %9536 = vmatpush1.bf16.msra.mxu0 %v9517
      %9537 = vmatprep.subr.bf16.mxu0 0
      %9538 = vmatpush1.bf16.msra.mxu0 %v9516
      %9539 = vmatprep.subr.bf16.mxu0 0
      %9540 = vmatpush1.bf16.msra.mxu0 %v9515
      %9541 = vmatprep.subr.bf16.mxu0 0
      %9542 = vmatpush1.bf16.msra.mxu0 %v9514
      %9543 = vmatprep.subr.bf16.mxu0 0
      %9544 = vmatpush1.bf16.msra.mxu0 %v9513
      %9545 = vmatprep.subr.bf16.mxu0 0
      %9546 = vmatpush2.bf16.msra.mxu0 0
      %9547 = vmatprep.subr.bf16.mxu0 0
      %9548 = vmatpush2.bf16.msra.mxu0 0
      %9549 = vmatprep.subr.bf16.mxu0 0
      %9550 = vmatpush2.bf16.msra.mxu0 0
      %9551 = vmatprep.subr.bf16.mxu0 0
      %9552 = vmatpush2.bf16.msra.mxu0 0
      %9553 = vmatprep.subr.bf16.mxu0 0
      %9554 = vmatpush2.bf16.msra.mxu0 0
      %9555 = vmatprep.subr.bf16.mxu0 0
      %9556 = vmatpush2.bf16.msra.mxu0 0
      %9557 = vmatprep.subr.bf16.mxu0 0
      %9558 = vmatpush2.bf16.msra.mxu0 0
      %9559 = vmatprep.subr.bf16.mxu0 0
      %9560 = vmatpush2.bf16.msra.mxu0 0
      %9561 = vmatprep.mubr.bf16.mxu0 0
      %9562 = vmatmul.mubr.bf16.gmra.mxu0 %v9449
      %v9563 = vpop.f32.mrf.mxu0
      %v9564 = vadd.f32 0.0, %v9563
      %v9565 = vpop.f32.mrf.mxu0
      %v9566 = vpop.f32.mrf.mxu0
      %v9567 = vadd.f32 0.0, %v9566
      %v9568 = vpop.f32.mrf.mxu0
      %9569 = vmatprep.mubr.bf16.mxu0 0
      %9570 = vmatmul.mubr.bf16.gmra.mxu0 %v9450
      %v9571 = vpop.f32.mrf.mxu0
      %v9572 = vadd.f32 0.0, %v9571
      %v9573 = vpop.f32.mrf.mxu0
      %v9574 = vpop.f32.mrf.mxu0
      %v9575 = vadd.f32 0.0, %v9574
      %v9576 = vpop.f32.mrf.mxu0
      %9577 = vmatprep.mubr.bf16.mxu0 0
      %9578 = vmatmul.mubr.bf16.gmra.mxu0 %v9451
      %v9579 = vpop.f32.mrf.mxu0
      %v9580 = vadd.f32 0.0, %v9579
      %v9581 = vpop.f32.mrf.mxu0
      %v9582 = vpop.f32.mrf.mxu0
      %v9583 = vadd.f32 0.0, %v9582
      %v9584 = vpop.f32.mrf.mxu0
      %9585 = vmatprep.mubr.bf16.mxu0 0
      %9586 = vmatmul.mubr.bf16.gmra.mxu0 %v9452
      %v9587 = vpop.f32.mrf.mxu0
      %v9588 = vadd.f32 0.0, %v9587
      %v9589 = vpop.f32.mrf.mxu0
      %v9590 = vpop.f32.mrf.mxu0
      %v9591 = vadd.f32 0.0, %v9590
      %v9592 = vpop.f32.mrf.mxu0
      %9593 = vmatprep.mubr.bf16.mxu0 0
      %9594 = vmatmul.mubr.bf16.gmra.mxu0 %v9453
      %v9595 = vpop.f32.mrf.mxu0
      %v9596 = vadd.f32 0.0, %v9595
      %v9597 = vpop.f32.mrf.mxu0
      %v9598 = vpop.f32.mrf.mxu0
      %v9599 = vadd.f32 0.0, %v9598
      %v9600 = vpop.f32.mrf.mxu0
      %9601 = vmatprep.mubr.bf16.mxu0 0
      %9602 = vmatmul.mubr.bf16.gmra.mxu0 %v9454
      %v9603 = vpop.f32.mrf.mxu0
      %v9604 = vadd.f32 0.0, %v9603
      %v9605 = vpop.f32.mrf.mxu0
      %v9606 = vpop.f32.mrf.mxu0
      %v9607 = vadd.f32 0.0, %v9606
      %v9608 = vpop.f32.mrf.mxu0
      %9609 = vmatprep.mubr.bf16.mxu0 0
      %9610 = vmatmul.mubr.bf16.gmra.mxu0 %v9455
      %v9611 = vpop.f32.mrf.mxu0
      %v9612 = vadd.f32 0.0, %v9611
      %v9613 = vpop.f32.mrf.mxu0
      %v9614 = vpop.f32.mrf.mxu0
      %v9615 = vadd.f32 0.0, %v9614
      %v9616 = vpop.f32.mrf.mxu0
      %9617 = vmatprep.mubr.bf16.mxu0 0
      %9618 = vmatmul.mubr.bf16.gmra.mxu0 %v9456
      %v9619 = vpop.f32.mrf.mxu0
      %v9620 = vadd.f32 0.0, %v9619
      %v9621 = vpop.f32.mrf.mxu0
      %v9622 = vpop.f32.mrf.mxu0
      %v9623 = vadd.f32 0.0, %v9622
      %v9624 = vpop.f32.mrf.mxu0
      %9625 = vmatprep.mubr.bf16.mxu0 0
      %9626 = vmatmul.mubr.bf16.gmra.mxu0 %v9457
      %v9627 = vpop.f32.mrf.mxu0
      %v9628 = vadd.f32 0.0, %v9627
      %v9629 = vpop.f32.mrf.mxu0
      %v9630 = vpop.f32.mrf.mxu0
      %v9631 = vadd.f32 0.0, %v9630
      %v9632 = vpop.f32.mrf.mxu0
      %9633 = vmatprep.mubr.bf16.mxu0 0
      %9634 = vmatmul.mubr.bf16.gmra.mxu0 %v9458
      %v9635 = vpop.f32.mrf.mxu0
      %v9636 = vadd.f32 0.0, %v9635
      %v9637 = vpop.f32.mrf.mxu0
      %v9638 = vpop.f32.mrf.mxu0
      %v9639 = vadd.f32 0.0, %v9638
      %v9640 = vpop.f32.mrf.mxu0
      %9641 = vmatprep.mubr.bf16.mxu0 0
      %9642 = vmatmul.mubr.bf16.gmra.mxu0 %v9459
      %v9643 = vpop.f32.mrf.mxu0
      %v9644 = vadd.f32 0.0, %v9643
      %v9645 = vpop.f32.mrf.mxu0
      %v9646 = vpop.f32.mrf.mxu0
      %v9647 = vadd.f32 0.0, %v9646
      %v9648 = vpop.f32.mrf.mxu0
      %9649 = vmatprep.mubr.bf16.mxu0 0
      %9650 = vmatmul.mubr.bf16.gmra.mxu0 %v9460
      %v9651 = vpop.f32.mrf.mxu0
      %v9652 = vadd.f32 0.0, %v9651
      %v9653 = vpop.f32.mrf.mxu0
      %v9654 = vpop.f32.mrf.mxu0
      %v9655 = vadd.f32 0.0, %v9654
      %v9656 = vpop.f32.mrf.mxu0
      %9657 = vmatprep.mubr.bf16.mxu0 0
      %9658 = vmatmul.mubr.bf16.gmra.mxu0 %v9461
      %v9659 = vpop.f32.mrf.mxu0
      %v9660 = vadd.f32 0.0, %v9659
      %v9661 = vpop.f32.mrf.mxu0
      %v9662 = vpop.f32.mrf.mxu0
      %v9663 = vadd.f32 0.0, %v9662
      %v9664 = vpop.f32.mrf.mxu0
      %9665 = vmatprep.mubr.bf16.mxu0 0
      %9666 = vmatmul.mubr.bf16.gmra.mxu0 %v9462
      %v9667 = vpop.f32.mrf.mxu0
      %v9668 = vadd.f32 0.0, %v9667
      %v9669 = vpop.f32.mrf.mxu0
      %v9670 = vpop.f32.mrf.mxu0
      %v9671 = vadd.f32 0.0, %v9670
      %v9672 = vpop.f32.mrf.mxu0
      %9673 = vmatprep.mubr.bf16.mxu0 0
      %9674 = vmatmul.mubr.bf16.gmra.mxu0 %v9463
      %v9675 = vpop.f32.mrf.mxu0
      %v9676 = vadd.f32 0.0, %v9675
      %v9677 = vpop.f32.mrf.mxu0
      %v9678 = vpop.f32.mrf.mxu0
      %v9679 = vadd.f32 0.0, %v9678
      %v9680 = vpop.f32.mrf.mxu0
      %9681 = vmatprep.mubr.bf16.mxu0 0
      %9682 = vmatmul.mubr.bf16.gmra.mxu0 %v9464
      %v9683 = vpop.f32.mrf.mxu0
      %v9684 = vadd.f32 0.0, %v9683
      %v9685 = vpop.f32.mrf.mxu0
      %v9686 = vpop.f32.mrf.mxu0
      %v9687 = vadd.f32 0.0, %v9686
      %v9688 = vpop.f32.mrf.mxu0
      %9689 = vdwg.mxu0
      %v9690 = vadd.f32 %v9369, %v9564
      %v9691 = vadd.f32 %v9370, %v9567
      %v9692 = vadd.f32 %v9371, %v9572
      %v9693 = vadd.f32 %v9372, %v9575
      %v9694 = vadd.f32 %v9373, %v9580
      %v9695 = vadd.f32 %v9374, %v9583
      %v9696 = vadd.f32 %v9375, %v9588
      %v9697 = vadd.f32 %v9376, %v9591
      %v9698 = vadd.f32 %v9377, %v9596
      %v9699 = vadd.f32 %v9378, %v9599
      %v9700 = vadd.f32 %v9379, %v9604
      %v9701 = vadd.f32 %v9380, %v9607
      %v9702 = vadd.f32 %v9381, %v9612
      %v9703 = vadd.f32 %v9382, %v9615
      %v9704 = vadd.f32 %v9383, %v9620
      %v9705 = vadd.f32 %v9384, %v9623
      %v9706 = vadd.f32 %v9385, %v9628
      %v9707 = vadd.f32 %v9386, %v9631
      %v9708 = vadd.f32 %v9387, %v9636
      %v9709 = vadd.f32 %v9388, %v9639
      %v9710 = vadd.f32 %v9389, %v9644
      %v9711 = vadd.f32 %v9390, %v9647
      %v9712 = vadd.f32 %v9391, %v9652
      %v9713 = vadd.f32 %v9392, %v9655
      %v9714 = vadd.f32 %v9393, %v9660
      %v9715 = vadd.f32 %v9394, %v9663
      %v9716 = vadd.f32 %v9395, %v9668
      %v9717 = vadd.f32 %v9396, %v9671
      %v9718 = vadd.f32 %v9397, %v9676
      %v9719 = vadd.f32 %v9398, %v9679
      %v9720 = vadd.f32 %v9399, %v9684
      %v9721 = vadd.f32 %v9400, %v9687
      %v9722 = vld [vmem:[#allocation3 + $0x27] sm:$0xff]
      %v9723 = vld [vmem:[#allocation3 + $0x2f] sm:$0xff]
      %v9724 = vld [vmem:[#allocation3 + $0x37] sm:$0xff]
      %v9725 = vld [vmem:[#allocation3 + $0x3f] sm:$0xff]
      %v9726 = vld [vmem:[#allocation3 + $0x47] sm:$0xff]
      %v9727 = vld [vmem:[#allocation3 + $0x4f] sm:$0xff]
      %v9728 = vld [vmem:[#allocation3 + $0x57] sm:$0xff]
      %v9729 = vld [vmem:[#allocation3 + $0x5f] sm:$0xff]
      %v9730 = vld [vmem:[#allocation3 + $0x67] sm:$0xff]
      %v9731 = vld [vmem:[#allocation3 + $0x6f] sm:$0xff]
      %v9732 = vld [vmem:[#allocation3 + $0x77] sm:$0xff]
      %v9733 = vld [vmem:[#allocation3 + $0x7f] sm:$0xff]
      %v9734 = vld [vmem:[#allocation3 + $0x87] sm:$0xff]
      %v9735 = vld [vmem:[#allocation3 + $0x8f] sm:$0xff]
      %v9736 = vld [vmem:[#allocation3 + $0x97] sm:$0xff]
      %v9737 = vld [vmem:[#allocation3 + $0x9f] sm:$0xff]
      %v9738 = vld [vmem:[#allocation3 + $0xa7] sm:$0xff]
      %v9739 = vld [vmem:[#allocation3 + $0xaf] sm:$0xff]
      %v9740 = vld [vmem:[#allocation3 + $0xb7] sm:$0xff]
      %v9741 = vld [vmem:[#allocation3 + $0xbf] sm:$0xff]
      %v9742 = vld [vmem:[#allocation3 + $0xc7] sm:$0xff]
      %v9743 = vld [vmem:[#allocation3 + $0xcf] sm:$0xff]
      %v9744 = vld [vmem:[#allocation3 + $0xd7] sm:$0xff]
      %v9745 = vld [vmem:[#allocation3 + $0xdf] sm:$0xff]
      %v9746 = vld [vmem:[#allocation3 + $0xe7] sm:$0xff]
      %v9747 = vld [vmem:[#allocation3 + $0xef] sm:$0xff]
      %v9748 = vld [vmem:[#allocation3 + $0xf7] sm:$0xff]
      %v9749 = vld [vmem:[#allocation3 + $0xff] sm:$0xff]
      %v9750 = vld [vmem:[#allocation3 + $0x107] sm:$0xff]
      %v9751 = vld [vmem:[#allocation3 + $0x10f] sm:$0xff]
      %v9752 = vld [vmem:[#allocation3 + $0x117] sm:$0xff]
      %v9753 = vld [vmem:[#allocation3 + $0x11f] sm:$0xff]
      %v9754 = vpack.c.bf16 %v9723, %v9722
      %v9755 = vpack.c.bf16 %v9725, %v9724
      %v9756 = vpack.c.bf16 %v9727, %v9726
      %v9757 = vpack.c.bf16 %v9729, %v9728
      %v9758 = vpack.c.bf16 %v9731, %v9730
      %v9759 = vpack.c.bf16 %v9733, %v9732
      %v9760 = vpack.c.bf16 %v9735, %v9734
      %v9761 = vpack.c.bf16 %v9737, %v9736
      %v9762 = vpack.c.bf16 %v9739, %v9738
      %v9763 = vpack.c.bf16 %v9741, %v9740
      %v9764 = vpack.c.bf16 %v9743, %v9742
      %v9765 = vpack.c.bf16 %v9745, %v9744
      %v9766 = vpack.c.bf16 %v9747, %v9746
      %v9767 = vpack.c.bf16 %v9749, %v9748
      %v9768 = vpack.c.bf16 %v9751, %v9750
      %v9769 = vpack.c.bf16 %v9753, %v9752
      %v9770 = vmul.bf16 %v9754, %v1063
      %v9771 = vmul.bf16 %v9755, %v1064
      %v9772 = vmul.bf16 %v9756, %v1065
      %v9773 = vmul.bf16 %v9757, %v1066
      %v9774 = vmul.bf16 %v9758, %v1067
      %v9775 = vmul.bf16 %v9759, %v1068
      %v9776 = vmul.bf16 %v9760, %v1069
      %v9777 = vmul.bf16 %v9761, %v1070
      %v9778 = vmul.bf16 %v9762, %v1071
      %v9779 = vmul.bf16 %v9763, %v1072
      %v9780 = vmul.bf16 %v9764, %v1073
      %v9781 = vmul.bf16 %v9765, %v1074
      %v9782 = vmul.bf16 %v9766, %v1075
      %v9783 = vmul.bf16 %v9767, %v1076
      %v9784 = vmul.bf16 %v9768, %v1077
      %v9785 = vmul.bf16 %v9769, %v1078
      %v9786 = vld [vmem:[%s5147] sm:$0xf]
      %v9787 = vld [vmem:[%s5147 + $0x4] sm:$0xf]
      %v9788 = vld [vmem:[%s5147 + $0x8] sm:$0xf]
      %v9789 = vld [vmem:[%s5147 + $0xc] sm:$0xf]
      %v9790 = vld [vmem:[%s5147 + $0x10] sm:$0xf]
      %v9791 = vld [vmem:[%s5147 + $0x14] sm:$0xf]
      %v9792 = vld [vmem:[%s5147 + $0x18] sm:$0xf]
      %v9793 = vld [vmem:[%s5147 + $0x1c] sm:$0xf]
      %v9794 = vld [vmem:[%s5147 + $0x20] sm:$0xf]
      %v9795 = vld [vmem:[%s5147 + $0x24] sm:$0xf]
      %v9796 = vld [vmem:[%s5147 + $0x28] sm:$0xf]
      %v9797 = vld [vmem:[%s5147 + $0x2c] sm:$0xf]
      %v9798 = vld [vmem:[%s5147 + $0x30] sm:$0xf]
      %v9799 = vld [vmem:[%s5147 + $0x34] sm:$0xf]
      %v9800 = vld [vmem:[%s5147 + $0x38] sm:$0xf]
      %v9801 = vld [vmem:[%s5147 + $0x3c] sm:$0xf]
      %v9818 = vunpack.c.l.b16 %v9786
      %v9819 = vunpack.c.l.b16 %v9787
      %v9820 = vunpack.c.l.b16 %v9788
      %v9821 = vunpack.c.l.b16 %v9789
      %v9822 = vunpack.c.l.b16 %v9790
      %v9823 = vunpack.c.l.b16 %v9791
      %v9824 = vunpack.c.l.b16 %v9792
      %v9825 = vunpack.c.l.b16 %v9793
      %v9826 = vunpack.c.l.b16 %v9794
      %v9827 = vunpack.c.l.b16 %v9795
      %v9828 = vunpack.c.l.b16 %v9796
      %v9829 = vunpack.c.l.b16 %v9797
      %v9830 = vunpack.c.l.b16 %v9798
      %v9831 = vunpack.c.l.b16 %v9799
      %v9832 = vunpack.c.l.b16 %v9800
      %v9833 = vunpack.c.l.b16 %v9801
      %v9834 = vpack.c.b16 %v9819, %v9818
      %v9835 = vpack.c.b16 %v9821, %v9820
      %v9836 = vpack.c.b16 %v9823, %v9822
      %v9837 = vpack.c.b16 %v9825, %v9824
      %v9838 = vpack.c.b16 %v9827, %v9826
      %v9839 = vpack.c.b16 %v9829, %v9828
      %v9840 = vpack.c.b16 %v9831, %v9830
      %v9841 = vpack.c.b16 %v9833, %v9832
      %9850 = vmatprep.subr.bf16.mxu0 0
      %9851 = vmatpush1.bf16.msra.mxu0 %v9841
      %9852 = vmatprep.subr.bf16.mxu0 0
      %9853 = vmatpush1.bf16.msra.mxu0 %v9840
      %9854 = vmatprep.subr.bf16.mxu0 0
      %9855 = vmatpush1.bf16.msra.mxu0 %v9839
      %9856 = vmatprep.subr.bf16.mxu0 0
      %9857 = vmatpush1.bf16.msra.mxu0 %v9838
      %9858 = vmatprep.subr.bf16.mxu0 0
      %9859 = vmatpush1.bf16.msra.mxu0 %v9837
      %9860 = vmatprep.subr.bf16.mxu0 0
      %9861 = vmatpush1.bf16.msra.mxu0 %v9836
      %9862 = vmatprep.subr.bf16.mxu0 0
      %9863 = vmatpush1.bf16.msra.mxu0 %v9835
      %9864 = vmatprep.subr.bf16.mxu0 0
      %9865 = vmatpush1.bf16.msra.mxu0 %v9834
      %9866 = vmatprep.subr.bf16.mxu0 0
      %9867 = vmatpush2.bf16.msra.mxu0 0
      %9868 = vmatprep.subr.bf16.mxu0 0
      %9869 = vmatpush2.bf16.msra.mxu0 0
      %9870 = vmatprep.subr.bf16.mxu0 0
      %9871 = vmatpush2.bf16.msra.mxu0 0
      %9872 = vmatprep.subr.bf16.mxu0 0
      %9873 = vmatpush2.bf16.msra.mxu0 0
      %9874 = vmatprep.subr.bf16.mxu0 0
      %9875 = vmatpush2.bf16.msra.mxu0 0
      %9876 = vmatprep.subr.bf16.mxu0 0
      %9877 = vmatpush2.bf16.msra.mxu0 0
      %9878 = vmatprep.subr.bf16.mxu0 0
      %9879 = vmatpush2.bf16.msra.mxu0 0
      %9880 = vmatprep.subr.bf16.mxu0 0
      %9881 = vmatpush2.bf16.msra.mxu0 0
      %9882 = vmatprep.mubr.bf16.mxu0 0
      %9883 = vmatmul.mubr.bf16.gmra.mxu0 %v9770
      %v9884 = vpop.f32.mrf.mxu0
      %v9885 = vadd.f32 0.0, %v9884
      %v9886 = vpop.f32.mrf.mxu0
      %v9887 = vpop.f32.mrf.mxu0
      %v9888 = vadd.f32 0.0, %v9887
      %v9889 = vpop.f32.mrf.mxu0
      %9890 = vmatprep.mubr.bf16.mxu0 0
      %9891 = vmatmul.mubr.bf16.gmra.mxu0 %v9771
      %v9892 = vpop.f32.mrf.mxu0
      %v9893 = vadd.f32 0.0, %v9892
      %v9894 = vpop.f32.mrf.mxu0
      %v9895 = vpop.f32.mrf.mxu0
      %v9896 = vadd.f32 0.0, %v9895
      %v9897 = vpop.f32.mrf.mxu0
      %9898 = vmatprep.mubr.bf16.mxu0 0
      %9899 = vmatmul.mubr.bf16.gmra.mxu0 %v9772
      %v9900 = vpop.f32.mrf.mxu0
      %v9901 = vadd.f32 0.0, %v9900
      %v9902 = vpop.f32.mrf.mxu0
      %v9903 = vpop.f32.mrf.mxu0
      %v9904 = vadd.f32 0.0, %v9903
      %v9905 = vpop.f32.mrf.mxu0
      %9906 = vmatprep.mubr.bf16.mxu0 0
      %9907 = vmatmul.mubr.bf16.gmra.mxu0 %v9773
      %v9908 = vpop.f32.mrf.mxu0
      %v9909 = vadd.f32 0.0, %v9908
      %v9910 = vpop.f32.mrf.mxu0
      %v9911 = vpop.f32.mrf.mxu0
      %v9912 = vadd.f32 0.0, %v9911
      %v9913 = vpop.f32.mrf.mxu0
      %9914 = vmatprep.mubr.bf16.mxu0 0
      %9915 = vmatmul.mubr.bf16.gmra.mxu0 %v9774
      %v9916 = vpop.f32.mrf.mxu0
      %v9917 = vadd.f32 0.0, %v9916
      %v9918 = vpop.f32.mrf.mxu0
      %v9919 = vpop.f32.mrf.mxu0
      %v9920 = vadd.f32 0.0, %v9919
      %v9921 = vpop.f32.mrf.mxu0
      %9922 = vmatprep.mubr.bf16.mxu0 0
      %9923 = vmatmul.mubr.bf16.gmra.mxu0 %v9775
      %v9924 = vpop.f32.mrf.mxu0
      %v9925 = vadd.f32 0.0, %v9924
      %v9926 = vpop.f32.mrf.mxu0
      %v9927 = vpop.f32.mrf.mxu0
      %v9928 = vadd.f32 0.0, %v9927
      %v9929 = vpop.f32.mrf.mxu0
      %9930 = vmatprep.mubr.bf16.mxu0 0
      %9931 = vmatmul.mubr.bf16.gmra.mxu0 %v9776
      %v9932 = vpop.f32.mrf.mxu0
      %v9933 = vadd.f32 0.0, %v9932
      %v9934 = vpop.f32.mrf.mxu0
      %v9935 = vpop.f32.mrf.mxu0
      %v9936 = vadd.f32 0.0, %v9935
      %v9937 = vpop.f32.mrf.mxu0
      %9938 = vmatprep.mubr.bf16.mxu0 0
      %9939 = vmatmul.mubr.bf16.gmra.mxu0 %v9777
      %v9940 = vpop.f32.mrf.mxu0
      %v9941 = vadd.f32 0.0, %v9940
      %v9942 = vpop.f32.mrf.mxu0
      %v9943 = vpop.f32.mrf.mxu0
      %v9944 = vadd.f32 0.0, %v9943
      %v9945 = vpop.f32.mrf.mxu0
      %9946 = vmatprep.mubr.bf16.mxu0 0
      %9947 = vmatmul.mubr.bf16.gmra.mxu0 %v9778
      %v9948 = vpop.f32.mrf.mxu0
      %v9949 = vadd.f32 0.0, %v9948
      %v9950 = vpop.f32.mrf.mxu0
      %v9951 = vpop.f32.mrf.mxu0
      %v9952 = vadd.f32 0.0, %v9951
      %v9953 = vpop.f32.mrf.mxu0
      %9954 = vmatprep.mubr.bf16.mxu0 0
      %9955 = vmatmul.mubr.bf16.gmra.mxu0 %v9779
      %v9956 = vpop.f32.mrf.mxu0
      %v9957 = vadd.f32 0.0, %v9956
      %v9958 = vpop.f32.mrf.mxu0
      %v9959 = vpop.f32.mrf.mxu0
      %v9960 = vadd.f32 0.0, %v9959
      %v9961 = vpop.f32.mrf.mxu0
      %9962 = vmatprep.mubr.bf16.mxu0 0
      %9963 = vmatmul.mubr.bf16.gmra.mxu0 %v9780
      %v9964 = vpop.f32.mrf.mxu0
      %v9965 = vadd.f32 0.0, %v9964
      %v9966 = vpop.f32.mrf.mxu0
      %v9967 = vpop.f32.mrf.mxu0
      %v9968 = vadd.f32 0.0, %v9967
      %v9969 = vpop.f32.mrf.mxu0
      %9970 = vmatprep.mubr.bf16.mxu0 0
      %9971 = vmatmul.mubr.bf16.gmra.mxu0 %v9781
      %v9972 = vpop.f32.mrf.mxu0
      %v9973 = vadd.f32 0.0, %v9972
      %v9974 = vpop.f32.mrf.mxu0
      %v9975 = vpop.f32.mrf.mxu0
      %v9976 = vadd.f32 0.0, %v9975
      %v9977 = vpop.f32.mrf.mxu0
      %9978 = vmatprep.mubr.bf16.mxu0 0
      %9979 = vmatmul.mubr.bf16.gmra.mxu0 %v9782
      %v9980 = vpop.f32.mrf.mxu0
      %v9981 = vadd.f32 0.0, %v9980
      %v9982 = vpop.f32.mrf.mxu0
      %v9983 = vpop.f32.mrf.mxu0
      %v9984 = vadd.f32 0.0, %v9983
      %v9985 = vpop.f32.mrf.mxu0
      %9986 = vmatprep.mubr.bf16.mxu0 0
      %9987 = vmatmul.mubr.bf16.gmra.mxu0 %v9783
      %v9988 = vpop.f32.mrf.mxu0
      %v9989 = vadd.f32 0.0, %v9988
      %v9990 = vpop.f32.mrf.mxu0
      %v9991 = vpop.f32.mrf.mxu0
      %v9992 = vadd.f32 0.0, %v9991
      %v9993 = vpop.f32.mrf.mxu0
      %9994 = vmatprep.mubr.bf16.mxu0 0
      %9995 = vmatmul.mubr.bf16.gmra.mxu0 %v9784
      %v9996 = vpop.f32.mrf.mxu0
      %v9997 = vadd.f32 0.0, %v9996
      %v9998 = vpop.f32.mrf.mxu0
      %v9999 = vpop.f32.mrf.mxu0
      %v10000 = vadd.f32 0.0, %v9999
      %v10001 = vpop.f32.mrf.mxu0
      %10002 = vmatprep.mubr.bf16.mxu0 0
      %10003 = vmatmul.mubr.bf16.gmra.mxu0 %v9785
      %v10004 = vpop.f32.mrf.mxu0
      %v10005 = vadd.f32 0.0, %v10004
      %v10006 = vpop.f32.mrf.mxu0
      %v10007 = vpop.f32.mrf.mxu0
      %v10008 = vadd.f32 0.0, %v10007
      %v10009 = vpop.f32.mrf.mxu0
      %10010 = vdwg.mxu0
      %v10011 = vadd.f32 %v9690, %v9885
      %v10012 = vadd.f32 %v9691, %v9888
      %v10013 = vadd.f32 %v9692, %v9893
      %v10014 = vadd.f32 %v9693, %v9896
      %v10015 = vadd.f32 %v9694, %v9901
      %v10016 = vadd.f32 %v9695, %v9904
      %v10017 = vadd.f32 %v9696, %v9909
      %v10018 = vadd.f32 %v9697, %v9912
      %v10019 = vadd.f32 %v9698, %v9917
      %v10020 = vadd.f32 %v9699, %v9920
      %v10021 = vadd.f32 %v9700, %v9925
      %v10022 = vadd.f32 %v9701, %v9928
      %v10023 = vadd.f32 %v9702, %v9933
      %v10024 = vadd.f32 %v9703, %v9936
      %v10025 = vadd.f32 %v9704, %v9941
      %v10026 = vadd.f32 %v9705, %v9944
      %v10027 = vadd.f32 %v9706, %v9949
      %v10028 = vadd.f32 %v9707, %v9952
      %v10029 = vadd.f32 %v9708, %v9957
      %v10030 = vadd.f32 %v9709, %v9960
      %v10031 = vadd.f32 %v9710, %v9965
      %v10032 = vadd.f32 %v9711, %v9968
      %v10033 = vadd.f32 %v9712, %v9973
      %v10034 = vadd.f32 %v9713, %v9976
      %v10035 = vadd.f32 %v9714, %v9981
      %v10036 = vadd.f32 %v9715, %v9984
      %v10037 = vadd.f32 %v9716, %v9989
      %v10038 = vadd.f32 %v9717, %v9992
      %v10039 = vadd.f32 %v9718, %v9997
      %v10040 = vadd.f32 %v9719, %v10000
      %v10041 = vadd.f32 %v9720, %v10005
      %v10042 = vadd.f32 %v9721, %v10008
      %v10043 = vld [vmem:[#allocation3 + $0x28] sm:$0xff]
      %v10044 = vld [vmem:[#allocation3 + $0x30] sm:$0xff]
      %v10045 = vld [vmem:[#allocation3 + $0x38] sm:$0xff]
      %v10046 = vld [vmem:[#allocation3 + $0x40] sm:$0xff]
      %v10047 = vld [vmem:[#allocation3 + $0x48] sm:$0xff]
      %v10048 = vld [vmem:[#allocation3 + $0x50] sm:$0xff]
      %v10049 = vld [vmem:[#allocation3 + $0x58] sm:$0xff]
      %v10050 = vld [vmem:[#allocation3 + $0x60] sm:$0xff]
      %v10051 = vld [vmem:[#allocation3 + $0x68] sm:$0xff]
      %v10052 = vld [vmem:[#allocation3 + $0x70] sm:$0xff]
      %v10053 = vld [vmem:[#allocation3 + $0x78] sm:$0xff]
      %v10054 = vld [vmem:[#allocation3 + $0x80] sm:$0xff]
      %v10055 = vld [vmem:[#allocation3 + $0x88] sm:$0xff]
      %v10056 = vld [vmem:[#allocation3 + $0x90] sm:$0xff]
      %v10057 = vld [vmem:[#allocation3 + $0x98] sm:$0xff]
      %v10058 = vld [vmem:[#allocation3 + $0xa0] sm:$0xff]
      %v10059 = vld [vmem:[#allocation3 + $0xa8] sm:$0xff]
      %v10060 = vld [vmem:[#allocation3 + $0xb0] sm:$0xff]
      %v10061 = vld [vmem:[#allocation3 + $0xb8] sm:$0xff]
      %v10062 = vld [vmem:[#allocation3 + $0xc0] sm:$0xff]
      %v10063 = vld [vmem:[#allocation3 + $0xc8] sm:$0xff]
      %v10064 = vld [vmem:[#allocation3 + $0xd0] sm:$0xff]
      %v10065 = vld [vmem:[#allocation3 + $0xd8] sm:$0xff]
      %v10066 = vld [vmem:[#allocation3 + $0xe0] sm:$0xff]
      %v10067 = vld [vmem:[#allocation3 + $0xe8] sm:$0xff]
      %v10068 = vld [vmem:[#allocation3 + $0xf0] sm:$0xff]
      %v10069 = vld [vmem:[#allocation3 + $0xf8] sm:$0xff]
      %v10070 = vld [vmem:[#allocation3 + $0x100] sm:$0xff]
      %v10071 = vld [vmem:[#allocation3 + $0x108] sm:$0xff]
      %v10072 = vld [vmem:[#allocation3 + $0x110] sm:$0xff]
      %v10073 = vld [vmem:[#allocation3 + $0x118] sm:$0xff]
      %v10074 = vld [vmem:[#allocation3 + $0x120] sm:$0xff]
      %v10075 = vpack.c.bf16 %v10044, %v10043
      %v10076 = vpack.c.bf16 %v10046, %v10045
      %v10077 = vpack.c.bf16 %v10048, %v10047
      %v10078 = vpack.c.bf16 %v10050, %v10049
      %v10079 = vpack.c.bf16 %v10052, %v10051
      %v10080 = vpack.c.bf16 %v10054, %v10053
      %v10081 = vpack.c.bf16 %v10056, %v10055
      %v10082 = vpack.c.bf16 %v10058, %v10057
      %v10083 = vpack.c.bf16 %v10060, %v10059
      %v10084 = vpack.c.bf16 %v10062, %v10061
      %v10085 = vpack.c.bf16 %v10064, %v10063
      %v10086 = vpack.c.bf16 %v10066, %v10065
      %v10087 = vpack.c.bf16 %v10068, %v10067
      %v10088 = vpack.c.bf16 %v10070, %v10069
      %v10089 = vpack.c.bf16 %v10072, %v10071
      %v10090 = vpack.c.bf16 %v10074, %v10073
      %v10091 = vld [vmem:[%s5453] sm:$0xf]
      %v10092 = vld [vmem:[%s5453 + $0x4] sm:$0xf]
      %v10093 = vld [vmem:[%s5453 + $0x8] sm:$0xf]
      %v10094 = vld [vmem:[%s5453 + $0xc] sm:$0xf]
      %v10095 = vld [vmem:[%s5453 + $0x10] sm:$0xf]
      %v10096 = vld [vmem:[%s5453 + $0x14] sm:$0xf]
      %v10097 = vld [vmem:[%s5453 + $0x18] sm:$0xf]
      %v10098 = vld [vmem:[%s5453 + $0x1c] sm:$0xf]
      %v10099 = vld [vmem:[%s5453 + $0x20] sm:$0xf]
      %v10100 = vld [vmem:[%s5453 + $0x24] sm:$0xf]
      %v10101 = vld [vmem:[%s5453 + $0x28] sm:$0xf]
      %v10102 = vld [vmem:[%s5453 + $0x2c] sm:$0xf]
      %v10103 = vld [vmem:[%s5453 + $0x30] sm:$0xf]
      %v10104 = vld [vmem:[%s5453 + $0x34] sm:$0xf]
      %v10105 = vld [vmem:[%s5453 + $0x38] sm:$0xf]
      %v10106 = vld [vmem:[%s5453 + $0x3c] sm:$0xf]
      %v10123 = vunpack.c.l.b16 %v10091
      %v10124 = vunpack.c.l.b16 %v10092
      %v10125 = vunpack.c.l.b16 %v10093
      %v10126 = vunpack.c.l.b16 %v10094
      %v10127 = vunpack.c.l.b16 %v10095
      %v10128 = vunpack.c.l.b16 %v10096
      %v10129 = vunpack.c.l.b16 %v10097
      %v10130 = vunpack.c.l.b16 %v10098
      %v10131 = vunpack.c.l.b16 %v10099
      %v10132 = vunpack.c.l.b16 %v10100
      %v10133 = vunpack.c.l.b16 %v10101
      %v10134 = vunpack.c.l.b16 %v10102
      %v10135 = vunpack.c.l.b16 %v10103
      %v10136 = vunpack.c.l.b16 %v10104
      %v10137 = vunpack.c.l.b16 %v10105
      %v10138 = vunpack.c.l.b16 %v10106
      %v10139 = vpack.c.b16 %v10124, %v10123
      %v10140 = vpack.c.b16 %v10126, %v10125
      %v10141 = vpack.c.b16 %v10128, %v10127
      %v10142 = vpack.c.b16 %v10130, %v10129
      %v10143 = vpack.c.b16 %v10132, %v10131
      %v10144 = vpack.c.b16 %v10134, %v10133
      %v10145 = vpack.c.b16 %v10136, %v10135
      %v10146 = vpack.c.b16 %v10138, %v10137
      %10155 = vmatprep.subr.bf16.mxu0 0
      %10156 = vmatpush1.bf16.msra.mxu0 %v10146
      %10157 = vmatprep.subr.bf16.mxu0 0
      %10158 = vmatpush1.bf16.msra.mxu0 %v10145
      %10159 = vmatprep.subr.bf16.mxu0 0
      %10160 = vmatpush1.bf16.msra.mxu0 %v10144
      %10161 = vmatprep.subr.bf16.mxu0 0
      %10162 = vmatpush1.bf16.msra.mxu0 %v10143
      %10163 = vmatprep.subr.bf16.mxu0 0
      %10164 = vmatpush1.bf16.msra.mxu0 %v10142
      %10165 = vmatprep.subr.bf16.mxu0 0
      %10166 = vmatpush1.bf16.msra.mxu0 %v10141
      %10167 = vmatprep.subr.bf16.mxu0 0
      %10168 = vmatpush1.bf16.msra.mxu0 %v10140
      %10169 = vmatprep.subr.bf16.mxu0 0
      %10170 = vmatpush1.bf16.msra.mxu0 %v10139
      %10171 = vmatprep.subr.bf16.mxu0 0
      %10172 = vmatpush2.bf16.msra.mxu0 0
      %10173 = vmatprep.subr.bf16.mxu0 0
      %10174 = vmatpush2.bf16.msra.mxu0 0
      %10175 = vmatprep.subr.bf16.mxu0 0
      %10176 = vmatpush2.bf16.msra.mxu0 0
      %10177 = vmatprep.subr.bf16.mxu0 0
      %10178 = vmatpush2.bf16.msra.mxu0 0
      %10179 = vmatprep.subr.bf16.mxu0 0
      %10180 = vmatpush2.bf16.msra.mxu0 0
      %10181 = vmatprep.subr.bf16.mxu0 0
      %10182 = vmatpush2.bf16.msra.mxu0 0
      %10183 = vmatprep.subr.bf16.mxu0 0
      %10184 = vmatpush2.bf16.msra.mxu0 0
      %10185 = vmatprep.subr.bf16.mxu0 0
      %10186 = vmatpush2.bf16.msra.mxu0 0
      %10187 = vmatprep.mubr.bf16.mxu0 0
      %10188 = vmatmul.mubr.bf16.gmra.mxu0 %v10075
      %v10189 = vpop.f32.mrf.mxu0
      %v10190 = vadd.f32 0.0, %v10189
      %v10191 = vpop.f32.mrf.mxu0
      %v10192 = vpop.f32.mrf.mxu0
      %v10193 = vadd.f32 0.0, %v10192
      %v10194 = vpop.f32.mrf.mxu0
      %10195 = vmatprep.mubr.bf16.mxu0 0
      %10196 = vmatmul.mubr.bf16.gmra.mxu0 %v10076
      %v10197 = vpop.f32.mrf.mxu0
      %v10198 = vadd.f32 0.0, %v10197
      %v10199 = vpop.f32.mrf.mxu0
      %v10200 = vpop.f32.mrf.mxu0
      %v10201 = vadd.f32 0.0, %v10200
      %v10202 = vpop.f32.mrf.mxu0
      %10203 = vmatprep.mubr.bf16.mxu0 0
      %10204 = vmatmul.mubr.bf16.gmra.mxu0 %v10077
      %v10205 = vpop.f32.mrf.mxu0
      %v10206 = vadd.f32 0.0, %v10205
      %v10207 = vpop.f32.mrf.mxu0
      %v10208 = vpop.f32.mrf.mxu0
      %v10209 = vadd.f32 0.0, %v10208
      %v10210 = vpop.f32.mrf.mxu0
      %10211 = vmatprep.mubr.bf16.mxu0 0
      %10212 = vmatmul.mubr.bf16.gmra.mxu0 %v10078
      %v10213 = vpop.f32.mrf.mxu0
      %v10214 = vadd.f32 0.0, %v10213
      %v10215 = vpop.f32.mrf.mxu0
      %v10216 = vpop.f32.mrf.mxu0
      %v10217 = vadd.f32 0.0, %v10216
      %v10218 = vpop.f32.mrf.mxu0
      %10219 = vmatprep.mubr.bf16.mxu0 0
      %10220 = vmatmul.mubr.bf16.gmra.mxu0 %v10079
      %v10221 = vpop.f32.mrf.mxu0
      %v10222 = vadd.f32 0.0, %v10221
      %v10223 = vpop.f32.mrf.mxu0
      %v10224 = vpop.f32.mrf.mxu0
      %v10225 = vadd.f32 0.0, %v10224
      %v10226 = vpop.f32.mrf.mxu0
      %10227 = vmatprep.mubr.bf16.mxu0 0
      %10228 = vmatmul.mubr.bf16.gmra.mxu0 %v10080
      %v10229 = vpop.f32.mrf.mxu0
      %v10230 = vadd.f32 0.0, %v10229
      %v10231 = vpop.f32.mrf.mxu0
      %v10232 = vpop.f32.mrf.mxu0
      %v10233 = vadd.f32 0.0, %v10232
      %v10234 = vpop.f32.mrf.mxu0
      %10235 = vmatprep.mubr.bf16.mxu0 0
      %10236 = vmatmul.mubr.bf16.gmra.mxu0 %v10081
      %v10237 = vpop.f32.mrf.mxu0
      %v10238 = vadd.f32 0.0, %v10237
      %v10239 = vpop.f32.mrf.mxu0
      %v10240 = vpop.f32.mrf.mxu0
      %v10241 = vadd.f32 0.0, %v10240
      %v10242 = vpop.f32.mrf.mxu0
      %10243 = vmatprep.mubr.bf16.mxu0 0
      %10244 = vmatmul.mubr.bf16.gmra.mxu0 %v10082
      %v10245 = vpop.f32.mrf.mxu0
      %v10246 = vadd.f32 0.0, %v10245
      %v10247 = vpop.f32.mrf.mxu0
      %v10248 = vpop.f32.mrf.mxu0
      %v10249 = vadd.f32 0.0, %v10248
      %v10250 = vpop.f32.mrf.mxu0
      %10251 = vmatprep.mubr.bf16.mxu0 0
      %10252 = vmatmul.mubr.bf16.gmra.mxu0 %v10083
      %v10253 = vpop.f32.mrf.mxu0
      %v10254 = vadd.f32 0.0, %v10253
      %v10255 = vpop.f32.mrf.mxu0
      %v10256 = vpop.f32.mrf.mxu0
      %v10257 = vadd.f32 0.0, %v10256
      %v10258 = vpop.f32.mrf.mxu0
      %10259 = vmatprep.mubr.bf16.mxu0 0
      %10260 = vmatmul.mubr.bf16.gmra.mxu0 %v10084
      %v10261 = vpop.f32.mrf.mxu0
      %v10262 = vadd.f32 0.0, %v10261
      %v10263 = vpop.f32.mrf.mxu0
      %v10264 = vpop.f32.mrf.mxu0
      %v10265 = vadd.f32 0.0, %v10264
      %v10266 = vpop.f32.mrf.mxu0
      %10267 = vmatprep.mubr.bf16.mxu0 0
      %10268 = vmatmul.mubr.bf16.gmra.mxu0 %v10085
      %v10269 = vpop.f32.mrf.mxu0
      %v10270 = vadd.f32 0.0, %v10269
      %v10271 = vpop.f32.mrf.mxu0
      %v10272 = vpop.f32.mrf.mxu0
      %v10273 = vadd.f32 0.0, %v10272
      %v10274 = vpop.f32.mrf.mxu0
      %10275 = vmatprep.mubr.bf16.mxu0 0
      %10276 = vmatmul.mubr.bf16.gmra.mxu0 %v10086
      %v10277 = vpop.f32.mrf.mxu0
      %v10278 = vadd.f32 0.0, %v10277
      %v10279 = vpop.f32.mrf.mxu0
      %v10280 = vpop.f32.mrf.mxu0
      %v10281 = vadd.f32 0.0, %v10280
      %v10282 = vpop.f32.mrf.mxu0
      %10283 = vmatprep.mubr.bf16.mxu0 0
      %10284 = vmatmul.mubr.bf16.gmra.mxu0 %v10087
      %v10285 = vpop.f32.mrf.mxu0
      %v10286 = vadd.f32 0.0, %v10285
      %v10287 = vpop.f32.mrf.mxu0
      %v10288 = vpop.f32.mrf.mxu0
      %v10289 = vadd.f32 0.0, %v10288
      %v10290 = vpop.f32.mrf.mxu0
      %10291 = vmatprep.mubr.bf16.mxu0 0
      %10292 = vmatmul.mubr.bf16.gmra.mxu0 %v10088
      %v10293 = vpop.f32.mrf.mxu0
      %v10294 = vadd.f32 0.0, %v10293
      %v10295 = vpop.f32.mrf.mxu0
      %v10296 = vpop.f32.mrf.mxu0
      %v10297 = vadd.f32 0.0, %v10296
      %v10298 = vpop.f32.mrf.mxu0
      %10299 = vmatprep.mubr.bf16.mxu0 0
      %10300 = vmatmul.mubr.bf16.gmra.mxu0 %v10089
      %v10301 = vpop.f32.mrf.mxu0
      %v10302 = vadd.f32 0.0, %v10301
      %v10303 = vpop.f32.mrf.mxu0
      %v10304 = vpop.f32.mrf.mxu0
      %v10305 = vadd.f32 0.0, %v10304
      %v10306 = vpop.f32.mrf.mxu0
      %10307 = vmatprep.mubr.bf16.mxu0 0
      %10308 = vmatmul.mubr.bf16.gmra.mxu0 %v10090
      %v10309 = vpop.f32.mrf.mxu0
      %v10310 = vadd.f32 0.0, %v10309
      %v10311 = vpop.f32.mrf.mxu0
      %v10312 = vpop.f32.mrf.mxu0
      %v10313 = vadd.f32 0.0, %v10312
      %v10314 = vpop.f32.mrf.mxu0
      %10315 = vdwg.mxu0
      %v10316 = vadd.f32 %v10011, %v10190
      %v10317 = vadd.f32 %v10012, %v10193
      %v10318 = vadd.f32 %v10013, %v10198
      %v10319 = vadd.f32 %v10014, %v10201
      %v10320 = vadd.f32 %v10015, %v10206
      %v10321 = vadd.f32 %v10016, %v10209
      %v10322 = vadd.f32 %v10017, %v10214
      %v10323 = vadd.f32 %v10018, %v10217
      %v10324 = vadd.f32 %v10019, %v10222
      %v10325 = vadd.f32 %v10020, %v10225
      %v10326 = vadd.f32 %v10021, %v10230
      %v10327 = vadd.f32 %v10022, %v10233
      %v10328 = vadd.f32 %v10023, %v10238
      %v10329 = vadd.f32 %v10024, %v10241
      %v10330 = vadd.f32 %v10025, %v10246
      %v10331 = vadd.f32 %v10026, %v10249
      %v10332 = vadd.f32 %v10027, %v10254
      %v10333 = vadd.f32 %v10028, %v10257
      %v10334 = vadd.f32 %v10029, %v10262
      %v10335 = vadd.f32 %v10030, %v10265
      %v10336 = vadd.f32 %v10031, %v10270
      %v10337 = vadd.f32 %v10032, %v10273
      %v10338 = vadd.f32 %v10033, %v10278
      %v10339 = vadd.f32 %v10034, %v10281
      %v10340 = vadd.f32 %v10035, %v10286
      %v10341 = vadd.f32 %v10036, %v10289
      %v10342 = vadd.f32 %v10037, %v10294
      %v10343 = vadd.f32 %v10038, %v10297
      %v10344 = vadd.f32 %v10039, %v10302
      %v10345 = vadd.f32 %v10040, %v10305
      %v10346 = vadd.f32 %v10041, %v10310
      %v10347 = vadd.f32 %v10042, %v10313
      %v10348 = vld [vmem:[#allocation3 + $0x29] sm:$0xff]
      %v10349 = vld [vmem:[#allocation3 + $0x31] sm:$0xff]
      %v10350 = vld [vmem:[#allocation3 + $0x39] sm:$0xff]
      %v10351 = vld [vmem:[#allocation3 + $0x41] sm:$0xff]
      %v10352 = vld [vmem:[#allocation3 + $0x49] sm:$0xff]
      %v10353 = vld [vmem:[#allocation3 + $0x51] sm:$0xff]
      %v10354 = vld [vmem:[#allocation3 + $0x59] sm:$0xff]
      %v10355 = vld [vmem:[#allocation3 + $0x61] sm:$0xff]
      %v10356 = vld [vmem:[#allocation3 + $0x69] sm:$0xff]
      %v10357 = vld [vmem:[#allocation3 + $0x71] sm:$0xff]
      %v10358 = vld [vmem:[#allocation3 + $0x79] sm:$0xff]
      %v10359 = vld [vmem:[#allocation3 + $0x81] sm:$0xff]
      %v10360 = vld [vmem:[#allocation3 + $0x89] sm:$0xff]
      %v10361 = vld [vmem:[#allocation3 + $0x91] sm:$0xff]
      %v10362 = vld [vmem:[#allocation3 + $0x99] sm:$0xff]
      %v10363 = vld [vmem:[#allocation3 + $0xa1] sm:$0xff]
      %v10364 = vld [vmem:[#allocation3 + $0xa9] sm:$0xff]
      %v10365 = vld [vmem:[#allocation3 + $0xb1] sm:$0xff]
      %v10366 = vld [vmem:[#allocation3 + $0xb9] sm:$0xff]
      %v10367 = vld [vmem:[#allocation3 + $0xc1] sm:$0xff]
      %v10368 = vld [vmem:[#allocation3 + $0xc9] sm:$0xff]
      %v10369 = vld [vmem:[#allocation3 + $0xd1] sm:$0xff]
      %v10370 = vld [vmem:[#allocation3 + $0xd9] sm:$0xff]
      %v10371 = vld [vmem:[#allocation3 + $0xe1] sm:$0xff]
      %v10372 = vld [vmem:[#allocation3 + $0xe9] sm:$0xff]
      %v10373 = vld [vmem:[#allocation3 + $0xf1] sm:$0xff]
      %v10374 = vld [vmem:[#allocation3 + $0xf9] sm:$0xff]
      %v10375 = vld [vmem:[#allocation3 + $0x101] sm:$0xff]
      %v10376 = vld [vmem:[#allocation3 + $0x109] sm:$0xff]
      %v10377 = vld [vmem:[#allocation3 + $0x111] sm:$0xff]
      %v10378 = vld [vmem:[#allocation3 + $0x119] sm:$0xff]
      %v10379 = vld [vmem:[#allocation3 + $0x121] sm:$0xff]
      %v10380 = vpack.c.bf16 %v10349, %v10348
      %v10381 = vpack.c.bf16 %v10351, %v10350
      %v10382 = vpack.c.bf16 %v10353, %v10352
      %v10383 = vpack.c.bf16 %v10355, %v10354
      %v10384 = vpack.c.bf16 %v10357, %v10356
      %v10385 = vpack.c.bf16 %v10359, %v10358
      %v10386 = vpack.c.bf16 %v10361, %v10360
      %v10387 = vpack.c.bf16 %v10363, %v10362
      %v10388 = vpack.c.bf16 %v10365, %v10364
      %v10389 = vpack.c.bf16 %v10367, %v10366
      %v10390 = vpack.c.bf16 %v10369, %v10368
      %v10391 = vpack.c.bf16 %v10371, %v10370
      %v10392 = vpack.c.bf16 %v10373, %v10372
      %v10393 = vpack.c.bf16 %v10375, %v10374
      %v10394 = vpack.c.bf16 %v10377, %v10376
      %v10395 = vpack.c.bf16 %v10379, %v10378
      %v10396 = vmul.bf16 %v10380, %v1655
      %v10397 = vmul.bf16 %v10381, %v1656
      %v10398 = vmul.bf16 %v10382, %v1657
      %v10399 = vmul.bf16 %v10383, %v1658
      %v10400 = vmul.bf16 %v10384, %v1659
      %v10401 = vmul.bf16 %v10385, %v1660
      %v10402 = vmul.bf16 %v10386, %v1661
      %v10403 = vmul.bf16 %v10387, %v1662
      %v10404 = vmul.bf16 %v10388, %v1663
      %v10405 = vmul.bf16 %v10389, %v1664
      %v10406 = vmul.bf16 %v10390, %v1665
      %v10407 = vmul.bf16 %v10391, %v1666
      %v10408 = vmul.bf16 %v10392, %v1667
      %v10409 = vmul.bf16 %v10393, %v1668
      %v10410 = vmul.bf16 %v10394, %v1669
      %v10411 = vmul.bf16 %v10395, %v1670
      %v10412 = vld [vmem:[%s5775] sm:$0xf]
      %v10413 = vld [vmem:[%s5775 + $0x4] sm:$0xf]
      %v10414 = vld [vmem:[%s5775 + $0x8] sm:$0xf]
      %v10415 = vld [vmem:[%s5775 + $0xc] sm:$0xf]
      %v10416 = vld [vmem:[%s5775 + $0x10] sm:$0xf]
      %v10417 = vld [vmem:[%s5775 + $0x14] sm:$0xf]
      %v10418 = vld [vmem:[%s5775 + $0x18] sm:$0xf]
      %v10419 = vld [vmem:[%s5775 + $0x1c] sm:$0xf]
      %v10420 = vld [vmem:[%s5775 + $0x20] sm:$0xf]
      %v10421 = vld [vmem:[%s5775 + $0x24] sm:$0xf]
      %v10422 = vld [vmem:[%s5775 + $0x28] sm:$0xf]
      %v10423 = vld [vmem:[%s5775 + $0x2c] sm:$0xf]
      %v10424 = vld [vmem:[%s5775 + $0x30] sm:$0xf]
      %v10425 = vld [vmem:[%s5775 + $0x34] sm:$0xf]
      %v10426 = vld [vmem:[%s5775 + $0x38] sm:$0xf]
      %v10427 = vld [vmem:[%s5775 + $0x3c] sm:$0xf]
      %v10444 = vunpack.c.l.b16 %v10412
      %v10445 = vunpack.c.l.b16 %v10413
      %v10446 = vunpack.c.l.b16 %v10414
      %v10447 = vunpack.c.l.b16 %v10415
      %v10448 = vunpack.c.l.b16 %v10416
      %v10449 = vunpack.c.l.b16 %v10417
      %v10450 = vunpack.c.l.b16 %v10418
      %v10451 = vunpack.c.l.b16 %v10419
      %v10452 = vunpack.c.l.b16 %v10420
      %v10453 = vunpack.c.l.b16 %v10421
      %v10454 = vunpack.c.l.b16 %v10422
      %v10455 = vunpack.c.l.b16 %v10423
      %v10456 = vunpack.c.l.b16 %v10424
      %v10457 = vunpack.c.l.b16 %v10425
      %v10458 = vunpack.c.l.b16 %v10426
      %v10459 = vunpack.c.l.b16 %v10427
      %v10460 = vpack.c.b16 %v10445, %v10444
      %v10461 = vpack.c.b16 %v10447, %v10446
      %v10462 = vpack.c.b16 %v10449, %v10448
      %v10463 = vpack.c.b16 %v10451, %v10450
      %v10464 = vpack.c.b16 %v10453, %v10452
      %v10465 = vpack.c.b16 %v10455, %v10454
      %v10466 = vpack.c.b16 %v10457, %v10456
      %v10467 = vpack.c.b16 %v10459, %v10458
      %10476 = vmatprep.subr.bf16.mxu0 0
      %10477 = vmatpush1.bf16.msra.mxu0 %v10467
      %10478 = vmatprep.subr.bf16.mxu0 0
      %10479 = vmatpush1.bf16.msra.mxu0 %v10466
      %10480 = vmatprep.subr.bf16.mxu0 0
      %10481 = vmatpush1.bf16.msra.mxu0 %v10465
      %10482 = vmatprep.subr.bf16.mxu0 0
      %10483 = vmatpush1.bf16.msra.mxu0 %v10464
      %10484 = vmatprep.subr.bf16.mxu0 0
      %10485 = vmatpush1.bf16.msra.mxu0 %v10463
      %10486 = vmatprep.subr.bf16.mxu0 0
      %10487 = vmatpush1.bf16.msra.mxu0 %v10462
      %10488 = vmatprep.subr.bf16.mxu0 0
      %10489 = vmatpush1.bf16.msra.mxu0 %v10461
      %10490 = vmatprep.subr.bf16.mxu0 0
      %10491 = vmatpush1.bf16.msra.mxu0 %v10460
      %10492 = vmatprep.subr.bf16.mxu0 0
      %10493 = vmatpush2.bf16.msra.mxu0 0
      %10494 = vmatprep.subr.bf16.mxu0 0
      %10495 = vmatpush2.bf16.msra.mxu0 0
      %10496 = vmatprep.subr.bf16.mxu0 0
      %10497 = vmatpush2.bf16.msra.mxu0 0
      %10498 = vmatprep.subr.bf16.mxu0 0
      %10499 = vmatpush2.bf16.msra.mxu0 0
      %10500 = vmatprep.subr.bf16.mxu0 0
      %10501 = vmatpush2.bf16.msra.mxu0 0
      %10502 = vmatprep.subr.bf16.mxu0 0
      %10503 = vmatpush2.bf16.msra.mxu0 0
      %10504 = vmatprep.subr.bf16.mxu0 0
      %10505 = vmatpush2.bf16.msra.mxu0 0
      %10506 = vmatprep.subr.bf16.mxu0 0
      %10507 = vmatpush2.bf16.msra.mxu0 0
      %10508 = vmatprep.mubr.bf16.mxu0 0
      %10509 = vmatmul.mubr.bf16.gmra.mxu0 %v10396
      %v10510 = vpop.f32.mrf.mxu0
      %v10511 = vadd.f32 0.0, %v10510
      %v10512 = vpop.f32.mrf.mxu0
      %v10513 = vpop.f32.mrf.mxu0
      %v10514 = vadd.f32 0.0, %v10513
      %v10515 = vpop.f32.mrf.mxu0
      %10516 = vmatprep.mubr.bf16.mxu0 0
      %10517 = vmatmul.mubr.bf16.gmra.mxu0 %v10397
      %v10518 = vpop.f32.mrf.mxu0
      %v10519 = vadd.f32 0.0, %v10518
      %v10520 = vpop.f32.mrf.mxu0
      %v10521 = vpop.f32.mrf.mxu0
      %v10522 = vadd.f32 0.0, %v10521
      %v10523 = vpop.f32.mrf.mxu0
      %10524 = vmatprep.mubr.bf16.mxu0 0
      %10525 = vmatmul.mubr.bf16.gmra.mxu0 %v10398
      %v10526 = vpop.f32.mrf.mxu0
      %v10527 = vadd.f32 0.0, %v10526
      %v10528 = vpop.f32.mrf.mxu0
      %v10529 = vpop.f32.mrf.mxu0
      %v10530 = vadd.f32 0.0, %v10529
      %v10531 = vpop.f32.mrf.mxu0
      %10532 = vmatprep.mubr.bf16.mxu0 0
      %10533 = vmatmul.mubr.bf16.gmra.mxu0 %v10399
      %v10534 = vpop.f32.mrf.mxu0
      %v10535 = vadd.f32 0.0, %v10534
      %v10536 = vpop.f32.mrf.mxu0
      %v10537 = vpop.f32.mrf.mxu0
      %v10538 = vadd.f32 0.0, %v10537
      %v10539 = vpop.f32.mrf.mxu0
      %10540 = vmatprep.mubr.bf16.mxu0 0
      %10541 = vmatmul.mubr.bf16.gmra.mxu0 %v10400
      %v10542 = vpop.f32.mrf.mxu0
      %v10543 = vadd.f32 0.0, %v10542
      %v10544 = vpop.f32.mrf.mxu0
      %v10545 = vpop.f32.mrf.mxu0
      %v10546 = vadd.f32 0.0, %v10545
      %v10547 = vpop.f32.mrf.mxu0
      %10548 = vmatprep.mubr.bf16.mxu0 0
      %10549 = vmatmul.mubr.bf16.gmra.mxu0 %v10401
      %v10550 = vpop.f32.mrf.mxu0
      %v10551 = vadd.f32 0.0, %v10550
      %v10552 = vpop.f32.mrf.mxu0
      %v10553 = vpop.f32.mrf.mxu0
      %v10554 = vadd.f32 0.0, %v10553
      %v10555 = vpop.f32.mrf.mxu0
      %10556 = vmatprep.mubr.bf16.mxu0 0
      %10557 = vmatmul.mubr.bf16.gmra.mxu0 %v10402
      %v10558 = vpop.f32.mrf.mxu0
      %v10559 = vadd.f32 0.0, %v10558
      %v10560 = vpop.f32.mrf.mxu0
      %v10561 = vpop.f32.mrf.mxu0
      %v10562 = vadd.f32 0.0, %v10561
      %v10563 = vpop.f32.mrf.mxu0
      %10564 = vmatprep.mubr.bf16.mxu0 0
      %10565 = vmatmul.mubr.bf16.gmra.mxu0 %v10403
      %v10566 = vpop.f32.mrf.mxu0
      %v10567 = vadd.f32 0.0, %v10566
      %v10568 = vpop.f32.mrf.mxu0
      %v10569 = vpop.f32.mrf.mxu0
      %v10570 = vadd.f32 0.0, %v10569
      %v10571 = vpop.f32.mrf.mxu0
      %10572 = vmatprep.mubr.bf16.mxu0 0
      %10573 = vmatmul.mubr.bf16.gmra.mxu0 %v10404
      %v10574 = vpop.f32.mrf.mxu0
      %v10575 = vadd.f32 0.0, %v10574
      %v10576 = vpop.f32.mrf.mxu0
      %v10577 = vpop.f32.mrf.mxu0
      %v10578 = vadd.f32 0.0, %v10577
      %v10579 = vpop.f32.mrf.mxu0
      %10580 = vmatprep.mubr.bf16.mxu0 0
      %10581 = vmatmul.mubr.bf16.gmra.mxu0 %v10405
      %v10582 = vpop.f32.mrf.mxu0
      %v10583 = vadd.f32 0.0, %v10582
      %v10584 = vpop.f32.mrf.mxu0
      %v10585 = vpop.f32.mrf.mxu0
      %v10586 = vadd.f32 0.0, %v10585
      %v10587 = vpop.f32.mrf.mxu0
      %10588 = vmatprep.mubr.bf16.mxu0 0
      %10589 = vmatmul.mubr.bf16.gmra.mxu0 %v10406
      %v10590 = vpop.f32.mrf.mxu0
      %v10591 = vadd.f32 0.0, %v10590
      %v10592 = vpop.f32.mrf.mxu0
      %v10593 = vpop.f32.mrf.mxu0
      %v10594 = vadd.f32 0.0, %v10593
      %v10595 = vpop.f32.mrf.mxu0
      %10596 = vmatprep.mubr.bf16.mxu0 0
      %10597 = vmatmul.mubr.bf16.gmra.mxu0 %v10407
      %v10598 = vpop.f32.mrf.mxu0
      %v10599 = vadd.f32 0.0, %v10598
      %v10600 = vpop.f32.mrf.mxu0
      %v10601 = vpop.f32.mrf.mxu0
      %v10602 = vadd.f32 0.0, %v10601
      %v10603 = vpop.f32.mrf.mxu0
      %10604 = vmatprep.mubr.bf16.mxu0 0
      %10605 = vmatmul.mubr.bf16.gmra.mxu0 %v10408
      %v10606 = vpop.f32.mrf.mxu0
      %v10607 = vadd.f32 0.0, %v10606
      %v10608 = vpop.f32.mrf.mxu0
      %v10609 = vpop.f32.mrf.mxu0
      %v10610 = vadd.f32 0.0, %v10609
      %v10611 = vpop.f32.mrf.mxu0
      %10612 = vmatprep.mubr.bf16.mxu0 0
      %10613 = vmatmul.mubr.bf16.gmra.mxu0 %v10409
      %v10614 = vpop.f32.mrf.mxu0
      %v10615 = vadd.f32 0.0, %v10614
      %v10616 = vpop.f32.mrf.mxu0
      %v10617 = vpop.f32.mrf.mxu0
      %v10618 = vadd.f32 0.0, %v10617
      %v10619 = vpop.f32.mrf.mxu0
      %10620 = vmatprep.mubr.bf16.mxu0 0
      %10621 = vmatmul.mubr.bf16.gmra.mxu0 %v10410
      %v10622 = vpop.f32.mrf.mxu0
      %v10623 = vadd.f32 0.0, %v10622
      %v10624 = vpop.f32.mrf.mxu0
      %v10625 = vpop.f32.mrf.mxu0
      %v10626 = vadd.f32 0.0, %v10625
      %v10627 = vpop.f32.mrf.mxu0
      %10628 = vmatprep.mubr.bf16.mxu0 0
      %10629 = vmatmul.mubr.bf16.gmra.mxu0 %v10411
      %v10630 = vpop.f32.mrf.mxu0
      %v10631 = vadd.f32 0.0, %v10630
      %v10632 = vpop.f32.mrf.mxu0
      %v10633 = vpop.f32.mrf.mxu0
      %v10634 = vadd.f32 0.0, %v10633
      %v10635 = vpop.f32.mrf.mxu0
      %10636 = vdwg.mxu0
      %v10637 = vadd.f32 %v10316, %v10511
      %v10638 = vadd.f32 %v10317, %v10514
      %v10639 = vadd.f32 %v10318, %v10519
      %v10640 = vadd.f32 %v10319, %v10522
      %v10641 = vadd.f32 %v10320, %v10527
      %v10642 = vadd.f32 %v10321, %v10530
      %v10643 = vadd.f32 %v10322, %v10535
      %v10644 = vadd.f32 %v10323, %v10538
      %v10645 = vadd.f32 %v10324, %v10543
      %v10646 = vadd.f32 %v10325, %v10546
      %v10647 = vadd.f32 %v10326, %v10551
      %v10648 = vadd.f32 %v10327, %v10554
      %v10649 = vadd.f32 %v10328, %v10559
      %v10650 = vadd.f32 %v10329, %v10562
      %v10651 = vadd.f32 %v10330, %v10567
      %v10652 = vadd.f32 %v10331, %v10570
      %v10653 = vadd.f32 %v10332, %v10575
      %v10654 = vadd.f32 %v10333, %v10578
      %v10655 = vadd.f32 %v10334, %v10583
      %v10656 = vadd.f32 %v10335, %v10586
      %v10657 = vadd.f32 %v10336, %v10591
      %v10658 = vadd.f32 %v10337, %v10594
      %v10659 = vadd.f32 %v10338, %v10599
      %v10660 = vadd.f32 %v10339, %v10602
      %v10661 = vadd.f32 %v10340, %v10607
      %v10662 = vadd.f32 %v10341, %v10610
      %v10663 = vadd.f32 %v10342, %v10615
      %v10664 = vadd.f32 %v10343, %v10618
      %v10665 = vadd.f32 %v10344, %v10623
      %v10666 = vadd.f32 %v10345, %v10626
      %v10667 = vadd.f32 %v10346, %v10631
      %v10668 = vadd.f32 %v10347, %v10634
      %v10669 = vmul.f32 %v10637, %v6037
      %v10670 = vmul.f32 %v10638, %v6037
      %v10671 = vmul.f32 %v10639, %v6037
      %v10672 = vmul.f32 %v10640, %v6037
      %v10673 = vmul.f32 %v10641, %v6037
      %v10674 = vmul.f32 %v10642, %v6037
      %v10675 = vmul.f32 %v10643, %v6037
      %v10676 = vmul.f32 %v10644, %v6037
      %v10677 = vmul.f32 %v10645, %v6037
      %v10678 = vmul.f32 %v10646, %v6037
      %v10679 = vmul.f32 %v10647, %v6037
      %v10680 = vmul.f32 %v10648, %v6037
      %v10681 = vmul.f32 %v10649, %v6037
      %v10682 = vmul.f32 %v10650, %v6037
      %v10683 = vmul.f32 %v10651, %v6037
      %v10684 = vmul.f32 %v10652, %v6037
      %v10685 = vmul.f32 %v10653, %v6037
      %v10686 = vmul.f32 %v10654, %v6037
      %v10687 = vmul.f32 %v10655, %v6037
      %v10688 = vmul.f32 %v10656, %v6037
      %v10689 = vmul.f32 %v10657, %v6037
      %v10690 = vmul.f32 %v10658, %v6037
      %v10691 = vmul.f32 %v10659, %v6037
      %v10692 = vmul.f32 %v10660, %v6037
      %v10693 = vmul.f32 %v10661, %v6037
      %v10694 = vmul.f32 %v10662, %v6037
      %v10695 = vmul.f32 %v10663, %v6037
      %v10696 = vmul.f32 %v10664, %v6037
      %v10697 = vmul.f32 %v10665, %v6037
      %v10698 = vmul.f32 %v10666, %v6037
      %v10699 = vmul.f32 %v10667, %v6037
      %v10700 = vmul.f32 %v10668, %v6037
      %v10701 = vadd.f32 %v10669, %v6075
      %v10702 = vadd.f32 %v10670, %v6075
      %v10703 = vadd.f32 %v10671, %v6075
      %v10704 = vadd.f32 %v10672, %v6075
      %v10705 = vadd.f32 %v10673, %v6075
      %v10706 = vadd.f32 %v10674, %v6075
      %v10707 = vadd.f32 %v10675, %v6075
      %v10708 = vadd.f32 %v10676, %v6075
      %v10709 = vadd.f32 %v10677, %v6075
      %v10710 = vadd.f32 %v10678, %v6075
      %v10711 = vadd.f32 %v10679, %v6075
      %v10712 = vadd.f32 %v10680, %v6075
      %v10713 = vadd.f32 %v10681, %v6075
      %v10714 = vadd.f32 %v10682, %v6075
      %v10715 = vadd.f32 %v10683, %v6075
      %v10716 = vadd.f32 %v10684, %v6075
      %v10717 = vadd.f32 %v10685, %v6075
      %v10718 = vadd.f32 %v10686, %v6075
      %v10719 = vadd.f32 %v10687, %v6075
      %v10720 = vadd.f32 %v10688, %v6075
      %v10721 = vadd.f32 %v10689, %v6075
      %v10722 = vadd.f32 %v10690, %v6075
      %v10723 = vadd.f32 %v10691, %v6075
      %v10724 = vadd.f32 %v10692, %v6075
      %v10725 = vadd.f32 %v10693, %v6075
      %v10726 = vadd.f32 %v10694, %v6075
      %v10727 = vadd.f32 %v10695, %v6075
      %v10728 = vadd.f32 %v10696, %v6075
      %v10729 = vadd.f32 %v10697, %v6075
      %v10730 = vadd.f32 %v10698, %v6075
      %v10731 = vadd.f32 %v10699, %v6075
      %v10732 = vadd.f32 %v10700, %v6075
      %10733 = vxpose.xlu0.b32.start [1/16] %v10701, 128
      %10734 = vxpose.xlu0.b32.cont [2/16] %v10702, 128
      %10735 = vxpose.xlu0.b32.cont [3/16] %v10703, 128
      %10736 = vxpose.xlu0.b32.cont [4/16] %v10704, 128
      %10737 = vxpose.xlu0.b32.cont [5/16] %v10705, 128
      %10738 = vxpose.xlu0.b32.cont [6/16] %v10706, 128
      %10739 = vxpose.xlu0.b32.cont [7/16] %v10707, 128
      %10740 = vxpose.xlu0.b32.cont [8/16] %v10708, 128
      %10741 = vxpose.xlu0.b32.cont [9/16] %v10709, 128
      %10742 = vxpose.xlu0.b32.cont [10/16] %v10710, 128
      %10743 = vxpose.xlu0.b32.cont [11/16] %v10711, 128
      %10744 = vxpose.xlu0.b32.cont [12/16] %v10712, 128
      %10745 = vxpose.xlu0.b32.cont [13/16] %v10713, 128
      %10746 = vxpose.xlu0.b32.cont [14/16] %v10714, 128
      %10747 = vxpose.xlu0.b32.cont [15/16] %v10715, 128
      %10748 = vxpose.xlu0.b32.end [16/16] %v10716, 128
      %v10749 = vpop.trf.xlu0
      %v10750 = vpop.trf.xlu0
      %v10751 = vpop.trf.xlu0
      %v10752 = vpop.trf.xlu0
      %v10753 = vpop.trf.xlu0
      %v10754 = vpop.trf.xlu0
      %v10755 = vpop.trf.xlu0
      %v10756 = vpop.trf.xlu0
      %v10757 = vpop.trf.xlu0
      %v10758 = vpop.trf.xlu0
      %v10759 = vpop.trf.xlu0
      %v10760 = vpop.trf.xlu0
      %v10761 = vpop.trf.xlu0
      %v10762 = vpop.trf.xlu0
      %v10763 = vpop.trf.xlu0
      %v10764 = vpop.trf.xlu0
      %10765 = vxpose.xlu0.b32.start [1/16] %v10717, 128
      %10766 = vxpose.xlu0.b32.cont [2/16] %v10718, 128
      %10767 = vxpose.xlu0.b32.cont [3/16] %v10719, 128
      %10768 = vxpose.xlu0.b32.cont [4/16] %v10720, 128
      %10769 = vxpose.xlu0.b32.cont [5/16] %v10721, 128
      %10770 = vxpose.xlu0.b32.cont [6/16] %v10722, 128
      %10771 = vxpose.xlu0.b32.cont [7/16] %v10723, 128
      %10772 = vxpose.xlu0.b32.cont [8/16] %v10724, 128
      %10773 = vxpose.xlu0.b32.cont [9/16] %v10725, 128
      %10774 = vxpose.xlu0.b32.cont [10/16] %v10726, 128
      %10775 = vxpose.xlu0.b32.cont [11/16] %v10727, 128
      %10776 = vxpose.xlu0.b32.cont [12/16] %v10728, 128
      %10777 = vxpose.xlu0.b32.cont [13/16] %v10729, 128
      %10778 = vxpose.xlu0.b32.cont [14/16] %v10730, 128
      %10779 = vxpose.xlu0.b32.cont [15/16] %v10731, 128
      %10780 = vxpose.xlu0.b32.end [16/16] %v10732, 128
      %v10781 = vpop.trf.xlu0
      %v10782 = vpop.trf.xlu0
      %v10783 = vpop.trf.xlu0
      %v10784 = vpop.trf.xlu0
      %v10785 = vpop.trf.xlu0
      %v10786 = vpop.trf.xlu0
      %v10787 = vpop.trf.xlu0
      %v10788 = vpop.trf.xlu0
      %v10789 = vpop.trf.xlu0
      %v10790 = vpop.trf.xlu0
      %v10791 = vpop.trf.xlu0
      %v10792 = vpop.trf.xlu0
      %v10793 = vpop.trf.xlu0
      %v10794 = vpop.trf.xlu0
      %v10795 = vpop.trf.xlu0
      %v10796 = vpop.trf.xlu0
      %v10797 = vadd.f32 %v10749, %v6190
      %v10798 = vadd.f32 %v10781, %v6191
      %v10799 = vadd.f32 %v10750, %v6192
      %v10800 = vadd.f32 %v10782, %v6193
      %v10801 = vadd.f32 %v10751, %v6194
      %v10802 = vadd.f32 %v10783, %v6195
      %v10803 = vadd.f32 %v10752, %v6196
      %v10804 = vadd.f32 %v10784, %v6197
      %s10805 = scalar_lea.vmem %s339, 64
      %10806 = vst [vmem:[%s10805] sm:$0xff] %v10797
      %10807 = vst [vmem:[%s10805 + $0x8] sm:$0xff] %v10798
      %10808 = vst [vmem:[%s10805 + $0x10] sm:$0xff] %v10799
      %10809 = vst [vmem:[%s10805 + $0x18] sm:$0xff] %v10800
      %10810 = vst [vmem:[%s10805 + $0x20] sm:$0xff] %v10801
      %10811 = vst [vmem:[%s10805 + $0x28] sm:$0xff] %v10802
      %10812 = vst [vmem:[%s10805 + $0x30] sm:$0xff] %v10803
      %10813 = vst [vmem:[%s10805 + $0x38] sm:$0xff] %v10804
      %s10814 = smul.u32 2, %s20
      %p10815 = scmp.lt.s32.totalorder %s10814, 3
      %s10816 = scalar_select %p10815, %s10814, 3
      %s10817 = smul.addr %s10816, 8
      %s10818 = smul.addr %s10817, 8
      %s10819 = scalar_lea.vmem %s9, %s10818
      // Predicated region
      $region57: #{ms_conv_block.1} parent=55 // pred_check
        %p10820 = pneg %p232
      $region58: #{ms_conv_block.1} parent=55 // pred_check_branch
        %10822 = sbr.rel (%p10820) target = $region60
      $region59: #{ms_conv_block.1} parent=55 // pred_region
        %s10823 = smul.u32 2, %s20
      $region60: #{ms_conv_block.1} parent=55 // pred_fallthru
        _
    $region56: #{ms_conv_block.1} parent=5 // pred_fallthru
      _
    %p10824 = scmp.le.s32.totalorder 2, %s15
    // Predicated region
    $region61: #{ms_conv_block.1} parent=5 // pred_check
      %p10825 = pneg %p10824
    $region62: #{ms_conv_block.1} parent=5 // pred_check_branch
      %10827 = sbr.rel (%p10825) target = $region64
    $region63: #{ms_conv_block.1} parent=5 // pred_region
      %s10828 = ssub.s32 %s15, 2
      // Predicated region
      $region65: #{ms_conv_block.1} parent=63 // pred_check
        %p10829 = pneg %p238
      $region66: #{ms_conv_block.1} parent=63 // pred_check_branch
        %10831 = sbr.rel (%p10829) target = $region68
      $region67: #{ms_conv_block.1} parent=63 // pred_region
        %s10832 = smul.u32 2, %s21
        %p10833 = scmp.lt.s32.totalorder %s10832, 3
        %s10834 = scalar_select %p10833, %s10832, 3
        %s10835 = smul.addr %s10834, 8
        %s10836 = smul.addr %s10835, 8
        %s10837 = scalar_lea.vmem %s9, %s10836
      $region68: #{ms_conv_block.1} parent=63 // pred_fallthru
        _
    $region64: #{ms_conv_block.1} parent=5 // pred_fallthru
      _
  $region6: #{ms_conv_block.1} parent=0 // loop_footer
    %s19 = sadd.s32 1, %s15
  $region7: #{ms_conv_block.1} parent=0 // loop_footer_branch
    %14 = sbr.rel target = $region3
  $region8: #{ms_conv_block.1} parent=0 // loop_exit
    _

</llo_original>
